<compile_context>
chip_gen: v5e
topology: v5e:2x2
jax: 0.10.0
libtpu: 0.0.40
codegen_flags: <defaults>
</compile_context>

<pallas_src>
import jax
import jax.numpy as jnp
from jax import lax
from jax.experimental import pallas as pl
from jax.experimental.pallas import tpu as pltpu

LANE = 128
_COL_TAIL = 8   # spare rows at the end of col so the +1/+2 row-offset LHS views stay in-bounds


def _pick_row_group(h, wb, max_rows=512):
    """Largest divisor RG of h with RG*wb <= max_rows (matmul M lands ~128-512)."""
    best = 1
    for rg in range(1, h + 1):
        if h % rg == 0 and rg * wb <= max_rows:
            best = rg
    return best


def resblocks_kernel(x_ref, w1_ref, b1_ref, w2_ref, b2_ref, out_ref,
                     act_pad, mid_pad, col):
    """One (batch element n, res-block b) grid step.

    x_ref   : (1, H, W, Cp)            f32   input (read only at block b == 0)
    w*_ref  : (n_blocks, 3, 3*Cp, Cp)  bf16  per-dw conv weight slabs (BN-scaled), resident
    b*_ref  : (n_blocks, 1, Cp)        f32   folded BN shifts, resident
    out_ref : (1, H, W, Cp)            f32   written only at the last block
    act_pad : (H+2, Wb, Cp)            f32   persistent padded activation (residual carrier);
                                             interior at rows [1,H], cols [2, W+2)
    mid_pad : (H+2, Wb, Cp)            bf16  padded conv1 output (post BN1 + ReLU)
    col     : (RG*Wb + 8, 3*Cp)        bf16  dh-stacked im2col slab buffer
    """
    H = x_ref.shape[1]
    W = x_ref.shape[2]
    Wb = act_pad.shape[1]
    Cp = act_pad.shape[2]
    RG = (col.shape[0] - _COL_TAIL) // Wb
    M = RG * Wb
    n_rg = H // RG

    b = pl.program_id(1)
    n_blocks = pl.num_programs(1)

    # ---- block 0: zero only the 1-px halo strips and load this element's input.
    # Interiors are fully overwritten (by x here, by conv1/conv2 below).  All
    # mid_pad strip stores start at even column offsets with even extents, so
    # the packed bf16 stores stay 32-bit-pair aligned.
    @pl.when(b == 0)
    def _init():
        act_pad[0:1, :, :] = jnp.zeros((1, Wb, Cp), jnp.float32)
        act_pad[H + 1:H + 2, :, :] = jnp.zeros((1, Wb, Cp), jnp.float32)
        act_pad[1:H + 1, 0:2, :] = jnp.zeros((H, 2, Cp), jnp.float32)
        act_pad[1:H + 1, W + 2:W + 4, :] = jnp.zeros((H, 2, Cp), jnp.float32)
        mid_pad[0:1, :, :] = jnp.zeros((1, Wb, Cp), mid_pad.dtype)
        mid_pad[H + 1:H + 2, :, :] = jnp.zeros((1, Wb, Cp), mid_pad.dtype)
        mid_pad[1:H + 1, 0:2, :] = jnp.zeros((H, 2, Cp), mid_pad.dtype)
        mid_pad[1:H + 1, W + 2:W + 4, :] = jnp.zeros((H, 2, Cp), mid_pad.dtype)
        act_pad[1:H + 1, 2:W + 2, :] = x_ref[0]

    b1 = b1_ref[b]                       # (1, Cp) f32
    b2 = b2_ref[b]

    def build_col(src_ref, r0):
        # Three aligned slab stores per row group:
        #   col[i*Wb + x, dh*Cp + c] = src[r0 + i + dh, x, c]
        for dh in range(3):
            slab = src_ref[pl.ds(r0 + dh, RG), :, :]             # (RG, Wb, Cp)
            col[0:M, dh * Cp:(dh + 1) * Cp] = (
                slab.astype(jnp.bfloat16).reshape(M, Cp))

    def conv3x3(w_ref):
        # acc[i*Wb + j] = conv output at row (r0 + i), column (j - 1);
        # columns j in [1, W] are valid, the rest are junk and discarded.
        # The +dw row-offset LHS views realize the 3 dw taps without any
        # additional im2col stores; f32 accumulation across the 3 matmuls.
        acc = jnp.dot(col[0:M, :], w_ref[b, 0],
                      preferred_element_type=jnp.float32)
        acc = acc + jnp.dot(col[1:M + 1, :], w_ref[b, 1],
                            preferred_element_type=jnp.float32)
        acc = acc + jnp.dot(col[2:M + 2, :], w_ref[b, 2],
                            preferred_element_type=jnp.float32)
        return acc

    def for_each_row_group(body):
        # Python-unrolled for small trip counts (LLO visibility); fori_loop
        # keeps code size and vreg live ranges bounded for large H.
        if n_rg <= 8:
            for rg in range(n_rg):
                body(rg * RG)
        else:
            def _step(rg, carry):
                body(rg * RG)
                return carry
            lax.fori_loop(0, n_rg, _step, 0)

    # ---- Conv-1 + BN-1 shift + ReLU (stored as the bf16 conv-2 operand) ----
    def conv1_rg(r0):
        build_col(act_pad, r0)
        h = jnp.maximum(conv3x3(w1_ref) + b1, 0.0)               # (M, Cp) f32
        h = h.reshape(RG, Wb, Cp)[:, 1:W + 1, :]
        mid_pad[pl.ds(r0 + 1, RG), 2:W + 2, :] = h.astype(mid_pad.dtype)

    # ---- Conv-2 + BN-2 shift + residual add (clip=False path) ----
    def conv2_rg(r0):
        build_col(mid_pad, r0)
        y = (conv3x3(w2_ref) + b2).reshape(RG, Wb, Cp)[:, 1:W + 1, :]
        res = act_pad[pl.ds(r0 + 1, RG), 2:W + 2, :]
        act_pad[pl.ds(r0 + 1, RG), 2:W + 2, :] = res + y

    for_each_row_group(conv1_rg)
    for_each_row_group(conv2_rg)

    # ---- last block: emit the (unpadded) activation for this batch element ----
    @pl.when(b == n_blocks - 1)
    def _finalize():
        out_ref[0] = act_pad[1:H + 1, 2:W + 2, :].astype(out_ref.dtype)


def _fold_and_pack(block_params, C, Cp):
    """Stack per-block BN-folded params, channel-pad, and repack the weights
    into per-dw (3*Cp, Cp) slabs matching the dh-stacked im2col K layout."""
    w1s, b1s, w2s, b2s = [], [], [], []
    for (w1, s1, w2, s2) in block_params:
        for w, shift, wl, bl in ((w1, s1, w1s, b1s), (w2, s2, w2s, b2s)):
            wp = jnp.zeros((3, 3, Cp, Cp), jnp.float32).at[:, :, :C, :C].set(w)
            # (dh, dw, ci, co) -> (dw, dh*Cp + ci, co)
            wl.append(jnp.transpose(wp, (1, 0, 2, 3))
                      .reshape(3, 3 * Cp, Cp).astype(jnp.bfloat16))
            bl.append(jnp.zeros((1, Cp), jnp.float32).at[:, :C].set(
                shift.reshape(1, C)))
    return (jnp.stack(w1s), jnp.stack(b1s), jnp.stack(w2s), jnp.stack(b2s))


def resblocks_forward(x_nchw, block_params):
    """ResBlocks.forward: n_blocks ResBlocks fused into a single pallas_call."""
    N, C, H, W = x_nchw.shape
    n_blocks = len(block_params)
    Cp = max(LANE, -(-C // LANE) * LANE)

    # 2-column left pad keeps packed stores pair-aligned; keep Wb even so the
    # im2col slab stores always end on a full bf16 pair.
    Wb = W + 4 + (W % 2)
    # mid is only ever a bf16 matmul operand; keep it bf16 unless an odd W
    # would force sub-pair masked stores.
    mid_dtype = jnp.bfloat16 if W % 2 == 0 else jnp.float32
    mid_itemsize = 2 if mid_dtype == jnp.bfloat16 else 4

    RG = _pick_row_group(H, Wb)
    M = RG * Wb

    x = jnp.transpose(x_nchw, (0, 2, 3, 1))                     # NCHW -> NHWC
    x = jnp.pad(x, ((0, 0), (0, 0), (0, 0), (0, Cp - C)))       # lane-dense C

    w1_all, b1_all, w2_all, b2_all = _fold_and_pack(block_params, C, Cp)

    # Explicit VMEM budget: scratches + double-buffered x/out blocks +
    # resident weights, with headroom.
    scratch_bytes = ((H + 2) * Wb * Cp * 4                      # act_pad
                     + (H + 2) * Wb * Cp * mid_itemsize         # mid_pad
                     + (M + _COL_TAIL) * 3 * Cp * 2)            # col
    io_bytes = 2 * 2 * H * W * Cp * 4                           # x + out blocks
    weight_bytes = 2 * n_blocks * (2 * 9 * Cp * Cp * 2 + 2 * Cp * 4)
    vmem_limit = int(1.5 * (scratch_bytes + io_bytes + weight_bytes)) + (4 << 20)
    vmem_limit = max(32 << 20, min(vmem_limit, 100 << 20))

    out = pl.pallas_call(
        resblocks_kernel,
        out_shape=jax.ShapeDtypeStruct((N, H, W, Cp), jnp.float32),
        grid_spec=pltpu.PrefetchScalarGridSpec(
            num_scalar_prefetch=0,
            grid=(N, n_blocks),
            in_specs=[
                # x: constant block index along the block axis -> DMA'd once
                # per batch element (read inside the kernel only at b == 0).
                pl.BlockSpec((1, H, W, Cp), lambda n, b: (n, 0, 0, 0)),
                # All blocks' weights/shifts stay resident (constant index
                # maps -> fetched once); the kernel indexes them by block id.
                pl.BlockSpec((n_blocks, 3, 3 * Cp, Cp),
                             lambda n, b: (0, 0, 0, 0)),
                pl.BlockSpec((n_blocks, 1, Cp), lambda n, b: (0, 0, 0)),
                pl.BlockSpec((n_blocks, 3, 3 * Cp, Cp),
                             lambda n, b: (0, 0, 0, 0)),
                pl.BlockSpec((n_blocks, 1, Cp), lambda n, b: (0, 0, 0)),
            ],
            # Output resident across the block axis; written only at the last
            # block, flushed to HBM when n advances.
            out_specs=pl.BlockSpec((1, H, W, Cp), lambda n, b: (n, 0, 0, 0)),
            scratch_shapes=[
                pltpu.VMEM((H + 2, Wb, Cp), jnp.float32),            # act_pad
                pltpu.VMEM((H + 2, Wb, Cp), mid_dtype),              # mid_pad
                pltpu.VMEM((M + _COL_TAIL, 3 * Cp), jnp.bfloat16),   # col
            ],
        ),
        compiler_params=pltpu.CompilerParams(
            dimension_semantics=("parallel", "arbitrary"),
            vmem_limit_bytes=vmem_limit),
    )(x, w1_all, b1_all, w2_all, b2_all)

    out = out[..., :C]                                          # strip C padding
    return jnp.transpose(out, (0, 3, 1, 2))                     # NHWC -> NCHW


def make_resblock_params(key, channels, eps=1e-5):
    """Deterministic synthetic parameters for one ResBlock, eval-mode BN folded."""
    keys = jax.random.split(key, 10)
    params = []
    for i in range(2):  # two conv + BN stages
        k_w, k_g, k_b, k_m, k_v = keys[5 * i: 5 * i + 5]
        w = 0.1 * jax.random.normal(k_w, (3, 3, channels, channels), jnp.float32)
        gamma = jax.random.uniform(k_g, (channels,), jnp.float32, 0.5, 1.5)
        beta = 0.1 * jax.random.normal(k_b, (channels,), jnp.float32)
        running_mean = 0.1 * jax.random.normal(k_m, (channels,), jnp.float32)
        running_var = jax.random.uniform(k_v, (channels,), jnp.float32, 0.5, 1.5)
        scale = gamma * lax.rsqrt(running_var + eps)             # (C,)
        shift = beta - running_mean * scale                      # (C,)
        w_eff = w * scale[None, None, None, :]                   # fold into HWIO
        params.append((w_eff, shift))
    (w1, s1), (w2, s2) = params
    return w1, s1, w2, s2


# -------------------- pure-JAX reference (for checking) --------------------
def _conv3x3_ref(x_nhwc, w_hwio, matmul_dtype):
    return lax.conv_general_dilated(
        x_nhwc.astype(matmul_dtype), w_hwio.astype(matmul_dtype),
        window_strides=(1, 1), padding=((1, 1), (1, 1)),
        dimension_numbers=("NHWC", "HWIO", "NHWC"),
        preferred_element_type=jnp.float32)


def resblocks_ref(x_nchw, block_params, matmul_dtype=jnp.float32):
    x = jnp.transpose(x_nchw, (0, 2, 3, 1))
    for (w1, s1, w2, s2) in block_params:
        h = _conv3x3_ref(x, w1, matmul_dtype) + s1[None, None, None, :]
        h = jnp.maximum(h, 0.0)
        h = _conv3x3_ref(h, w2, matmul_dtype) + s2[None, None, None, :]
        x = x + h
    return jnp.transpose(x, (0, 3, 1, 2))


if __name__ == "__main__":
    N, C, H, W = 2, 4, 16, 16
    N_BLOCKS = 2

    key = jax.random.PRNGKey(0)
    k_x, k_p = jax.random.split(key)
    x = jax.random.normal(k_x, (N, C, H, W), jnp.float32)       # NCHW like PyTorch

    block_keys = jax.random.split(k_p, N_BLOCKS)
    block_params = [make_resblock_params(bk, C) for bk in block_keys]

    out = jax.block_until_ready(jax.jit(resblocks_forward)(x, block_params))
    assert out.shape == (N, C, H, W)

    # Tight check vs. a reference with the same bf16 matmul-operand precision.
    ref_bf16 = jax.block_until_ready(
        resblocks_ref(x, block_params, matmul_dtype=jnp.bfloat16))
    assert jnp.allclose(out, ref_bf16, atol=3e-3, rtol=3e-3), float(
        jnp.max(jnp.abs(out - ref_bf16)))

    # Loose check vs. the full-f32 reference (module semantics); the gap is the
    # expected bf16-MXU quantization error.
    ref_f32 = jax.block_until_ready(resblocks_ref(x, block_params))
    gap = float(jnp.max(jnp.abs(out - ref_f32)))
    assert gap < 1e-1, gap

    print("KERNEL_OK")
</pallas_src>

<mosaic_0001>
module attributes {stable_mosaic.version = 11 : i64} {
  func.func @resblocks_kernel(%arg0: i32, %arg1: i32, %arg2: memref<1x16x16x128xf32, #tpu.memory_space<vmem>>, %arg3: memref<2x3x384x128xbf16, #tpu.memory_space<vmem>>, %arg4: memref<2x1x128xf32, #tpu.memory_space<vmem>>, %arg5: memref<2x3x384x128xbf16, #tpu.memory_space<vmem>>, %arg6: memref<2x1x128xf32, #tpu.memory_space<vmem>>, %arg7: memref<1x16x16x128xf32, #tpu.memory_space<vmem>>, %arg8: memref<18x20x128xf32, #tpu.memory_space<vmem>>, %arg9: memref<18x20x128xbf16, #tpu.memory_space<vmem>>, %arg10: memref<328x384xbf16, #tpu.memory_space<vmem>>) attributes {dimension_semantics = [#tpu.dimension_semantics<parallel>, #tpu.dimension_semantics<arbitrary>], iteration_bounds = array<i64: 2, 2>, scalar_prefetch = 0 : i64, scratch_operands = 3 : i64, tpu.core_type = #tpu.core_type<tc>, window_params = [{transform_indices = @transform_0, window_bounds = array<i64: 1, 16, 16, 128>}, {pipeline_mode = #tpu.pipeline_mode<synchronous>, transform_indices = @transform_1, window_bounds = array<i64: 2, 3, 384, 128>}, {pipeline_mode = #tpu.pipeline_mode<synchronous>, transform_indices = @transform_2, window_bounds = array<i64: 2, 1, 128>}, {pipeline_mode = #tpu.pipeline_mode<synchronous>, transform_indices = @transform_3, window_bounds = array<i64: 2, 3, 384, 128>}, {pipeline_mode = #tpu.pipeline_mode<synchronous>, transform_indices = @transform_4, window_bounds = array<i64: 2, 1, 128>}, {transform_indices = @transform_5, window_bounds = array<i64: 1, 16, 16, 128>}]} {
    %c0_i32 = arith.constant 0 : i32
    %0 = arith.cmpi eq, %arg1, %c0_i32 : i32
    %1 = arith.extui %0 : i1 to i32
    %c0_i32_0 = arith.constant 0 : i32
    %2 = arith.cmpi ne, %1, %c0_i32_0 : i32
    scf.if %2 {
      %cst_76 = arith.constant 0.000000e+00 : f32
      %82 = vector.broadcast %cst_76 : f32 to vector<1x20x128xf32>
      %c0_77 = arith.constant 0 : index
      %c0_78 = arith.constant 0 : index
      %c0_79 = arith.constant 0 : index
      %83 = vector.load %arg8[%c0_77, %c0_78, %c0_79] : memref<18x20x128xf32, #tpu.memory_space<vmem>>, vector<1x20x128xf32>
      tpu.vector_store %arg8[%c0_77, %c0_78, %c0_79], %82 {strides = array<i32>} : memref<18x20x128xf32, #tpu.memory_space<vmem>>, vector<1x20x128xf32>,
      %cst_80 = arith.constant 0.000000e+00 : f32
      %84 = vector.broadcast %cst_80 : f32 to vector<1x20x128xf32>
      %c17 = arith.constant 17 : index
      %c0_81 = arith.constant 0 : index
      %c0_82 = arith.constant 0 : index
      %85 = vector.load %arg8[%c17, %c0_81, %c0_82] : memref<18x20x128xf32, #tpu.memory_space<vmem>>, vector<1x20x128xf32>
      tpu.vector_store %arg8[%c17, %c0_81, %c0_82], %84 {strides = array<i32>} : memref<18x20x128xf32, #tpu.memory_space<vmem>>, vector<1x20x128xf32>,
      %cst_83 = arith.constant 0.000000e+00 : f32
      %86 = vector.broadcast %cst_83 : f32 to vector<16x2x128xf32>
      %c1_84 = arith.constant 1 : index
      %c0_85 = arith.constant 0 : index
      %c0_86 = arith.constant 0 : index
      %87 = vector.load %arg8[%c1_84, %c0_85, %c0_86] : memref<18x20x128xf32, #tpu.memory_space<vmem>>, vector<16x2x128xf32>
      tpu.vector_store %arg8[%c1_84, %c0_85, %c0_86], %86 {strides = array<i32>} : memref<18x20x128xf32, #tpu.memory_space<vmem>>, vector<16x2x128xf32>,
      %cst_87 = arith.constant 0.000000e+00 : f32
      %88 = vector.broadcast %cst_87 : f32 to vector<16x2x128xf32>
      %c1_88 = arith.constant 1 : index
      %c18 = arith.constant 18 : index
      %c0_89 = arith.constant 0 : index
      %89 = vector.load %arg8[%c1_88, %c18, %c0_89] : memref<18x20x128xf32, #tpu.memory_space<vmem>>, vector<16x2x128xf32>
      tpu.vector_store %arg8[%c1_88, %c18, %c0_89], %88 {strides = array<i32>} : memref<18x20x128xf32, #tpu.memory_space<vmem>>, vector<16x2x128xf32>,
      %cst_90 = arith.constant 0.000000e+00 : bf16
      %90 = vector.broadcast %cst_90 : bf16 to vector<1x20x128xbf16>
      %c0_91 = arith.constant 0 : index
      %c0_92 = arith.constant 0 : index
      %c0_93 = arith.constant 0 : index
      %91 = vector.load %arg9[%c0_91, %c0_92, %c0_93] : memref<18x20x128xbf16, #tpu.memory_space<vmem>>, vector<1x20x128xbf16>
      tpu.vector_store %arg9[%c0_91, %c0_92, %c0_93], %90 {strides = array<i32>} : memref<18x20x128xbf16, #tpu.memory_space<vmem>>, vector<1x20x128xbf16>,
      %cst_94 = arith.constant 0.000000e+00 : bf16
      %92 = vector.broadcast %cst_94 : bf16 to vector<1x20x128xbf16>
      %c17_95 = arith.constant 17 : index
      %c0_96 = arith.constant 0 : index
      %c0_97 = arith.constant 0 : index
      %93 = vector.load %arg9[%c17_95, %c0_96, %c0_97] : memref<18x20x128xbf16, #tpu.memory_space<vmem>>, vector<1x20x128xbf16>
      tpu.vector_store %arg9[%c17_95, %c0_96, %c0_97], %92 {strides = array<i32>} : memref<18x20x128xbf16, #tpu.memory_space<vmem>>, vector<1x20x128xbf16>,
      %cst_98 = arith.constant 0.000000e+00 : bf16
      %94 = vector.broadcast %cst_98 : bf16 to vector<16x2x128xbf16>
      %c1_99 = arith.constant 1 : index
      %c0_100 = arith.constant 0 : index
      %c0_101 = arith.constant 0 : index
      %95 = vector.load %arg9[%c1_99, %c0_100, %c0_101] : memref<18x20x128xbf16, #tpu.memory_space<vmem>>, vector<16x2x128xbf16>
      tpu.vector_store %arg9[%c1_99, %c0_100, %c0_101], %94 {strides = array<i32>} : memref<18x20x128xbf16, #tpu.memory_space<vmem>>, vector<16x2x128xbf16>,
      %cst_102 = arith.constant 0.000000e+00 : bf16
      %96 = vector.broadcast %cst_102 : bf16 to vector<16x2x128xbf16>
      %c1_103 = arith.constant 1 : index
      %c18_104 = arith.constant 18 : index
      %c0_105 = arith.constant 0 : index
      %97 = vector.load %arg9[%c1_103, %c18_104, %c0_105] : memref<18x20x128xbf16, #tpu.memory_space<vmem>>, vector<16x2x128xbf16>
      tpu.vector_store %arg9[%c1_103, %c18_104, %c0_105], %96 {strides = array<i32>} : memref<18x20x128xbf16, #tpu.memory_space<vmem>>, vector<16x2x128xbf16>,
      %c0_106 = arith.constant 0 : index
      %c0_107 = arith.constant 0 : index
      %c0_108 = arith.constant 0 : index
      %c0_109 = arith.constant 0 : index
      %98 = vector.load %arg2[%c0_106, %c0_107, %c0_108, %c0_109] : memref<1x16x16x128xf32, #tpu.memory_space<vmem>>, vector<1x16x16x128xf32>
      %99 = vector.shape_cast %98 : vector<1x16x16x128xf32> to vector<16x16x128xf32>
      %c1_110 = arith.constant 1 : index
      %c2_111 = arith.constant 2 : index
      %c0_112 = arith.constant 0 : index
      %100 = vector.load %arg8[%c1_110, %c2_111, %c0_112] : memref<18x20x128xf32, #tpu.memory_space<vmem>>, vector<16x16x128xf32>
      tpu.vector_store %arg8[%c1_110, %c2_111, %c0_112], %99 {strides = array<i32>} : memref<18x20x128xf32, #tpu.memory_space<vmem>>, vector<16x16x128xf32>,
    } else {
    }
    %3 = arith.index_cast %arg1 : i32 to index
    %c0 = arith.constant 0 : index
    %c0_1 = arith.constant 0 : index
    %4 = vector.load %arg4[%3, %c0, %c0_1] : memref<2x1x128xf32, #tpu.memory_space<vmem>>, vector<1x1x128xf32>
    %5 = vector.shape_cast %4 : vector<1x1x128xf32> to vector<1x128xf32>
    %6 = arith.index_cast %arg1 : i32 to index
    %c0_2 = arith.constant 0 : index
    %c0_3 = arith.constant 0 : index
    %7 = vector.load %arg6[%6, %c0_2, %c0_3] : memref<2x1x128xf32, #tpu.memory_space<vmem>>, vector<1x1x128xf32>
    %8 = vector.shape_cast %7 : vector<1x1x128xf32> to vector<1x128xf32>
    %c0_4 = arith.constant 0 : index
    %c0_5 = arith.constant 0 : index
    %c0_6 = arith.constant 0 : index
    %9 = vector.load %arg8[%c0_4, %c0_5, %c0_6] : memref<18x20x128xf32, #tpu.memory_space<vmem>>, vector<16x20x128xf32>
    %10 = arith.truncf %9 : vector<16x20x128xf32> to vector<16x20x128xbf16>
    %11 = vector.shape_cast %10 : vector<16x20x128xbf16> to vector<320x128xbf16>
    %c0_7 = arith.constant 0 : index
    %c0_8 = arith.constant 0 : index
    %12 = vector.load %arg10[%c0_7, %c0_8] : memref<328x384xbf16, #tpu.memory_space<vmem>>, vector<320x128xbf16>
    tpu.vector_store %arg10[%c0_7, %c0_8], %11 {strides = array<i32>} : memref<328x384xbf16, #tpu.memory_space<vmem>>, vector<320x128xbf16>,
    %c1 = arith.constant 1 : index
    %c0_9 = arith.constant 0 : index
    %c0_10 = arith.constant 0 : index
    %13 = vector.load %arg8[%c1, %c0_9, %c0_10] : memref<18x20x128xf32, #tpu.memory_space<vmem>>, vector<16x20x128xf32>
    %14 = arith.truncf %13 : vector<16x20x128xf32> to vector<16x20x128xbf16>
    %15 = vector.shape_cast %14 : vector<16x20x128xbf16> to vector<320x128xbf16>
    %c0_11 = arith.constant 0 : index
    %c128 = arith.constant 128 : index
    %16 = vector.load %arg10[%c0_11, %c128] : memref<328x384xbf16, #tpu.memory_space<vmem>>, vector<320x128xbf16>
    tpu.vector_store %arg10[%c0_11, %c128], %15 {strides = array<i32>} : memref<328x384xbf16, #tpu.memory_space<vmem>>, vector<320x128xbf16>,
    %c2 = arith.constant 2 : index
    %c0_12 = arith.constant 0 : index
    %c0_13 = arith.constant 0 : index
    %17 = vector.load %arg8[%c2, %c0_12, %c0_13] : memref<18x20x128xf32, #tpu.memory_space<vmem>>, vector<16x20x128xf32>
    %18 = arith.truncf %17 : vector<16x20x128xf32> to vector<16x20x128xbf16>
    %19 = vector.shape_cast %18 : vector<16x20x128xbf16> to vector<320x128xbf16>
    %c0_14 = arith.constant 0 : index
    %c256 = arith.constant 256 : index
    %20 = vector.load %arg10[%c0_14, %c256] : memref<328x384xbf16, #tpu.memory_space<vmem>>, vector<320x128xbf16>
    tpu.vector_store %arg10[%c0_14, %c256], %19 {strides = array<i32>} : memref<328x384xbf16, #tpu.memory_space<vmem>>, vector<320x128xbf16>,
    %c0_15 = arith.constant 0 : index
    %c0_16 = arith.constant 0 : index
    %21 = vector.load %arg10[%c0_15, %c0_16] : memref<328x384xbf16, #tpu.memory_space<vmem>>, vector<320x384xbf16>
    %22 = arith.index_cast %arg1 : i32 to index
    %c0_17 = arith.constant 0 : index
    %c0_18 = arith.constant 0 : index
    %c0_19 = arith.constant 0 : index
    %23 = vector.load %arg3[%22, %c0_17, %c0_18, %c0_19] : memref<2x3x384x128xbf16, #tpu.memory_space<vmem>>, vector<1x1x384x128xbf16>
    %24 = vector.shape_cast %23 : vector<1x1x384x128xbf16> to vector<384x128xbf16>
    %cst = arith.constant dense<0.000000e+00> : vector<320x128xf32>
    %25 = tpu.matmul %21, %24, %cst {dimension_numbers = #tpu.dot_dimension_numbers<[1], [0], [0], [1], [0, 0, 1, 1], [], []>} : vector<320x384xbf16>, vector<384x128xbf16>, vector<320x128xf32> -> vector<320x128xf32>
    %c1_20 = arith.constant 1 : index
    %c0_21 = arith.constant 0 : index
    %26 = vector.load %arg10[%c1_20, %c0_21] : memref<328x384xbf16, #tpu.memory_space<vmem>>, vector<320x384xbf16>
    %27 = arith.index_cast %arg1 : i32 to index
    %c1_22 = arith.constant 1 : index
    %c0_23 = arith.constant 0 : index
    %c0_24 = arith.constant 0 : index
    %28 = vector.load %arg3[%27, %c1_22, %c0_23, %c0_24] : memref<2x3x384x128xbf16, #tpu.memory_space<vmem>>, vector<1x1x384x128xbf16>
    %29 = vector.shape_cast %28 : vector<1x1x384x128xbf16> to vector<384x128xbf16>
    %cst_25 = arith.constant dense<0.000000e+00> : vector<320x128xf32>
    %30 = tpu.matmul %26, %29, %cst_25 {dimension_numbers = #tpu.dot_dimension_numbers<[1], [0], [0], [1], [0, 0, 1, 1], [], []>} : vector<320x384xbf16>, vector<384x128xbf16>, vector<320x128xf32> -> vector<320x128xf32>
    %31 = arith.addf %25, %30 : vector<320x128xf32>
    %c2_26 = arith.constant 2 : index
    %c0_27 = arith.constant 0 : index
    %32 = vector.load %arg10[%c2_26, %c0_27] : memref<328x384xbf16, #tpu.memory_space<vmem>>, vector<320x384xbf16>
    %33 = arith.index_cast %arg1 : i32 to index
    %c2_28 = arith.constant 2 : index
    %c0_29 = arith.constant 0 : index
    %c0_30 = arith.constant 0 : index
    %34 = vector.load %arg3[%33, %c2_28, %c0_29, %c0_30] : memref<2x3x384x128xbf16, #tpu.memory_space<vmem>>, vector<1x1x384x128xbf16>
    %35 = vector.shape_cast %34 : vector<1x1x384x128xbf16> to vector<384x128xbf16>
    %cst_31 = arith.constant dense<0.000000e+00> : vector<320x128xf32>
    %36 = tpu.matmul %32, %35, %cst_31 {dimension_numbers = #tpu.dot_dimension_numbers<[1], [0], [0], [1], [0, 0, 1, 1], [], []>} : vector<320x384xbf16>, vector<384x128xbf16>, vector<320x128xf32> -> vector<320x128xf32>
    %37 = arith.addf %31, %36 : vector<320x128xf32>
    %38 = vector.broadcast %5 : vector<1x128xf32> to vector<320x128xf32>
    %39 = arith.addf %37, %38 : vector<320x128xf32>
    %cst_32 = arith.constant 0.000000e+00 : f32
    %40 = vector.broadcast %cst_32 : f32 to vector<320x128xf32>
    %41 = arith.maximumf %39, %40 : vector<320x128xf32>
    %42 = vector.shape_cast %41 : vector<320x128xf32> to vector<16x20x128xf32>
    %43 = vector.extract_strided_slice %42 {offsets = [0, 1, 0], sizes = [16, 16, 128], strides = [1, 1, 1]} : vector<16x20x128xf32> to vector<16x16x128xf32>
    %44 = arith.truncf %43 : vector<16x16x128xf32> to vector<16x16x128xbf16>
    %c1_33 = arith.constant 1 : index
    %c2_34 = arith.constant 2 : index
    %c0_35 = arith.constant 0 : index
    %45 = vector.load %arg9[%c1_33, %c2_34, %c0_35] : memref<18x20x128xbf16, #tpu.memory_space<vmem>>, vector<16x16x128xbf16>
    tpu.vector_store %arg9[%c1_33, %c2_34, %c0_35], %44 {strides = array<i32>} : memref<18x20x128xbf16, #tpu.memory_space<vmem>>, vector<16x16x128xbf16>,
    %c0_36 = arith.constant 0 : index
    %c0_37 = arith.constant 0 : index
    %c0_38 = arith.constant 0 : index
    %46 = vector.load %arg9[%c0_36, %c0_37, %c0_38] : memref<18x20x128xbf16, #tpu.memory_space<vmem>>, vector<16x20x128xbf16>
    %47 = vector.shape_cast %46 : vector<16x20x128xbf16> to vector<320x128xbf16>
    %c0_39 = arith.constant 0 : index
    %c0_40 = arith.constant 0 : index
    %48 = vector.load %arg10[%c0_39, %c0_40] : memref<328x384xbf16, #tpu.memory_space<vmem>>, vector<320x128xbf16>
    tpu.vector_store %arg10[%c0_39, %c0_40], %47 {strides = array<i32>} : memref<328x384xbf16, #tpu.memory_space<vmem>>, vector<320x128xbf16>,
    %c1_41 = arith.constant 1 : index
    %c0_42 = arith.constant 0 : index
    %c0_43 = arith.constant 0 : index
    %49 = vector.load %arg9[%c1_41, %c0_42, %c0_43] : memref<18x20x128xbf16, #tpu.memory_space<vmem>>, vector<16x20x128xbf16>
    %50 = vector.shape_cast %49 : vector<16x20x128xbf16> to vector<320x128xbf16>
    %c0_44 = arith.constant 0 : index
    %c128_45 = arith.constant 128 : index
    %51 = vector.load %arg10[%c0_44, %c128_45] : memref<328x384xbf16, #tpu.memory_space<vmem>>, vector<320x128xbf16>
    tpu.vector_store %arg10[%c0_44, %c128_45], %50 {strides = array<i32>} : memref<328x384xbf16, #tpu.memory_space<vmem>>, vector<320x128xbf16>,
    %c2_46 = arith.constant 2 : index
    %c0_47 = arith.constant 0 : index
    %c0_48 = arith.constant 0 : index
    %52 = vector.load %arg9[%c2_46, %c0_47, %c0_48] : memref<18x20x128xbf16, #tpu.memory_space<vmem>>, vector<16x20x128xbf16>
    %53 = vector.shape_cast %52 : vector<16x20x128xbf16> to vector<320x128xbf16>
    %c0_49 = arith.constant 0 : index
    %c256_50 = arith.constant 256 : index
    %54 = vector.load %arg10[%c0_49, %c256_50] : memref<328x384xbf16, #tpu.memory_space<vmem>>, vector<320x128xbf16>
    tpu.vector_store %arg10[%c0_49, %c256_50], %53 {strides = array<i32>} : memref<328x384xbf16, #tpu.memory_space<vmem>>, vector<320x128xbf16>,
    %c0_51 = arith.constant 0 : index
    %c0_52 = arith.constant 0 : index
    %55 = vector.load %arg10[%c0_51, %c0_52] : memref<328x384xbf16, #tpu.memory_space<vmem>>, vector<320x384xbf16>
    %56 = arith.index_cast %arg1 : i32 to index
    %c0_53 = arith.constant 0 : index
    %c0_54 = arith.constant 0 : index
    %c0_55 = arith.constant 0 : index
    %57 = vector.load %arg5[%56, %c0_53, %c0_54, %c0_55] : memref<2x3x384x128xbf16, #tpu.memory_space<vmem>>, vector<1x1x384x128xbf16>
    %58 = vector.shape_cast %57 : vector<1x1x384x128xbf16> to vector<384x128xbf16>
    %cst_56 = arith.constant dense<0.000000e+00> : vector<320x128xf32>
    %59 = tpu.matmul %55, %58, %cst_56 {dimension_numbers = #tpu.dot_dimension_numbers<[1], [0], [0], [1], [0, 0, 1, 1], [], []>} : vector<320x384xbf16>, vector<384x128xbf16>, vector<320x128xf32> -> vector<320x128xf32>
    %c1_57 = arith.constant 1 : index
    %c0_58 = arith.constant 0 : index
    %60 = vector.load %arg10[%c1_57, %c0_58] : memref<328x384xbf16, #tpu.memory_space<vmem>>, vector<320x384xbf16>
    %61 = arith.index_cast %arg1 : i32 to index
    %c1_59 = arith.constant 1 : index
    %c0_60 = arith.constant 0 : index
    %c0_61 = arith.constant 0 : index
    %62 = vector.load %arg5[%61, %c1_59, %c0_60, %c0_61] : memref<2x3x384x128xbf16, #tpu.memory_space<vmem>>, vector<1x1x384x128xbf16>
    %63 = vector.shape_cast %62 : vector<1x1x384x128xbf16> to vector<384x128xbf16>
    %cst_62 = arith.constant dense<0.000000e+00> : vector<320x128xf32>
    %64 = tpu.matmul %60, %63, %cst_62 {dimension_numbers = #tpu.dot_dimension_numbers<[1], [0], [0], [1], [0, 0, 1, 1], [], []>} : vector<320x384xbf16>, vector<384x128xbf16>, vector<320x128xf32> -> vector<320x128xf32>
    %65 = arith.addf %59, %64 : vector<320x128xf32>
    %c2_63 = arith.constant 2 : index
    %c0_64 = arith.constant 0 : index
    %66 = vector.load %arg10[%c2_63, %c0_64] : memref<328x384xbf16, #tpu.memory_space<vmem>>, vector<320x384xbf16>
    %67 = arith.index_cast %arg1 : i32 to index
    %c2_65 = arith.constant 2 : index
    %c0_66 = arith.constant 0 : index
    %c0_67 = arith.constant 0 : index
    %68 = vector.load %arg5[%67, %c2_65, %c0_66, %c0_67] : memref<2x3x384x128xbf16, #tpu.memory_space<vmem>>, vector<1x1x384x128xbf16>
    %69 = vector.shape_cast %68 : vector<1x1x384x128xbf16> to vector<384x128xbf16>
    %cst_68 = arith.constant dense<0.000000e+00> : vector<320x128xf32>
    %70 = tpu.matmul %66, %69, %cst_68 {dimension_numbers = #tpu.dot_dimension_numbers<[1], [0], [0], [1], [0, 0, 1, 1], [], []>} : vector<320x384xbf16>, vector<384x128xbf16>, vector<320x128xf32> -> vector<320x128xf32>
    %71 = arith.addf %65, %70 : vector<320x128xf32>
    %72 = vector.broadcast %8 : vector<1x128xf32> to vector<320x128xf32>
    %73 = arith.addf %71, %72 : vector<320x128xf32>
    %74 = vector.shape_cast %73 : vector<320x128xf32> to vector<16x20x128xf32>
    %75 = vector.extract_strided_slice %74 {offsets = [0, 1, 0], sizes = [16, 16, 128], strides = [1, 1, 1]} : vector<16x20x128xf32> to vector<16x16x128xf32>
    %c1_69 = arith.constant 1 : index
    %c2_70 = arith.constant 2 : index
    %c0_71 = arith.constant 0 : index
    %76 = vector.load %arg8[%c1_69, %c2_70, %c0_71] : memref<18x20x128xf32, #tpu.memory_space<vmem>>, vector<16x16x128xf32>
    %77 = arith.addf %76, %75 : vector<16x16x128xf32>
    %c1_72 = arith.constant 1 : index
    %c2_73 = arith.constant 2 : index
    %c0_74 = arith.constant 0 : index
    %78 = vector.load %arg8[%c1_72, %c2_73, %c0_74] : memref<18x20x128xf32, #tpu.memory_space<vmem>>, vector<16x16x128xf32>
    tpu.vector_store %arg8[%c1_72, %c2_73, %c0_74], %77 {strides = array<i32>} : memref<18x20x128xf32, #tpu.memory_space<vmem>>, vector<16x16x128xf32>,
    %c1_i32 = arith.constant 1 : i32
    %79 = arith.cmpi eq, %arg1, %c1_i32 : i32
    %80 = arith.extui %79 : i1 to i32
    %c0_i32_75 = arith.constant 0 : i32
    %81 = arith.cmpi ne, %80, %c0_i32_75 : i32
    scf.if %81 {
      %c1_76 = arith.constant 1 : index
      %c2_77 = arith.constant 2 : index
      %c0_78 = arith.constant 0 : index
      %82 = vector.load %arg8[%c1_76, %c2_77, %c0_78] : memref<18x20x128xf32, #tpu.memory_space<vmem>>, vector<16x16x128xf32>
      %c0_79 = arith.constant 0 : index
      %c0_80 = arith.constant 0 : index
      %c0_81 = arith.constant 0 : index
      %c0_82 = arith.constant 0 : index
      %83 = vector.load %arg7[%c0_79, %c0_80, %c0_81, %c0_82] : memref<1x16x16x128xf32, #tpu.memory_space<vmem>>, vector<1x16x16x128xf32>
      %84 = vector.shape_cast %83 : vector<1x16x16x128xf32> to vector<16x16x128xf32>
      %85 = vector.shape_cast %82 : vector<16x16x128xf32> to vector<1x16x16x128xf32>
      tpu.vector_store %arg7[%c0_79, %c0_80, %c0_81, %c0_82], %85 {strides = array<i32>} : memref<1x16x16x128xf32, #tpu.memory_space<vmem>>, vector<1x16x16x128xf32>,
    } else {
    }
    return
  }
  func.func @transform_0(%arg0: i32, %arg1: i32) -> (i32, i32, i32, i32) {
    %c0_i32 = arith.constant 0 : i32
    %c0_i32_0 = arith.constant 0 : i32
    %c0_i32_1 = arith.constant 0 : i32
    %c0_i32_2 = arith.constant 0 : i32
    return %arg0, %c0_i32, %c0_i32_0, %c0_i32_1 : i32, i32, i32, i32
  }
  func.func @transform_1(%arg0: i32, %arg1: i32) -> (i32, i32, i32, i32) {
    %c0_i32 = arith.constant 0 : i32
    %c0_i32_0 = arith.constant 0 : i32
    %c0_i32_1 = arith.constant 0 : i32
    %c0_i32_2 = arith.constant 0 : i32
    %c0_i32_3 = arith.constant 0 : i32
    return %c0_i32, %c0_i32_0, %c0_i32_1, %c0_i32_2 : i32, i32, i32, i32
  }
  func.func @transform_2(%arg0: i32, %arg1: i32) -> (i32, i32, i32) {
    %c0_i32 = arith.constant 0 : i32
    %c0_i32_0 = arith.constant 0 : i32
    %c0_i32_1 = arith.constant 0 : i32
    %c0_i32_2 = arith.constant 0 : i32
    return %c0_i32, %c0_i32_0, %c0_i32_1 : i32, i32, i32
  }
  func.func @transform_3(%arg0: i32, %arg1: i32) -> (i32, i32, i32, i32) {
    %c0_i32 = arith.constant 0 : i32
    %c0_i32_0 = arith.constant 0 : i32
    %c0_i32_1 = arith.constant 0 : i32
    %c0_i32_2 = arith.constant 0 : i32
    %c0_i32_3 = arith.constant 0 : i32
    return %c0_i32, %c0_i32_0, %c0_i32_1, %c0_i32_2 : i32, i32, i32, i32
  }
  func.func @transform_4(%arg0: i32, %arg1: i32) -> (i32, i32, i32) {
    %c0_i32 = arith.constant 0 : i32
    %c0_i32_0 = arith.constant 0 : i32
    %c0_i32_1 = arith.constant 0 : i32
    %c0_i32_2 = arith.constant 0 : i32
    return %c0_i32, %c0_i32_0, %c0_i32_1 : i32, i32, i32
  }
  func.func @transform_5(%arg0: i32, %arg1: i32) -> (i32, i32, i32, i32) {
    %c0_i32 = arith.constant 0 : i32
    %c0_i32_0 = arith.constant 0 : i32
    %c0_i32_1 = arith.constant 0 : i32
    %c0_i32_2 = arith.constant 0 : i32
    return %arg0, %c0_i32, %c0_i32_0, %c0_i32_1 : i32, i32, i32, i32
  }
}

</mosaic_0001>

<llo_original>
// kernel: resblocks_forward.1
$region0: #{resblocks_forward.1}
  #allocation0 [shape = 'u32[]', space=smem, size = 0x4, offset = 0x4, fixed_abs, tag = 'smem constant byte address 0x4 - core index']
  #allocation1 [shape = 'u32[72,128]{1,0:T(1,128)}', space=vmem, size = 0x9000, scoped, tag = 'internal scratch']
  #allocation2 [shape = 'f32[18,20,128]{2,1,0:T(8,128)}', space=vmem, size = 0x36000, scoped, tag = 'scratch operand']
  #allocation3 [shape = 'bf16[18,20,128]{2,1,0:T(8,128)(2,1)}', space=vmem, size = 0x1b000, scoped, tag = 'scratch operand']
  #allocation4 [shape = 'bf16[328,384]{1,0:T(8,128)(2,1)}', space=vmem, size = 0x3d800, scoped, tag = 'scratch operand']
  %s0 = inlined_call_operand.vmem [shape: f32[2,16,16,128], index: 0, kind: input, shape index: {}]
  %s1 = inlined_call_operand.vmem [shape: bf16[2,3,384,128], index: 1, kind: input, shape index: {}]
  %s2 = inlined_call_operand.vmem [shape: f32[2,1,128], index: 2, kind: input, shape index: {}]
  %s3 = inlined_call_operand.vmem [shape: bf16[2,3,384,128], index: 3, kind: input, shape index: {}]
  %s4 = inlined_call_operand.vmem [shape: f32[2,1,128], index: 4, kind: input, shape index: {}]
  %s5 = inlined_call_operand.vmem [shape: f32[2,16,16,128], index: 5, kind: output, shape index: {}]
  %s6 = sld [smem:[#allocation0]]
  $region61: #{resblocks_forward.1} parent=0
    _
  %s8 = ssub.s32 1, %s6
  %s9 = scalar_select 0, %s8, %s6
  loop: start=0, step=1, limit=6
  $region2: #{resblocks_forward.1} parent=0 // loop_pre_header
    _
  $region3: #{resblocks_forward.1} parent=0 // loop_header
    %s11 = sphi 0, %s15
    %p12 = scmp.ge.s32.totalorder %s11, 6
    %s18 = sphi 0, %s30
    %s19 = sphi 0, %s26
    %s20 = sphi 0, %s18
    %s21 = sphi 0, %s19
    %s22 = sphi 0, %s20
    %s23 = sphi 0, %s21
    %s33 = sphi 0, %s35
    %s36 = sphi 0, %s33
    %s37 = sphi 0, %s36
    %s53 = sphi 0, %s37
    %s57 = sphi 0, %s57
    %s59 = sphi 0, %s57
    %s60 = sphi 0, %s59
    %s74 = sphi 0, %s60
    %s78 = sphi 0, %s78
    %s80 = sphi 0, %s78
    %s81 = sphi 0, %s80
    %s95 = sphi 0, %s81
    %s99 = sphi 0, %s99
    %s101 = sphi 0, %s99
    %s102 = sphi 0, %s101
    %s116 = sphi 0, %s102
    %s120 = sphi 0, %s120
    %s122 = sphi 0, %s120
    %s123 = sphi 0, %s122
    %s137 = sphi 0, %s123
    %s143 = sphi 0, %s145
    %s146 = sphi 0, %s143
    %s147 = sphi 0, %s146
    %s163 = sphi 0, %s147
  $region4: #{resblocks_forward.1} parent=0 // loop_header_branch
    %14 = sbr.rel (%p12) target = $region8
  $region5: #{resblocks_forward.1} parent=0 // loop_body
    %s16 = ssub.s32 %s11, 1
    %s17 = ssub.s32 %s11, 2
    %s24 = sadd.s32 1, %s19
    %p25 = scmp.ge.s32.totalorder %s24, 2
    %s26 = scalar_select %p25, 0, %s24
    %s27 = sadd.s32 1, %s18
    %s28 = scalar_select %p25, %s27, %s18
    %p29 = scmp.ge.s32.totalorder %s28, 2
    %s30 = scalar_select %p29, 0, %s28
    %s31 = ssub.s32 %s18, %s30
    %p32 = scmp.eq.s32.totalorder %s31, 0
    %s34 = sadd.s32 %s33, 1
    %s35 = scalar_select %p32, %s33, %s34
    %p38 = pneg %p32
    %p39 = scmp.eq.s32.totalorder %s11, 3
    %p40 = por %p38, %p39
    %p41 = scmp.ne.s32.totalorder %s33, %s36
    %p42 = scmp.eq.s32.totalorder %s11, 0
    %p43 = por %p41, %p42
    %p44 = scmp.ne.s32.totalorder %s33, %s36
    %p45 = scmp.eq.s32.totalorder %s16, 3
    %p46 = por %p44, %p45
    %p47 = scmp.ne.s32.totalorder %s36, %s37
    %p48 = scmp.eq.s32.totalorder %s16, 0
    %p49 = por %p47, %p48
    %p50 = scmp.ne.s32.totalorder %s36, %s37
    %p51 = scmp.eq.s32.totalorder %s17, 3
    %p52 = por %p50, %p51
    %p54 = scmp.ne.s32.totalorder %s37, %s53
    %p55 = scmp.eq.s32.totalorder %s17, 0
    %p56 = por %p54, %p55
    %s58 = sadd.s32 %s57, 1
    %p61 = scmp.eq.s32.totalorder %s11, 3
    %p62 = scmp.ne.s32.totalorder %s57, %s59
    %p63 = scmp.eq.s32.totalorder %s11, 0
    %p64 = por %p62, %p63
    %p65 = scmp.ne.s32.totalorder %s57, %s59
    %p66 = scmp.eq.s32.totalorder %s16, 3
    %p67 = por %p65, %p66
    %p68 = scmp.ne.s32.totalorder %s59, %s60
    %p69 = scmp.eq.s32.totalorder %s16, 0
    %p70 = por %p68, %p69
    %p71 = scmp.ne.s32.totalorder %s59, %s60
    %p72 = scmp.eq.s32.totalorder %s17, 3
    %p73 = por %p71, %p72
    %p75 = scmp.ne.s32.totalorder %s60, %s74
    %p76 = scmp.eq.s32.totalorder %s17, 0
    %p77 = por %p75, %p76
    %s79 = sadd.s32 %s78, 1
    %p82 = scmp.eq.s32.totalorder %s11, 3
    %p83 = scmp.ne.s32.totalorder %s78, %s80
    %p84 = scmp.eq.s32.totalorder %s11, 0
    %p85 = por %p83, %p84
    %p86 = scmp.ne.s32.totalorder %s78, %s80
    %p87 = scmp.eq.s32.totalorder %s16, 3
    %p88 = por %p86, %p87
    %p89 = scmp.ne.s32.totalorder %s80, %s81
    %p90 = scmp.eq.s32.totalorder %s16, 0
    %p91 = por %p89, %p90
    %p92 = scmp.ne.s32.totalorder %s80, %s81
    %p93 = scmp.eq.s32.totalorder %s17, 3
    %p94 = por %p92, %p93
    %p96 = scmp.ne.s32.totalorder %s81, %s95
    %p97 = scmp.eq.s32.totalorder %s17, 0
    %p98 = por %p96, %p97
    %s100 = sadd.s32 %s99, 1
    %p103 = scmp.eq.s32.totalorder %s11, 3
    %p104 = scmp.ne.s32.totalorder %s99, %s101
    %p105 = scmp.eq.s32.totalorder %s11, 0
    %p106 = por %p104, %p105
    %p107 = scmp.ne.s32.totalorder %s99, %s101
    %p108 = scmp.eq.s32.totalorder %s16, 3
    %p109 = por %p107, %p108
    %p110 = scmp.ne.s32.totalorder %s101, %s102
    %p111 = scmp.eq.s32.totalorder %s16, 0
    %p112 = por %p110, %p111
    %p113 = scmp.ne.s32.totalorder %s101, %s102
    %p114 = scmp.eq.s32.totalorder %s17, 3
    %p115 = por %p113, %p114
    %p117 = scmp.ne.s32.totalorder %s102, %s116
    %p118 = scmp.eq.s32.totalorder %s17, 0
    %p119 = por %p117, %p118
    %s121 = sadd.s32 %s120, 1
    %p124 = scmp.eq.s32.totalorder %s11, 3
    %p125 = scmp.ne.s32.totalorder %s120, %s122
    %p126 = scmp.eq.s32.totalorder %s11, 0
    %p127 = por %p125, %p126
    %p128 = scmp.ne.s32.totalorder %s120, %s122
    %p129 = scmp.eq.s32.totalorder %s16, 3
    %p130 = por %p128, %p129
    %p131 = scmp.ne.s32.totalorder %s122, %s123
    %p132 = scmp.eq.s32.totalorder %s16, 0
    %p133 = por %p131, %p132
    %p134 = scmp.ne.s32.totalorder %s122, %s123
    %p135 = scmp.eq.s32.totalorder %s17, 3
    %p136 = por %p134, %p135
    %p138 = scmp.ne.s32.totalorder %s123, %s137
    %p139 = scmp.eq.s32.totalorder %s17, 0
    %p140 = por %p138, %p139
    %s141 = ssub.s32 %s18, %s30
    %p142 = scmp.eq.s32.totalorder %s141, 0
    %s144 = sadd.s32 %s143, 1
    %s145 = scalar_select %p142, %s143, %s144
    %p148 = pneg %p142
    %p149 = scmp.eq.s32.totalorder %s11, 3
    %p150 = por %p148, %p149
    %p151 = scmp.ne.s32.totalorder %s143, %s146
    %p152 = scmp.eq.s32.totalorder %s11, 0
    %p153 = por %p151, %p152
    %p154 = scmp.ne.s32.totalorder %s143, %s146
    %p155 = scmp.eq.s32.totalorder %s16, 3
    %p156 = por %p154, %p155
    %p157 = scmp.ne.s32.totalorder %s146, %s147
    %p158 = scmp.eq.s32.totalorder %s16, 0
    %p159 = por %p157, %p158
    %p160 = scmp.ne.s32.totalorder %s146, %s147
    %p161 = scmp.eq.s32.totalorder %s17, 3
    %p162 = por %p160, %p161
    %p164 = scmp.ne.s32.totalorder %s147, %s163
    %p165 = scmp.eq.s32.totalorder %s17, 0
    %p166 = por %p164, %p165
    %p167 = scmp.le.s32.totalorder 1, %s11
    %p168 = scmp.lt.s32.totalorder %s11, 5
    %p169 = pnand %p167, %p168
    %p170 = pneg %p169
    // Predicated region
    $region9: #{resblocks_forward.1} parent=5 // pred_check
      _
    $region10: #{resblocks_forward.1} parent=5 // pred_check_branch
      %172 = sbr.rel (%p169) target = $region12
    $region11: #{resblocks_forward.1} parent=5 // pred_region
      %s173 = ssub.s32 %s11, 1
      // Predicated region
      $region13: #{resblocks_forward.1} parent=11 // pred_check
        %p174 = pneg %p70
      $region14: #{resblocks_forward.1} parent=11 // pred_check_branch
        %176 = sbr.rel (%p174) target = $region16
      $region15: #{resblocks_forward.1} parent=11 // pred_region
        _
      $region16: #{resblocks_forward.1} parent=11 // pred_fallthru
        _
      // Predicated region
      $region17: #{resblocks_forward.1} parent=11 // pred_check
        %p177 = pneg %p91
      $region18: #{resblocks_forward.1} parent=11 // pred_check_branch
        %179 = sbr.rel (%p177) target = $region20
      $region19: #{resblocks_forward.1} parent=11 // pred_region
        _
      $region20: #{resblocks_forward.1} parent=11 // pred_fallthru
        _
      // Predicated region
      $region21: #{resblocks_forward.1} parent=11 // pred_check
        %p180 = pneg %p112
      $region22: #{resblocks_forward.1} parent=11 // pred_check_branch
        %182 = sbr.rel (%p180) target = $region24
      $region23: #{resblocks_forward.1} parent=11 // pred_region
        _
      $region24: #{resblocks_forward.1} parent=11 // pred_fallthru
        _
      // Predicated region
      $region25: #{resblocks_forward.1} parent=11 // pred_check
        %p183 = pneg %p133
      $region26: #{resblocks_forward.1} parent=11 // pred_check_branch
        %185 = sbr.rel (%p183) target = $region28
      $region27: #{resblocks_forward.1} parent=11 // pred_region
        _
      $region28: #{resblocks_forward.1} parent=11 // pred_fallthru
        _
    $region12: #{resblocks_forward.1} parent=5 // pred_fallthru
      _
    %p186 = scmp.lt.s32.totalorder %s11, 4
    // Predicated region
    $region29: #{resblocks_forward.1} parent=5 // pred_check
      %p187 = pneg %p186
    $region30: #{resblocks_forward.1} parent=5 // pred_check_branch
      %189 = sbr.rel (%p187) target = $region32
    $region31: #{resblocks_forward.1} parent=5 // pred_region
      // Predicated region
      $region33: #{resblocks_forward.1} parent=31 // pred_check
        %p190 = pneg %p43
      $region34: #{resblocks_forward.1} parent=31 // pred_check_branch
        %192 = sbr.rel (%p190) target = $region36
      $region35: #{resblocks_forward.1} parent=31 // pred_region
        %p193 = scmp.lt.s32.totalorder %s18, 1
        %s194 = scalar_select %p193, %s18, 1
        %s195 = smul.addr %s194, 32
        %s196 = smul.addr %s195, 8
        %s197 = scalar_lea.vmem %s0, %s196
      $region36: #{resblocks_forward.1} parent=31 // pred_fallthru
        _
    $region32: #{resblocks_forward.1} parent=5 // pred_fallthru
      _
    %p198 = scmp.le.s32.totalorder 1, %s11
    %p199 = scmp.lt.s32.totalorder %s11, 5
    %p200 = pnand %p198, %p199
    %p201 = pneg %p200
    // Predicated region
    $region37: #{resblocks_forward.1} parent=5 // pred_check
      _
    $region38: #{resblocks_forward.1} parent=5 // pred_check_branch
      %203 = sbr.rel (%p200) target = $region40
    $region39: #{resblocks_forward.1} parent=5 // pred_region
      %s204 = ssub.s32 %s11, 1
      %p205 = scmp.lt.s32.totalorder %s20, 1
      %s206 = scalar_select %p205, %s20, 1
      %s207 = smul.addr %s206, 32
      %s208 = smul.addr %s207, 8
      %s209 = scalar_lea.vmem %s0, %s208
      %p210 = pneg %p49
      %p211 = pneg %p46
      %p212 = pneg %p70
      %p213 = pneg %p67
      %p214 = pneg %p91
      %p215 = pneg %p88
      %p216 = pneg %p112
      %p217 = pneg %p109
      %p218 = pneg %p133
      %p219 = pneg %p130
      %p220 = pneg %p159
      %p221 = pneg %p156
      %p222 = scmp.lt.s32.totalorder %s20, 1
      %s223 = scalar_select %p222, %s20, 1
      %s224 = smul.addr %s223, 32
      %s225 = smul.addr %s224, 8
      %s226 = scalar_lea.vmem %s5, %s225
      %p227 = scmp.lt.s32.totalorder %s20, 1
      %s228 = scalar_select %p227, %s20, 1
      %s229 = smul.addr %s228, 32
      %s230 = smul.addr %s229, 8
      %s231 = scalar_lea.vmem %s0, %s230
      %p232 = scmp.lt.s32.totalorder %s20, 1
      %s233 = scalar_select %p232, %s20, 1
      %s234 = smul.addr %s233, 32
      %s235 = smul.addr %s234, 8
      %s236 = scalar_lea.vmem %s5, %s235
      %p238 = scmp.eq.s32.totalorder %s21, 0
      // Predicated region
      $region41: #{resblocks_forward.1} parent=39 // pred_check
        %p239 = pneg %p238
      $region42: #{resblocks_forward.1} parent=39 // pred_check_branch
        %241 = sbr.rel (%p239) target = $region44
      $region43: #{resblocks_forward.1} parent=39 // pred_region
        %242 = vst [vmem:[#allocation2] sm:$0xff] 0.0
        %243 = vst [vmem:[#allocation2 + $0x8] sm:$0xff] 0.0
        %244 = vst [vmem:[#allocation2 + $0x10] sm:$0xf] 0.0
        %s245 = scalar_lea.vmem [#allocation2], 408
        %246 = vst [vmem:[%s245] sm:$0xff] 0.0
        %247 = vst [vmem:[%s245 + $0x8] sm:$0xff] 0.0
        %248 = vst [vmem:[%s245 + $0x10] sm:$0xf] 0.0
        %s249 = scalar_lea.vmem [#allocation2], 24
        %250 = vst [vmem:[%s249] sm:$0x3] 0.0
        %251 = vst [vmem:[%s249 + $0x18] sm:$0x3] 0.0
        %252 = vst [vmem:[%s249 + $0x30] sm:$0x3] 0.0
        %253 = vst [vmem:[%s249 + $0x48] sm:$0x3] 0.0
        %254 = vst [vmem:[%s249 + $0x60] sm:$0x3] 0.0
        %255 = vst [vmem:[%s249 + $0x78] sm:$0x3] 0.0
        %256 = vst [vmem:[%s249 + $0x90] sm:$0x3] 0.0
        %257 = vst [vmem:[%s249 + $0xa8] sm:$0x3] 0.0
        %258 = vst [vmem:[%s249 + $0xc0] sm:$0x3] 0.0
        %259 = vst [vmem:[%s249 + $0xd8] sm:$0x3] 0.0
        %260 = vst [vmem:[%s249 + $0xf0] sm:$0x3] 0.0
        %261 = vst [vmem:[%s249 + $0x108] sm:$0x3] 0.0
        %262 = vst [vmem:[%s249 + $0x120] sm:$0x3] 0.0
        %263 = vst [vmem:[%s249 + $0x138] sm:$0x3] 0.0
        %264 = vst [vmem:[%s249 + $0x150] sm:$0x3] 0.0
        %265 = vst [vmem:[%s249 + $0x168] sm:$0x3] 0.0
        %266 = vst [vmem:[%s249 + $0x12] sm:$0x3] 0.0
        %267 = vst [vmem:[%s249 + $0x2a] sm:$0x3] 0.0
        %268 = vst [vmem:[%s249 + $0x42] sm:$0x3] 0.0
        %269 = vst [vmem:[%s249 + $0x5a] sm:$0x3] 0.0
        %270 = vst [vmem:[%s249 + $0x72] sm:$0x3] 0.0
        %271 = vst [vmem:[%s249 + $0x8a] sm:$0x3] 0.0
        %272 = vst [vmem:[%s249 + $0xa2] sm:$0x3] 0.0
        %273 = vst [vmem:[%s249 + $0xba] sm:$0x3] 0.0
        %274 = vst [vmem:[%s249 + $0xd2] sm:$0x3] 0.0
        %275 = vst [vmem:[%s249 + $0xea] sm:$0x3] 0.0
        %276 = vst [vmem:[%s249 + $0x102] sm:$0x3] 0.0
        %277 = vst [vmem:[%s249 + $0x11a] sm:$0x3] 0.0
        %278 = vst [vmem:[%s249 + $0x132] sm:$0x3] 0.0
        %279 = vst [vmem:[%s249 + $0x14a] sm:$0x3] 0.0
        %280 = vst [vmem:[%s249 + $0x162] sm:$0x3] 0.0
        %281 = vst [vmem:[%s249 + $0x17a] sm:$0x3] 0.0
        %282 = vst [vmem:[#allocation3] sm:$0xf] 0
        %283 = vst [vmem:[#allocation3 + $0x4] sm:$0xf] 0
        %284 = vst [vmem:[#allocation3 + $0x8] sm:$0x3] 0
        %s285 = scalar_lea.vmem [#allocation3], 204
        %286 = vst [vmem:[%s285] sm:$0xf] 0
        %287 = vst [vmem:[%s285 + $0x4] sm:$0xf] 0
        %288 = vst [vmem:[%s285 + $0x8] sm:$0x3] 0
        %s289 = scalar_lea.vmem [#allocation3], 12
        %290 = vst [vmem:[%s289] sm:$0x1] 0
        %291 = vst [vmem:[%s289 + $0xc] sm:$0x1] 0
        %292 = vst [vmem:[%s289 + $0x18] sm:$0x1] 0
        %293 = vst [vmem:[%s289 + $0x24] sm:$0x1] 0
        %294 = vst [vmem:[%s289 + $0x30] sm:$0x1] 0
        %295 = vst [vmem:[%s289 + $0x3c] sm:$0x1] 0
        %296 = vst [vmem:[%s289 + $0x48] sm:$0x1] 0
        %297 = vst [vmem:[%s289 + $0x54] sm:$0x1] 0
        %298 = vst [vmem:[%s289 + $0x60] sm:$0x1] 0
        %299 = vst [vmem:[%s289 + $0x6c] sm:$0x1] 0
        %300 = vst [vmem:[%s289 + $0x78] sm:$0x1] 0
        %301 = vst [vmem:[%s289 + $0x84] sm:$0x1] 0
        %302 = vst [vmem:[%s289 + $0x90] sm:$0x1] 0
        %303 = vst [vmem:[%s289 + $0x9c] sm:$0x1] 0
        %304 = vst [vmem:[%s289 + $0xa8] sm:$0x1] 0
        %305 = vst [vmem:[%s289 + $0xb4] sm:$0x1] 0
        %306 = vst [vmem:[%s289 + $0x8] sm:$0x2] 0
        %307 = vst [vmem:[%s289 + $0x14] sm:$0x2] 0
        %308 = vst [vmem:[%s289 + $0x20] sm:$0x2] 0
        %309 = vst [vmem:[%s289 + $0x2c] sm:$0x2] 0
        %310 = vst [vmem:[%s289 + $0x38] sm:$0x2] 0
        %311 = vst [vmem:[%s289 + $0x44] sm:$0x2] 0
        %312 = vst [vmem:[%s289 + $0x50] sm:$0x2] 0
        %313 = vst [vmem:[%s289 + $0x5c] sm:$0x2] 0
        %314 = vst [vmem:[%s289 + $0x68] sm:$0x2] 0
        %315 = vst [vmem:[%s289 + $0x74] sm:$0x2] 0
        %316 = vst [vmem:[%s289 + $0x80] sm:$0x2] 0
        %317 = vst [vmem:[%s289 + $0x8c] sm:$0x2] 0
        %318 = vst [vmem:[%s289 + $0x98] sm:$0x2] 0
        %319 = vst [vmem:[%s289 + $0xa4] sm:$0x2] 0
        %320 = vst [vmem:[%s289 + $0xb0] sm:$0x2] 0
        %321 = vst [vmem:[%s289 + $0xbc] sm:$0x2] 0
        %v322 = vld [vmem:[%s231] sm:$0xff]
        %v323 = vld [vmem:[%s231 + $0x8] sm:$0xff]
        %v324 = vld [vmem:[%s231 + $0x10] sm:$0xff]
        %v325 = vld [vmem:[%s231 + $0x18] sm:$0xff]
        %v326 = vld [vmem:[%s231 + $0x20] sm:$0xff]
        %v327 = vld [vmem:[%s231 + $0x28] sm:$0xff]
        %v328 = vld [vmem:[%s231 + $0x30] sm:$0xff]
        %v329 = vld [vmem:[%s231 + $0x38] sm:$0xff]
        %v330 = vld [vmem:[%s231 + $0x40] sm:$0xff]
        %v331 = vld [vmem:[%s231 + $0x48] sm:$0xff]
        %v332 = vld [vmem:[%s231 + $0x50] sm:$0xff]
        %v333 = vld [vmem:[%s231 + $0x58] sm:$0xff]
        %v334 = vld [vmem:[%s231 + $0x60] sm:$0xff]
        %v335 = vld [vmem:[%s231 + $0x68] sm:$0xff]
        %v336 = vld [vmem:[%s231 + $0x70] sm:$0xff]
        %v337 = vld [vmem:[%s231 + $0x78] sm:$0xff]
        %v338 = vld [vmem:[%s231 + $0x80] sm:$0xff]
        %v339 = vld [vmem:[%s231 + $0x88] sm:$0xff]
        %v340 = vld [vmem:[%s231 + $0x90] sm:$0xff]
        %v341 = vld [vmem:[%s231 + $0x98] sm:$0xff]
        %v342 = vld [vmem:[%s231 + $0xa0] sm:$0xff]
        %v343 = vld [vmem:[%s231 + $0xa8] sm:$0xff]
        %v344 = vld [vmem:[%s231 + $0xb0] sm:$0xff]
        %v345 = vld [vmem:[%s231 + $0xb8] sm:$0xff]
        %v346 = vld [vmem:[%s231 + $0xc0] sm:$0xff]
        %v347 = vld [vmem:[%s231 + $0xc8] sm:$0xff]
        %v348 = vld [vmem:[%s231 + $0xd0] sm:$0xff]
        %v349 = vld [vmem:[%s231 + $0xd8] sm:$0xff]
        %v350 = vld [vmem:[%s231 + $0xe0] sm:$0xff]
        %v351 = vld [vmem:[%s231 + $0xe8] sm:$0xff]
        %v352 = vld [vmem:[%s231 + $0xf0] sm:$0xff]
        %v353 = vld [vmem:[%s231 + $0xf8] sm:$0xff]
        %354 = vst [vmem:[%s249 + $0x2] sm:$0xff] %v322
        %355 = vst [vmem:[%s249 + $0xa] sm:$0xff] %v323
        %356 = vst [vmem:[%s249 + $0x1a] sm:$0xff] %v324
        %357 = vst [vmem:[%s249 + $0x22] sm:$0xff] %v325
        %358 = vst [vmem:[%s249 + $0x32] sm:$0xff] %v326
        %359 = vst [vmem:[%s249 + $0x3a] sm:$0xff] %v327
        %360 = vst [vmem:[%s249 + $0x4a] sm:$0xff] %v328
        %361 = vst [vmem:[%s249 + $0x52] sm:$0xff] %v329
        %362 = vst [vmem:[%s249 + $0x62] sm:$0xff] %v330
        %363 = vst [vmem:[%s249 + $0x6a] sm:$0xff] %v331
        %364 = vst [vmem:[%s249 + $0x7a] sm:$0xff] %v332
        %365 = vst [vmem:[%s249 + $0x82] sm:$0xff] %v333
        %366 = vst [vmem:[%s249 + $0x92] sm:$0xff] %v334
        %367 = vst [vmem:[%s249 + $0x9a] sm:$0xff] %v335
        %368 = vst [vmem:[%s249 + $0xaa] sm:$0xff] %v336
        %369 = vst [vmem:[%s249 + $0xb2] sm:$0xff] %v337
        %370 = vst [vmem:[%s249 + $0xc2] sm:$0xff] %v338
        %371 = vst [vmem:[%s249 + $0xca] sm:$0xff] %v339
        %372 = vst [vmem:[%s249 + $0xda] sm:$0xff] %v340
        %373 = vst [vmem:[%s249 + $0xe2] sm:$0xff] %v341
        %374 = vst [vmem:[%s249 + $0xf2] sm:$0xff] %v342
        %375 = vst [vmem:[%s249 + $0xfa] sm:$0xff] %v343
        %376 = vst [vmem:[%s249 + $0x10a] sm:$0xff] %v344
        %377 = vst [vmem:[%s249 + $0x112] sm:$0xff] %v345
        %378 = vst [vmem:[%s249 + $0x122] sm:$0xff] %v346
        %379 = vst [vmem:[%s249 + $0x12a] sm:$0xff] %v347
        %380 = vst [vmem:[%s249 + $0x13a] sm:$0xff] %v348
        %381 = vst [vmem:[%s249 + $0x142] sm:$0xff] %v349
        %382 = vst [vmem:[%s249 + $0x152] sm:$0xff] %v350
        %383 = vst [vmem:[%s249 + $0x15a] sm:$0xff] %v351
        %384 = vst [vmem:[%s249 + $0x16a] sm:$0xff] %v352
        %385 = vst [vmem:[%s249 + $0x172] sm:$0xff] %v353
      $region44: #{resblocks_forward.1} parent=39 // pred_fallthru
        _
      %s386 = scalar_lea.vmem %s2, %s21
      %v387 = vld [vmem:[%s386] sm:$0x1]
      %s388 = scalar_lea.vmem %s4, %s21
      %v389 = vld [vmem:[%s388] sm:$0x1]
      %v390 = vld [vmem:[#allocation2] sm:$0xff]
      %v391 = vld [vmem:[#allocation2 + $0x8] sm:$0xff]
      %v392 = vld [vmem:[#allocation2 + $0x10] sm:$0xf]
      %v393 = vld [vmem:[#allocation2 + $0x18] sm:$0xff]
      %v394 = vld [vmem:[#allocation2 + $0x20] sm:$0xff]
      %v395 = vld [vmem:[#allocation2 + $0x28] sm:$0xf]
      %v396 = vld [vmem:[#allocation2 + $0x30] sm:$0xff]
      %v397 = vld [vmem:[#allocation2 + $0x38] sm:$0xff]
      %v398 = vld [vmem:[#allocation2 + $0x40] sm:$0xf]
      %v399 = vld [vmem:[#allocation2 + $0x48] sm:$0xff]
      %v400 = vld [vmem:[#allocation2 + $0x50] sm:$0xff]
      %v401 = vld [vmem:[#allocation2 + $0x58] sm:$0xf]
      %v402 = vld [vmem:[#allocation2 + $0x60] sm:$0xff]
      %v403 = vld [vmem:[#allocation2 + $0x68] sm:$0xff]
      %v404 = vld [vmem:[#allocation2 + $0x70] sm:$0xf]
      %v405 = vld [vmem:[#allocation2 + $0x78] sm:$0xff]
      %v406 = vld [vmem:[#allocation2 + $0x80] sm:$0xff]
      %v407 = vld [vmem:[#allocation2 + $0x88] sm:$0xf]
      %v408 = vld [vmem:[#allocation2 + $0x90] sm:$0xff]
      %v409 = vld [vmem:[#allocation2 + $0x98] sm:$0xff]
      %v410 = vld [vmem:[#allocation2 + $0xa0] sm:$0xf]
      %v411 = vld [vmem:[#allocation2 + $0xa8] sm:$0xff]
      %v412 = vld [vmem:[#allocation2 + $0xb0] sm:$0xff]
      %v413 = vld [vmem:[#allocation2 + $0xb8] sm:$0xf]
      %v414 = vld [vmem:[#allocation2 + $0xc0] sm:$0xff]
      %v415 = vld [vmem:[#allocation2 + $0xc8] sm:$0xff]
      %v416 = vld [vmem:[#allocation2 + $0xd0] sm:$0xf]
      %v417 = vld [vmem:[#allocation2 + $0xd8] sm:$0xff]
      %v418 = vld [vmem:[#allocation2 + $0xe0] sm:$0xff]
      %v419 = vld [vmem:[#allocation2 + $0xe8] sm:$0xf]
      %v420 = vld [vmem:[#allocation2 + $0xf0] sm:$0xff]
      %v421 = vld [vmem:[#allocation2 + $0xf8] sm:$0xff]
      %v422 = vld [vmem:[#allocation2 + $0x100] sm:$0xf]
      %v423 = vld [vmem:[#allocation2 + $0x108] sm:$0xff]
      %v424 = vld [vmem:[#allocation2 + $0x110] sm:$0xff]
      %v425 = vld [vmem:[#allocation2 + $0x118] sm:$0xf]
      %v426 = vld [vmem:[#allocation2 + $0x120] sm:$0xff]
      %v427 = vld [vmem:[#allocation2 + $0x128] sm:$0xff]
      %v428 = vld [vmem:[#allocation2 + $0x130] sm:$0xf]
      %v429 = vld [vmem:[#allocation2 + $0x138] sm:$0xff]
      %v430 = vld [vmem:[#allocation2 + $0x140] sm:$0xff]
      %v431 = vld [vmem:[#allocation2 + $0x148] sm:$0xf]
      %v432 = vld [vmem:[#allocation2 + $0x150] sm:$0xff]
      %v433 = vld [vmem:[#allocation2 + $0x158] sm:$0xff]
      %v434 = vld [vmem:[#allocation2 + $0x160] sm:$0xf]
      %v435 = vld [vmem:[#allocation2 + $0x168] sm:$0xff]
      %v436 = vld [vmem:[#allocation2 + $0x170] sm:$0xff]
      %v437 = vld [vmem:[#allocation2 + $0x178] sm:$0xf]
      %v438 = vpack.c.bf16 %v390, %v390
      %v439 = vpack.c.bf16 %v391, %v391
      %v440 = vpack.c.bf16 %v392, %v392
      %v441 = vpack.c.bf16 %v393, %v393
      %v442 = vpack.c.bf16 %v394, %v394
      %v443 = vpack.c.bf16 %v395, %v395
      %v444 = vpack.c.bf16 %v396, %v396
      %v445 = vpack.c.bf16 %v397, %v397
      %v446 = vpack.c.bf16 %v398, %v398
      %v447 = vpack.c.bf16 %v399, %v399
      %v448 = vpack.c.bf16 %v400, %v400
      %v449 = vpack.c.bf16 %v401, %v401
      %v450 = vpack.c.bf16 %v402, %v402
      %v451 = vpack.c.bf16 %v403, %v403
      %v452 = vpack.c.bf16 %v404, %v404
      %v453 = vpack.c.bf16 %v405, %v405
      %v454 = vpack.c.bf16 %v406, %v406
      %v455 = vpack.c.bf16 %v407, %v407
      %v456 = vpack.c.bf16 %v408, %v408
      %v457 = vpack.c.bf16 %v409, %v409
      %v458 = vpack.c.bf16 %v410, %v410
      %v459 = vpack.c.bf16 %v411, %v411
      %v460 = vpack.c.bf16 %v412, %v412
      %v461 = vpack.c.bf16 %v413, %v413
      %v462 = vpack.c.bf16 %v414, %v414
      %v463 = vpack.c.bf16 %v415, %v415
      %v464 = vpack.c.bf16 %v416, %v416
      %v465 = vpack.c.bf16 %v417, %v417
      %v466 = vpack.c.bf16 %v418, %v418
      %v467 = vpack.c.bf16 %v419, %v419
      %v468 = vpack.c.bf16 %v420, %v420
      %v469 = vpack.c.bf16 %v421, %v421
      %v470 = vpack.c.bf16 %v422, %v422
      %v471 = vpack.c.bf16 %v423, %v423
      %v472 = vpack.c.bf16 %v424, %v424
      %v473 = vpack.c.bf16 %v425, %v425
      %v474 = vpack.c.bf16 %v426, %v426
      %v475 = vpack.c.bf16 %v427, %v427
      %v476 = vpack.c.bf16 %v428, %v428
      %v477 = vpack.c.bf16 %v429, %v429
      %v478 = vpack.c.bf16 %v430, %v430
      %v479 = vpack.c.bf16 %v431, %v431
      %v480 = vpack.c.bf16 %v432, %v432
      %v481 = vpack.c.bf16 %v433, %v433
      %v482 = vpack.c.bf16 %v434, %v434
      %v483 = vpack.c.bf16 %v435, %v435
      %v484 = vpack.c.bf16 %v436, %v436
      %v485 = vpack.c.bf16 %v437, %v437
      %v534 = vrot.slane %v438, 2
      %v535 = vrot.slane %v439, 2
      %v536 = vrot.slane %v440, 2
      %v537 = vrot.slane %v441, 2
      %v538 = vrot.slane %v442, 2
      %v539 = vrot.slane %v443, 2
      %v540 = vrot.slane %v444, 2
      %v541 = vrot.slane %v445, 2
      %v542 = vrot.slane %v446, 2
      %v543 = vrot.slane %v447, 2
      %v544 = vrot.slane %v448, 2
      %v545 = vrot.slane %v449, 2
      %v546 = vrot.slane %v450, 2
      %v547 = vrot.slane %v451, 2
      %v548 = vrot.slane %v452, 2
      %v549 = vrot.slane %v453, 2
      %v550 = vrot.slane %v454, 2
      %v551 = vrot.slane %v455, 2
      %v552 = vrot.slane %v456, 2
      %v553 = vrot.slane %v457, 2
      %v554 = vrot.slane %v458, 2
      %v555 = vrot.slane %v459, 2
      %v556 = vrot.slane %v460, 2
      %v557 = vrot.slane %v461, 2
      %v558 = vrot.slane %v462, 2
      %v559 = vrot.slane %v463, 2
      %v560 = vrot.slane %v464, 2
      %v561 = vrot.slane %v465, 2
      %v562 = vrot.slane %v466, 2
      %v563 = vrot.slane %v467, 2
      %v564 = vrot.slane %v468, 2
      %v565 = vrot.slane %v469, 2
      %v566 = vrot.slane %v470, 2
      %v567 = vrot.slane %v471, 2
      %v568 = vrot.slane %v472, 2
      %v569 = vrot.slane %v473, 2
      %v570 = vrot.slane %v474, 2
      %v571 = vrot.slane %v475, 2
      %v572 = vrot.slane %v476, 2
      %v573 = vrot.slane %v477, 2
      %v574 = vrot.slane %v478, 2
      %v575 = vrot.slane %v479, 2
      %v576 = vrot.slane %v480, 2
      %v577 = vrot.slane %v481, 2
      %v578 = vrot.slane %v482, 2
      %v579 = vrot.slane %v483, 2
      %v580 = vrot.slane %v484, 2
      %v581 = vrot.slane %v485, 2
      %vm582 = vcmask 1041408
      %v585 = vsel %vm582, %v438, %v534
      %vm586 = vcmask 1043458
      %v587 = vsel %vm586, %v438, %v534
      %v589 = vrot.slane %v587, 2
      %v592 = vsel %vm582, %v439, %v535
      %v593 = vsel %vm586, %v439, %v535
      %v595 = vrot.slane %v593, 2
      %v598 = vsel %vm582, %v440, %v536
      %v601 = vsel %vm582, %v441, %v537
      %v602 = vsel %vm586, %v441, %v537
      %v604 = vrot.slane %v602, 2
      %v607 = vsel %vm582, %v442, %v538
      %v608 = vsel %vm586, %v442, %v538
      %v610 = vrot.slane %v608, 2
      %v613 = vsel %vm582, %v443, %v539
      %v616 = vsel %vm582, %v444, %v540
      %v617 = vsel %vm586, %v444, %v540
      %v619 = vrot.slane %v617, 2
      %v622 = vsel %vm582, %v445, %v541
      %v623 = vsel %vm586, %v445, %v541
      %v625 = vrot.slane %v623, 2
      %v628 = vsel %vm582, %v446, %v542
      %v631 = vsel %vm582, %v447, %v543
      %v632 = vsel %vm586, %v447, %v543
      %v634 = vrot.slane %v632, 2
      %v637 = vsel %vm582, %v448, %v544
      %v638 = vsel %vm586, %v448, %v544
      %v640 = vrot.slane %v638, 2
      %v643 = vsel %vm582, %v449, %v545
      %v646 = vsel %vm582, %v450, %v546
      %v647 = vsel %vm586, %v450, %v546
      %v649 = vrot.slane %v647, 2
      %v652 = vsel %vm582, %v451, %v547
      %v653 = vsel %vm586, %v451, %v547
      %v655 = vrot.slane %v653, 2
      %v658 = vsel %vm582, %v452, %v548
      %v661 = vsel %vm582, %v453, %v549
      %v662 = vsel %vm586, %v453, %v549
      %v664 = vrot.slane %v662, 2
      %v667 = vsel %vm582, %v454, %v550
      %v668 = vsel %vm586, %v454, %v550
      %v670 = vrot.slane %v668, 2
      %v673 = vsel %vm582, %v455, %v551
      %v676 = vsel %vm582, %v456, %v552
      %v677 = vsel %vm586, %v456, %v552
      %v679 = vrot.slane %v677, 2
      %v682 = vsel %vm582, %v457, %v553
      %v683 = vsel %vm586, %v457, %v553
      %v685 = vrot.slane %v683, 2
      %v688 = vsel %vm582, %v458, %v554
      %v691 = vsel %vm582, %v459, %v555
      %v692 = vsel %vm586, %v459, %v555
      %v694 = vrot.slane %v692, 2
      %v697 = vsel %vm582, %v460, %v556
      %v698 = vsel %vm586, %v460, %v556
      %v700 = vrot.slane %v698, 2
      %v703 = vsel %vm582, %v461, %v557
      %v706 = vsel %vm582, %v462, %v558
      %v707 = vsel %vm586, %v462, %v558
      %v709 = vrot.slane %v707, 2
      %v712 = vsel %vm582, %v463, %v559
      %v713 = vsel %vm586, %v463, %v559
      %v715 = vrot.slane %v713, 2
      %v718 = vsel %vm582, %v464, %v560
      %v721 = vsel %vm582, %v465, %v561
      %v722 = vsel %vm586, %v465, %v561
      %v724 = vrot.slane %v722, 2
      %v727 = vsel %vm582, %v466, %v562
      %v728 = vsel %vm586, %v466, %v562
      %v730 = vrot.slane %v728, 2
      %v733 = vsel %vm582, %v467, %v563
      %v736 = vsel %vm582, %v468, %v564
      %v737 = vsel %vm586, %v468, %v564
      %v739 = vrot.slane %v737, 2
      %v742 = vsel %vm582, %v469, %v565
      %v743 = vsel %vm586, %v469, %v565
      %v745 = vrot.slane %v743, 2
      %v748 = vsel %vm582, %v470, %v566
      %v751 = vsel %vm582, %v471, %v567
      %v752 = vsel %vm586, %v471, %v567
      %v754 = vrot.slane %v752, 2
      %v757 = vsel %vm582, %v472, %v568
      %v758 = vsel %vm586, %v472, %v568
      %v760 = vrot.slane %v758, 2
      %v763 = vsel %vm582, %v473, %v569
      %v766 = vsel %vm582, %v474, %v570
      %v767 = vsel %vm586, %v474, %v570
      %v769 = vrot.slane %v767, 2
      %v772 = vsel %vm582, %v475, %v571
      %v773 = vsel %vm586, %v475, %v571
      %v775 = vrot.slane %v773, 2
      %v778 = vsel %vm582, %v476, %v572
      %v781 = vsel %vm582, %v477, %v573
      %v782 = vsel %vm586, %v477, %v573
      %v784 = vrot.slane %v782, 2
      %v787 = vsel %vm582, %v478, %v574
      %v788 = vsel %vm586, %v478, %v574
      %v790 = vrot.slane %v788, 2
      %v793 = vsel %vm582, %v479, %v575
      %v796 = vsel %vm582, %v480, %v576
      %v797 = vsel %vm586, %v480, %v576
      %v799 = vrot.slane %v797, 2
      %v802 = vsel %vm582, %v481, %v577
      %v803 = vsel %vm586, %v481, %v577
      %v805 = vrot.slane %v803, 2
      %v808 = vsel %vm582, %v482, %v578
      %v811 = vsel %vm582, %v483, %v579
      %v812 = vsel %vm586, %v483, %v579
      %v814 = vrot.slane %v812, 2
      %v817 = vsel %vm582, %v484, %v580
      %v818 = vsel %vm586, %v484, %v580
      %v820 = vrot.slane %v818, 2
      %v823 = vsel %vm582, %v485, %v581
      %824 = vst [vmem:[#allocation1] ss:$2 sm:$0xff] %v585
      %s826 = scalar_lea.vmem [#allocation1], 1
      %827 = vst [vmem:[%s826] ss:$2 sm:$0xff] %v589
      %s828 = scalar_lea.vmem [#allocation1], 16
      %829 = vst [vmem:[%s828] ss:$2 sm:$0xff] %v592
      %s831 = scalar_lea.vmem [#allocation1], 17
      %832 = vst [vmem:[%s831] ss:$2 sm:$0xff] %v595
      %s833 = scalar_lea.vmem [#allocation1], 32
      %834 = vst [vmem:[%s833] ss:$2 sm:$0xff] %v598
      %s835 = scalar_lea.vmem [#allocation1], 33
      %836 = vst [vmem:[%s835] ss:$2 sm:$0xff] %v601
      %s838 = scalar_lea.vmem [#allocation1], 48
      %839 = vst [vmem:[%s838] ss:$2 sm:$0xff] %v604
      %s840 = scalar_lea.vmem [#allocation1], 49
      %841 = vst [vmem:[%s840] ss:$2 sm:$0xff] %v607
      %v842 = vld.sshfl [vmem:[#allocation1] sm:$0xff pattern:$0x75643120]
      %v843 = vld.sshfl [vmem:[#allocation1 + $0x10] sm:$0xff pattern:$0x75643120]
      %v844 = vld.sshfl [vmem:[#allocation1 + $0x20] sm:$0xff pattern:$0x75643120]
      %v845 = vld.sshfl [vmem:[#allocation1 + $0x30] sm:$0xff pattern:$0x75643120]
      %847 = vst [vmem:[#allocation1] ss:$2 sm:$0xff] %v610
      %848 = vst [vmem:[%s826] ss:$2 sm:$0xff] %v613
      %849 = vst [vmem:[%s828] ss:$2 sm:$0xff] %v616
      %851 = vst [vmem:[%s831] ss:$2 sm:$0xff] %v619
      %852 = vst [vmem:[%s833] ss:$2 sm:$0xff] %v622
      %854 = vst [vmem:[%s835] ss:$2 sm:$0xff] %v625
      %855 = vst [vmem:[%s838] ss:$2 sm:$0xff] %v628
      %856 = vst [vmem:[%s840] ss:$2 sm:$0xff] %v631
      %v857 = vld.sshfl [vmem:[#allocation1] sm:$0xff pattern:$0x75643120]
      %v858 = vld.sshfl [vmem:[#allocation1 + $0x10] sm:$0xff pattern:$0x75643120]
      %v859 = vld.sshfl [vmem:[#allocation1 + $0x20] sm:$0xff pattern:$0x75643120]
      %v860 = vld.sshfl [vmem:[#allocation1 + $0x30] sm:$0xff pattern:$0x75643120]
      %862 = vst [vmem:[#allocation1] ss:$2 sm:$0xff] %v634
      %863 = vst [vmem:[%s826] ss:$2 sm:$0xff] %v637
      %865 = vst [vmem:[%s828] ss:$2 sm:$0xff] %v640
      %866 = vst [vmem:[%s831] ss:$2 sm:$0xff] %v643
      %867 = vst [vmem:[%s833] ss:$2 sm:$0xff] %v646
      %869 = vst [vmem:[%s835] ss:$2 sm:$0xff] %v649
      %870 = vst [vmem:[%s838] ss:$2 sm:$0xff] %v652
      %872 = vst [vmem:[%s840] ss:$2 sm:$0xff] %v655
      %v873 = vld.sshfl [vmem:[#allocation1] sm:$0xff pattern:$0x75643120]
      %v874 = vld.sshfl [vmem:[#allocation1 + $0x10] sm:$0xff pattern:$0x75643120]
      %v875 = vld.sshfl [vmem:[#allocation1 + $0x20] sm:$0xff pattern:$0x75643120]
      %v876 = vld.sshfl [vmem:[#allocation1 + $0x30] sm:$0xff pattern:$0x75643120]
      %877 = vst [vmem:[#allocation1] ss:$2 sm:$0xff] %v658
      %878 = vst [vmem:[%s826] ss:$2 sm:$0xff] %v661
      %880 = vst [vmem:[%s828] ss:$2 sm:$0xff] %v664
      %881 = vst [vmem:[%s831] ss:$2 sm:$0xff] %v667
      %883 = vst [vmem:[%s833] ss:$2 sm:$0xff] %v670
      %884 = vst [vmem:[%s835] ss:$2 sm:$0xff] %v673
      %885 = vst [vmem:[%s838] ss:$2 sm:$0xff] %v676
      %887 = vst [vmem:[%s840] ss:$2 sm:$0xff] %v679
      %v888 = vld.sshfl [vmem:[#allocation1] sm:$0xff pattern:$0x75643120]
      %v889 = vld.sshfl [vmem:[#allocation1 + $0x10] sm:$0xff pattern:$0x75643120]
      %v890 = vld.sshfl [vmem:[#allocation1 + $0x20] sm:$0xff pattern:$0x75643120]
      %v891 = vld.sshfl [vmem:[#allocation1 + $0x30] sm:$0xff pattern:$0x75643120]
      %892 = vst [vmem:[#allocation1] ss:$2 sm:$0xff] %v682
      %894 = vst [vmem:[%s826] ss:$2 sm:$0xff] %v685
      %895 = vst [vmem:[%s828] ss:$2 sm:$0xff] %v688
      %896 = vst [vmem:[%s831] ss:$2 sm:$0xff] %v691
      %898 = vst [vmem:[%s833] ss:$2 sm:$0xff] %v694
      %899 = vst [vmem:[%s835] ss:$2 sm:$0xff] %v697
      %901 = vst [vmem:[%s838] ss:$2 sm:$0xff] %v700
      %902 = vst [vmem:[%s840] ss:$2 sm:$0xff] %v703
      %v903 = vld.sshfl [vmem:[#allocation1] sm:$0xff pattern:$0x75643120]
      %v904 = vld.sshfl [vmem:[#allocation1 + $0x10] sm:$0xff pattern:$0x75643120]
      %v905 = vld.sshfl [vmem:[#allocation1 + $0x20] sm:$0xff pattern:$0x75643120]
      %v906 = vld.sshfl [vmem:[#allocation1 + $0x30] sm:$0xff pattern:$0x75643120]
      %907 = vst [vmem:[#allocation1] ss:$2 sm:$0xff] %v706
      %909 = vst [vmem:[%s826] ss:$2 sm:$0xff] %v709
      %910 = vst [vmem:[%s828] ss:$2 sm:$0xff] %v712
      %912 = vst [vmem:[%s831] ss:$2 sm:$0xff] %v715
      %913 = vst [vmem:[%s833] ss:$2 sm:$0xff] %v718
      %914 = vst [vmem:[%s835] ss:$2 sm:$0xff] %v721
      %916 = vst [vmem:[%s838] ss:$2 sm:$0xff] %v724
      %917 = vst [vmem:[%s840] ss:$2 sm:$0xff] %v727
      %v918 = vld.sshfl [vmem:[#allocation1] sm:$0xff pattern:$0x75643120]
      %v919 = vld.sshfl [vmem:[#allocation1 + $0x10] sm:$0xff pattern:$0x75643120]
      %v920 = vld.sshfl [vmem:[#allocation1 + $0x20] sm:$0xff pattern:$0x75643120]
      %v921 = vld.sshfl [vmem:[#allocation1 + $0x30] sm:$0xff pattern:$0x75643120]
      %923 = vst [vmem:[#allocation1] ss:$2 sm:$0xff] %v730
      %924 = vst [vmem:[%s826] ss:$2 sm:$0xff] %v733
      %925 = vst [vmem:[%s828] ss:$2 sm:$0xff] %v736
      %927 = vst [vmem:[%s831] ss:$2 sm:$0xff] %v739
      %928 = vst [vmem:[%s833] ss:$2 sm:$0xff] %v742
      %930 = vst [vmem:[%s835] ss:$2 sm:$0xff] %v745
      %931 = vst [vmem:[%s838] ss:$2 sm:$0xff] %v748
      %932 = vst [vmem:[%s840] ss:$2 sm:$0xff] %v751
      %v933 = vld.sshfl [vmem:[#allocation1] sm:$0xff pattern:$0x75643120]
      %v934 = vld.sshfl [vmem:[#allocation1 + $0x10] sm:$0xff pattern:$0x75643120]
      %v935 = vld.sshfl [vmem:[#allocation1 + $0x20] sm:$0xff pattern:$0x75643120]
      %v936 = vld.sshfl [vmem:[#allocation1 + $0x30] sm:$0xff pattern:$0x75643120]
      %938 = vst [vmem:[#allocation1] ss:$2 sm:$0xff] %v754
      %939 = vst [vmem:[%s826] ss:$2 sm:$0xff] %v757
      %941 = vst [vmem:[%s828] ss:$2 sm:$0xff] %v760
      %942 = vst [vmem:[%s831] ss:$2 sm:$0xff] %v763
      %943 = vst [vmem:[%s833] ss:$2 sm:$0xff] %v766
      %945 = vst [vmem:[%s835] ss:$2 sm:$0xff] %v769
      %946 = vst [vmem:[%s838] ss:$2 sm:$0xff] %v772
      %948 = vst [vmem:[%s840] ss:$2 sm:$0xff] %v775
      %v949 = vld.sshfl [vmem:[#allocation1] sm:$0xff pattern:$0x75643120]
      %v950 = vld.sshfl [vmem:[#allocation1 + $0x10] sm:$0xff pattern:$0x75643120]
      %v951 = vld.sshfl [vmem:[#allocation1 + $0x20] sm:$0xff pattern:$0x75643120]
      %v952 = vld.sshfl [vmem:[#allocation1 + $0x30] sm:$0xff pattern:$0x75643120]
      %953 = vst [vmem:[#allocation1] ss:$2 sm:$0xff] %v778
      %954 = vst [vmem:[%s826] ss:$2 sm:$0xff] %v781
      %956 = vst [vmem:[%s828] ss:$2 sm:$0xff] %v784
      %957 = vst [vmem:[%s831] ss:$2 sm:$0xff] %v787
      %959 = vst [vmem:[%s833] ss:$2 sm:$0xff] %v790
      %960 = vst [vmem:[%s835] ss:$2 sm:$0xff] %v793
      %961 = vst [vmem:[%s838] ss:$2 sm:$0xff] %v796
      %963 = vst [vmem:[%s840] ss:$2 sm:$0xff] %v799
      %v964 = vld.sshfl [vmem:[#allocation1] sm:$0xff pattern:$0x75643120]
      %v965 = vld.sshfl [vmem:[#allocation1 + $0x10] sm:$0xff pattern:$0x75643120]
      %v966 = vld.sshfl [vmem:[#allocation1 + $0x20] sm:$0xff pattern:$0x75643120]
      %v967 = vld.sshfl [vmem:[#allocation1 + $0x30] sm:$0xff pattern:$0x75643120]
      %968 = vst [vmem:[#allocation1] ss:$2 sm:$0xff] %v802
      %970 = vst [vmem:[%s826] ss:$2 sm:$0xff] %v805
      %971 = vst [vmem:[%s828] ss:$2 sm:$0xff] %v808
      %972 = vst [vmem:[%s831] ss:$2 sm:$0xff] %v811
      %974 = vst [vmem:[%s833] ss:$2 sm:$0xff] %v814
      %975 = vst [vmem:[%s835] ss:$2 sm:$0xff] %v817
      %977 = vst [vmem:[%s838] ss:$2 sm:$0xff] %v820
      %978 = vst [vmem:[%s840] ss:$2 sm:$0xff] %v823
      %v979 = vld.sshfl [vmem:[#allocation1] sm:$0xff pattern:$0x75643120]
      %v980 = vld.sshfl [vmem:[#allocation1 + $0x10] sm:$0xff pattern:$0x75643120]
      %v981 = vld.sshfl [vmem:[#allocation1 + $0x20] sm:$0xff pattern:$0x75643120]
      %v982 = vld.sshfl [vmem:[#allocation1 + $0x30] sm:$0xff pattern:$0x75643120]
      %1023 = vst [vmem:[#allocation4] sm:$0xf] %v842
      %1024 = vst [vmem:[#allocation4 + $0xc] sm:$0xf] %v843
      %1025 = vst [vmem:[#allocation4 + $0x18] sm:$0xf] %v844
      %1026 = vst [vmem:[#allocation4 + $0x24] sm:$0xf] %v845
      %1027 = vst [vmem:[#allocation4 + $0x30] sm:$0xf] %v857
      %1028 = vst [vmem:[#allocation4 + $0x3c] sm:$0xf] %v858
      %1029 = vst [vmem:[#allocation4 + $0x48] sm:$0xf] %v859
      %1030 = vst [vmem:[#allocation4 + $0x54] sm:$0xf] %v860
      %1031 = vst [vmem:[#allocation4 + $0x60] sm:$0xf] %v873
      %1032 = vst [vmem:[#allocation4 + $0x6c] sm:$0xf] %v874
      %1033 = vst [vmem:[#allocation4 + $0x78] sm:$0xf] %v875
      %1034 = vst [vmem:[#allocation4 + $0x84] sm:$0xf] %v876
      %1035 = vst [vmem:[#allocation4 + $0x90] sm:$0xf] %v888
      %1036 = vst [vmem:[#allocation4 + $0x9c] sm:$0xf] %v889
      %1037 = vst [vmem:[#allocation4 + $0xa8] sm:$0xf] %v890
      %1038 = vst [vmem:[#allocation4 + $0xb4] sm:$0xf] %v891
      %1039 = vst [vmem:[#allocation4 + $0xc0] sm:$0xf] %v903
      %1040 = vst [vmem:[#allocation4 + $0xcc] sm:$0xf] %v904
      %1041 = vst [vmem:[#allocation4 + $0xd8] sm:$0xf] %v905
      %1042 = vst [vmem:[#allocation4 + $0xe4] sm:$0xf] %v906
      %1043 = vst [vmem:[#allocation4 + $0xf0] sm:$0xf] %v918
      %1044 = vst [vmem:[#allocation4 + $0xfc] sm:$0xf] %v919
      %1045 = vst [vmem:[#allocation4 + $0x108] sm:$0xf] %v920
      %1046 = vst [vmem:[#allocation4 + $0x114] sm:$0xf] %v921
      %1047 = vst [vmem:[#allocation4 + $0x120] sm:$0xf] %v933
      %1048 = vst [vmem:[#allocation4 + $0x12c] sm:$0xf] %v934
      %1049 = vst [vmem:[#allocation4 + $0x138] sm:$0xf] %v935
      %1050 = vst [vmem:[#allocation4 + $0x144] sm:$0xf] %v936
      %1051 = vst [vmem:[#allocation4 + $0x150] sm:$0xf] %v949
      %1052 = vst [vmem:[#allocation4 + $0x15c] sm:$0xf] %v950
      %1053 = vst [vmem:[#allocation4 + $0x168] sm:$0xf] %v951
      %1054 = vst [vmem:[#allocation4 + $0x174] sm:$0xf] %v952
      %1055 = vst [vmem:[#allocation4 + $0x180] sm:$0xf] %v964
      %1056 = vst [vmem:[#allocation4 + $0x18c] sm:$0xf] %v965
      %1057 = vst [vmem:[#allocation4 + $0x198] sm:$0xf] %v966
      %1058 = vst [vmem:[#allocation4 + $0x1a4] sm:$0xf] %v967
      %1059 = vst [vmem:[#allocation4 + $0x1b0] sm:$0xf] %v979
      %1060 = vst [vmem:[#allocation4 + $0x1bc] sm:$0xf] %v980
      %1061 = vst [vmem:[#allocation4 + $0x1c8] sm:$0xf] %v981
      %1062 = vst [vmem:[#allocation4 + $0x1d4] sm:$0xf] %v982
      %s1063 = scalar_lea.vmem [#allocation2], 24
      %v1064 = vld [vmem:[%s1063] sm:$0xff]
      %v1065 = vld [vmem:[%s1063 + $0x8] sm:$0xff]
      %v1066 = vld [vmem:[%s1063 + $0x10] sm:$0xf]
      %v1067 = vld [vmem:[%s1063 + $0x18] sm:$0xff]
      %v1068 = vld [vmem:[%s1063 + $0x20] sm:$0xff]
      %v1069 = vld [vmem:[%s1063 + $0x28] sm:$0xf]
      %v1070 = vld [vmem:[%s1063 + $0x30] sm:$0xff]
      %v1071 = vld [vmem:[%s1063 + $0x38] sm:$0xff]
      %v1072 = vld [vmem:[%s1063 + $0x40] sm:$0xf]
      %v1073 = vld [vmem:[%s1063 + $0x48] sm:$0xff]
      %v1074 = vld [vmem:[%s1063 + $0x50] sm:$0xff]
      %v1075 = vld [vmem:[%s1063 + $0x58] sm:$0xf]
      %v1076 = vld [vmem:[%s1063 + $0x60] sm:$0xff]
      %v1077 = vld [vmem:[%s1063 + $0x68] sm:$0xff]
      %v1078 = vld [vmem:[%s1063 + $0x70] sm:$0xf]
      %v1079 = vld [vmem:[%s1063 + $0x78] sm:$0xff]
      %v1080 = vld [vmem:[%s1063 + $0x80] sm:$0xff]
      %v1081 = vld [vmem:[%s1063 + $0x88] sm:$0xf]
      %v1082 = vld [vmem:[%s1063 + $0x90] sm:$0xff]
      %v1083 = vld [vmem:[%s1063 + $0x98] sm:$0xff]
      %v1084 = vld [vmem:[%s1063 + $0xa0] sm:$0xf]
      %v1085 = vld [vmem:[%s1063 + $0xa8] sm:$0xff]
      %v1086 = vld [vmem:[%s1063 + $0xb0] sm:$0xff]
      %v1087 = vld [vmem:[%s1063 + $0xb8] sm:$0xf]
      %v1088 = vld [vmem:[%s1063 + $0xc0] sm:$0xff]
      %v1089 = vld [vmem:[%s1063 + $0xc8] sm:$0xff]
      %v1090 = vld [vmem:[%s1063 + $0xd0] sm:$0xf]
      %v1091 = vld [vmem:[%s1063 + $0xd8] sm:$0xff]
      %v1092 = vld [vmem:[%s1063 + $0xe0] sm:$0xff]
      %v1093 = vld [vmem:[%s1063 + $0xe8] sm:$0xf]
      %v1094 = vld [vmem:[%s1063 + $0xf0] sm:$0xff]
      %v1095 = vld [vmem:[%s1063 + $0xf8] sm:$0xff]
      %v1096 = vld [vmem:[%s1063 + $0x100] sm:$0xf]
      %v1097 = vld [vmem:[%s1063 + $0x108] sm:$0xff]
      %v1098 = vld [vmem:[%s1063 + $0x110] sm:$0xff]
      %v1099 = vld [vmem:[%s1063 + $0x118] sm:$0xf]
      %v1100 = vld [vmem:[%s1063 + $0x120] sm:$0xff]
      %v1101 = vld [vmem:[%s1063 + $0x128] sm:$0xff]
      %v1102 = vld [vmem:[%s1063 + $0x130] sm:$0xf]
      %v1103 = vld [vmem:[%s1063 + $0x138] sm:$0xff]
      %v1104 = vld [vmem:[%s1063 + $0x140] sm:$0xff]
      %v1105 = vld [vmem:[%s1063 + $0x148] sm:$0xf]
      %v1106 = vld [vmem:[%s1063 + $0x150] sm:$0xff]
      %v1107 = vld [vmem:[%s1063 + $0x158] sm:$0xff]
      %v1108 = vld [vmem:[%s1063 + $0x160] sm:$0xf]
      %v1109 = vld [vmem:[%s1063 + $0x168] sm:$0xff]
      %v1110 = vld [vmem:[%s1063 + $0x170] sm:$0xff]
      %v1111 = vld [vmem:[%s1063 + $0x178] sm:$0xf]
      %v1112 = vpack.c.bf16 %v1064, %v1064
      %v1113 = vpack.c.bf16 %v1065, %v1065
      %v1114 = vpack.c.bf16 %v1066, %v1066
      %v1115 = vpack.c.bf16 %v1067, %v1067
      %v1116 = vpack.c.bf16 %v1068, %v1068
      %v1117 = vpack.c.bf16 %v1069, %v1069
      %v1118 = vpack.c.bf16 %v1070, %v1070
      %v1119 = vpack.c.bf16 %v1071, %v1071
      %v1120 = vpack.c.bf16 %v1072, %v1072
      %v1121 = vpack.c.bf16 %v1073, %v1073
      %v1122 = vpack.c.bf16 %v1074, %v1074
      %v1123 = vpack.c.bf16 %v1075, %v1075
      %v1124 = vpack.c.bf16 %v1076, %v1076
      %v1125 = vpack.c.bf16 %v1077, %v1077
      %v1126 = vpack.c.bf16 %v1078, %v1078
      %v1127 = vpack.c.bf16 %v1079, %v1079
      %v1128 = vpack.c.bf16 %v1080, %v1080
      %v1129 = vpack.c.bf16 %v1081, %v1081
      %v1130 = vpack.c.bf16 %v1082, %v1082
      %v1131 = vpack.c.bf16 %v1083, %v1083
      %v1132 = vpack.c.bf16 %v1084, %v1084
      %v1133 = vpack.c.bf16 %v1085, %v1085
      %v1134 = vpack.c.bf16 %v1086, %v1086
      %v1135 = vpack.c.bf16 %v1087, %v1087
      %v1136 = vpack.c.bf16 %v1088, %v1088
      %v1137 = vpack.c.bf16 %v1089, %v1089
      %v1138 = vpack.c.bf16 %v1090, %v1090
      %v1139 = vpack.c.bf16 %v1091, %v1091
      %v1140 = vpack.c.bf16 %v1092, %v1092
      %v1141 = vpack.c.bf16 %v1093, %v1093
      %v1142 = vpack.c.bf16 %v1094, %v1094
      %v1143 = vpack.c.bf16 %v1095, %v1095
      %v1144 = vpack.c.bf16 %v1096, %v1096
      %v1145 = vpack.c.bf16 %v1097, %v1097
      %v1146 = vpack.c.bf16 %v1098, %v1098
      %v1147 = vpack.c.bf16 %v1099, %v1099
      %v1148 = vpack.c.bf16 %v1100, %v1100
      %v1149 = vpack.c.bf16 %v1101, %v1101
      %v1150 = vpack.c.bf16 %v1102, %v1102
      %v1151 = vpack.c.bf16 %v1103, %v1103
      %v1152 = vpack.c.bf16 %v1104, %v1104
      %v1153 = vpack.c.bf16 %v1105, %v1105
      %v1154 = vpack.c.bf16 %v1106, %v1106
      %v1155 = vpack.c.bf16 %v1107, %v1107
      %v1156 = vpack.c.bf16 %v1108, %v1108
      %v1157 = vpack.c.bf16 %v1109, %v1109
      %v1158 = vpack.c.bf16 %v1110, %v1110
      %v1159 = vpack.c.bf16 %v1111, %v1111
      %v1208 = vrot.slane %v1112, 2
      %v1209 = vrot.slane %v1113, 2
      %v1210 = vrot.slane %v1114, 2
      %v1211 = vrot.slane %v1115, 2
      %v1212 = vrot.slane %v1116, 2
      %v1213 = vrot.slane %v1117, 2
      %v1214 = vrot.slane %v1118, 2
      %v1215 = vrot.slane %v1119, 2
      %v1216 = vrot.slane %v1120, 2
      %v1217 = vrot.slane %v1121, 2
      %v1218 = vrot.slane %v1122, 2
      %v1219 = vrot.slane %v1123, 2
      %v1220 = vrot.slane %v1124, 2
      %v1221 = vrot.slane %v1125, 2
      %v1222 = vrot.slane %v1126, 2
      %v1223 = vrot.slane %v1127, 2
      %v1224 = vrot.slane %v1128, 2
      %v1225 = vrot.slane %v1129, 2
      %v1226 = vrot.slane %v1130, 2
      %v1227 = vrot.slane %v1131, 2
      %v1228 = vrot.slane %v1132, 2
      %v1229 = vrot.slane %v1133, 2
      %v1230 = vrot.slane %v1134, 2
      %v1231 = vrot.slane %v1135, 2
      %v1232 = vrot.slane %v1136, 2
      %v1233 = vrot.slane %v1137, 2
      %v1234 = vrot.slane %v1138, 2
      %v1235 = vrot.slane %v1139, 2
      %v1236 = vrot.slane %v1140, 2
      %v1237 = vrot.slane %v1141, 2
      %v1238 = vrot.slane %v1142, 2
      %v1239 = vrot.slane %v1143, 2
      %v1240 = vrot.slane %v1144, 2
      %v1241 = vrot.slane %v1145, 2
      %v1242 = vrot.slane %v1146, 2
      %v1243 = vrot.slane %v1147, 2
      %v1244 = vrot.slane %v1148, 2
      %v1245 = vrot.slane %v1149, 2
      %v1246 = vrot.slane %v1150, 2
      %v1247 = vrot.slane %v1151, 2
      %v1248 = vrot.slane %v1152, 2
      %v1249 = vrot.slane %v1153, 2
      %v1250 = vrot.slane %v1154, 2
      %v1251 = vrot.slane %v1155, 2
      %v1252 = vrot.slane %v1156, 2
      %v1253 = vrot.slane %v1157, 2
      %v1254 = vrot.slane %v1158, 2
      %v1255 = vrot.slane %v1159, 2
      %v1258 = vsel %vm582, %v1112, %v1208
      %v1259 = vsel %vm586, %v1112, %v1208
      %v1261 = vrot.slane %v1259, 2
      %v1264 = vsel %vm582, %v1113, %v1209
      %v1265 = vsel %vm586, %v1113, %v1209
      %v1267 = vrot.slane %v1265, 2
      %v1270 = vsel %vm582, %v1114, %v1210
      %v1273 = vsel %vm582, %v1115, %v1211
      %v1274 = vsel %vm586, %v1115, %v1211
      %v1276 = vrot.slane %v1274, 2
      %v1279 = vsel %vm582, %v1116, %v1212
      %v1280 = vsel %vm586, %v1116, %v1212
      %v1282 = vrot.slane %v1280, 2
      %v1285 = vsel %vm582, %v1117, %v1213
      %v1288 = vsel %vm582, %v1118, %v1214
      %v1289 = vsel %vm586, %v1118, %v1214
      %v1291 = vrot.slane %v1289, 2
      %v1294 = vsel %vm582, %v1119, %v1215
      %v1295 = vsel %vm586, %v1119, %v1215
      %v1297 = vrot.slane %v1295, 2
      %v1300 = vsel %vm582, %v1120, %v1216
      %v1303 = vsel %vm582, %v1121, %v1217
      %v1304 = vsel %vm586, %v1121, %v1217
      %v1306 = vrot.slane %v1304, 2
      %v1309 = vsel %vm582, %v1122, %v1218
      %v1310 = vsel %vm586, %v1122, %v1218
      %v1312 = vrot.slane %v1310, 2
      %v1315 = vsel %vm582, %v1123, %v1219
      %v1318 = vsel %vm582, %v1124, %v1220
      %v1319 = vsel %vm586, %v1124, %v1220
      %v1321 = vrot.slane %v1319, 2
      %v1324 = vsel %vm582, %v1125, %v1221
      %v1325 = vsel %vm586, %v1125, %v1221
      %v1327 = vrot.slane %v1325, 2
      %v1330 = vsel %vm582, %v1126, %v1222
      %v1333 = vsel %vm582, %v1127, %v1223
      %v1334 = vsel %vm586, %v1127, %v1223
      %v1336 = vrot.slane %v1334, 2
      %v1339 = vsel %vm582, %v1128, %v1224
      %v1340 = vsel %vm586, %v1128, %v1224
      %v1342 = vrot.slane %v1340, 2
      %v1345 = vsel %vm582, %v1129, %v1225
      %v1348 = vsel %vm582, %v1130, %v1226
      %v1349 = vsel %vm586, %v1130, %v1226
      %v1351 = vrot.slane %v1349, 2
      %v1354 = vsel %vm582, %v1131, %v1227
      %v1355 = vsel %vm586, %v1131, %v1227
      %v1357 = vrot.slane %v1355, 2
      %v1360 = vsel %vm582, %v1132, %v1228
      %v1363 = vsel %vm582, %v1133, %v1229
      %v1364 = vsel %vm586, %v1133, %v1229
      %v1366 = vrot.slane %v1364, 2
      %v1369 = vsel %vm582, %v1134, %v1230
      %v1370 = vsel %vm586, %v1134, %v1230
      %v1372 = vrot.slane %v1370, 2
      %v1375 = vsel %vm582, %v1135, %v1231
      %v1378 = vsel %vm582, %v1136, %v1232
      %v1379 = vsel %vm586, %v1136, %v1232
      %v1381 = vrot.slane %v1379, 2
      %v1384 = vsel %vm582, %v1137, %v1233
      %v1385 = vsel %vm586, %v1137, %v1233
      %v1387 = vrot.slane %v1385, 2
      %v1390 = vsel %vm582, %v1138, %v1234
      %v1393 = vsel %vm582, %v1139, %v1235
      %v1394 = vsel %vm586, %v1139, %v1235
      %v1396 = vrot.slane %v1394, 2
      %v1399 = vsel %vm582, %v1140, %v1236
      %v1400 = vsel %vm586, %v1140, %v1236
      %v1402 = vrot.slane %v1400, 2
      %v1405 = vsel %vm582, %v1141, %v1237
      %v1408 = vsel %vm582, %v1142, %v1238
      %v1409 = vsel %vm586, %v1142, %v1238
      %v1411 = vrot.slane %v1409, 2
      %v1414 = vsel %vm582, %v1143, %v1239
      %v1415 = vsel %vm586, %v1143, %v1239
      %v1417 = vrot.slane %v1415, 2
      %v1420 = vsel %vm582, %v1144, %v1240
      %v1423 = vsel %vm582, %v1145, %v1241
      %v1424 = vsel %vm586, %v1145, %v1241
      %v1426 = vrot.slane %v1424, 2
      %v1429 = vsel %vm582, %v1146, %v1242
      %v1430 = vsel %vm586, %v1146, %v1242
      %v1432 = vrot.slane %v1430, 2
      %v1435 = vsel %vm582, %v1147, %v1243
      %v1438 = vsel %vm582, %v1148, %v1244
      %v1439 = vsel %vm586, %v1148, %v1244
      %v1441 = vrot.slane %v1439, 2
      %v1444 = vsel %vm582, %v1149, %v1245
      %v1445 = vsel %vm586, %v1149, %v1245
      %v1447 = vrot.slane %v1445, 2
      %v1450 = vsel %vm582, %v1150, %v1246
      %v1453 = vsel %vm582, %v1151, %v1247
      %v1454 = vsel %vm586, %v1151, %v1247
      %v1456 = vrot.slane %v1454, 2
      %v1459 = vsel %vm582, %v1152, %v1248
      %v1460 = vsel %vm586, %v1152, %v1248
      %v1462 = vrot.slane %v1460, 2
      %v1465 = vsel %vm582, %v1153, %v1249
      %v1468 = vsel %vm582, %v1154, %v1250
      %v1469 = vsel %vm586, %v1154, %v1250
      %v1471 = vrot.slane %v1469, 2
      %v1474 = vsel %vm582, %v1155, %v1251
      %v1475 = vsel %vm586, %v1155, %v1251
      %v1477 = vrot.slane %v1475, 2
      %v1480 = vsel %vm582, %v1156, %v1252
      %v1483 = vsel %vm582, %v1157, %v1253
      %v1484 = vsel %vm586, %v1157, %v1253
      %v1486 = vrot.slane %v1484, 2
      %v1489 = vsel %vm582, %v1158, %v1254
      %v1490 = vsel %vm586, %v1158, %v1254
      %v1492 = vrot.slane %v1490, 2
      %v1495 = vsel %vm582, %v1159, %v1255
      %1496 = vst [vmem:[#allocation1] ss:$2 sm:$0xff] %v1258
      %s1498 = scalar_lea.vmem [#allocation1], 1
      %1499 = vst [vmem:[%s1498] ss:$2 sm:$0xff] %v1261
      %s1500 = scalar_lea.vmem [#allocation1], 16
      %1501 = vst [vmem:[%s1500] ss:$2 sm:$0xff] %v1264
      %s1503 = scalar_lea.vmem [#allocation1], 17
      %1504 = vst [vmem:[%s1503] ss:$2 sm:$0xff] %v1267
      %s1505 = scalar_lea.vmem [#allocation1], 32
      %1506 = vst [vmem:[%s1505] ss:$2 sm:$0xff] %v1270
      %s1507 = scalar_lea.vmem [#allocation1], 33
      %1508 = vst [vmem:[%s1507] ss:$2 sm:$0xff] %v1273
      %s1510 = scalar_lea.vmem [#allocation1], 48
      %1511 = vst [vmem:[%s1510] ss:$2 sm:$0xff] %v1276
      %s1512 = scalar_lea.vmem [#allocation1], 49
      %1513 = vst [vmem:[%s1512] ss:$2 sm:$0xff] %v1279
      %v1514 = vld.sshfl [vmem:[#allocation1] sm:$0xff pattern:$0x75643120]
      %v1515 = vld.sshfl [vmem:[#allocation1 + $0x10] sm:$0xff pattern:$0x75643120]
      %v1516 = vld.sshfl [vmem:[#allocation1 + $0x20] sm:$0xff pattern:$0x75643120]
      %v1517 = vld.sshfl [vmem:[#allocation1 + $0x30] sm:$0xff pattern:$0x75643120]
      %1519 = vst [vmem:[#allocation1] ss:$2 sm:$0xff] %v1282
      %1520 = vst [vmem:[%s1498] ss:$2 sm:$0xff] %v1285
      %1521 = vst [vmem:[%s1500] ss:$2 sm:$0xff] %v1288
      %1523 = vst [vmem:[%s1503] ss:$2 sm:$0xff] %v1291
      %1524 = vst [vmem:[%s1505] ss:$2 sm:$0xff] %v1294
      %1526 = vst [vmem:[%s1507] ss:$2 sm:$0xff] %v1297
      %1527 = vst [vmem:[%s1510] ss:$2 sm:$0xff] %v1300
      %1528 = vst [vmem:[%s1512] ss:$2 sm:$0xff] %v1303
      %v1529 = vld.sshfl [vmem:[#allocation1] sm:$0xff pattern:$0x75643120]
      %v1530 = vld.sshfl [vmem:[#allocation1 + $0x10] sm:$0xff pattern:$0x75643120]
      %v1531 = vld.sshfl [vmem:[#allocation1 + $0x20] sm:$0xff pattern:$0x75643120]
      %v1532 = vld.sshfl [vmem:[#allocation1 + $0x30] sm:$0xff pattern:$0x75643120]
      %1534 = vst [vmem:[#allocation1] ss:$2 sm:$0xff] %v1306
      %1535 = vst [vmem:[%s1498] ss:$2 sm:$0xff] %v1309
      %1537 = vst [vmem:[%s1500] ss:$2 sm:$0xff] %v1312
      %1538 = vst [vmem:[%s1503] ss:$2 sm:$0xff] %v1315
      %1539 = vst [vmem:[%s1505] ss:$2 sm:$0xff] %v1318
      %1541 = vst [vmem:[%s1507] ss:$2 sm:$0xff] %v1321
      %1542 = vst [vmem:[%s1510] ss:$2 sm:$0xff] %v1324
      %1544 = vst [vmem:[%s1512] ss:$2 sm:$0xff] %v1327
      %v1545 = vld.sshfl [vmem:[#allocation1] sm:$0xff pattern:$0x75643120]
      %v1546 = vld.sshfl [vmem:[#allocation1 + $0x10] sm:$0xff pattern:$0x75643120]
      %v1547 = vld.sshfl [vmem:[#allocation1 + $0x20] sm:$0xff pattern:$0x75643120]
      %v1548 = vld.sshfl [vmem:[#allocation1 + $0x30] sm:$0xff pattern:$0x75643120]
      %1549 = vst [vmem:[#allocation1] ss:$2 sm:$0xff] %v1330
      %1550 = vst [vmem:[%s1498] ss:$2 sm:$0xff] %v1333
      %1552 = vst [vmem:[%s1500] ss:$2 sm:$0xff] %v1336
      %1553 = vst [vmem:[%s1503] ss:$2 sm:$0xff] %v1339
      %1555 = vst [vmem:[%s1505] ss:$2 sm:$0xff] %v1342
      %1556 = vst [vmem:[%s1507] ss:$2 sm:$0xff] %v1345
      %1557 = vst [vmem:[%s1510] ss:$2 sm:$0xff] %v1348
      %1559 = vst [vmem:[%s1512] ss:$2 sm:$0xff] %v1351
      %v1560 = vld.sshfl [vmem:[#allocation1] sm:$0xff pattern:$0x75643120]
      %v1561 = vld.sshfl [vmem:[#allocation1 + $0x10] sm:$0xff pattern:$0x75643120]
      %v1562 = vld.sshfl [vmem:[#allocation1 + $0x20] sm:$0xff pattern:$0x75643120]
      %v1563 = vld.sshfl [vmem:[#allocation1 + $0x30] sm:$0xff pattern:$0x75643120]
      %1564 = vst [vmem:[#allocation1] ss:$2 sm:$0xff] %v1354
      %1566 = vst [vmem:[%s1498] ss:$2 sm:$0xff] %v1357
      %1567 = vst [vmem:[%s1500] ss:$2 sm:$0xff] %v1360
      %1568 = vst [vmem:[%s1503] ss:$2 sm:$0xff] %v1363
      %1570 = vst [vmem:[%s1505] ss:$2 sm:$0xff] %v1366
      %1571 = vst [vmem:[%s1507] ss:$2 sm:$0xff] %v1369
      %1573 = vst [vmem:[%s1510] ss:$2 sm:$0xff] %v1372
      %1574 = vst [vmem:[%s1512] ss:$2 sm:$0xff] %v1375
      %v1575 = vld.sshfl [vmem:[#allocation1] sm:$0xff pattern:$0x75643120]
      %v1576 = vld.sshfl [vmem:[#allocation1 + $0x10] sm:$0xff pattern:$0x75643120]
      %v1577 = vld.sshfl [vmem:[#allocation1 + $0x20] sm:$0xff pattern:$0x75643120]
      %v1578 = vld.sshfl [vmem:[#allocation1 + $0x30] sm:$0xff pattern:$0x75643120]
      %1579 = vst [vmem:[#allocation1] ss:$2 sm:$0xff] %v1378
      %1581 = vst [vmem:[%s1498] ss:$2 sm:$0xff] %v1381
      %1582 = vst [vmem:[%s1500] ss:$2 sm:$0xff] %v1384
      %1584 = vst [vmem:[%s1503] ss:$2 sm:$0xff] %v1387
      %1585 = vst [vmem:[%s1505] ss:$2 sm:$0xff] %v1390
      %1586 = vst [vmem:[%s1507] ss:$2 sm:$0xff] %v1393
      %1588 = vst [vmem:[%s1510] ss:$2 sm:$0xff] %v1396
      %1589 = vst [vmem:[%s1512] ss:$2 sm:$0xff] %v1399
      %v1590 = vld.sshfl [vmem:[#allocation1] sm:$0xff pattern:$0x75643120]
      %v1591 = vld.sshfl [vmem:[#allocation1 + $0x10] sm:$0xff pattern:$0x75643120]
      %v1592 = vld.sshfl [vmem:[#allocation1 + $0x20] sm:$0xff pattern:$0x75643120]
      %v1593 = vld.sshfl [vmem:[#allocation1 + $0x30] sm:$0xff pattern:$0x75643120]
      %1595 = vst [vmem:[#allocation1] ss:$2 sm:$0xff] %v1402
      %1596 = vst [vmem:[%s1498] ss:$2 sm:$0xff] %v1405
      %1597 = vst [vmem:[%s1500] ss:$2 sm:$0xff] %v1408
      %1599 = vst [vmem:[%s1503] ss:$2 sm:$0xff] %v1411
      %1600 = vst [vmem:[%s1505] ss:$2 sm:$0xff] %v1414
      %1602 = vst [vmem:[%s1507] ss:$2 sm:$0xff] %v1417
      %1603 = vst [vmem:[%s1510] ss:$2 sm:$0xff] %v1420
      %1604 = vst [vmem:[%s1512] ss:$2 sm:$0xff] %v1423
      %v1605 = vld.sshfl [vmem:[#allocation1] sm:$0xff pattern:$0x75643120]
      %v1606 = vld.sshfl [vmem:[#allocation1 + $0x10] sm:$0xff pattern:$0x75643120]
      %v1607 = vld.sshfl [vmem:[#allocation1 + $0x20] sm:$0xff pattern:$0x75643120]
      %v1608 = vld.sshfl [vmem:[#allocation1 + $0x30] sm:$0xff pattern:$0x75643120]
      %1610 = vst [vmem:[#allocation1] ss:$2 sm:$0xff] %v1426
      %1611 = vst [vmem:[%s1498] ss:$2 sm:$0xff] %v1429
      %1613 = vst [vmem:[%s1500] ss:$2 sm:$0xff] %v1432
      %1614 = vst [vmem:[%s1503] ss:$2 sm:$0xff] %v1435
      %1615 = vst [vmem:[%s1505] ss:$2 sm:$0xff] %v1438
      %1617 = vst [vmem:[%s1507] ss:$2 sm:$0xff] %v1441
      %1618 = vst [vmem:[%s1510] ss:$2 sm:$0xff] %v1444
      %1620 = vst [vmem:[%s1512] ss:$2 sm:$0xff] %v1447
      %v1621 = vld.sshfl [vmem:[#allocation1] sm:$0xff pattern:$0x75643120]
      %v1622 = vld.sshfl [vmem:[#allocation1 + $0x10] sm:$0xff pattern:$0x75643120]
      %v1623 = vld.sshfl [vmem:[#allocation1 + $0x20] sm:$0xff pattern:$0x75643120]
      %v1624 = vld.sshfl [vmem:[#allocation1 + $0x30] sm:$0xff pattern:$0x75643120]
      %1625 = vst [vmem:[#allocation1] ss:$2 sm:$0xff] %v1450
      %1626 = vst [vmem:[%s1498] ss:$2 sm:$0xff] %v1453
      %1628 = vst [vmem:[%s1500] ss:$2 sm:$0xff] %v1456
      %1629 = vst [vmem:[%s1503] ss:$2 sm:$0xff] %v1459
      %1631 = vst [vmem:[%s1505] ss:$2 sm:$0xff] %v1462
      %1632 = vst [vmem:[%s1507] ss:$2 sm:$0xff] %v1465
      %1633 = vst [vmem:[%s1510] ss:$2 sm:$0xff] %v1468
      %1635 = vst [vmem:[%s1512] ss:$2 sm:$0xff] %v1471
      %v1636 = vld.sshfl [vmem:[#allocation1] sm:$0xff pattern:$0x75643120]
      %v1637 = vld.sshfl [vmem:[#allocation1 + $0x10] sm:$0xff pattern:$0x75643120]
      %v1638 = vld.sshfl [vmem:[#allocation1 + $0x20] sm:$0xff pattern:$0x75643120]
      %v1639 = vld.sshfl [vmem:[#allocation1 + $0x30] sm:$0xff pattern:$0x75643120]
      %1640 = vst [vmem:[#allocation1] ss:$2 sm:$0xff] %v1474
      %1642 = vst [vmem:[%s1498] ss:$2 sm:$0xff] %v1477
      %1643 = vst [vmem:[%s1500] ss:$2 sm:$0xff] %v1480
      %1644 = vst [vmem:[%s1503] ss:$2 sm:$0xff] %v1483
      %1646 = vst [vmem:[%s1505] ss:$2 sm:$0xff] %v1486
      %1647 = vst [vmem:[%s1507] ss:$2 sm:$0xff] %v1489
      %1649 = vst [vmem:[%s1510] ss:$2 sm:$0xff] %v1492
      %1650 = vst [vmem:[%s1512] ss:$2 sm:$0xff] %v1495
      %v1651 = vld.sshfl [vmem:[#allocation1] sm:$0xff pattern:$0x75643120]
      %v1652 = vld.sshfl [vmem:[#allocation1 + $0x10] sm:$0xff pattern:$0x75643120]
      %v1653 = vld.sshfl [vmem:[#allocation1 + $0x20] sm:$0xff pattern:$0x75643120]
      %v1654 = vld.sshfl [vmem:[#allocation1 + $0x30] sm:$0xff pattern:$0x75643120]
      %1695 = vst [vmem:[#allocation4 + $0x4] sm:$0xf] %v1514
      %1696 = vst [vmem:[#allocation4 + $0x10] sm:$0xf] %v1515
      %1697 = vst [vmem:[#allocation4 + $0x1c] sm:$0xf] %v1516
      %1698 = vst [vmem:[#allocation4 + $0x28] sm:$0xf] %v1517
      %1699 = vst [vmem:[#allocation4 + $0x34] sm:$0xf] %v1529
      %1700 = vst [vmem:[#allocation4 + $0x40] sm:$0xf] %v1530
      %1701 = vst [vmem:[#allocation4 + $0x4c] sm:$0xf] %v1531
      %1702 = vst [vmem:[#allocation4 + $0x58] sm:$0xf] %v1532
      %1703 = vst [vmem:[#allocation4 + $0x64] sm:$0xf] %v1545
      %1704 = vst [vmem:[#allocation4 + $0x70] sm:$0xf] %v1546
      %1705 = vst [vmem:[#allocation4 + $0x7c] sm:$0xf] %v1547
      %1706 = vst [vmem:[#allocation4 + $0x88] sm:$0xf] %v1548
      %1707 = vst [vmem:[#allocation4 + $0x94] sm:$0xf] %v1560
      %1708 = vst [vmem:[#allocation4 + $0xa0] sm:$0xf] %v1561
      %1709 = vst [vmem:[#allocation4 + $0xac] sm:$0xf] %v1562
      %1710 = vst [vmem:[#allocation4 + $0xb8] sm:$0xf] %v1563
      %1711 = vst [vmem:[#allocation4 + $0xc4] sm:$0xf] %v1575
      %1712 = vst [vmem:[#allocation4 + $0xd0] sm:$0xf] %v1576
      %1713 = vst [vmem:[#allocation4 + $0xdc] sm:$0xf] %v1577
      %1714 = vst [vmem:[#allocation4 + $0xe8] sm:$0xf] %v1578
      %1715 = vst [vmem:[#allocation4 + $0xf4] sm:$0xf] %v1590
      %1716 = vst [vmem:[#allocation4 + $0x100] sm:$0xf] %v1591
      %1717 = vst [vmem:[#allocation4 + $0x10c] sm:$0xf] %v1592
      %1718 = vst [vmem:[#allocation4 + $0x118] sm:$0xf] %v1593
      %1719 = vst [vmem:[#allocation4 + $0x124] sm:$0xf] %v1605
      %1720 = vst [vmem:[#allocation4 + $0x130] sm:$0xf] %v1606
      %1721 = vst [vmem:[#allocation4 + $0x13c] sm:$0xf] %v1607
      %1722 = vst [vmem:[#allocation4 + $0x148] sm:$0xf] %v1608
      %1723 = vst [vmem:[#allocation4 + $0x154] sm:$0xf] %v1621
      %1724 = vst [vmem:[#allocation4 + $0x160] sm:$0xf] %v1622
      %1725 = vst [vmem:[#allocation4 + $0x16c] sm:$0xf] %v1623
      %1726 = vst [vmem:[#allocation4 + $0x178] sm:$0xf] %v1624
      %1727 = vst [vmem:[#allocation4 + $0x184] sm:$0xf] %v1636
      %1728 = vst [vmem:[#allocation4 + $0x190] sm:$0xf] %v1637
      %1729 = vst [vmem:[#allocation4 + $0x19c] sm:$0xf] %v1638
      %1730 = vst [vmem:[#allocation4 + $0x1a8] sm:$0xf] %v1639
      %1731 = vst [vmem:[#allocation4 + $0x1b4] sm:$0xf] %v1651
      %1732 = vst [vmem:[#allocation4 + $0x1c0] sm:$0xf] %v1652
      %1733 = vst [vmem:[#allocation4 + $0x1cc] sm:$0xf] %v1653
      %1734 = vst [vmem:[#allocation4 + $0x1d8] sm:$0xf] %v1654
      %s1735 = scalar_lea.vmem [#allocation2], 48
      %v1736 = vld [vmem:[%s1735] sm:$0xff]
      %v1737 = vld [vmem:[%s1735 + $0x8] sm:$0xff]
      %v1738 = vld [vmem:[%s1735 + $0x10] sm:$0xf]
      %v1739 = vld [vmem:[%s1735 + $0x18] sm:$0xff]
      %v1740 = vld [vmem:[%s1735 + $0x20] sm:$0xff]
      %v1741 = vld [vmem:[%s1735 + $0x28] sm:$0xf]
      %v1742 = vld [vmem:[%s1735 + $0x30] sm:$0xff]
      %v1743 = vld [vmem:[%s1735 + $0x38] sm:$0xff]
      %v1744 = vld [vmem:[%s1735 + $0x40] sm:$0xf]
      %v1745 = vld [vmem:[%s1735 + $0x48] sm:$0xff]
      %v1746 = vld [vmem:[%s1735 + $0x50] sm:$0xff]
      %v1747 = vld [vmem:[%s1735 + $0x58] sm:$0xf]
      %v1748 = vld [vmem:[%s1735 + $0x60] sm:$0xff]
      %v1749 = vld [vmem:[%s1735 + $0x68] sm:$0xff]
      %v1750 = vld [vmem:[%s1735 + $0x70] sm:$0xf]
      %v1751 = vld [vmem:[%s1735 + $0x78] sm:$0xff]
      %v1752 = vld [vmem:[%s1735 + $0x80] sm:$0xff]
      %v1753 = vld [vmem:[%s1735 + $0x88] sm:$0xf]
      %v1754 = vld [vmem:[%s1735 + $0x90] sm:$0xff]
      %v1755 = vld [vmem:[%s1735 + $0x98] sm:$0xff]
      %v1756 = vld [vmem:[%s1735 + $0xa0] sm:$0xf]
      %v1757 = vld [vmem:[%s1735 + $0xa8] sm:$0xff]
      %v1758 = vld [vmem:[%s1735 + $0xb0] sm:$0xff]
      %v1759 = vld [vmem:[%s1735 + $0xb8] sm:$0xf]
      %v1760 = vld [vmem:[%s1735 + $0xc0] sm:$0xff]
      %v1761 = vld [vmem:[%s1735 + $0xc8] sm:$0xff]
      %v1762 = vld [vmem:[%s1735 + $0xd0] sm:$0xf]
      %v1763 = vld [vmem:[%s1735 + $0xd8] sm:$0xff]
      %v1764 = vld [vmem:[%s1735 + $0xe0] sm:$0xff]
      %v1765 = vld [vmem:[%s1735 + $0xe8] sm:$0xf]
      %v1766 = vld [vmem:[%s1735 + $0xf0] sm:$0xff]
      %v1767 = vld [vmem:[%s1735 + $0xf8] sm:$0xff]
      %v1768 = vld [vmem:[%s1735 + $0x100] sm:$0xf]
      %v1769 = vld [vmem:[%s1735 + $0x108] sm:$0xff]
      %v1770 = vld [vmem:[%s1735 + $0x110] sm:$0xff]
      %v1771 = vld [vmem:[%s1735 + $0x118] sm:$0xf]
      %v1772 = vld [vmem:[%s1735 + $0x120] sm:$0xff]
      %v1773 = vld [vmem:[%s1735 + $0x128] sm:$0xff]
      %v1774 = vld [vmem:[%s1735 + $0x130] sm:$0xf]
      %v1775 = vld [vmem:[%s1735 + $0x138] sm:$0xff]
      %v1776 = vld [vmem:[%s1735 + $0x140] sm:$0xff]
      %v1777 = vld [vmem:[%s1735 + $0x148] sm:$0xf]
      %v1778 = vld [vmem:[%s1735 + $0x150] sm:$0xff]
      %v1779 = vld [vmem:[%s1735 + $0x158] sm:$0xff]
      %v1780 = vld [vmem:[%s1735 + $0x160] sm:$0xf]
      %v1781 = vld [vmem:[%s1735 + $0x168] sm:$0xff]
      %v1782 = vld [vmem:[%s1735 + $0x170] sm:$0xff]
      %v1783 = vld [vmem:[%s1735 + $0x178] sm:$0xf]
      %v1784 = vpack.c.bf16 %v1736, %v1736
      %v1785 = vpack.c.bf16 %v1737, %v1737
      %v1786 = vpack.c.bf16 %v1738, %v1738
      %v1787 = vpack.c.bf16 %v1739, %v1739
      %v1788 = vpack.c.bf16 %v1740, %v1740
      %v1789 = vpack.c.bf16 %v1741, %v1741
      %v1790 = vpack.c.bf16 %v1742, %v1742
      %v1791 = vpack.c.bf16 %v1743, %v1743
      %v1792 = vpack.c.bf16 %v1744, %v1744
      %v1793 = vpack.c.bf16 %v1745, %v1745
      %v1794 = vpack.c.bf16 %v1746, %v1746
      %v1795 = vpack.c.bf16 %v1747, %v1747
      %v1796 = vpack.c.bf16 %v1748, %v1748
      %v1797 = vpack.c.bf16 %v1749, %v1749
      %v1798 = vpack.c.bf16 %v1750, %v1750
      %v1799 = vpack.c.bf16 %v1751, %v1751
      %v1800 = vpack.c.bf16 %v1752, %v1752
      %v1801 = vpack.c.bf16 %v1753, %v1753
      %v1802 = vpack.c.bf16 %v1754, %v1754
      %v1803 = vpack.c.bf16 %v1755, %v1755
      %v1804 = vpack.c.bf16 %v1756, %v1756
      %v1805 = vpack.c.bf16 %v1757, %v1757
      %v1806 = vpack.c.bf16 %v1758, %v1758
      %v1807 = vpack.c.bf16 %v1759, %v1759
      %v1808 = vpack.c.bf16 %v1760, %v1760
      %v1809 = vpack.c.bf16 %v1761, %v1761
      %v1810 = vpack.c.bf16 %v1762, %v1762
      %v1811 = vpack.c.bf16 %v1763, %v1763
      %v1812 = vpack.c.bf16 %v1764, %v1764
      %v1813 = vpack.c.bf16 %v1765, %v1765
      %v1814 = vpack.c.bf16 %v1766, %v1766
      %v1815 = vpack.c.bf16 %v1767, %v1767
      %v1816 = vpack.c.bf16 %v1768, %v1768
      %v1817 = vpack.c.bf16 %v1769, %v1769
      %v1818 = vpack.c.bf16 %v1770, %v1770
      %v1819 = vpack.c.bf16 %v1771, %v1771
      %v1820 = vpack.c.bf16 %v1772, %v1772
      %v1821 = vpack.c.bf16 %v1773, %v1773
      %v1822 = vpack.c.bf16 %v1774, %v1774
      %v1823 = vpack.c.bf16 %v1775, %v1775
      %v1824 = vpack.c.bf16 %v1776, %v1776
      %v1825 = vpack.c.bf16 %v1777, %v1777
      %v1826 = vpack.c.bf16 %v1778, %v1778
      %v1827 = vpack.c.bf16 %v1779, %v1779
      %v1828 = vpack.c.bf16 %v1780, %v1780
      %v1829 = vpack.c.bf16 %v1781, %v1781
      %v1830 = vpack.c.bf16 %v1782, %v1782
      %v1831 = vpack.c.bf16 %v1783, %v1783
      %v1880 = vrot.slane %v1784, 2
      %v1881 = vrot.slane %v1785, 2
      %v1882 = vrot.slane %v1786, 2
      %v1883 = vrot.slane %v1787, 2
      %v1884 = vrot.slane %v1788, 2
      %v1885 = vrot.slane %v1789, 2
      %v1886 = vrot.slane %v1790, 2
      %v1887 = vrot.slane %v1791, 2
      %v1888 = vrot.slane %v1792, 2
      %v1889 = vrot.slane %v1793, 2
      %v1890 = vrot.slane %v1794, 2
      %v1891 = vrot.slane %v1795, 2
      %v1892 = vrot.slane %v1796, 2
      %v1893 = vrot.slane %v1797, 2
      %v1894 = vrot.slane %v1798, 2
      %v1895 = vrot.slane %v1799, 2
      %v1896 = vrot.slane %v1800, 2
      %v1897 = vrot.slane %v1801, 2
      %v1898 = vrot.slane %v1802, 2
      %v1899 = vrot.slane %v1803, 2
      %v1900 = vrot.slane %v1804, 2
      %v1901 = vrot.slane %v1805, 2
      %v1902 = vrot.slane %v1806, 2
      %v1903 = vrot.slane %v1807, 2
      %v1904 = vrot.slane %v1808, 2
      %v1905 = vrot.slane %v1809, 2
      %v1906 = vrot.slane %v1810, 2
      %v1907 = vrot.slane %v1811, 2
      %v1908 = vrot.slane %v1812, 2
      %v1909 = vrot.slane %v1813, 2
      %v1910 = vrot.slane %v1814, 2
      %v1911 = vrot.slane %v1815, 2
      %v1912 = vrot.slane %v1816, 2
      %v1913 = vrot.slane %v1817, 2
      %v1914 = vrot.slane %v1818, 2
      %v1915 = vrot.slane %v1819, 2
      %v1916 = vrot.slane %v1820, 2
      %v1917 = vrot.slane %v1821, 2
      %v1918 = vrot.slane %v1822, 2
      %v1919 = vrot.slane %v1823, 2
      %v1920 = vrot.slane %v1824, 2
      %v1921 = vrot.slane %v1825, 2
      %v1922 = vrot.slane %v1826, 2
      %v1923 = vrot.slane %v1827, 2
      %v1924 = vrot.slane %v1828, 2
      %v1925 = vrot.slane %v1829, 2
      %v1926 = vrot.slane %v1830, 2
      %v1927 = vrot.slane %v1831, 2
      %v1930 = vsel %vm582, %v1784, %v1880
      %v1931 = vsel %vm586, %v1784, %v1880
      %v1933 = vrot.slane %v1931, 2
      %v1936 = vsel %vm582, %v1785, %v1881
      %v1937 = vsel %vm586, %v1785, %v1881
      %v1939 = vrot.slane %v1937, 2
      %v1942 = vsel %vm582, %v1786, %v1882
      %v1945 = vsel %vm582, %v1787, %v1883
      %v1946 = vsel %vm586, %v1787, %v1883
      %v1948 = vrot.slane %v1946, 2
      %v1951 = vsel %vm582, %v1788, %v1884
      %v1952 = vsel %vm586, %v1788, %v1884
      %v1954 = vrot.slane %v1952, 2
      %v1957 = vsel %vm582, %v1789, %v1885
      %v1960 = vsel %vm582, %v1790, %v1886
      %v1961 = vsel %vm586, %v1790, %v1886
      %v1963 = vrot.slane %v1961, 2
      %v1966 = vsel %vm582, %v1791, %v1887
      %v1967 = vsel %vm586, %v1791, %v1887
      %v1969 = vrot.slane %v1967, 2
      %v1972 = vsel %vm582, %v1792, %v1888
      %v1975 = vsel %vm582, %v1793, %v1889
      %v1976 = vsel %vm586, %v1793, %v1889
      %v1978 = vrot.slane %v1976, 2
      %v1981 = vsel %vm582, %v1794, %v1890
      %v1982 = vsel %vm586, %v1794, %v1890
      %v1984 = vrot.slane %v1982, 2
      %v1987 = vsel %vm582, %v1795, %v1891
      %v1990 = vsel %vm582, %v1796, %v1892
      %v1991 = vsel %vm586, %v1796, %v1892
      %v1993 = vrot.slane %v1991, 2
      %v1996 = vsel %vm582, %v1797, %v1893
      %v1997 = vsel %vm586, %v1797, %v1893
      %v1999 = vrot.slane %v1997, 2
      %v2002 = vsel %vm582, %v1798, %v1894
      %v2005 = vsel %vm582, %v1799, %v1895
      %v2006 = vsel %vm586, %v1799, %v1895
      %v2008 = vrot.slane %v2006, 2
      %v2011 = vsel %vm582, %v1800, %v1896
      %v2012 = vsel %vm586, %v1800, %v1896
      %v2014 = vrot.slane %v2012, 2
      %v2017 = vsel %vm582, %v1801, %v1897
      %v2020 = vsel %vm582, %v1802, %v1898
      %v2021 = vsel %vm586, %v1802, %v1898
      %v2023 = vrot.slane %v2021, 2
      %v2026 = vsel %vm582, %v1803, %v1899
      %v2027 = vsel %vm586, %v1803, %v1899
      %v2029 = vrot.slane %v2027, 2
      %v2032 = vsel %vm582, %v1804, %v1900
      %v2035 = vsel %vm582, %v1805, %v1901
      %v2036 = vsel %vm586, %v1805, %v1901
      %v2038 = vrot.slane %v2036, 2
      %v2041 = vsel %vm582, %v1806, %v1902
      %v2042 = vsel %vm586, %v1806, %v1902
      %v2044 = vrot.slane %v2042, 2
      %v2047 = vsel %vm582, %v1807, %v1903
      %v2050 = vsel %vm582, %v1808, %v1904
      %v2051 = vsel %vm586, %v1808, %v1904
      %v2053 = vrot.slane %v2051, 2
      %v2056 = vsel %vm582, %v1809, %v1905
      %v2057 = vsel %vm586, %v1809, %v1905
      %v2059 = vrot.slane %v2057, 2
      %v2062 = vsel %vm582, %v1810, %v1906
      %v2065 = vsel %vm582, %v1811, %v1907
      %v2066 = vsel %vm586, %v1811, %v1907
      %v2068 = vrot.slane %v2066, 2
      %v2071 = vsel %vm582, %v1812, %v1908
      %v2072 = vsel %vm586, %v1812, %v1908
      %v2074 = vrot.slane %v2072, 2
      %v2077 = vsel %vm582, %v1813, %v1909
      %v2080 = vsel %vm582, %v1814, %v1910
      %v2081 = vsel %vm586, %v1814, %v1910
      %v2083 = vrot.slane %v2081, 2
      %v2086 = vsel %vm582, %v1815, %v1911
      %v2087 = vsel %vm586, %v1815, %v1911
      %v2089 = vrot.slane %v2087, 2
      %v2092 = vsel %vm582, %v1816, %v1912
      %v2095 = vsel %vm582, %v1817, %v1913
      %v2096 = vsel %vm586, %v1817, %v1913
      %v2098 = vrot.slane %v2096, 2
      %v2101 = vsel %vm582, %v1818, %v1914
      %v2102 = vsel %vm586, %v1818, %v1914
      %v2104 = vrot.slane %v2102, 2
      %v2107 = vsel %vm582, %v1819, %v1915
      %v2110 = vsel %vm582, %v1820, %v1916
      %v2111 = vsel %vm586, %v1820, %v1916
      %v2113 = vrot.slane %v2111, 2
      %v2116 = vsel %vm582, %v1821, %v1917
      %v2117 = vsel %vm586, %v1821, %v1917
      %v2119 = vrot.slane %v2117, 2
      %v2122 = vsel %vm582, %v1822, %v1918
      %v2125 = vsel %vm582, %v1823, %v1919
      %v2126 = vsel %vm586, %v1823, %v1919
      %v2128 = vrot.slane %v2126, 2
      %v2131 = vsel %vm582, %v1824, %v1920
      %v2132 = vsel %vm586, %v1824, %v1920
      %v2134 = vrot.slane %v2132, 2
      %v2137 = vsel %vm582, %v1825, %v1921
      %v2140 = vsel %vm582, %v1826, %v1922
      %v2141 = vsel %vm586, %v1826, %v1922
      %v2143 = vrot.slane %v2141, 2
      %v2146 = vsel %vm582, %v1827, %v1923
      %v2147 = vsel %vm586, %v1827, %v1923
      %v2149 = vrot.slane %v2147, 2
      %v2152 = vsel %vm582, %v1828, %v1924
      %v2155 = vsel %vm582, %v1829, %v1925
      %v2156 = vsel %vm586, %v1829, %v1925
      %v2158 = vrot.slane %v2156, 2
      %v2161 = vsel %vm582, %v1830, %v1926
      %v2162 = vsel %vm586, %v1830, %v1926
      %v2164 = vrot.slane %v2162, 2
      %v2167 = vsel %vm582, %v1831, %v1927
      %2168 = vst [vmem:[#allocation1] ss:$2 sm:$0xff] %v1930
      %s2170 = scalar_lea.vmem [#allocation1], 1
      %2171 = vst [vmem:[%s2170] ss:$2 sm:$0xff] %v1933
      %s2172 = scalar_lea.vmem [#allocation1], 16
      %2173 = vst [vmem:[%s2172] ss:$2 sm:$0xff] %v1936
      %s2175 = scalar_lea.vmem [#allocation1], 17
      %2176 = vst [vmem:[%s2175] ss:$2 sm:$0xff] %v1939
      %s2177 = scalar_lea.vmem [#allocation1], 32
      %2178 = vst [vmem:[%s2177] ss:$2 sm:$0xff] %v1942
      %s2179 = scalar_lea.vmem [#allocation1], 33
      %2180 = vst [vmem:[%s2179] ss:$2 sm:$0xff] %v1945
      %s2182 = scalar_lea.vmem [#allocation1], 48
      %2183 = vst [vmem:[%s2182] ss:$2 sm:$0xff] %v1948
      %s2184 = scalar_lea.vmem [#allocation1], 49
      %2185 = vst [vmem:[%s2184] ss:$2 sm:$0xff] %v1951
      %v2186 = vld.sshfl [vmem:[#allocation1] sm:$0xff pattern:$0x75643120]
      %v2187 = vld.sshfl [vmem:[#allocation1 + $0x10] sm:$0xff pattern:$0x75643120]
      %v2188 = vld.sshfl [vmem:[#allocation1 + $0x20] sm:$0xff pattern:$0x75643120]
      %v2189 = vld.sshfl [vmem:[#allocation1 + $0x30] sm:$0xff pattern:$0x75643120]
      %2191 = vst [vmem:[#allocation1] ss:$2 sm:$0xff] %v1954
      %2192 = vst [vmem:[%s2170] ss:$2 sm:$0xff] %v1957
      %2193 = vst [vmem:[%s2172] ss:$2 sm:$0xff] %v1960
      %2195 = vst [vmem:[%s2175] ss:$2 sm:$0xff] %v1963
      %2196 = vst [vmem:[%s2177] ss:$2 sm:$0xff] %v1966
      %2198 = vst [vmem:[%s2179] ss:$2 sm:$0xff] %v1969
      %2199 = vst [vmem:[%s2182] ss:$2 sm:$0xff] %v1972
      %2200 = vst [vmem:[%s2184] ss:$2 sm:$0xff] %v1975
      %v2201 = vld.sshfl [vmem:[#allocation1] sm:$0xff pattern:$0x75643120]
      %v2202 = vld.sshfl [vmem:[#allocation1 + $0x10] sm:$0xff pattern:$0x75643120]
      %v2203 = vld.sshfl [vmem:[#allocation1 + $0x20] sm:$0xff pattern:$0x75643120]
      %v2204 = vld.sshfl [vmem:[#allocation1 + $0x30] sm:$0xff pattern:$0x75643120]
      %2206 = vst [vmem:[#allocation1] ss:$2 sm:$0xff] %v1978
      %2207 = vst [vmem:[%s2170] ss:$2 sm:$0xff] %v1981
      %2209 = vst [vmem:[%s2172] ss:$2 sm:$0xff] %v1984
      %2210 = vst [vmem:[%s2175] ss:$2 sm:$0xff] %v1987
      %2211 = vst [vmem:[%s2177] ss:$2 sm:$0xff] %v1990
      %2213 = vst [vmem:[%s2179] ss:$2 sm:$0xff] %v1993
      %2214 = vst [vmem:[%s2182] ss:$2 sm:$0xff] %v1996
      %2216 = vst [vmem:[%s2184] ss:$2 sm:$0xff] %v1999
      %v2217 = vld.sshfl [vmem:[#allocation1] sm:$0xff pattern:$0x75643120]
      %v2218 = vld.sshfl [vmem:[#allocation1 + $0x10] sm:$0xff pattern:$0x75643120]
      %v2219 = vld.sshfl [vmem:[#allocation1 + $0x20] sm:$0xff pattern:$0x75643120]
      %v2220 = vld.sshfl [vmem:[#allocation1 + $0x30] sm:$0xff pattern:$0x75643120]
      %2221 = vst [vmem:[#allocation1] ss:$2 sm:$0xff] %v2002
      %2222 = vst [vmem:[%s2170] ss:$2 sm:$0xff] %v2005
      %2224 = vst [vmem:[%s2172] ss:$2 sm:$0xff] %v2008
      %2225 = vst [vmem:[%s2175] ss:$2 sm:$0xff] %v2011
      %2227 = vst [vmem:[%s2177] ss:$2 sm:$0xff] %v2014
      %2228 = vst [vmem:[%s2179] ss:$2 sm:$0xff] %v2017
      %2229 = vst [vmem:[%s2182] ss:$2 sm:$0xff] %v2020
      %2231 = vst [vmem:[%s2184] ss:$2 sm:$0xff] %v2023
      %v2232 = vld.sshfl [vmem:[#allocation1] sm:$0xff pattern:$0x75643120]
      %v2233 = vld.sshfl [vmem:[#allocation1 + $0x10] sm:$0xff pattern:$0x75643120]
      %v2234 = vld.sshfl [vmem:[#allocation1 + $0x20] sm:$0xff pattern:$0x75643120]
      %v2235 = vld.sshfl [vmem:[#allocation1 + $0x30] sm:$0xff pattern:$0x75643120]
      %2236 = vst [vmem:[#allocation1] ss:$2 sm:$0xff] %v2026
      %2238 = vst [vmem:[%s2170] ss:$2 sm:$0xff] %v2029
      %2239 = vst [vmem:[%s2172] ss:$2 sm:$0xff] %v2032
      %2240 = vst [vmem:[%s2175] ss:$2 sm:$0xff] %v2035
      %2242 = vst [vmem:[%s2177] ss:$2 sm:$0xff] %v2038
      %2243 = vst [vmem:[%s2179] ss:$2 sm:$0xff] %v2041
      %2245 = vst [vmem:[%s2182] ss:$2 sm:$0xff] %v2044
      %2246 = vst [vmem:[%s2184] ss:$2 sm:$0xff] %v2047
      %v2247 = vld.sshfl [vmem:[#allocation1] sm:$0xff pattern:$0x75643120]
      %v2248 = vld.sshfl [vmem:[#allocation1 + $0x10] sm:$0xff pattern:$0x75643120]
      %v2249 = vld.sshfl [vmem:[#allocation1 + $0x20] sm:$0xff pattern:$0x75643120]
      %v2250 = vld.sshfl [vmem:[#allocation1 + $0x30] sm:$0xff pattern:$0x75643120]
      %2251 = vst [vmem:[#allocation1] ss:$2 sm:$0xff] %v2050
      %2253 = vst [vmem:[%s2170] ss:$2 sm:$0xff] %v2053
      %2254 = vst [vmem:[%s2172] ss:$2 sm:$0xff] %v2056
      %2256 = vst [vmem:[%s2175] ss:$2 sm:$0xff] %v2059
      %2257 = vst [vmem:[%s2177] ss:$2 sm:$0xff] %v2062
      %2258 = vst [vmem:[%s2179] ss:$2 sm:$0xff] %v2065
      %2260 = vst [vmem:[%s2182] ss:$2 sm:$0xff] %v2068
      %2261 = vst [vmem:[%s2184] ss:$2 sm:$0xff] %v2071
      %v2262 = vld.sshfl [vmem:[#allocation1] sm:$0xff pattern:$0x75643120]
      %v2263 = vld.sshfl [vmem:[#allocation1 + $0x10] sm:$0xff pattern:$0x75643120]
      %v2264 = vld.sshfl [vmem:[#allocation1 + $0x20] sm:$0xff pattern:$0x75643120]
      %v2265 = vld.sshfl [vmem:[#allocation1 + $0x30] sm:$0xff pattern:$0x75643120]
      %2267 = vst [vmem:[#allocation1] ss:$2 sm:$0xff] %v2074
      %2268 = vst [vmem:[%s2170] ss:$2 sm:$0xff] %v2077
      %2269 = vst [vmem:[%s2172] ss:$2 sm:$0xff] %v2080
      %2271 = vst [vmem:[%s2175] ss:$2 sm:$0xff] %v2083
      %2272 = vst [vmem:[%s2177] ss:$2 sm:$0xff] %v2086
      %2274 = vst [vmem:[%s2179] ss:$2 sm:$0xff] %v2089
      %2275 = vst [vmem:[%s2182] ss:$2 sm:$0xff] %v2092
      %2276 = vst [vmem:[%s2184] ss:$2 sm:$0xff] %v2095
      %v2277 = vld.sshfl [vmem:[#allocation1] sm:$0xff pattern:$0x75643120]
      %v2278 = vld.sshfl [vmem:[#allocation1 + $0x10] sm:$0xff pattern:$0x75643120]
      %v2279 = vld.sshfl [vmem:[#allocation1 + $0x20] sm:$0xff pattern:$0x75643120]
      %v2280 = vld.sshfl [vmem:[#allocation1 + $0x30] sm:$0xff pattern:$0x75643120]
      %2282 = vst [vmem:[#allocation1] ss:$2 sm:$0xff] %v2098
      %2283 = vst [vmem:[%s2170] ss:$2 sm:$0xff] %v2101
      %2285 = vst [vmem:[%s2172] ss:$2 sm:$0xff] %v2104
      %2286 = vst [vmem:[%s2175] ss:$2 sm:$0xff] %v2107
      %2287 = vst [vmem:[%s2177] ss:$2 sm:$0xff] %v2110
      %2289 = vst [vmem:[%s2179] ss:$2 sm:$0xff] %v2113
      %2290 = vst [vmem:[%s2182] ss:$2 sm:$0xff] %v2116
      %2292 = vst [vmem:[%s2184] ss:$2 sm:$0xff] %v2119
      %v2293 = vld.sshfl [vmem:[#allocation1] sm:$0xff pattern:$0x75643120]
      %v2294 = vld.sshfl [vmem:[#allocation1 + $0x10] sm:$0xff pattern:$0x75643120]
      %v2295 = vld.sshfl [vmem:[#allocation1 + $0x20] sm:$0xff pattern:$0x75643120]
      %v2296 = vld.sshfl [vmem:[#allocation1 + $0x30] sm:$0xff pattern:$0x75643120]
      %2297 = vst [vmem:[#allocation1] ss:$2 sm:$0xff] %v2122
      %2298 = vst [vmem:[%s2170] ss:$2 sm:$0xff] %v2125
      %2300 = vst [vmem:[%s2172] ss:$2 sm:$0xff] %v2128
      %2301 = vst [vmem:[%s2175] ss:$2 sm:$0xff] %v2131
      %2303 = vst [vmem:[%s2177] ss:$2 sm:$0xff] %v2134
      %2304 = vst [vmem:[%s2179] ss:$2 sm:$0xff] %v2137
      %2305 = vst [vmem:[%s2182] ss:$2 sm:$0xff] %v2140
      %2307 = vst [vmem:[%s2184] ss:$2 sm:$0xff] %v2143
      %v2308 = vld.sshfl [vmem:[#allocation1] sm:$0xff pattern:$0x75643120]
      %v2309 = vld.sshfl [vmem:[#allocation1 + $0x10] sm:$0xff pattern:$0x75643120]
      %v2310 = vld.sshfl [vmem:[#allocation1 + $0x20] sm:$0xff pattern:$0x75643120]
      %v2311 = vld.sshfl [vmem:[#allocation1 + $0x30] sm:$0xff pattern:$0x75643120]
      %2312 = vst [vmem:[#allocation1] ss:$2 sm:$0xff] %v2146
      %2314 = vst [vmem:[%s2170] ss:$2 sm:$0xff] %v2149
      %2315 = vst [vmem:[%s2172] ss:$2 sm:$0xff] %v2152
      %2316 = vst [vmem:[%s2175] ss:$2 sm:$0xff] %v2155
      %2318 = vst [vmem:[%s2177] ss:$2 sm:$0xff] %v2158
      %2319 = vst [vmem:[%s2179] ss:$2 sm:$0xff] %v2161
      %2321 = vst [vmem:[%s2182] ss:$2 sm:$0xff] %v2164
      %2322 = vst [vmem:[%s2184] ss:$2 sm:$0xff] %v2167
      %v2323 = vld.sshfl [vmem:[#allocation1] sm:$0xff pattern:$0x75643120]
      %v2324 = vld.sshfl [vmem:[#allocation1 + $0x10] sm:$0xff pattern:$0x75643120]
      %v2325 = vld.sshfl [vmem:[#allocation1 + $0x20] sm:$0xff pattern:$0x75643120]
      %v2326 = vld.sshfl [vmem:[#allocation1 + $0x30] sm:$0xff pattern:$0x75643120]
      %2367 = vst [vmem:[#allocation4 + $0x8] sm:$0xf] %v2186
      %2368 = vst [vmem:[#allocation4 + $0x14] sm:$0xf] %v2187
      %2369 = vst [vmem:[#allocation4 + $0x20] sm:$0xf] %v2188
      %2370 = vst [vmem:[#allocation4 + $0x2c] sm:$0xf] %v2189
      %2371 = vst [vmem:[#allocation4 + $0x38] sm:$0xf] %v2201
      %2372 = vst [vmem:[#allocation4 + $0x44] sm:$0xf] %v2202
      %2373 = vst [vmem:[#allocation4 + $0x50] sm:$0xf] %v2203
      %2374 = vst [vmem:[#allocation4 + $0x5c] sm:$0xf] %v2204
      %2375 = vst [vmem:[#allocation4 + $0x68] sm:$0xf] %v2217
      %2376 = vst [vmem:[#allocation4 + $0x74] sm:$0xf] %v2218
      %2377 = vst [vmem:[#allocation4 + $0x80] sm:$0xf] %v2219
      %2378 = vst [vmem:[#allocation4 + $0x8c] sm:$0xf] %v2220
      %2379 = vst [vmem:[#allocation4 + $0x98] sm:$0xf] %v2232
      %2380 = vst [vmem:[#allocation4 + $0xa4] sm:$0xf] %v2233
      %2381 = vst [vmem:[#allocation4 + $0xb0] sm:$0xf] %v2234
      %2382 = vst [vmem:[#allocation4 + $0xbc] sm:$0xf] %v2235
      %2383 = vst [vmem:[#allocation4 + $0xc8] sm:$0xf] %v2247
      %2384 = vst [vmem:[#allocation4 + $0xd4] sm:$0xf] %v2248
      %2385 = vst [vmem:[#allocation4 + $0xe0] sm:$0xf] %v2249
      %2386 = vst [vmem:[#allocation4 + $0xec] sm:$0xf] %v2250
      %2387 = vst [vmem:[#allocation4 + $0xf8] sm:$0xf] %v2262
      %2388 = vst [vmem:[#allocation4 + $0x104] sm:$0xf] %v2263
      %2389 = vst [vmem:[#allocation4 + $0x110] sm:$0xf] %v2264
      %2390 = vst [vmem:[#allocation4 + $0x11c] sm:$0xf] %v2265
      %2391 = vst [vmem:[#allocation4 + $0x128] sm:$0xf] %v2277
      %2392 = vst [vmem:[#allocation4 + $0x134] sm:$0xf] %v2278
      %2393 = vst [vmem:[#allocation4 + $0x140] sm:$0xf] %v2279
      %2394 = vst [vmem:[#allocation4 + $0x14c] sm:$0xf] %v2280
      %2395 = vst [vmem:[#allocation4 + $0x158] sm:$0xf] %v2293
      %2396 = vst [vmem:[#allocation4 + $0x164] sm:$0xf] %v2294
      %2397 = vst [vmem:[#allocation4 + $0x170] sm:$0xf] %v2295
      %2398 = vst [vmem:[#allocation4 + $0x17c] sm:$0xf] %v2296
      %2399 = vst [vmem:[#allocation4 + $0x188] sm:$0xf] %v2308
      %2400 = vst [vmem:[#allocation4 + $0x194] sm:$0xf] %v2309
      %2401 = vst [vmem:[#allocation4 + $0x1a0] sm:$0xf] %v2310
      %2402 = vst [vmem:[#allocation4 + $0x1ac] sm:$0xf] %v2311
      %2403 = vst [vmem:[#allocation4 + $0x1b8] sm:$0xf] %v2323
      %2404 = vst [vmem:[#allocation4 + $0x1c4] sm:$0xf] %v2324
      %2405 = vst [vmem:[#allocation4 + $0x1d0] sm:$0xf] %v2325
      %2406 = vst [vmem:[#allocation4 + $0x1dc] sm:$0xf] %v2326
      %v2407 = vld [vmem:[#allocation4] sm:$0xff]
      %v2408 = vld [vmem:[#allocation4 + $0x8] sm:$0xf]
      %v2409 = vld [vmem:[#allocation4 + $0xc] sm:$0xff]
      %v2410 = vld [vmem:[#allocation4 + $0x14] sm:$0xf]
      %v2411 = vld [vmem:[#allocation4 + $0x18] sm:$0xff]
      %v2412 = vld [vmem:[#allocation4 + $0x20] sm:$0xf]
      %v2413 = vld [vmem:[#allocation4 + $0x24] sm:$0xff]
      %v2414 = vld [vmem:[#allocation4 + $0x2c] sm:$0xf]
      %v2415 = vld [vmem:[#allocation4 + $0x30] sm:$0xff]
      %v2416 = vld [vmem:[#allocation4 + $0x38] sm:$0xf]
      %v2417 = vld [vmem:[#allocation4 + $0x3c] sm:$0xff]
      %v2418 = vld [vmem:[#allocation4 + $0x44] sm:$0xf]
      %v2419 = vld [vmem:[#allocation4 + $0x48] sm:$0xff]
      %v2420 = vld [vmem:[#allocation4 + $0x50] sm:$0xf]
      %v2421 = vld [vmem:[#allocation4 + $0x54] sm:$0xff]
      %v2422 = vld [vmem:[#allocation4 + $0x5c] sm:$0xf]
      %v2423 = vld [vmem:[#allocation4 + $0x60] sm:$0xff]
      %v2424 = vld [vmem:[#allocation4 + $0x68] sm:$0xf]
      %v2425 = vld [vmem:[#allocation4 + $0x6c] sm:$0xff]
      %v2426 = vld [vmem:[#allocation4 + $0x74] sm:$0xf]
      %v2427 = vld [vmem:[#allocation4 + $0x78] sm:$0xff]
      %v2428 = vld [vmem:[#allocation4 + $0x80] sm:$0xf]
      %v2429 = vld [vmem:[#allocation4 + $0x84] sm:$0xff]
      %v2430 = vld [vmem:[#allocation4 + $0x8c] sm:$0xf]
      %v2431 = vld [vmem:[#allocation4 + $0x90] sm:$0xff]
      %v2432 = vld [vmem:[#allocation4 + $0x98] sm:$0xf]
      %v2433 = vld [vmem:[#allocation4 + $0x9c] sm:$0xff]
      %v2434 = vld [vmem:[#allocation4 + $0xa4] sm:$0xf]
      %v2435 = vld [vmem:[#allocation4 + $0xa8] sm:$0xff]
      %v2436 = vld [vmem:[#allocation4 + $0xb0] sm:$0xf]
      %v2437 = vld [vmem:[#allocation4 + $0xb4] sm:$0xff]
      %v2438 = vld [vmem:[#allocation4 + $0xbc] sm:$0xf]
      %v2439 = vld [vmem:[#allocation4 + $0xc0] sm:$0xff]
      %v2440 = vld [vmem:[#allocation4 + $0xc8] sm:$0xf]
      %v2441 = vld [vmem:[#allocation4 + $0xcc] sm:$0xff]
      %v2442 = vld [vmem:[#allocation4 + $0xd4] sm:$0xf]
      %v2443 = vld [vmem:[#allocation4 + $0xd8] sm:$0xff]
      %v2444 = vld [vmem:[#allocation4 + $0xe0] sm:$0xf]
      %v2445 = vld [vmem:[#allocation4 + $0xe4] sm:$0xff]
      %v2446 = vld [vmem:[#allocation4 + $0xec] sm:$0xf]
      %v2447 = vld [vmem:[#allocation4 + $0xf0] sm:$0xff]
      %v2448 = vld [vmem:[#allocation4 + $0xf8] sm:$0xf]
      %v2449 = vld [vmem:[#allocation4 + $0xfc] sm:$0xff]
      %v2450 = vld [vmem:[#allocation4 + $0x104] sm:$0xf]
      %v2451 = vld [vmem:[#allocation4 + $0x108] sm:$0xff]
      %v2452 = vld [vmem:[#allocation4 + $0x110] sm:$0xf]
      %v2453 = vld [vmem:[#allocation4 + $0x114] sm:$0xff]
      %v2454 = vld [vmem:[#allocation4 + $0x11c] sm:$0xf]
      %v2455 = vld [vmem:[#allocation4 + $0x120] sm:$0xff]
      %v2456 = vld [vmem:[#allocation4 + $0x128] sm:$0xf]
      %v2457 = vld [vmem:[#allocation4 + $0x12c] sm:$0xff]
      %v2458 = vld [vmem:[#allocation4 + $0x134] sm:$0xf]
      %v2459 = vld [vmem:[#allocation4 + $0x138] sm:$0xff]
      %v2460 = vld [vmem:[#allocation4 + $0x140] sm:$0xf]
      %v2461 = vld [vmem:[#allocation4 + $0x144] sm:$0xff]
      %v2462 = vld [vmem:[#allocation4 + $0x14c] sm:$0xf]
      %v2463 = vld [vmem:[#allocation4 + $0x150] sm:$0xff]
      %v2464 = vld [vmem:[#allocation4 + $0x158] sm:$0xf]
      %v2465 = vld [vmem:[#allocation4 + $0x15c] sm:$0xff]
      %v2466 = vld [vmem:[#allocation4 + $0x164] sm:$0xf]
      %v2467 = vld [vmem:[#allocation4 + $0x168] sm:$0xff]
      %v2468 = vld [vmem:[#allocation4 + $0x170] sm:$0xf]
      %v2469 = vld [vmem:[#allocation4 + $0x174] sm:$0xff]
      %v2470 = vld [vmem:[#allocation4 + $0x17c] sm:$0xf]
      %v2471 = vld [vmem:[#allocation4 + $0x180] sm:$0xff]
      %v2472 = vld [vmem:[#allocation4 + $0x188] sm:$0xf]
      %v2473 = vld [vmem:[#allocation4 + $0x18c] sm:$0xff]
      %v2474 = vld [vmem:[#allocation4 + $0x194] sm:$0xf]
      %v2475 = vld [vmem:[#allocation4 + $0x198] sm:$0xff]
      %v2476 = vld [vmem:[#allocation4 + $0x1a0] sm:$0xf]
      %v2477 = vld [vmem:[#allocation4 + $0x1a4] sm:$0xff]
      %v2478 = vld [vmem:[#allocation4 + $0x1ac] sm:$0xf]
      %v2479 = vld [vmem:[#allocation4 + $0x1b0] sm:$0xff]
      %v2480 = vld [vmem:[#allocation4 + $0x1b8] sm:$0xf]
      %v2481 = vld [vmem:[#allocation4 + $0x1bc] sm:$0xff]
      %v2482 = vld [vmem:[#allocation4 + $0x1c4] sm:$0xf]
      %v2483 = vld [vmem:[#allocation4 + $0x1c8] sm:$0xff]
      %v2484 = vld [vmem:[#allocation4 + $0x1d0] sm:$0xf]
      %v2485 = vld [vmem:[#allocation4 + $0x1d4] sm:$0xff]
      %v2486 = vld [vmem:[#allocation4 + $0x1dc] sm:$0xf]
      %s2487 = smul.u32 %s21, 144
      %s2488 = smul.addr %s2487, 4
      %s2489 = scalar_lea.vmem %s1, %s2488
      %v2490 = vld [vmem:[%s2489] sm:$0xf]
      %v2491 = vld [vmem:[%s2489 + $0x4] sm:$0xf]
      %v2492 = vld [vmem:[%s2489 + $0x8] sm:$0xf]
      %v2493 = vld [vmem:[%s2489 + $0xc] sm:$0xf]
      %v2494 = vld [vmem:[%s2489 + $0x10] sm:$0xf]
      %v2495 = vld [vmem:[%s2489 + $0x14] sm:$0xf]
      %v2496 = vld [vmem:[%s2489 + $0x18] sm:$0xf]
      %v2497 = vld [vmem:[%s2489 + $0x1c] sm:$0xf]
      %v2498 = vld [vmem:[%s2489 + $0x20] sm:$0xf]
      %v2499 = vld [vmem:[%s2489 + $0x24] sm:$0xf]
      %v2500 = vld [vmem:[%s2489 + $0x28] sm:$0xf]
      %v2501 = vld [vmem:[%s2489 + $0x2c] sm:$0xf]
      %v2502 = vld [vmem:[%s2489 + $0x30] sm:$0xf]
      %v2503 = vld [vmem:[%s2489 + $0x34] sm:$0xf]
      %v2504 = vld [vmem:[%s2489 + $0x38] sm:$0xf]
      %v2505 = vld [vmem:[%s2489 + $0x3c] sm:$0xf]
      %v2506 = vld [vmem:[%s2489 + $0x40] sm:$0xf]
      %v2507 = vld [vmem:[%s2489 + $0x44] sm:$0xf]
      %v2508 = vld [vmem:[%s2489 + $0x48] sm:$0xf]
      %v2509 = vld [vmem:[%s2489 + $0x4c] sm:$0xf]
      %v2510 = vld [vmem:[%s2489 + $0x50] sm:$0xf]
      %v2511 = vld [vmem:[%s2489 + $0x54] sm:$0xf]
      %v2512 = vld [vmem:[%s2489 + $0x58] sm:$0xf]
      %v2513 = vld [vmem:[%s2489 + $0x5c] sm:$0xf]
      %v2514 = vld [vmem:[%s2489 + $0x60] sm:$0xf]
      %v2515 = vld [vmem:[%s2489 + $0x64] sm:$0xf]
      %v2516 = vld [vmem:[%s2489 + $0x68] sm:$0xf]
      %v2517 = vld [vmem:[%s2489 + $0x6c] sm:$0xf]
      %v2518 = vld [vmem:[%s2489 + $0x70] sm:$0xf]
      %v2519 = vld [vmem:[%s2489 + $0x74] sm:$0xf]
      %v2520 = vld [vmem:[%s2489 + $0x78] sm:$0xf]
      %v2521 = vld [vmem:[%s2489 + $0x7c] sm:$0xf]
      %v2522 = vld [vmem:[%s2489 + $0x80] sm:$0xf]
      %v2523 = vld [vmem:[%s2489 + $0x84] sm:$0xf]
      %v2524 = vld [vmem:[%s2489 + $0x88] sm:$0xf]
      %v2525 = vld [vmem:[%s2489 + $0x8c] sm:$0xf]
      %v2526 = vld [vmem:[%s2489 + $0x90] sm:$0xf]
      %v2527 = vld [vmem:[%s2489 + $0x94] sm:$0xf]
      %v2528 = vld [vmem:[%s2489 + $0x98] sm:$0xf]
      %v2529 = vld [vmem:[%s2489 + $0x9c] sm:$0xf]
      %v2530 = vld [vmem:[%s2489 + $0xa0] sm:$0xf]
      %v2531 = vld [vmem:[%s2489 + $0xa4] sm:$0xf]
      %v2532 = vld [vmem:[%s2489 + $0xa8] sm:$0xf]
      %v2533 = vld [vmem:[%s2489 + $0xac] sm:$0xf]
      %v2534 = vld [vmem:[%s2489 + $0xb0] sm:$0xf]
      %v2535 = vld [vmem:[%s2489 + $0xb4] sm:$0xf]
      %v2536 = vld [vmem:[%s2489 + $0xb8] sm:$0xf]
      %v2537 = vld [vmem:[%s2489 + $0xbc] sm:$0xf]
      %v2538 = vld [vmem:[#allocation4] sm:$0xff]
      %v2539 = vld [vmem:[#allocation4 + $0x8] sm:$0xf]
      %v2540 = vld [vmem:[#allocation4 + $0xc] sm:$0xff]
      %v2541 = vld [vmem:[#allocation4 + $0x14] sm:$0xf]
      %v2542 = vld [vmem:[#allocation4 + $0x18] sm:$0xff]
      %v2543 = vld [vmem:[#allocation4 + $0x20] sm:$0xf]
      %v2544 = vld [vmem:[#allocation4 + $0x24] sm:$0xff]
      %v2545 = vld [vmem:[#allocation4 + $0x2c] sm:$0xf]
      %v2546 = vld [vmem:[#allocation4 + $0x30] sm:$0xff]
      %v2547 = vld [vmem:[#allocation4 + $0x38] sm:$0xf]
      %v2548 = vld [vmem:[#allocation4 + $0x3c] sm:$0xff]
      %v2549 = vld [vmem:[#allocation4 + $0x44] sm:$0xf]
      %v2550 = vld [vmem:[#allocation4 + $0x48] sm:$0xff]
      %v2551 = vld [vmem:[#allocation4 + $0x50] sm:$0xf]
      %v2552 = vld [vmem:[#allocation4 + $0x54] sm:$0xff]
      %v2553 = vld [vmem:[#allocation4 + $0x5c] sm:$0xf]
      %v2554 = vld [vmem:[#allocation4 + $0x60] sm:$0xff]
      %v2555 = vld [vmem:[#allocation4 + $0x68] sm:$0xf]
      %v2556 = vld [vmem:[#allocation4 + $0x6c] sm:$0xff]
      %v2557 = vld [vmem:[#allocation4 + $0x74] sm:$0xf]
      %v2558 = vld [vmem:[#allocation4 + $0x78] sm:$0xff]
      %v2559 = vld [vmem:[#allocation4 + $0x80] sm:$0xf]
      %v2560 = vld [vmem:[#allocation4 + $0x84] sm:$0xff]
      %v2561 = vld [vmem:[#allocation4 + $0x8c] sm:$0xf]
      %v2562 = vld [vmem:[#allocation4 + $0x90] sm:$0xff]
      %v2563 = vld [vmem:[#allocation4 + $0x98] sm:$0xf]
      %v2564 = vld [vmem:[#allocation4 + $0x9c] sm:$0xff]
      %v2565 = vld [vmem:[#allocation4 + $0xa4] sm:$0xf]
      %v2566 = vld [vmem:[#allocation4 + $0xa8] sm:$0xff]
      %v2567 = vld [vmem:[#allocation4 + $0xb0] sm:$0xf]
      %v2568 = vld [vmem:[#allocation4 + $0xb4] sm:$0xff]
      %v2569 = vld [vmem:[#allocation4 + $0xbc] sm:$0xf]
      %v2570 = vld [vmem:[#allocation4 + $0xc0] sm:$0xff]
      %v2571 = vld [vmem:[#allocation4 + $0xc8] sm:$0xf]
      %v2572 = vld [vmem:[#allocation4 + $0xcc] sm:$0xff]
      %v2573 = vld [vmem:[#allocation4 + $0xd4] sm:$0xf]
      %v2574 = vld [vmem:[#allocation4 + $0xd8] sm:$0xff]
      %v2575 = vld [vmem:[#allocation4 + $0xe0] sm:$0xf]
      %v2576 = vld [vmem:[#allocation4 + $0xe4] sm:$0xff]
      %v2577 = vld [vmem:[#allocation4 + $0xec] sm:$0xf]
      %v2578 = vld [vmem:[#allocation4 + $0xf0] sm:$0xff]
      %v2579 = vld [vmem:[#allocation4 + $0xf8] sm:$0xf]
      %v2580 = vld [vmem:[#allocation4 + $0xfc] sm:$0xff]
      %v2581 = vld [vmem:[#allocation4 + $0x104] sm:$0xf]
      %v2582 = vld [vmem:[#allocation4 + $0x108] sm:$0xff]
      %v2583 = vld [vmem:[#allocation4 + $0x110] sm:$0xf]
      %v2584 = vld [vmem:[#allocation4 + $0x114] sm:$0xff]
      %v2585 = vld [vmem:[#allocation4 + $0x11c] sm:$0xf]
      %v2586 = vld [vmem:[#allocation4 + $0x120] sm:$0xff]
      %v2587 = vld [vmem:[#allocation4 + $0x128] sm:$0xf]
      %v2588 = vld [vmem:[#allocation4 + $0x12c] sm:$0xff]
      %v2589 = vld [vmem:[#allocation4 + $0x134] sm:$0xf]
      %v2590 = vld [vmem:[#allocation4 + $0x138] sm:$0xff]
      %v2591 = vld [vmem:[#allocation4 + $0x140] sm:$0xf]
      %v2592 = vld [vmem:[#allocation4 + $0x144] sm:$0xff]
      %v2593 = vld [vmem:[#allocation4 + $0x14c] sm:$0xf]
      %v2594 = vld [vmem:[#allocation4 + $0x150] sm:$0xff]
      %v2595 = vld [vmem:[#allocation4 + $0x158] sm:$0xf]
      %v2596 = vld [vmem:[#allocation4 + $0x15c] sm:$0xff]
      %v2597 = vld [vmem:[#allocation4 + $0x164] sm:$0xf]
      %v2598 = vld [vmem:[#allocation4 + $0x168] sm:$0xff]
      %v2599 = vld [vmem:[#allocation4 + $0x170] sm:$0xf]
      %v2600 = vld [vmem:[#allocation4 + $0x174] sm:$0xff]
      %v2601 = vld [vmem:[#allocation4 + $0x17c] sm:$0xf]
      %v2602 = vld [vmem:[#allocation4 + $0x180] sm:$0xff]
      %v2603 = vld [vmem:[#allocation4 + $0x188] sm:$0xf]
      %v2604 = vld [vmem:[#allocation4 + $0x18c] sm:$0xff]
      %v2605 = vld [vmem:[#allocation4 + $0x194] sm:$0xf]
      %v2606 = vld [vmem:[#allocation4 + $0x198] sm:$0xff]
      %v2607 = vld [vmem:[#allocation4 + $0x1a0] sm:$0xf]
      %v2608 = vld [vmem:[#allocation4 + $0x1a4] sm:$0xff]
      %v2609 = vld [vmem:[#allocation4 + $0x1ac] sm:$0xf]
      %v2610 = vld [vmem:[#allocation4 + $0x1b0] sm:$0xff]
      %v2611 = vld [vmem:[#allocation4 + $0x1b8] sm:$0xf]
      %v2612 = vld [vmem:[#allocation4 + $0x1bc] sm:$0xff]
      %v2613 = vld [vmem:[#allocation4 + $0x1c4] sm:$0xf]
      %v2614 = vld [vmem:[#allocation4 + $0x1c8] sm:$0xff]
      %v2615 = vld [vmem:[#allocation4 + $0x1d0] sm:$0xf]
      %v2616 = vld [vmem:[#allocation4 + $0x1d4] sm:$0xff]
      %v2617 = vld [vmem:[#allocation4 + $0x1dc] sm:$0xf]
      %v2618 = vld [vmem:[#allocation4 + $0x1e0] sm:$0x11]
      %v2619 = vld [vmem:[#allocation4 + $0x1e8] sm:$0x1]
      %s2620 = sadd.s32 48, %s2487
      %s2621 = smul.addr %s2620, 4
      %s2622 = scalar_lea.vmem %s1, %s2621
      %v2623 = vld [vmem:[%s2622] sm:$0xf]
      %v2624 = vld [vmem:[%s2622 + $0x4] sm:$0xf]
      %v2625 = vld [vmem:[%s2622 + $0x8] sm:$0xf]
      %v2626 = vld [vmem:[%s2622 + $0xc] sm:$0xf]
      %v2627 = vld [vmem:[%s2622 + $0x10] sm:$0xf]
      %v2628 = vld [vmem:[%s2622 + $0x14] sm:$0xf]
      %v2629 = vld [vmem:[%s2622 + $0x18] sm:$0xf]
      %v2630 = vld [vmem:[%s2622 + $0x1c] sm:$0xf]
      %v2631 = vld [vmem:[%s2622 + $0x20] sm:$0xf]
      %v2632 = vld [vmem:[%s2622 + $0x24] sm:$0xf]
      %v2633 = vld [vmem:[%s2622 + $0x28] sm:$0xf]
      %v2634 = vld [vmem:[%s2622 + $0x2c] sm:$0xf]
      %v2635 = vld [vmem:[%s2622 + $0x30] sm:$0xf]
      %v2636 = vld [vmem:[%s2622 + $0x34] sm:$0xf]
      %v2637 = vld [vmem:[%s2622 + $0x38] sm:$0xf]
      %v2638 = vld [vmem:[%s2622 + $0x3c] sm:$0xf]
      %v2639 = vld [vmem:[%s2622 + $0x40] sm:$0xf]
      %v2640 = vld [vmem:[%s2622 + $0x44] sm:$0xf]
      %v2641 = vld [vmem:[%s2622 + $0x48] sm:$0xf]
      %v2642 = vld [vmem:[%s2622 + $0x4c] sm:$0xf]
      %v2643 = vld [vmem:[%s2622 + $0x50] sm:$0xf]
      %v2644 = vld [vmem:[%s2622 + $0x54] sm:$0xf]
      %v2645 = vld [vmem:[%s2622 + $0x58] sm:$0xf]
      %v2646 = vld [vmem:[%s2622 + $0x5c] sm:$0xf]
      %v2647 = vld [vmem:[%s2622 + $0x60] sm:$0xf]
      %v2648 = vld [vmem:[%s2622 + $0x64] sm:$0xf]
      %v2649 = vld [vmem:[%s2622 + $0x68] sm:$0xf]
      %v2650 = vld [vmem:[%s2622 + $0x6c] sm:$0xf]
      %v2651 = vld [vmem:[%s2622 + $0x70] sm:$0xf]
      %v2652 = vld [vmem:[%s2622 + $0x74] sm:$0xf]
      %v2653 = vld [vmem:[%s2622 + $0x78] sm:$0xf]
      %v2654 = vld [vmem:[%s2622 + $0x7c] sm:$0xf]
      %v2655 = vld [vmem:[%s2622 + $0x80] sm:$0xf]
      %v2656 = vld [vmem:[%s2622 + $0x84] sm:$0xf]
      %v2657 = vld [vmem:[%s2622 + $0x88] sm:$0xf]
      %v2658 = vld [vmem:[%s2622 + $0x8c] sm:$0xf]
      %v2659 = vld [vmem:[%s2622 + $0x90] sm:$0xf]
      %v2660 = vld [vmem:[%s2622 + $0x94] sm:$0xf]
      %v2661 = vld [vmem:[%s2622 + $0x98] sm:$0xf]
      %v2662 = vld [vmem:[%s2622 + $0x9c] sm:$0xf]
      %v2663 = vld [vmem:[%s2622 + $0xa0] sm:$0xf]
      %v2664 = vld [vmem:[%s2622 + $0xa4] sm:$0xf]
      %v2665 = vld [vmem:[%s2622 + $0xa8] sm:$0xf]
      %v2666 = vld [vmem:[%s2622 + $0xac] sm:$0xf]
      %v2667 = vld [vmem:[%s2622 + $0xb0] sm:$0xf]
      %v2668 = vld [vmem:[%s2622 + $0xb4] sm:$0xf]
      %v2669 = vld [vmem:[%s2622 + $0xb8] sm:$0xf]
      %v2670 = vld [vmem:[%s2622 + $0xbc] sm:$0xf]
      %v2753 = vunpack.c.l.b16 %v2538
      %v2754 = vunpack.c.h.b16 %v2538
      %v2755 = vunpack.c.l.b16 %v2539
      %v2756 = vunpack.c.l.b16 %v2540
      %v2757 = vunpack.c.h.b16 %v2540
      %v2758 = vunpack.c.l.b16 %v2541
      %v2759 = vunpack.c.l.b16 %v2542
      %v2760 = vunpack.c.h.b16 %v2542
      %v2761 = vunpack.c.l.b16 %v2543
      %v2762 = vunpack.c.l.b16 %v2544
      %v2763 = vunpack.c.h.b16 %v2544
      %v2764 = vunpack.c.l.b16 %v2545
      %v2765 = vunpack.c.l.b16 %v2546
      %v2766 = vunpack.c.h.b16 %v2546
      %v2767 = vunpack.c.l.b16 %v2547
      %v2768 = vunpack.c.l.b16 %v2548
      %v2769 = vunpack.c.h.b16 %v2548
      %v2770 = vunpack.c.l.b16 %v2549
      %v2771 = vunpack.c.l.b16 %v2550
      %v2772 = vunpack.c.h.b16 %v2550
      %v2773 = vunpack.c.l.b16 %v2551
      %v2774 = vunpack.c.l.b16 %v2552
      %v2775 = vunpack.c.h.b16 %v2552
      %v2776 = vunpack.c.l.b16 %v2553
      %v2777 = vunpack.c.l.b16 %v2554
      %v2778 = vunpack.c.h.b16 %v2554
      %v2779 = vunpack.c.l.b16 %v2555
      %v2780 = vunpack.c.l.b16 %v2556
      %v2781 = vunpack.c.h.b16 %v2556
      %v2782 = vunpack.c.l.b16 %v2557
      %v2783 = vunpack.c.l.b16 %v2558
      %v2784 = vunpack.c.h.b16 %v2558
      %v2785 = vunpack.c.l.b16 %v2559
      %v2786 = vunpack.c.l.b16 %v2560
      %v2787 = vunpack.c.h.b16 %v2560
      %v2788 = vunpack.c.l.b16 %v2561
      %v2789 = vunpack.c.l.b16 %v2562
      %v2790 = vunpack.c.h.b16 %v2562
      %v2791 = vunpack.c.l.b16 %v2563
      %v2792 = vunpack.c.l.b16 %v2564
      %v2793 = vunpack.c.h.b16 %v2564
      %v2794 = vunpack.c.l.b16 %v2565
      %v2795 = vunpack.c.l.b16 %v2566
      %v2796 = vunpack.c.h.b16 %v2566
      %v2797 = vunpack.c.l.b16 %v2567
      %v2798 = vunpack.c.l.b16 %v2568
      %v2799 = vunpack.c.h.b16 %v2568
      %v2800 = vunpack.c.l.b16 %v2569
      %v2801 = vunpack.c.l.b16 %v2570
      %v2802 = vunpack.c.h.b16 %v2570
      %v2803 = vunpack.c.l.b16 %v2571
      %v2804 = vunpack.c.l.b16 %v2572
      %v2805 = vunpack.c.h.b16 %v2572
      %v2806 = vunpack.c.l.b16 %v2573
      %v2807 = vunpack.c.l.b16 %v2574
      %v2808 = vunpack.c.h.b16 %v2574
      %v2809 = vunpack.c.l.b16 %v2575
      %v2810 = vunpack.c.l.b16 %v2576
      %v2811 = vunpack.c.h.b16 %v2576
      %v2812 = vunpack.c.l.b16 %v2577
      %v2813 = vunpack.c.l.b16 %v2578
      %v2814 = vunpack.c.h.b16 %v2578
      %v2815 = vunpack.c.l.b16 %v2579
      %v2816 = vunpack.c.l.b16 %v2580
      %v2817 = vunpack.c.h.b16 %v2580
      %v2818 = vunpack.c.l.b16 %v2581
      %v2819 = vunpack.c.l.b16 %v2582
      %v2820 = vunpack.c.h.b16 %v2582
      %v2821 = vunpack.c.l.b16 %v2583
      %v2822 = vunpack.c.l.b16 %v2584
      %v2823 = vunpack.c.h.b16 %v2584
      %v2824 = vunpack.c.l.b16 %v2585
      %v2825 = vunpack.c.l.b16 %v2586
      %v2826 = vunpack.c.h.b16 %v2586
      %v2827 = vunpack.c.l.b16 %v2587
      %v2828 = vunpack.c.l.b16 %v2588
      %v2829 = vunpack.c.h.b16 %v2588
      %v2830 = vunpack.c.l.b16 %v2589
      %v2831 = vunpack.c.l.b16 %v2590
      %v2832 = vunpack.c.h.b16 %v2590
      %v2833 = vunpack.c.l.b16 %v2591
      %v2834 = vunpack.c.l.b16 %v2592
      %v2835 = vunpack.c.h.b16 %v2592
      %v2836 = vunpack.c.l.b16 %v2593
      %v2837 = vunpack.c.l.b16 %v2594
      %v2838 = vunpack.c.h.b16 %v2594
      %v2839 = vunpack.c.l.b16 %v2595
      %v2840 = vunpack.c.l.b16 %v2596
      %v2841 = vunpack.c.h.b16 %v2596
      %v2842 = vunpack.c.l.b16 %v2597
      %v2843 = vunpack.c.l.b16 %v2598
      %v2844 = vunpack.c.h.b16 %v2598
      %v2845 = vunpack.c.l.b16 %v2599
      %v2846 = vunpack.c.l.b16 %v2600
      %v2847 = vunpack.c.h.b16 %v2600
      %v2848 = vunpack.c.l.b16 %v2601
      %v2849 = vunpack.c.l.b16 %v2602
      %v2850 = vunpack.c.h.b16 %v2602
      %v2851 = vunpack.c.l.b16 %v2603
      %v2852 = vunpack.c.l.b16 %v2604
      %v2853 = vunpack.c.h.b16 %v2604
      %v2854 = vunpack.c.l.b16 %v2605
      %v2855 = vunpack.c.l.b16 %v2606
      %v2856 = vunpack.c.h.b16 %v2606
      %v2857 = vunpack.c.l.b16 %v2607
      %v2858 = vunpack.c.l.b16 %v2608
      %v2859 = vunpack.c.h.b16 %v2608
      %v2860 = vunpack.c.l.b16 %v2609
      %v2861 = vunpack.c.l.b16 %v2610
      %v2862 = vunpack.c.h.b16 %v2610
      %v2863 = vunpack.c.l.b16 %v2611
      %v2864 = vunpack.c.l.b16 %v2612
      %v2865 = vunpack.c.h.b16 %v2612
      %v2866 = vunpack.c.l.b16 %v2613
      %v2867 = vunpack.c.l.b16 %v2614
      %v2868 = vunpack.c.h.b16 %v2614
      %v2869 = vunpack.c.l.b16 %v2615
      %v2870 = vunpack.c.l.b16 %v2616
      %v2871 = vunpack.c.h.b16 %v2616
      %v2872 = vunpack.c.l.b16 %v2617
      %v2873 = vunpack.c.l.b16 %v2618
      %v2874 = vunpack.c.h.b16 %v2618
      %v2875 = vunpack.c.l.b16 %v2619
      %v2876 = vpack.c.b16 %v2756, %v2753
      %v2877 = vpack.c.b16 %v2757, %v2754
      %v2878 = vpack.c.b16 %v2758, %v2755
      %v2879 = vpack.c.b16 %v2762, %v2759
      %v2880 = vpack.c.b16 %v2763, %v2760
      %v2881 = vpack.c.b16 %v2764, %v2761
      %v2882 = vpack.c.b16 %v2768, %v2765
      %v2883 = vpack.c.b16 %v2769, %v2766
      %v2884 = vpack.c.b16 %v2770, %v2767
      %v2885 = vpack.c.b16 %v2774, %v2771
      %v2886 = vpack.c.b16 %v2775, %v2772
      %v2887 = vpack.c.b16 %v2776, %v2773
      %v2888 = vpack.c.b16 %v2780, %v2777
      %v2889 = vpack.c.b16 %v2781, %v2778
      %v2890 = vpack.c.b16 %v2782, %v2779
      %v2891 = vpack.c.b16 %v2786, %v2783
      %v2892 = vpack.c.b16 %v2787, %v2784
      %v2893 = vpack.c.b16 %v2788, %v2785
      %v2894 = vpack.c.b16 %v2792, %v2789
      %v2895 = vpack.c.b16 %v2793, %v2790
      %v2896 = vpack.c.b16 %v2794, %v2791
      %v2897 = vpack.c.b16 %v2798, %v2795
      %v2898 = vpack.c.b16 %v2799, %v2796
      %v2899 = vpack.c.b16 %v2800, %v2797
      %v2900 = vpack.c.b16 %v2804, %v2801
      %v2901 = vpack.c.b16 %v2805, %v2802
      %v2902 = vpack.c.b16 %v2806, %v2803
      %v2903 = vpack.c.b16 %v2810, %v2807
      %v2904 = vpack.c.b16 %v2811, %v2808
      %v2905 = vpack.c.b16 %v2812, %v2809
      %v2906 = vpack.c.b16 %v2816, %v2813
      %v2907 = vpack.c.b16 %v2817, %v2814
      %v2908 = vpack.c.b16 %v2818, %v2815
      %v2909 = vpack.c.b16 %v2822, %v2819
      %v2910 = vpack.c.b16 %v2823, %v2820
      %v2911 = vpack.c.b16 %v2824, %v2821
      %v2912 = vpack.c.b16 %v2828, %v2825
      %v2913 = vpack.c.b16 %v2829, %v2826
      %v2914 = vpack.c.b16 %v2830, %v2827
      %v2915 = vpack.c.b16 %v2834, %v2831
      %v2916 = vpack.c.b16 %v2835, %v2832
      %v2917 = vpack.c.b16 %v2836, %v2833
      %v2918 = vpack.c.b16 %v2840, %v2837
      %v2919 = vpack.c.b16 %v2841, %v2838
      %v2920 = vpack.c.b16 %v2842, %v2839
      %v2921 = vpack.c.b16 %v2846, %v2843
      %v2922 = vpack.c.b16 %v2847, %v2844
      %v2923 = vpack.c.b16 %v2848, %v2845
      %v2924 = vpack.c.b16 %v2852, %v2849
      %v2925 = vpack.c.b16 %v2853, %v2850
      %v2926 = vpack.c.b16 %v2854, %v2851
      %v2927 = vpack.c.b16 %v2858, %v2855
      %v2928 = vpack.c.b16 %v2859, %v2856
      %v2929 = vpack.c.b16 %v2860, %v2857
      %v2930 = vpack.c.b16 %v2864, %v2861
      %v2931 = vpack.c.b16 %v2865, %v2862
      %v2932 = vpack.c.b16 %v2866, %v2863
      %v2933 = vpack.c.b16 %v2870, %v2867
      %v2934 = vpack.c.b16 %v2871, %v2868
      %v2935 = vpack.c.b16 %v2872, %v2869
      %v2936 = vpack.c.b16 %v2873, %v2873
      %v2937 = vpack.c.b16 %v2874, %v2874
      %v2938 = vpack.c.b16 %v2875, %v2875
      %vm2939 = vsmask.f32 7424
      %v2941 = vshrl.u32 %v2876, 16
      %v2943 = vshll.u32 %v2876, 16
      %v2945 = vrot.slane %v2943, 1
      %v2946 = vor.u32 %v2941, %v2945
      %v2948 = vshll.u32 %v2879, 16
      %v2950 = vrot.slane %v2948, 1
      %v2951 = vsel %vm2939, %v2946, %v2950
      %v2953 = vshrl.u32 %v2877, 16
      %v2955 = vshll.u32 %v2877, 16
      %v2957 = vrot.slane %v2955, 1
      %v2958 = vor.u32 %v2953, %v2957
      %v2960 = vshll.u32 %v2880, 16
      %v2962 = vrot.slane %v2960, 1
      %v2963 = vsel %vm2939, %v2958, %v2962
      %v2965 = vshrl.u32 %v2878, 16
      %v2967 = vshll.u32 %v2878, 16
      %v2969 = vrot.slane %v2967, 1
      %v2970 = vor.u32 %v2965, %v2969
      %v2972 = vshll.u32 %v2881, 16
      %v2974 = vrot.slane %v2972, 1
      %v2975 = vsel %vm2939, %v2970, %v2974
      %v2976 = vshrl.u32 %v2879, 16
      %v2978 = vor.u32 %v2976, %v2950
      %v2980 = vshll.u32 %v2882, 16
      %v2982 = vrot.slane %v2980, 1
      %v2983 = vsel %vm2939, %v2978, %v2982
      %v2984 = vshrl.u32 %v2880, 16
      %v2986 = vor.u32 %v2984, %v2962
      %v2988 = vshll.u32 %v2883, 16
      %v2990 = vrot.slane %v2988, 1
      %v2991 = vsel %vm2939, %v2986, %v2990
      %v2992 = vshrl.u32 %v2881, 16
      %v2994 = vor.u32 %v2992, %v2974
      %v2996 = vshll.u32 %v2884, 16
      %v2998 = vrot.slane %v2996, 1
      %v2999 = vsel %vm2939, %v2994, %v2998
      %v3000 = vshrl.u32 %v2882, 16
      %v3002 = vor.u32 %v3000, %v2982
      %v3004 = vshll.u32 %v2885, 16
      %v3006 = vrot.slane %v3004, 1
      %v3007 = vsel %vm2939, %v3002, %v3006
      %v3008 = vshrl.u32 %v2883, 16
      %v3010 = vor.u32 %v3008, %v2990
      %v3012 = vshll.u32 %v2886, 16
      %v3014 = vrot.slane %v3012, 1
      %v3015 = vsel %vm2939, %v3010, %v3014
      %v3016 = vshrl.u32 %v2884, 16
      %v3018 = vor.u32 %v3016, %v2998
      %v3020 = vshll.u32 %v2887, 16
      %v3022 = vrot.slane %v3020, 1
      %v3023 = vsel %vm2939, %v3018, %v3022
      %v3024 = vshrl.u32 %v2885, 16
      %v3026 = vor.u32 %v3024, %v3006
      %v3028 = vshll.u32 %v2888, 16
      %v3030 = vrot.slane %v3028, 1
      %v3031 = vsel %vm2939, %v3026, %v3030
      %v3032 = vshrl.u32 %v2886, 16
      %v3034 = vor.u32 %v3032, %v3014
      %v3036 = vshll.u32 %v2889, 16
      %v3038 = vrot.slane %v3036, 1
      %v3039 = vsel %vm2939, %v3034, %v3038
      %v3040 = vshrl.u32 %v2887, 16
      %v3042 = vor.u32 %v3040, %v3022
      %v3044 = vshll.u32 %v2890, 16
      %v3046 = vrot.slane %v3044, 1
      %v3047 = vsel %vm2939, %v3042, %v3046
      %v3048 = vshrl.u32 %v2888, 16
      %v3050 = vor.u32 %v3048, %v3030
      %v3052 = vshll.u32 %v2891, 16
      %v3054 = vrot.slane %v3052, 1
      %v3055 = vsel %vm2939, %v3050, %v3054
      %v3056 = vshrl.u32 %v2889, 16
      %v3058 = vor.u32 %v3056, %v3038
      %v3060 = vshll.u32 %v2892, 16
      %v3062 = vrot.slane %v3060, 1
      %v3063 = vsel %vm2939, %v3058, %v3062
      %v3064 = vshrl.u32 %v2890, 16
      %v3066 = vor.u32 %v3064, %v3046
      %v3068 = vshll.u32 %v2893, 16
      %v3070 = vrot.slane %v3068, 1
      %v3071 = vsel %vm2939, %v3066, %v3070
      %v3072 = vshrl.u32 %v2891, 16
      %v3074 = vor.u32 %v3072, %v3054
      %v3076 = vshll.u32 %v2894, 16
      %v3078 = vrot.slane %v3076, 1
      %v3079 = vsel %vm2939, %v3074, %v3078
      %v3080 = vshrl.u32 %v2892, 16
      %v3082 = vor.u32 %v3080, %v3062
      %v3084 = vshll.u32 %v2895, 16
      %v3086 = vrot.slane %v3084, 1
      %v3087 = vsel %vm2939, %v3082, %v3086
      %v3088 = vshrl.u32 %v2893, 16
      %v3090 = vor.u32 %v3088, %v3070
      %v3092 = vshll.u32 %v2896, 16
      %v3094 = vrot.slane %v3092, 1
      %v3095 = vsel %vm2939, %v3090, %v3094
      %v3096 = vshrl.u32 %v2894, 16
      %v3098 = vor.u32 %v3096, %v3078
      %v3100 = vshll.u32 %v2897, 16
      %v3102 = vrot.slane %v3100, 1
      %v3103 = vsel %vm2939, %v3098, %v3102
      %v3104 = vshrl.u32 %v2895, 16
      %v3106 = vor.u32 %v3104, %v3086
      %v3108 = vshll.u32 %v2898, 16
      %v3110 = vrot.slane %v3108, 1
      %v3111 = vsel %vm2939, %v3106, %v3110
      %v3112 = vshrl.u32 %v2896, 16
      %v3114 = vor.u32 %v3112, %v3094
      %v3116 = vshll.u32 %v2899, 16
      %v3118 = vrot.slane %v3116, 1
      %v3119 = vsel %vm2939, %v3114, %v3118
      %v3120 = vshrl.u32 %v2897, 16
      %v3122 = vor.u32 %v3120, %v3102
      %v3124 = vshll.u32 %v2900, 16
      %v3126 = vrot.slane %v3124, 1
      %v3127 = vsel %vm2939, %v3122, %v3126
      %v3128 = vshrl.u32 %v2898, 16
      %v3130 = vor.u32 %v3128, %v3110
      %v3132 = vshll.u32 %v2901, 16
      %v3134 = vrot.slane %v3132, 1
      %v3135 = vsel %vm2939, %v3130, %v3134
      %v3136 = vshrl.u32 %v2899, 16
      %v3138 = vor.u32 %v3136, %v3118
      %v3140 = vshll.u32 %v2902, 16
      %v3142 = vrot.slane %v3140, 1
      %v3143 = vsel %vm2939, %v3138, %v3142
      %v3144 = vshrl.u32 %v2900, 16
      %v3146 = vor.u32 %v3144, %v3126
      %v3148 = vshll.u32 %v2903, 16
      %v3150 = vrot.slane %v3148, 1
      %v3151 = vsel %vm2939, %v3146, %v3150
      %v3152 = vshrl.u32 %v2901, 16
      %v3154 = vor.u32 %v3152, %v3134
      %v3156 = vshll.u32 %v2904, 16
      %v3158 = vrot.slane %v3156, 1
      %v3159 = vsel %vm2939, %v3154, %v3158
      %v3160 = vshrl.u32 %v2902, 16
      %v3162 = vor.u32 %v3160, %v3142
      %v3164 = vshll.u32 %v2905, 16
      %v3166 = vrot.slane %v3164, 1
      %v3167 = vsel %vm2939, %v3162, %v3166
      %v3168 = vshrl.u32 %v2903, 16
      %v3170 = vor.u32 %v3168, %v3150
      %v3172 = vshll.u32 %v2906, 16
      %v3174 = vrot.slane %v3172, 1
      %v3175 = vsel %vm2939, %v3170, %v3174
      %v3176 = vshrl.u32 %v2904, 16
      %v3178 = vor.u32 %v3176, %v3158
      %v3180 = vshll.u32 %v2907, 16
      %v3182 = vrot.slane %v3180, 1
      %v3183 = vsel %vm2939, %v3178, %v3182
      %v3184 = vshrl.u32 %v2905, 16
      %v3186 = vor.u32 %v3184, %v3166
      %v3188 = vshll.u32 %v2908, 16
      %v3190 = vrot.slane %v3188, 1
      %v3191 = vsel %vm2939, %v3186, %v3190
      %v3192 = vshrl.u32 %v2906, 16
      %v3194 = vor.u32 %v3192, %v3174
      %v3196 = vshll.u32 %v2909, 16
      %v3198 = vrot.slane %v3196, 1
      %v3199 = vsel %vm2939, %v3194, %v3198
      %v3200 = vshrl.u32 %v2907, 16
      %v3202 = vor.u32 %v3200, %v3182
      %v3204 = vshll.u32 %v2910, 16
      %v3206 = vrot.slane %v3204, 1
      %v3207 = vsel %vm2939, %v3202, %v3206
      %v3208 = vshrl.u32 %v2908, 16
      %v3210 = vor.u32 %v3208, %v3190
      %v3212 = vshll.u32 %v2911, 16
      %v3214 = vrot.slane %v3212, 1
      %v3215 = vsel %vm2939, %v3210, %v3214
      %v3216 = vshrl.u32 %v2909, 16
      %v3218 = vor.u32 %v3216, %v3198
      %v3220 = vshll.u32 %v2912, 16
      %v3222 = vrot.slane %v3220, 1
      %v3223 = vsel %vm2939, %v3218, %v3222
      %v3224 = vshrl.u32 %v2910, 16
      %v3226 = vor.u32 %v3224, %v3206
      %v3228 = vshll.u32 %v2913, 16
      %v3230 = vrot.slane %v3228, 1
      %v3231 = vsel %vm2939, %v3226, %v3230
      %v3232 = vshrl.u32 %v2911, 16
      %v3234 = vor.u32 %v3232, %v3214
      %v3236 = vshll.u32 %v2914, 16
      %v3238 = vrot.slane %v3236, 1
      %v3239 = vsel %vm2939, %v3234, %v3238
      %v3240 = vshrl.u32 %v2912, 16
      %v3242 = vor.u32 %v3240, %v3222
      %v3244 = vshll.u32 %v2915, 16
      %v3246 = vrot.slane %v3244, 1
      %v3247 = vsel %vm2939, %v3242, %v3246
      %v3248 = vshrl.u32 %v2913, 16
      %v3250 = vor.u32 %v3248, %v3230
      %v3252 = vshll.u32 %v2916, 16
      %v3254 = vrot.slane %v3252, 1
      %v3255 = vsel %vm2939, %v3250, %v3254
      %v3256 = vshrl.u32 %v2914, 16
      %v3258 = vor.u32 %v3256, %v3238
      %v3260 = vshll.u32 %v2917, 16
      %v3262 = vrot.slane %v3260, 1
      %v3263 = vsel %vm2939, %v3258, %v3262
      %v3264 = vshrl.u32 %v2915, 16
      %v3266 = vor.u32 %v3264, %v3246
      %v3268 = vshll.u32 %v2918, 16
      %v3270 = vrot.slane %v3268, 1
      %v3271 = vsel %vm2939, %v3266, %v3270
      %v3272 = vshrl.u32 %v2916, 16
      %v3274 = vor.u32 %v3272, %v3254
      %v3276 = vshll.u32 %v2919, 16
      %v3278 = vrot.slane %v3276, 1
      %v3279 = vsel %vm2939, %v3274, %v3278
      %v3280 = vshrl.u32 %v2917, 16
      %v3282 = vor.u32 %v3280, %v3262
      %v3284 = vshll.u32 %v2920, 16
      %v3286 = vrot.slane %v3284, 1
      %v3287 = vsel %vm2939, %v3282, %v3286
      %v3288 = vshrl.u32 %v2918, 16
      %v3290 = vor.u32 %v3288, %v3270
      %v3292 = vshll.u32 %v2921, 16
      %v3294 = vrot.slane %v3292, 1
      %v3295 = vsel %vm2939, %v3290, %v3294
      %v3296 = vshrl.u32 %v2919, 16
      %v3298 = vor.u32 %v3296, %v3278
      %v3300 = vshll.u32 %v2922, 16
      %v3302 = vrot.slane %v3300, 1
      %v3303 = vsel %vm2939, %v3298, %v3302
      %v3304 = vshrl.u32 %v2920, 16
      %v3306 = vor.u32 %v3304, %v3286
      %v3308 = vshll.u32 %v2923, 16
      %v3310 = vrot.slane %v3308, 1
      %v3311 = vsel %vm2939, %v3306, %v3310
      %v3312 = vshrl.u32 %v2921, 16
      %v3314 = vor.u32 %v3312, %v3294
      %v3316 = vshll.u32 %v2924, 16
      %v3318 = vrot.slane %v3316, 1
      %v3319 = vsel %vm2939, %v3314, %v3318
      %v3320 = vshrl.u32 %v2922, 16
      %v3322 = vor.u32 %v3320, %v3302
      %v3324 = vshll.u32 %v2925, 16
      %v3326 = vrot.slane %v3324, 1
      %v3327 = vsel %vm2939, %v3322, %v3326
      %v3328 = vshrl.u32 %v2923, 16
      %v3330 = vor.u32 %v3328, %v3310
      %v3332 = vshll.u32 %v2926, 16
      %v3334 = vrot.slane %v3332, 1
      %v3335 = vsel %vm2939, %v3330, %v3334
      %v3336 = vshrl.u32 %v2924, 16
      %v3338 = vor.u32 %v3336, %v3318
      %v3340 = vshll.u32 %v2927, 16
      %v3342 = vrot.slane %v3340, 1
      %v3343 = vsel %vm2939, %v3338, %v3342
      %v3344 = vshrl.u32 %v2925, 16
      %v3346 = vor.u32 %v3344, %v3326
      %v3348 = vshll.u32 %v2928, 16
      %v3350 = vrot.slane %v3348, 1
      %v3351 = vsel %vm2939, %v3346, %v3350
      %v3352 = vshrl.u32 %v2926, 16
      %v3354 = vor.u32 %v3352, %v3334
      %v3356 = vshll.u32 %v2929, 16
      %v3358 = vrot.slane %v3356, 1
      %v3359 = vsel %vm2939, %v3354, %v3358
      %v3360 = vshrl.u32 %v2927, 16
      %v3362 = vor.u32 %v3360, %v3342
      %v3364 = vshll.u32 %v2930, 16
      %v3366 = vrot.slane %v3364, 1
      %v3367 = vsel %vm2939, %v3362, %v3366
      %v3368 = vshrl.u32 %v2928, 16
      %v3370 = vor.u32 %v3368, %v3350
      %v3372 = vshll.u32 %v2931, 16
      %v3374 = vrot.slane %v3372, 1
      %v3375 = vsel %vm2939, %v3370, %v3374
      %v3376 = vshrl.u32 %v2929, 16
      %v3378 = vor.u32 %v3376, %v3358
      %v3380 = vshll.u32 %v2932, 16
      %v3382 = vrot.slane %v3380, 1
      %v3383 = vsel %vm2939, %v3378, %v3382
      %v3384 = vshrl.u32 %v2930, 16
      %v3386 = vor.u32 %v3384, %v3366
      %v3388 = vshll.u32 %v2933, 16
      %v3390 = vrot.slane %v3388, 1
      %v3391 = vsel %vm2939, %v3386, %v3390
      %v3392 = vshrl.u32 %v2931, 16
      %v3394 = vor.u32 %v3392, %v3374
      %v3396 = vshll.u32 %v2934, 16
      %v3398 = vrot.slane %v3396, 1
      %v3399 = vsel %vm2939, %v3394, %v3398
      %v3400 = vshrl.u32 %v2932, 16
      %v3402 = vor.u32 %v3400, %v3382
      %v3404 = vshll.u32 %v2935, 16
      %v3406 = vrot.slane %v3404, 1
      %v3407 = vsel %vm2939, %v3402, %v3406
      %v3408 = vshrl.u32 %v2933, 16
      %v3410 = vor.u32 %v3408, %v3390
      %v3412 = vshll.u32 %v2936, 16
      %v3414 = vrot.slane %v3412, 1
      %v3415 = vsel %vm2939, %v3410, %v3414
      %v3416 = vshrl.u32 %v2934, 16
      %v3418 = vor.u32 %v3416, %v3398
      %v3420 = vshll.u32 %v2937, 16
      %v3422 = vrot.slane %v3420, 1
      %v3423 = vsel %vm2939, %v3418, %v3422
      %v3424 = vshrl.u32 %v2935, 16
      %v3426 = vor.u32 %v3424, %v3406
      %v3428 = vshll.u32 %v2938, 16
      %v3430 = vrot.slane %v3428, 1
      %v3431 = vsel %vm2939, %v3426, %v3430
      %v3540 = vunpack.c.l.b16 %v2623
      %v3541 = vunpack.c.l.b16 %v2624
      %v3542 = vunpack.c.l.b16 %v2625
      %v3543 = vunpack.c.l.b16 %v2626
      %v3544 = vunpack.c.l.b16 %v2627
      %v3545 = vunpack.c.l.b16 %v2628
      %v3546 = vunpack.c.l.b16 %v2629
      %v3547 = vunpack.c.l.b16 %v2630
      %v3548 = vunpack.c.l.b16 %v2631
      %v3549 = vunpack.c.l.b16 %v2632
      %v3550 = vunpack.c.l.b16 %v2633
      %v3551 = vunpack.c.l.b16 %v2634
      %v3552 = vunpack.c.l.b16 %v2635
      %v3553 = vunpack.c.l.b16 %v2636
      %v3554 = vunpack.c.l.b16 %v2637
      %v3555 = vunpack.c.l.b16 %v2638
      %v3556 = vunpack.c.l.b16 %v2639
      %v3557 = vunpack.c.l.b16 %v2640
      %v3558 = vunpack.c.l.b16 %v2641
      %v3559 = vunpack.c.l.b16 %v2642
      %v3560 = vunpack.c.l.b16 %v2643
      %v3561 = vunpack.c.l.b16 %v2644
      %v3562 = vunpack.c.l.b16 %v2645
      %v3563 = vunpack.c.l.b16 %v2646
      %v3564 = vunpack.c.l.b16 %v2647
      %v3565 = vunpack.c.l.b16 %v2648
      %v3566 = vunpack.c.l.b16 %v2649
      %v3567 = vunpack.c.l.b16 %v2650
      %v3568 = vunpack.c.l.b16 %v2651
      %v3569 = vunpack.c.l.b16 %v2652
      %v3570 = vunpack.c.l.b16 %v2653
      %v3571 = vunpack.c.l.b16 %v2654
      %v3572 = vunpack.c.l.b16 %v2655
      %v3573 = vunpack.c.l.b16 %v2656
      %v3574 = vunpack.c.l.b16 %v2657
      %v3575 = vunpack.c.l.b16 %v2658
      %v3576 = vunpack.c.l.b16 %v2659
      %v3577 = vunpack.c.l.b16 %v2660
      %v3578 = vunpack.c.l.b16 %v2661
      %v3579 = vunpack.c.l.b16 %v2662
      %v3580 = vunpack.c.l.b16 %v2663
      %v3581 = vunpack.c.l.b16 %v2664
      %v3582 = vunpack.c.l.b16 %v2665
      %v3583 = vunpack.c.l.b16 %v2666
      %v3584 = vunpack.c.l.b16 %v2667
      %v3585 = vunpack.c.l.b16 %v2668
      %v3586 = vunpack.c.l.b16 %v2669
      %v3587 = vunpack.c.l.b16 %v2670
      %v3588 = vpack.c.b16 %v3541, %v3540
      %v3589 = vpack.c.b16 %v3543, %v3542
      %v3590 = vpack.c.b16 %v3545, %v3544
      %v3591 = vpack.c.b16 %v3547, %v3546
      %v3592 = vpack.c.b16 %v3549, %v3548
      %v3593 = vpack.c.b16 %v3551, %v3550
      %v3594 = vpack.c.b16 %v3553, %v3552
      %v3595 = vpack.c.b16 %v3555, %v3554
      %v3596 = vpack.c.b16 %v3557, %v3556
      %v3597 = vpack.c.b16 %v3559, %v3558
      %v3598 = vpack.c.b16 %v3561, %v3560
      %v3599 = vpack.c.b16 %v3563, %v3562
      %v3600 = vpack.c.b16 %v3565, %v3564
      %v3601 = vpack.c.b16 %v3567, %v3566
      %v3602 = vpack.c.b16 %v3569, %v3568
      %v3603 = vpack.c.b16 %v3571, %v3570
      %v3604 = vpack.c.b16 %v3573, %v3572
      %v3605 = vpack.c.b16 %v3575, %v3574
      %v3606 = vpack.c.b16 %v3577, %v3576
      %v3607 = vpack.c.b16 %v3579, %v3578
      %v3608 = vpack.c.b16 %v3581, %v3580
      %v3609 = vpack.c.b16 %v3583, %v3582
      %v3610 = vpack.c.b16 %v3585, %v3584
      %v3611 = vpack.c.b16 %v3587, %v3586
      %3636 = vmatpush.bf16.msra.mxu0 %v3595
      %3637 = vmatpush.bf16.msra.mxu0 %v3594
      %3638 = vmatpush.bf16.msra.mxu0 %v3593
      %3639 = vmatpush.bf16.msra.mxu0 %v3592
      %3640 = vmatpush.bf16.msra.mxu0 %v3591
      %3641 = vmatpush.bf16.msra.mxu0 %v3590
      %3642 = vmatpush.bf16.msra.mxu0 %v3589
      %3643 = vmatpush.bf16.msra.mxu0 %v3588
      %3644 = vmatmul.bf16.gmra.mxu0 %v2951
      %v3645 = vpop.f32.mrf.mxu0
      %v3646 = vadd.f32 0.0, %v3645
      %v3647 = vpop.f32.mrf.mxu0
      %v3648 = vadd.f32 0.0, %v3647
      %3649 = vmatmul.bf16.gmra.mxu0 %v2983
      %v3650 = vpop.f32.mrf.mxu0
      %v3651 = vadd.f32 0.0, %v3650
      %v3652 = vpop.f32.mrf.mxu0
      %v3653 = vadd.f32 0.0, %v3652
      %3654 = vmatmul.bf16.gmra.mxu0 %v3007
      %v3655 = vpop.f32.mrf.mxu0
      %v3656 = vadd.f32 0.0, %v3655
      %v3657 = vpop.f32.mrf.mxu0
      %v3658 = vadd.f32 0.0, %v3657
      %3659 = vmatmul.bf16.gmra.mxu0 %v3031
      %v3660 = vpop.f32.mrf.mxu0
      %v3661 = vadd.f32 0.0, %v3660
      %v3662 = vpop.f32.mrf.mxu0
      %v3663 = vadd.f32 0.0, %v3662
      %3664 = vmatmul.bf16.gmra.mxu0 %v3055
      %v3665 = vpop.f32.mrf.mxu0
      %v3666 = vadd.f32 0.0, %v3665
      %v3667 = vpop.f32.mrf.mxu0
      %v3668 = vadd.f32 0.0, %v3667
      %3669 = vmatmul.bf16.gmra.mxu0 %v3079
      %v3670 = vpop.f32.mrf.mxu0
      %v3671 = vadd.f32 0.0, %v3670
      %v3672 = vpop.f32.mrf.mxu0
      %v3673 = vadd.f32 0.0, %v3672
      %3674 = vmatmul.bf16.gmra.mxu0 %v3103
      %v3675 = vpop.f32.mrf.mxu0
      %v3676 = vadd.f32 0.0, %v3675
      %v3677 = vpop.f32.mrf.mxu0
      %v3678 = vadd.f32 0.0, %v3677
      %3679 = vmatmul.bf16.gmra.mxu0 %v3127
      %v3680 = vpop.f32.mrf.mxu0
      %v3681 = vadd.f32 0.0, %v3680
      %v3682 = vpop.f32.mrf.mxu0
      %v3683 = vadd.f32 0.0, %v3682
      %3684 = vmatmul.bf16.gmra.mxu0 %v3151
      %v3685 = vpop.f32.mrf.mxu0
      %v3686 = vadd.f32 0.0, %v3685
      %v3687 = vpop.f32.mrf.mxu0
      %v3688 = vadd.f32 0.0, %v3687
      %3689 = vmatmul.bf16.gmra.mxu0 %v3175
      %v3690 = vpop.f32.mrf.mxu0
      %v3691 = vadd.f32 0.0, %v3690
      %v3692 = vpop.f32.mrf.mxu0
      %v3693 = vadd.f32 0.0, %v3692
      %3694 = vmatmul.bf16.gmra.mxu0 %v3199
      %v3695 = vpop.f32.mrf.mxu0
      %v3696 = vadd.f32 0.0, %v3695
      %v3697 = vpop.f32.mrf.mxu0
      %v3698 = vadd.f32 0.0, %v3697
      %3699 = vmatmul.bf16.gmra.mxu0 %v3223
      %v3700 = vpop.f32.mrf.mxu0
      %v3701 = vadd.f32 0.0, %v3700
      %v3702 = vpop.f32.mrf.mxu0
      %v3703 = vadd.f32 0.0, %v3702
      %3704 = vmatmul.bf16.gmra.mxu0 %v3247
      %v3705 = vpop.f32.mrf.mxu0
      %v3706 = vadd.f32 0.0, %v3705
      %v3707 = vpop.f32.mrf.mxu0
      %v3708 = vadd.f32 0.0, %v3707
      %3709 = vmatmul.bf16.gmra.mxu0 %v3271
      %v3710 = vpop.f32.mrf.mxu0
      %v3711 = vadd.f32 0.0, %v3710
      %v3712 = vpop.f32.mrf.mxu0
      %v3713 = vadd.f32 0.0, %v3712
      %3714 = vmatmul.bf16.gmra.mxu0 %v3295
      %v3715 = vpop.f32.mrf.mxu0
      %v3716 = vadd.f32 0.0, %v3715
      %v3717 = vpop.f32.mrf.mxu0
      %v3718 = vadd.f32 0.0, %v3717
      %3719 = vmatmul.bf16.gmra.mxu0 %v3319
      %v3720 = vpop.f32.mrf.mxu0
      %v3721 = vadd.f32 0.0, %v3720
      %v3722 = vpop.f32.mrf.mxu0
      %v3723 = vadd.f32 0.0, %v3722
      %3724 = vmatmul.bf16.gmra.mxu0 %v3343
      %v3725 = vpop.f32.mrf.mxu0
      %v3726 = vadd.f32 0.0, %v3725
      %v3727 = vpop.f32.mrf.mxu0
      %v3728 = vadd.f32 0.0, %v3727
      %3729 = vmatmul.bf16.gmra.mxu0 %v3367
      %v3730 = vpop.f32.mrf.mxu0
      %v3731 = vadd.f32 0.0, %v3730
      %v3732 = vpop.f32.mrf.mxu0
      %v3733 = vadd.f32 0.0, %v3732
      %3734 = vmatmul.bf16.gmra.mxu0 %v3391
      %v3735 = vpop.f32.mrf.mxu0
      %v3736 = vadd.f32 0.0, %v3735
      %v3737 = vpop.f32.mrf.mxu0
      %v3738 = vadd.f32 0.0, %v3737
      %3739 = vmatmul.bf16.gmra.mxu0 %v3415
      %v3740 = vpop.f32.mrf.mxu0
      %v3741 = vadd.f32 0.0, %v3740
      %v3742 = vpop.f32.mrf.mxu0
      %v3743 = vadd.f32 0.0, %v3742
      %3744 = vdwg.mxu0
      %3745 = vmatpush.bf16.msra.mxu0 %v3603
      %3746 = vmatpush.bf16.msra.mxu0 %v3602
      %3747 = vmatpush.bf16.msra.mxu0 %v3601
      %3748 = vmatpush.bf16.msra.mxu0 %v3600
      %3749 = vmatpush.bf16.msra.mxu0 %v3599
      %3750 = vmatpush.bf16.msra.mxu0 %v3598
      %3751 = vmatpush.bf16.msra.mxu0 %v3597
      %3752 = vmatpush.bf16.msra.mxu0 %v3596
      %3753 = vmatmul.bf16.gmra.mxu0 %v2963
      %v3754 = vpop.f32.mrf.mxu0
      %v3755 = vadd.f32 %v3646, %v3754
      %v3756 = vpop.f32.mrf.mxu0
      %v3757 = vadd.f32 %v3648, %v3756
      %3758 = vmatmul.bf16.gmra.mxu0 %v2991
      %v3759 = vpop.f32.mrf.mxu0
      %v3760 = vadd.f32 %v3651, %v3759
      %v3761 = vpop.f32.mrf.mxu0
      %v3762 = vadd.f32 %v3653, %v3761
      %3763 = vmatmul.bf16.gmra.mxu0 %v3015
      %v3764 = vpop.f32.mrf.mxu0
      %v3765 = vadd.f32 %v3656, %v3764
      %v3766 = vpop.f32.mrf.mxu0
      %v3767 = vadd.f32 %v3658, %v3766
      %3768 = vmatmul.bf16.gmra.mxu0 %v3039
      %v3769 = vpop.f32.mrf.mxu0
      %v3770 = vadd.f32 %v3661, %v3769
      %v3771 = vpop.f32.mrf.mxu0
      %v3772 = vadd.f32 %v3663, %v3771
      %3773 = vmatmul.bf16.gmra.mxu0 %v3063
      %v3774 = vpop.f32.mrf.mxu0
      %v3775 = vadd.f32 %v3666, %v3774
      %v3776 = vpop.f32.mrf.mxu0
      %v3777 = vadd.f32 %v3668, %v3776
      %3778 = vmatmul.bf16.gmra.mxu0 %v3087
      %v3779 = vpop.f32.mrf.mxu0
      %v3780 = vadd.f32 %v3671, %v3779
      %v3781 = vpop.f32.mrf.mxu0
      %v3782 = vadd.f32 %v3673, %v3781
      %3783 = vmatmul.bf16.gmra.mxu0 %v3111
      %v3784 = vpop.f32.mrf.mxu0
      %v3785 = vadd.f32 %v3676, %v3784
      %v3786 = vpop.f32.mrf.mxu0
      %v3787 = vadd.f32 %v3678, %v3786
      %3788 = vmatmul.bf16.gmra.mxu0 %v3135
      %v3789 = vpop.f32.mrf.mxu0
      %v3790 = vadd.f32 %v3681, %v3789
      %v3791 = vpop.f32.mrf.mxu0
      %v3792 = vadd.f32 %v3683, %v3791
      %3793 = vmatmul.bf16.gmra.mxu0 %v3159
      %v3794 = vpop.f32.mrf.mxu0
      %v3795 = vadd.f32 %v3686, %v3794
      %v3796 = vpop.f32.mrf.mxu0
      %v3797 = vadd.f32 %v3688, %v3796
      %3798 = vmatmul.bf16.gmra.mxu0 %v3183
      %v3799 = vpop.f32.mrf.mxu0
      %v3800 = vadd.f32 %v3691, %v3799
      %v3801 = vpop.f32.mrf.mxu0
      %v3802 = vadd.f32 %v3693, %v3801
      %3803 = vmatmul.bf16.gmra.mxu0 %v3207
      %v3804 = vpop.f32.mrf.mxu0
      %v3805 = vadd.f32 %v3696, %v3804
      %v3806 = vpop.f32.mrf.mxu0
      %v3807 = vadd.f32 %v3698, %v3806
      %3808 = vmatmul.bf16.gmra.mxu0 %v3231
      %v3809 = vpop.f32.mrf.mxu0
      %v3810 = vadd.f32 %v3701, %v3809
      %v3811 = vpop.f32.mrf.mxu0
      %v3812 = vadd.f32 %v3703, %v3811
      %3813 = vmatmul.bf16.gmra.mxu0 %v3255
      %v3814 = vpop.f32.mrf.mxu0
      %v3815 = vadd.f32 %v3706, %v3814
      %v3816 = vpop.f32.mrf.mxu0
      %v3817 = vadd.f32 %v3708, %v3816
      %3818 = vmatmul.bf16.gmra.mxu0 %v3279
      %v3819 = vpop.f32.mrf.mxu0
      %v3820 = vadd.f32 %v3711, %v3819
      %v3821 = vpop.f32.mrf.mxu0
      %v3822 = vadd.f32 %v3713, %v3821
      %3823 = vmatmul.bf16.gmra.mxu0 %v3303
      %v3824 = vpop.f32.mrf.mxu0
      %v3825 = vadd.f32 %v3716, %v3824
      %v3826 = vpop.f32.mrf.mxu0
      %v3827 = vadd.f32 %v3718, %v3826
      %3828 = vmatmul.bf16.gmra.mxu0 %v3327
      %v3829 = vpop.f32.mrf.mxu0
      %v3830 = vadd.f32 %v3721, %v3829
      %v3831 = vpop.f32.mrf.mxu0
      %v3832 = vadd.f32 %v3723, %v3831
      %3833 = vmatmul.bf16.gmra.mxu0 %v3351
      %v3834 = vpop.f32.mrf.mxu0
      %v3835 = vadd.f32 %v3726, %v3834
      %v3836 = vpop.f32.mrf.mxu0
      %v3837 = vadd.f32 %v3728, %v3836
      %3838 = vmatmul.bf16.gmra.mxu0 %v3375
      %v3839 = vpop.f32.mrf.mxu0
      %v3840 = vadd.f32 %v3731, %v3839
      %v3841 = vpop.f32.mrf.mxu0
      %v3842 = vadd.f32 %v3733, %v3841
      %3843 = vmatmul.bf16.gmra.mxu0 %v3399
      %v3844 = vpop.f32.mrf.mxu0
      %v3845 = vadd.f32 %v3736, %v3844
      %v3846 = vpop.f32.mrf.mxu0
      %v3847 = vadd.f32 %v3738, %v3846
      %3848 = vmatmul.bf16.gmra.mxu0 %v3423
      %v3849 = vpop.f32.mrf.mxu0
      %v3850 = vadd.f32 %v3741, %v3849
      %v3851 = vpop.f32.mrf.mxu0
      %v3852 = vadd.f32 %v3743, %v3851
      %3853 = vdwg.mxu0
      %3854 = vmatpush.bf16.msra.mxu0 %v3611
      %3855 = vmatpush.bf16.msra.mxu0 %v3610
      %3856 = vmatpush.bf16.msra.mxu0 %v3609
      %3857 = vmatpush.bf16.msra.mxu0 %v3608
      %3858 = vmatpush.bf16.msra.mxu0 %v3607
      %3859 = vmatpush.bf16.msra.mxu0 %v3606
      %3860 = vmatpush.bf16.msra.mxu0 %v3605
      %3861 = vmatpush.bf16.msra.mxu0 %v3604
      %3862 = vmatmul.bf16.gmra.mxu0 %v2975
      %v3863 = vpop.f32.mrf.mxu0
      %v3864 = vadd.f32 %v3755, %v3863
      %v3865 = vpop.f32.mrf.mxu0
      %v3866 = vadd.f32 %v3757, %v3865
      %3867 = vmatmul.bf16.gmra.mxu0 %v2999
      %v3868 = vpop.f32.mrf.mxu0
      %v3869 = vadd.f32 %v3760, %v3868
      %v3870 = vpop.f32.mrf.mxu0
      %v3871 = vadd.f32 %v3762, %v3870
      %3872 = vmatmul.bf16.gmra.mxu0 %v3023
      %v3873 = vpop.f32.mrf.mxu0
      %v3874 = vadd.f32 %v3765, %v3873
      %v3875 = vpop.f32.mrf.mxu0
      %v3876 = vadd.f32 %v3767, %v3875
      %3877 = vmatmul.bf16.gmra.mxu0 %v3047
      %v3878 = vpop.f32.mrf.mxu0
      %v3879 = vadd.f32 %v3770, %v3878
      %v3880 = vpop.f32.mrf.mxu0
      %v3881 = vadd.f32 %v3772, %v3880
      %3882 = vmatmul.bf16.gmra.mxu0 %v3071
      %v3883 = vpop.f32.mrf.mxu0
      %v3884 = vadd.f32 %v3775, %v3883
      %v3885 = vpop.f32.mrf.mxu0
      %v3886 = vadd.f32 %v3777, %v3885
      %3887 = vmatmul.bf16.gmra.mxu0 %v3095
      %v3888 = vpop.f32.mrf.mxu0
      %v3889 = vadd.f32 %v3780, %v3888
      %v3890 = vpop.f32.mrf.mxu0
      %v3891 = vadd.f32 %v3782, %v3890
      %3892 = vmatmul.bf16.gmra.mxu0 %v3119
      %v3893 = vpop.f32.mrf.mxu0
      %v3894 = vadd.f32 %v3785, %v3893
      %v3895 = vpop.f32.mrf.mxu0
      %v3896 = vadd.f32 %v3787, %v3895
      %3897 = vmatmul.bf16.gmra.mxu0 %v3143
      %v3898 = vpop.f32.mrf.mxu0
      %v3899 = vadd.f32 %v3790, %v3898
      %v3900 = vpop.f32.mrf.mxu0
      %v3901 = vadd.f32 %v3792, %v3900
      %3902 = vmatmul.bf16.gmra.mxu0 %v3167
      %v3903 = vpop.f32.mrf.mxu0
      %v3904 = vadd.f32 %v3795, %v3903
      %v3905 = vpop.f32.mrf.mxu0
      %v3906 = vadd.f32 %v3797, %v3905
      %3907 = vmatmul.bf16.gmra.mxu0 %v3191
      %v3908 = vpop.f32.mrf.mxu0
      %v3909 = vadd.f32 %v3800, %v3908
      %v3910 = vpop.f32.mrf.mxu0
      %v3911 = vadd.f32 %v3802, %v3910
      %3912 = vmatmul.bf16.gmra.mxu0 %v3215
      %v3913 = vpop.f32.mrf.mxu0
      %v3914 = vadd.f32 %v3805, %v3913
      %v3915 = vpop.f32.mrf.mxu0
      %v3916 = vadd.f32 %v3807, %v3915
      %3917 = vmatmul.bf16.gmra.mxu0 %v3239
      %v3918 = vpop.f32.mrf.mxu0
      %v3919 = vadd.f32 %v3810, %v3918
      %v3920 = vpop.f32.mrf.mxu0
      %v3921 = vadd.f32 %v3812, %v3920
      %3922 = vmatmul.bf16.gmra.mxu0 %v3263
      %v3923 = vpop.f32.mrf.mxu0
      %v3924 = vadd.f32 %v3815, %v3923
      %v3925 = vpop.f32.mrf.mxu0
      %v3926 = vadd.f32 %v3817, %v3925
      %3927 = vmatmul.bf16.gmra.mxu0 %v3287
      %v3928 = vpop.f32.mrf.mxu0
      %v3929 = vadd.f32 %v3820, %v3928
      %v3930 = vpop.f32.mrf.mxu0
      %v3931 = vadd.f32 %v3822, %v3930
      %3932 = vmatmul.bf16.gmra.mxu0 %v3311
      %v3933 = vpop.f32.mrf.mxu0
      %v3934 = vadd.f32 %v3825, %v3933
      %v3935 = vpop.f32.mrf.mxu0
      %v3936 = vadd.f32 %v3827, %v3935
      %3937 = vmatmul.bf16.gmra.mxu0 %v3335
      %v3938 = vpop.f32.mrf.mxu0
      %v3939 = vadd.f32 %v3830, %v3938
      %v3940 = vpop.f32.mrf.mxu0
      %v3941 = vadd.f32 %v3832, %v3940
      %3942 = vmatmul.bf16.gmra.mxu0 %v3359
      %v3943 = vpop.f32.mrf.mxu0
      %v3944 = vadd.f32 %v3835, %v3943
      %v3945 = vpop.f32.mrf.mxu0
      %v3946 = vadd.f32 %v3837, %v3945
      %3947 = vmatmul.bf16.gmra.mxu0 %v3383
      %v3948 = vpop.f32.mrf.mxu0
      %v3949 = vadd.f32 %v3840, %v3948
      %v3950 = vpop.f32.mrf.mxu0
      %v3951 = vadd.f32 %v3842, %v3950
      %3952 = vmatmul.bf16.gmra.mxu0 %v3407
      %v3953 = vpop.f32.mrf.mxu0
      %v3954 = vadd.f32 %v3845, %v3953
      %v3955 = vpop.f32.mrf.mxu0
      %v3956 = vadd.f32 %v3847, %v3955
      %3957 = vmatmul.bf16.gmra.mxu0 %v3431
      %v3958 = vpop.f32.mrf.mxu0
      %v3959 = vadd.f32 %v3850, %v3958
      %v3960 = vpop.f32.mrf.mxu0
      %v3961 = vadd.f32 %v3852, %v3960
      %3962 = vdwg.mxu0
      %v4043 = vunpack.c.l.b16 %v2407
      %v4044 = vunpack.c.h.b16 %v2407
      %v4045 = vunpack.c.l.b16 %v2408
      %v4046 = vunpack.c.l.b16 %v2409
      %v4047 = vunpack.c.h.b16 %v2409
      %v4048 = vunpack.c.l.b16 %v2410
      %v4049 = vunpack.c.l.b16 %v2411
      %v4050 = vunpack.c.h.b16 %v2411
      %v4051 = vunpack.c.l.b16 %v2412
      %v4052 = vunpack.c.l.b16 %v2413
      %v4053 = vunpack.c.h.b16 %v2413
      %v4054 = vunpack.c.l.b16 %v2414
      %v4055 = vunpack.c.l.b16 %v2415
      %v4056 = vunpack.c.h.b16 %v2415
      %v4057 = vunpack.c.l.b16 %v2416
      %v4058 = vunpack.c.l.b16 %v2417
      %v4059 = vunpack.c.h.b16 %v2417
      %v4060 = vunpack.c.l.b16 %v2418
      %v4061 = vunpack.c.l.b16 %v2419
      %v4062 = vunpack.c.h.b16 %v2419
      %v4063 = vunpack.c.l.b16 %v2420
      %v4064 = vunpack.c.l.b16 %v2421
      %v4065 = vunpack.c.h.b16 %v2421
      %v4066 = vunpack.c.l.b16 %v2422
      %v4067 = vunpack.c.l.b16 %v2423
      %v4068 = vunpack.c.h.b16 %v2423
      %v4069 = vunpack.c.l.b16 %v2424
      %v4070 = vunpack.c.l.b16 %v2425
      %v4071 = vunpack.c.h.b16 %v2425
      %v4072 = vunpack.c.l.b16 %v2426
      %v4073 = vunpack.c.l.b16 %v2427
      %v4074 = vunpack.c.h.b16 %v2427
      %v4075 = vunpack.c.l.b16 %v2428
      %v4076 = vunpack.c.l.b16 %v2429
      %v4077 = vunpack.c.h.b16 %v2429
      %v4078 = vunpack.c.l.b16 %v2430
      %v4079 = vunpack.c.l.b16 %v2431
      %v4080 = vunpack.c.h.b16 %v2431
      %v4081 = vunpack.c.l.b16 %v2432
      %v4082 = vunpack.c.l.b16 %v2433
      %v4083 = vunpack.c.h.b16 %v2433
      %v4084 = vunpack.c.l.b16 %v2434
      %v4085 = vunpack.c.l.b16 %v2435
      %v4086 = vunpack.c.h.b16 %v2435
      %v4087 = vunpack.c.l.b16 %v2436
      %v4088 = vunpack.c.l.b16 %v2437
      %v4089 = vunpack.c.h.b16 %v2437
      %v4090 = vunpack.c.l.b16 %v2438
      %v4091 = vunpack.c.l.b16 %v2439
      %v4092 = vunpack.c.h.b16 %v2439
      %v4093 = vunpack.c.l.b16 %v2440
      %v4094 = vunpack.c.l.b16 %v2441
      %v4095 = vunpack.c.h.b16 %v2441
      %v4096 = vunpack.c.l.b16 %v2442
      %v4097 = vunpack.c.l.b16 %v2443
      %v4098 = vunpack.c.h.b16 %v2443
      %v4099 = vunpack.c.l.b16 %v2444
      %v4100 = vunpack.c.l.b16 %v2445
      %v4101 = vunpack.c.h.b16 %v2445
      %v4102 = vunpack.c.l.b16 %v2446
      %v4103 = vunpack.c.l.b16 %v2447
      %v4104 = vunpack.c.h.b16 %v2447
      %v4105 = vunpack.c.l.b16 %v2448
      %v4106 = vunpack.c.l.b16 %v2449
      %v4107 = vunpack.c.h.b16 %v2449
      %v4108 = vunpack.c.l.b16 %v2450
      %v4109 = vunpack.c.l.b16 %v2451
      %v4110 = vunpack.c.h.b16 %v2451
      %v4111 = vunpack.c.l.b16 %v2452
      %v4112 = vunpack.c.l.b16 %v2453
      %v4113 = vunpack.c.h.b16 %v2453
      %v4114 = vunpack.c.l.b16 %v2454
      %v4115 = vunpack.c.l.b16 %v2455
      %v4116 = vunpack.c.h.b16 %v2455
      %v4117 = vunpack.c.l.b16 %v2456
      %v4118 = vunpack.c.l.b16 %v2457
      %v4119 = vunpack.c.h.b16 %v2457
      %v4120 = vunpack.c.l.b16 %v2458
      %v4121 = vunpack.c.l.b16 %v2459
      %v4122 = vunpack.c.h.b16 %v2459
      %v4123 = vunpack.c.l.b16 %v2460
      %v4124 = vunpack.c.l.b16 %v2461
      %v4125 = vunpack.c.h.b16 %v2461
      %v4126 = vunpack.c.l.b16 %v2462
      %v4127 = vunpack.c.l.b16 %v2463
      %v4128 = vunpack.c.h.b16 %v2463
      %v4129 = vunpack.c.l.b16 %v2464
      %v4130 = vunpack.c.l.b16 %v2465
      %v4131 = vunpack.c.h.b16 %v2465
      %v4132 = vunpack.c.l.b16 %v2466
      %v4133 = vunpack.c.l.b16 %v2467
      %v4134 = vunpack.c.h.b16 %v2467
      %v4135 = vunpack.c.l.b16 %v2468
      %v4136 = vunpack.c.l.b16 %v2469
      %v4137 = vunpack.c.h.b16 %v2469
      %v4138 = vunpack.c.l.b16 %v2470
      %v4139 = vunpack.c.l.b16 %v2471
      %v4140 = vunpack.c.h.b16 %v2471
      %v4141 = vunpack.c.l.b16 %v2472
      %v4142 = vunpack.c.l.b16 %v2473
      %v4143 = vunpack.c.h.b16 %v2473
      %v4144 = vunpack.c.l.b16 %v2474
      %v4145 = vunpack.c.l.b16 %v2475
      %v4146 = vunpack.c.h.b16 %v2475
      %v4147 = vunpack.c.l.b16 %v2476
      %v4148 = vunpack.c.l.b16 %v2477
      %v4149 = vunpack.c.h.b16 %v2477
      %v4150 = vunpack.c.l.b16 %v2478
      %v4151 = vunpack.c.l.b16 %v2479
      %v4152 = vunpack.c.h.b16 %v2479
      %v4153 = vunpack.c.l.b16 %v2480
      %v4154 = vunpack.c.l.b16 %v2481
      %v4155 = vunpack.c.h.b16 %v2481
      %v4156 = vunpack.c.l.b16 %v2482
      %v4157 = vunpack.c.l.b16 %v2483
      %v4158 = vunpack.c.h.b16 %v2483
      %v4159 = vunpack.c.l.b16 %v2484
      %v4160 = vunpack.c.l.b16 %v2485
      %v4161 = vunpack.c.h.b16 %v2485
      %v4162 = vunpack.c.l.b16 %v2486
      %v4163 = vpack.c.b16 %v4046, %v4043
      %v4164 = vpack.c.b16 %v4047, %v4044
      %v4165 = vpack.c.b16 %v4048, %v4045
      %v4166 = vpack.c.b16 %v4052, %v4049
      %v4167 = vpack.c.b16 %v4053, %v4050
      %v4168 = vpack.c.b16 %v4054, %v4051
      %v4169 = vpack.c.b16 %v4058, %v4055
      %v4170 = vpack.c.b16 %v4059, %v4056
      %v4171 = vpack.c.b16 %v4060, %v4057
      %v4172 = vpack.c.b16 %v4064, %v4061
      %v4173 = vpack.c.b16 %v4065, %v4062
      %v4174 = vpack.c.b16 %v4066, %v4063
      %v4175 = vpack.c.b16 %v4070, %v4067
      %v4176 = vpack.c.b16 %v4071, %v4068
      %v4177 = vpack.c.b16 %v4072, %v4069
      %v4178 = vpack.c.b16 %v4076, %v4073
      %v4179 = vpack.c.b16 %v4077, %v4074
      %v4180 = vpack.c.b16 %v4078, %v4075
      %v4181 = vpack.c.b16 %v4082, %v4079
      %v4182 = vpack.c.b16 %v4083, %v4080
      %v4183 = vpack.c.b16 %v4084, %v4081
      %v4184 = vpack.c.b16 %v4088, %v4085
      %v4185 = vpack.c.b16 %v4089, %v4086
      %v4186 = vpack.c.b16 %v4090, %v4087
      %v4187 = vpack.c.b16 %v4094, %v4091
      %v4188 = vpack.c.b16 %v4095, %v4092
      %v4189 = vpack.c.b16 %v4096, %v4093
      %v4190 = vpack.c.b16 %v4100, %v4097
      %v4191 = vpack.c.b16 %v4101, %v4098
      %v4192 = vpack.c.b16 %v4102, %v4099
      %v4193 = vpack.c.b16 %v4106, %v4103
      %v4194 = vpack.c.b16 %v4107, %v4104
      %v4195 = vpack.c.b16 %v4108, %v4105
      %v4196 = vpack.c.b16 %v4112, %v4109
      %v4197 = vpack.c.b16 %v4113, %v4110
      %v4198 = vpack.c.b16 %v4114, %v4111
      %v4199 = vpack.c.b16 %v4118, %v4115
      %v4200 = vpack.c.b16 %v4119, %v4116
      %v4201 = vpack.c.b16 %v4120, %v4117
      %v4202 = vpack.c.b16 %v4124, %v4121
      %v4203 = vpack.c.b16 %v4125, %v4122
      %v4204 = vpack.c.b16 %v4126, %v4123
      %v4205 = vpack.c.b16 %v4130, %v4127
      %v4206 = vpack.c.b16 %v4131, %v4128
      %v4207 = vpack.c.b16 %v4132, %v4129
      %v4208 = vpack.c.b16 %v4136, %v4133
      %v4209 = vpack.c.b16 %v4137, %v4134
      %v4210 = vpack.c.b16 %v4138, %v4135
      %v4211 = vpack.c.b16 %v4142, %v4139
      %v4212 = vpack.c.b16 %v4143, %v4140
      %v4213 = vpack.c.b16 %v4144, %v4141
      %v4214 = vpack.c.b16 %v4148, %v4145
      %v4215 = vpack.c.b16 %v4149, %v4146
      %v4216 = vpack.c.b16 %v4150, %v4147
      %v4217 = vpack.c.b16 %v4154, %v4151
      %v4218 = vpack.c.b16 %v4155, %v4152
      %v4219 = vpack.c.b16 %v4156, %v4153
      %v4220 = vpack.c.b16 %v4160, %v4157
      %v4221 = vpack.c.b16 %v4161, %v4158
      %v4222 = vpack.c.b16 %v4162, %v4159
      %v4331 = vunpack.c.l.b16 %v2490
      %v4332 = vunpack.c.l.b16 %v2491
      %v4333 = vunpack.c.l.b16 %v2492
      %v4334 = vunpack.c.l.b16 %v2493
      %v4335 = vunpack.c.l.b16 %v2494
      %v4336 = vunpack.c.l.b16 %v2495
      %v4337 = vunpack.c.l.b16 %v2496
      %v4338 = vunpack.c.l.b16 %v2497
      %v4339 = vunpack.c.l.b16 %v2498
      %v4340 = vunpack.c.l.b16 %v2499
      %v4341 = vunpack.c.l.b16 %v2500
      %v4342 = vunpack.c.l.b16 %v2501
      %v4343 = vunpack.c.l.b16 %v2502
      %v4344 = vunpack.c.l.b16 %v2503
      %v4345 = vunpack.c.l.b16 %v2504
      %v4346 = vunpack.c.l.b16 %v2505
      %v4347 = vunpack.c.l.b16 %v2506
      %v4348 = vunpack.c.l.b16 %v2507
      %v4349 = vunpack.c.l.b16 %v2508
      %v4350 = vunpack.c.l.b16 %v2509
      %v4351 = vunpack.c.l.b16 %v2510
      %v4352 = vunpack.c.l.b16 %v2511
      %v4353 = vunpack.c.l.b16 %v2512
      %v4354 = vunpack.c.l.b16 %v2513
      %v4355 = vunpack.c.l.b16 %v2514
      %v4356 = vunpack.c.l.b16 %v2515
      %v4357 = vunpack.c.l.b16 %v2516
      %v4358 = vunpack.c.l.b16 %v2517
      %v4359 = vunpack.c.l.b16 %v2518
      %v4360 = vunpack.c.l.b16 %v2519
      %v4361 = vunpack.c.l.b16 %v2520
      %v4362 = vunpack.c.l.b16 %v2521
      %v4363 = vunpack.c.l.b16 %v2522
      %v4364 = vunpack.c.l.b16 %v2523
      %v4365 = vunpack.c.l.b16 %v2524
      %v4366 = vunpack.c.l.b16 %v2525
      %v4367 = vunpack.c.l.b16 %v2526
      %v4368 = vunpack.c.l.b16 %v2527
      %v4369 = vunpack.c.l.b16 %v2528
      %v4370 = vunpack.c.l.b16 %v2529
      %v4371 = vunpack.c.l.b16 %v2530
      %v4372 = vunpack.c.l.b16 %v2531
      %v4373 = vunpack.c.l.b16 %v2532
      %v4374 = vunpack.c.l.b16 %v2533
      %v4375 = vunpack.c.l.b16 %v2534
      %v4376 = vunpack.c.l.b16 %v2535
      %v4377 = vunpack.c.l.b16 %v2536
      %v4378 = vunpack.c.l.b16 %v2537
      %v4379 = vpack.c.b16 %v4332, %v4331
      %v4380 = vpack.c.b16 %v4334, %v4333
      %v4381 = vpack.c.b16 %v4336, %v4335
      %v4382 = vpack.c.b16 %v4338, %v4337
      %v4383 = vpack.c.b16 %v4340, %v4339
      %v4384 = vpack.c.b16 %v4342, %v4341
      %v4385 = vpack.c.b16 %v4344, %v4343
      %v4386 = vpack.c.b16 %v4346, %v4345
      %v4387 = vpack.c.b16 %v4348, %v4347
      %v4388 = vpack.c.b16 %v4350, %v4349
      %v4389 = vpack.c.b16 %v4352, %v4351
      %v4390 = vpack.c.b16 %v4354, %v4353
      %v4391 = vpack.c.b16 %v4356, %v4355
      %v4392 = vpack.c.b16 %v4358, %v4357
      %v4393 = vpack.c.b16 %v4360, %v4359
      %v4394 = vpack.c.b16 %v4362, %v4361
      %v4395 = vpack.c.b16 %v4364, %v4363
      %v4396 = vpack.c.b16 %v4366, %v4365
      %v4397 = vpack.c.b16 %v4368, %v4367
      %v4398 = vpack.c.b16 %v4370, %v4369
      %v4399 = vpack.c.b16 %v4372, %v4371
      %v4400 = vpack.c.b16 %v4374, %v4373
      %v4401 = vpack.c.b16 %v4376, %v4375
      %v4402 = vpack.c.b16 %v4378, %v4377
      %4427 = vmatpush.bf16.msra.mxu0 %v4386
      %4428 = vmatpush.bf16.msra.mxu0 %v4385
      %4429 = vmatpush.bf16.msra.mxu0 %v4384
      %4430 = vmatpush.bf16.msra.mxu0 %v4383
      %4431 = vmatpush.bf16.msra.mxu0 %v4382
      %4432 = vmatpush.bf16.msra.mxu0 %v4381
      %4433 = vmatpush.bf16.msra.mxu0 %v4380
      %4434 = vmatpush.bf16.msra.mxu0 %v4379
      %4435 = vmatmul.bf16.gmra.mxu0 %v4163
      %v4436 = vpop.f32.mrf.mxu0
      %v4437 = vadd.f32 %v3864, %v4436
      %v4438 = vpop.f32.mrf.mxu0
      %v4439 = vadd.f32 %v3866, %v4438
      %4440 = vmatmul.bf16.gmra.mxu0 %v4166
      %v4441 = vpop.f32.mrf.mxu0
      %v4442 = vadd.f32 %v3869, %v4441
      %v4443 = vpop.f32.mrf.mxu0
      %v4444 = vadd.f32 %v3871, %v4443
      %4445 = vmatmul.bf16.gmra.mxu0 %v4169
      %v4446 = vpop.f32.mrf.mxu0
      %v4447 = vadd.f32 %v3874, %v4446
      %v4448 = vpop.f32.mrf.mxu0
      %v4449 = vadd.f32 %v3876, %v4448
      %4450 = vmatmul.bf16.gmra.mxu0 %v4172
      %v4451 = vpop.f32.mrf.mxu0
      %v4452 = vadd.f32 %v3879, %v4451
      %v4453 = vpop.f32.mrf.mxu0
      %v4454 = vadd.f32 %v3881, %v4453
      %4455 = vmatmul.bf16.gmra.mxu0 %v4175
      %v4456 = vpop.f32.mrf.mxu0
      %v4457 = vadd.f32 %v3884, %v4456
      %v4458 = vpop.f32.mrf.mxu0
      %v4459 = vadd.f32 %v3886, %v4458
      %4460 = vmatmul.bf16.gmra.mxu0 %v4178
      %v4461 = vpop.f32.mrf.mxu0
      %v4462 = vadd.f32 %v3889, %v4461
      %v4463 = vpop.f32.mrf.mxu0
      %v4464 = vadd.f32 %v3891, %v4463
      %4465 = vmatmul.bf16.gmra.mxu0 %v4181
      %v4466 = vpop.f32.mrf.mxu0
      %v4467 = vadd.f32 %v3894, %v4466
      %v4468 = vpop.f32.mrf.mxu0
      %v4469 = vadd.f32 %v3896, %v4468
      %4470 = vmatmul.bf16.gmra.mxu0 %v4184
      %v4471 = vpop.f32.mrf.mxu0
      %v4472 = vadd.f32 %v3899, %v4471
      %v4473 = vpop.f32.mrf.mxu0
      %v4474 = vadd.f32 %v3901, %v4473
      %4475 = vmatmul.bf16.gmra.mxu0 %v4187
      %v4476 = vpop.f32.mrf.mxu0
      %v4477 = vadd.f32 %v3904, %v4476
      %v4478 = vpop.f32.mrf.mxu0
      %v4479 = vadd.f32 %v3906, %v4478
      %4480 = vmatmul.bf16.gmra.mxu0 %v4190
      %v4481 = vpop.f32.mrf.mxu0
      %v4482 = vadd.f32 %v3909, %v4481
      %v4483 = vpop.f32.mrf.mxu0
      %v4484 = vadd.f32 %v3911, %v4483
      %4485 = vmatmul.bf16.gmra.mxu0 %v4193
      %v4486 = vpop.f32.mrf.mxu0
      %v4487 = vadd.f32 %v3914, %v4486
      %v4488 = vpop.f32.mrf.mxu0
      %v4489 = vadd.f32 %v3916, %v4488
      %4490 = vmatmul.bf16.gmra.mxu0 %v4196
      %v4491 = vpop.f32.mrf.mxu0
      %v4492 = vadd.f32 %v3919, %v4491
      %v4493 = vpop.f32.mrf.mxu0
      %v4494 = vadd.f32 %v3921, %v4493
      %4495 = vmatmul.bf16.gmra.mxu0 %v4199
      %v4496 = vpop.f32.mrf.mxu0
      %v4497 = vadd.f32 %v3924, %v4496
      %v4498 = vpop.f32.mrf.mxu0
      %v4499 = vadd.f32 %v3926, %v4498
      %4500 = vmatmul.bf16.gmra.mxu0 %v4202
      %v4501 = vpop.f32.mrf.mxu0
      %v4502 = vadd.f32 %v3929, %v4501
      %v4503 = vpop.f32.mrf.mxu0
      %v4504 = vadd.f32 %v3931, %v4503
      %4505 = vmatmul.bf16.gmra.mxu0 %v4205
      %v4506 = vpop.f32.mrf.mxu0
      %v4507 = vadd.f32 %v3934, %v4506
      %v4508 = vpop.f32.mrf.mxu0
      %v4509 = vadd.f32 %v3936, %v4508
      %4510 = vmatmul.bf16.gmra.mxu0 %v4208
      %v4511 = vpop.f32.mrf.mxu0
      %v4512 = vadd.f32 %v3939, %v4511
      %v4513 = vpop.f32.mrf.mxu0
      %v4514 = vadd.f32 %v3941, %v4513
      %4515 = vmatmul.bf16.gmra.mxu0 %v4211
      %v4516 = vpop.f32.mrf.mxu0
      %v4517 = vadd.f32 %v3944, %v4516
      %v4518 = vpop.f32.mrf.mxu0
      %v4519 = vadd.f32 %v3946, %v4518
      %4520 = vmatmul.bf16.gmra.mxu0 %v4214
      %v4521 = vpop.f32.mrf.mxu0
      %v4522 = vadd.f32 %v3949, %v4521
      %v4523 = vpop.f32.mrf.mxu0
      %v4524 = vadd.f32 %v3951, %v4523
      %4525 = vmatmul.bf16.gmra.mxu0 %v4217
      %v4526 = vpop.f32.mrf.mxu0
      %v4527 = vadd.f32 %v3954, %v4526
      %v4528 = vpop.f32.mrf.mxu0
      %v4529 = vadd.f32 %v3956, %v4528
      %4530 = vmatmul.bf16.gmra.mxu0 %v4220
      %v4531 = vpop.f32.mrf.mxu0
      %v4532 = vadd.f32 %v3959, %v4531
      %v4533 = vpop.f32.mrf.mxu0
      %v4534 = vadd.f32 %v3961, %v4533
      %4535 = vdwg.mxu0
      %4536 = vmatpush.bf16.msra.mxu0 %v4394
      %4537 = vmatpush.bf16.msra.mxu0 %v4393
      %4538 = vmatpush.bf16.msra.mxu0 %v4392
      %4539 = vmatpush.bf16.msra.mxu0 %v4391
      %4540 = vmatpush.bf16.msra.mxu0 %v4390
      %4541 = vmatpush.bf16.msra.mxu0 %v4389
      %4542 = vmatpush.bf16.msra.mxu0 %v4388
      %4543 = vmatpush.bf16.msra.mxu0 %v4387
      %4544 = vmatmul.bf16.gmra.mxu0 %v4164
      %v4545 = vpop.f32.mrf.mxu0
      %v4546 = vadd.f32 %v4437, %v4545
      %v4547 = vpop.f32.mrf.mxu0
      %v4548 = vadd.f32 %v4439, %v4547
      %4549 = vmatmul.bf16.gmra.mxu0 %v4167
      %v4550 = vpop.f32.mrf.mxu0
      %v4551 = vadd.f32 %v4442, %v4550
      %v4552 = vpop.f32.mrf.mxu0
      %v4553 = vadd.f32 %v4444, %v4552
      %4554 = vmatmul.bf16.gmra.mxu0 %v4170
      %v4555 = vpop.f32.mrf.mxu0
      %v4556 = vadd.f32 %v4447, %v4555
      %v4557 = vpop.f32.mrf.mxu0
      %v4558 = vadd.f32 %v4449, %v4557
      %4559 = vmatmul.bf16.gmra.mxu0 %v4173
      %v4560 = vpop.f32.mrf.mxu0
      %v4561 = vadd.f32 %v4452, %v4560
      %v4562 = vpop.f32.mrf.mxu0
      %v4563 = vadd.f32 %v4454, %v4562
      %4564 = vmatmul.bf16.gmra.mxu0 %v4176
      %v4565 = vpop.f32.mrf.mxu0
      %v4566 = vadd.f32 %v4457, %v4565
      %v4567 = vpop.f32.mrf.mxu0
      %v4568 = vadd.f32 %v4459, %v4567
      %4569 = vmatmul.bf16.gmra.mxu0 %v4179
      %v4570 = vpop.f32.mrf.mxu0
      %v4571 = vadd.f32 %v4462, %v4570
      %v4572 = vpop.f32.mrf.mxu0
      %v4573 = vadd.f32 %v4464, %v4572
      %4574 = vmatmul.bf16.gmra.mxu0 %v4182
      %v4575 = vpop.f32.mrf.mxu0
      %v4576 = vadd.f32 %v4467, %v4575
      %v4577 = vpop.f32.mrf.mxu0
      %v4578 = vadd.f32 %v4469, %v4577
      %4579 = vmatmul.bf16.gmra.mxu0 %v4185
      %v4580 = vpop.f32.mrf.mxu0
      %v4581 = vadd.f32 %v4472, %v4580
      %v4582 = vpop.f32.mrf.mxu0
      %v4583 = vadd.f32 %v4474, %v4582
      %4584 = vmatmul.bf16.gmra.mxu0 %v4188
      %v4585 = vpop.f32.mrf.mxu0
      %v4586 = vadd.f32 %v4477, %v4585
      %v4587 = vpop.f32.mrf.mxu0
      %v4588 = vadd.f32 %v4479, %v4587
      %4589 = vmatmul.bf16.gmra.mxu0 %v4191
      %v4590 = vpop.f32.mrf.mxu0
      %v4591 = vadd.f32 %v4482, %v4590
      %v4592 = vpop.f32.mrf.mxu0
      %v4593 = vadd.f32 %v4484, %v4592
      %4594 = vmatmul.bf16.gmra.mxu0 %v4194
      %v4595 = vpop.f32.mrf.mxu0
      %v4596 = vadd.f32 %v4487, %v4595
      %v4597 = vpop.f32.mrf.mxu0
      %v4598 = vadd.f32 %v4489, %v4597
      %4599 = vmatmul.bf16.gmra.mxu0 %v4197
      %v4600 = vpop.f32.mrf.mxu0
      %v4601 = vadd.f32 %v4492, %v4600
      %v4602 = vpop.f32.mrf.mxu0
      %v4603 = vadd.f32 %v4494, %v4602
      %4604 = vmatmul.bf16.gmra.mxu0 %v4200
      %v4605 = vpop.f32.mrf.mxu0
      %v4606 = vadd.f32 %v4497, %v4605
      %v4607 = vpop.f32.mrf.mxu0
      %v4608 = vadd.f32 %v4499, %v4607
      %4609 = vmatmul.bf16.gmra.mxu0 %v4203
      %v4610 = vpop.f32.mrf.mxu0
      %v4611 = vadd.f32 %v4502, %v4610
      %v4612 = vpop.f32.mrf.mxu0
      %v4613 = vadd.f32 %v4504, %v4612
      %4614 = vmatmul.bf16.gmra.mxu0 %v4206
      %v4615 = vpop.f32.mrf.mxu0
      %v4616 = vadd.f32 %v4507, %v4615
      %v4617 = vpop.f32.mrf.mxu0
      %v4618 = vadd.f32 %v4509, %v4617
      %4619 = vmatmul.bf16.gmra.mxu0 %v4209
      %v4620 = vpop.f32.mrf.mxu0
      %v4621 = vadd.f32 %v4512, %v4620
      %v4622 = vpop.f32.mrf.mxu0
      %v4623 = vadd.f32 %v4514, %v4622
      %4624 = vmatmul.bf16.gmra.mxu0 %v4212
      %v4625 = vpop.f32.mrf.mxu0
      %v4626 = vadd.f32 %v4517, %v4625
      %v4627 = vpop.f32.mrf.mxu0
      %v4628 = vadd.f32 %v4519, %v4627
      %4629 = vmatmul.bf16.gmra.mxu0 %v4215
      %v4630 = vpop.f32.mrf.mxu0
      %v4631 = vadd.f32 %v4522, %v4630
      %v4632 = vpop.f32.mrf.mxu0
      %v4633 = vadd.f32 %v4524, %v4632
      %4634 = vmatmul.bf16.gmra.mxu0 %v4218
      %v4635 = vpop.f32.mrf.mxu0
      %v4636 = vadd.f32 %v4527, %v4635
      %v4637 = vpop.f32.mrf.mxu0
      %v4638 = vadd.f32 %v4529, %v4637
      %4639 = vmatmul.bf16.gmra.mxu0 %v4221
      %v4640 = vpop.f32.mrf.mxu0
      %v4641 = vadd.f32 %v4532, %v4640
      %v4642 = vpop.f32.mrf.mxu0
      %v4643 = vadd.f32 %v4534, %v4642
      %4644 = vdwg.mxu0
      %4645 = vmatpush.bf16.msra.mxu0 %v4402
      %4646 = vmatpush.bf16.msra.mxu0 %v4401
      %4647 = vmatpush.bf16.msra.mxu0 %v4400
      %4648 = vmatpush.bf16.msra.mxu0 %v4399
      %4649 = vmatpush.bf16.msra.mxu0 %v4398
      %4650 = vmatpush.bf16.msra.mxu0 %v4397
      %4651 = vmatpush.bf16.msra.mxu0 %v4396
      %4652 = vmatpush.bf16.msra.mxu0 %v4395
      %4653 = vmatmul.bf16.gmra.mxu0 %v4165
      %v4654 = vpop.f32.mrf.mxu0
      %v4655 = vadd.f32 %v4546, %v4654
      %v4656 = vpop.f32.mrf.mxu0
      %v4657 = vadd.f32 %v4548, %v4656
      %4658 = vmatmul.bf16.gmra.mxu0 %v4168
      %v4659 = vpop.f32.mrf.mxu0
      %v4660 = vadd.f32 %v4551, %v4659
      %v4661 = vpop.f32.mrf.mxu0
      %v4662 = vadd.f32 %v4553, %v4661
      %4663 = vmatmul.bf16.gmra.mxu0 %v4171
      %v4664 = vpop.f32.mrf.mxu0
      %v4665 = vadd.f32 %v4556, %v4664
      %v4666 = vpop.f32.mrf.mxu0
      %v4667 = vadd.f32 %v4558, %v4666
      %4668 = vmatmul.bf16.gmra.mxu0 %v4174
      %v4669 = vpop.f32.mrf.mxu0
      %v4670 = vadd.f32 %v4561, %v4669
      %v4671 = vpop.f32.mrf.mxu0
      %v4672 = vadd.f32 %v4563, %v4671
      %4673 = vmatmul.bf16.gmra.mxu0 %v4177
      %v4674 = vpop.f32.mrf.mxu0
      %v4675 = vadd.f32 %v4566, %v4674
      %v4676 = vpop.f32.mrf.mxu0
      %v4677 = vadd.f32 %v4568, %v4676
      %4678 = vmatmul.bf16.gmra.mxu0 %v4180
      %v4679 = vpop.f32.mrf.mxu0
      %v4680 = vadd.f32 %v4571, %v4679
      %v4681 = vpop.f32.mrf.mxu0
      %v4682 = vadd.f32 %v4573, %v4681
      %4683 = vmatmul.bf16.gmra.mxu0 %v4183
      %v4684 = vpop.f32.mrf.mxu0
      %v4685 = vadd.f32 %v4576, %v4684
      %v4686 = vpop.f32.mrf.mxu0
      %v4687 = vadd.f32 %v4578, %v4686
      %4688 = vmatmul.bf16.gmra.mxu0 %v4186
      %v4689 = vpop.f32.mrf.mxu0
      %v4690 = vadd.f32 %v4581, %v4689
      %v4691 = vpop.f32.mrf.mxu0
      %v4692 = vadd.f32 %v4583, %v4691
      %4693 = vmatmul.bf16.gmra.mxu0 %v4189
      %v4694 = vpop.f32.mrf.mxu0
      %v4695 = vadd.f32 %v4586, %v4694
      %v4696 = vpop.f32.mrf.mxu0
      %v4697 = vadd.f32 %v4588, %v4696
      %4698 = vmatmul.bf16.gmra.mxu0 %v4192
      %v4699 = vpop.f32.mrf.mxu0
      %v4700 = vadd.f32 %v4591, %v4699
      %v4701 = vpop.f32.mrf.mxu0
      %v4702 = vadd.f32 %v4593, %v4701
      %4703 = vmatmul.bf16.gmra.mxu0 %v4195
      %v4704 = vpop.f32.mrf.mxu0
      %v4705 = vadd.f32 %v4596, %v4704
      %v4706 = vpop.f32.mrf.mxu0
      %v4707 = vadd.f32 %v4598, %v4706
      %4708 = vmatmul.bf16.gmra.mxu0 %v4198
      %v4709 = vpop.f32.mrf.mxu0
      %v4710 = vadd.f32 %v4601, %v4709
      %v4711 = vpop.f32.mrf.mxu0
      %v4712 = vadd.f32 %v4603, %v4711
      %4713 = vmatmul.bf16.gmra.mxu0 %v4201
      %v4714 = vpop.f32.mrf.mxu0
      %v4715 = vadd.f32 %v4606, %v4714
      %v4716 = vpop.f32.mrf.mxu0
      %v4717 = vadd.f32 %v4608, %v4716
      %4718 = vmatmul.bf16.gmra.mxu0 %v4204
      %v4719 = vpop.f32.mrf.mxu0
      %v4720 = vadd.f32 %v4611, %v4719
      %v4721 = vpop.f32.mrf.mxu0
      %v4722 = vadd.f32 %v4613, %v4721
      %4723 = vmatmul.bf16.gmra.mxu0 %v4207
      %v4724 = vpop.f32.mrf.mxu0
      %v4725 = vadd.f32 %v4616, %v4724
      %v4726 = vpop.f32.mrf.mxu0
      %v4727 = vadd.f32 %v4618, %v4726
      %4728 = vmatmul.bf16.gmra.mxu0 %v4210
      %v4729 = vpop.f32.mrf.mxu0
      %v4730 = vadd.f32 %v4621, %v4729
      %v4731 = vpop.f32.mrf.mxu0
      %v4732 = vadd.f32 %v4623, %v4731
      %4733 = vmatmul.bf16.gmra.mxu0 %v4213
      %v4734 = vpop.f32.mrf.mxu0
      %v4735 = vadd.f32 %v4626, %v4734
      %v4736 = vpop.f32.mrf.mxu0
      %v4737 = vadd.f32 %v4628, %v4736
      %4738 = vmatmul.bf16.gmra.mxu0 %v4216
      %v4739 = vpop.f32.mrf.mxu0
      %v4740 = vadd.f32 %v4631, %v4739
      %v4741 = vpop.f32.mrf.mxu0
      %v4742 = vadd.f32 %v4633, %v4741
      %4743 = vmatmul.bf16.gmra.mxu0 %v4219
      %v4744 = vpop.f32.mrf.mxu0
      %v4745 = vadd.f32 %v4636, %v4744
      %v4746 = vpop.f32.mrf.mxu0
      %v4747 = vadd.f32 %v4638, %v4746
      %4748 = vmatmul.bf16.gmra.mxu0 %v4222
      %v4749 = vpop.f32.mrf.mxu0
      %v4750 = vadd.f32 %v4641, %v4749
      %v4751 = vpop.f32.mrf.mxu0
      %v4752 = vadd.f32 %v4643, %v4751
      %4753 = vdwg.mxu0
      %v4754 = vld [vmem:[#allocation4] sm:$0xee]
      %v4755 = vld [vmem:[#allocation4 + $0x8] sm:$0xe]
      %s4756 = sadd.s32 96, %s2487
      %s4757 = smul.addr %s4756, 4
      %s4758 = scalar_lea.vmem %s1, %s4757
      %v4759 = vld [vmem:[%s4758] sm:$0xf]
      %v4760 = vld [vmem:[%s4758 + $0x4] sm:$0xf]
      %v4761 = vld [vmem:[%s4758 + $0x8] sm:$0xf]
      %v4762 = vld [vmem:[%s4758 + $0xc] sm:$0xf]
      %v4763 = vld [vmem:[%s4758 + $0x10] sm:$0xf]
      %v4764 = vld [vmem:[%s4758 + $0x14] sm:$0xf]
      %v4765 = vld [vmem:[%s4758 + $0x18] sm:$0xf]
      %v4766 = vld [vmem:[%s4758 + $0x1c] sm:$0xf]
      %v4767 = vld [vmem:[%s4758 + $0x20] sm:$0xf]
      %v4768 = vld [vmem:[%s4758 + $0x24] sm:$0xf]
      %v4769 = vld [vmem:[%s4758 + $0x28] sm:$0xf]
      %v4770 = vld [vmem:[%s4758 + $0x2c] sm:$0xf]
      %v4771 = vld [vmem:[%s4758 + $0x30] sm:$0xf]
      %v4772 = vld [vmem:[%s4758 + $0x34] sm:$0xf]
      %v4773 = vld [vmem:[%s4758 + $0x38] sm:$0xf]
      %v4774 = vld [vmem:[%s4758 + $0x3c] sm:$0xf]
      %v4775 = vld [vmem:[%s4758 + $0x40] sm:$0xf]
      %v4776 = vld [vmem:[%s4758 + $0x44] sm:$0xf]
      %v4777 = vld [vmem:[%s4758 + $0x48] sm:$0xf]
      %v4778 = vld [vmem:[%s4758 + $0x4c] sm:$0xf]
      %v4779 = vld [vmem:[%s4758 + $0x50] sm:$0xf]
      %v4780 = vld [vmem:[%s4758 + $0x54] sm:$0xf]
      %v4781 = vld [vmem:[%s4758 + $0x58] sm:$0xf]
      %v4782 = vld [vmem:[%s4758 + $0x5c] sm:$0xf]
      %v4783 = vld [vmem:[%s4758 + $0x60] sm:$0xf]
      %v4784 = vld [vmem:[%s4758 + $0x64] sm:$0xf]
      %v4785 = vld [vmem:[%s4758 + $0x68] sm:$0xf]
      %v4786 = vld [vmem:[%s4758 + $0x6c] sm:$0xf]
      %v4787 = vld [vmem:[%s4758 + $0x70] sm:$0xf]
      %v4788 = vld [vmem:[%s4758 + $0x74] sm:$0xf]
      %v4789 = vld [vmem:[%s4758 + $0x78] sm:$0xf]
      %v4790 = vld [vmem:[%s4758 + $0x7c] sm:$0xf]
      %v4791 = vld [vmem:[%s4758 + $0x80] sm:$0xf]
      %v4792 = vld [vmem:[%s4758 + $0x84] sm:$0xf]
      %v4793 = vld [vmem:[%s4758 + $0x88] sm:$0xf]
      %v4794 = vld [vmem:[%s4758 + $0x8c] sm:$0xf]
      %v4795 = vld [vmem:[%s4758 + $0x90] sm:$0xf]
      %v4796 = vld [vmem:[%s4758 + $0x94] sm:$0xf]
      %v4797 = vld [vmem:[%s4758 + $0x98] sm:$0xf]
      %v4798 = vld [vmem:[%s4758 + $0x9c] sm:$0xf]
      %v4799 = vld [vmem:[%s4758 + $0xa0] sm:$0xf]
      %v4800 = vld [vmem:[%s4758 + $0xa4] sm:$0xf]
      %v4801 = vld [vmem:[%s4758 + $0xa8] sm:$0xf]
      %v4802 = vld [vmem:[%s4758 + $0xac] sm:$0xf]
      %v4803 = vld [vmem:[%s4758 + $0xb0] sm:$0xf]
      %v4804 = vld [vmem:[%s4758 + $0xb4] sm:$0xf]
      %v4805 = vld [vmem:[%s4758 + $0xb8] sm:$0xf]
      %v4806 = vld [vmem:[%s4758 + $0xbc] sm:$0xf]
      %v4809 = vunpack.c.l.b16 %v4754
      %v4810 = vunpack.c.h.b16 %v4754
      %v4811 = vunpack.c.l.b16 %v4755
      %v4812 = vpack.c.b16 %v2756, %v4809
      %v4813 = vpack.c.b16 %v2757, %v4810
      %v4814 = vpack.c.b16 %v2758, %v4811
      %vm4815 = vcmask 1046528
      %v4816 = vrot.slane %v4812, 1
      %v4817 = vrot.slane %v2879, 1
      %v4818 = vsel %vm4815, %v4816, %v4817
      %v4819 = vrot.slane %v4813, 1
      %v4820 = vrot.slane %v2880, 1
      %v4821 = vsel %vm4815, %v4819, %v4820
      %v4822 = vrot.slane %v4814, 1
      %v4823 = vrot.slane %v2881, 1
      %v4824 = vsel %vm4815, %v4822, %v4823
      %v4825 = vrot.slane %v2882, 1
      %v4826 = vsel %vm4815, %v4817, %v4825
      %v4827 = vrot.slane %v2883, 1
      %v4828 = vsel %vm4815, %v4820, %v4827
      %v4829 = vrot.slane %v2884, 1
      %v4830 = vsel %vm4815, %v4823, %v4829
      %v4831 = vrot.slane %v2885, 1
      %v4832 = vsel %vm4815, %v4825, %v4831
      %v4833 = vrot.slane %v2886, 1
      %v4834 = vsel %vm4815, %v4827, %v4833
      %v4835 = vrot.slane %v2887, 1
      %v4836 = vsel %vm4815, %v4829, %v4835
      %v4837 = vrot.slane %v2888, 1
      %v4838 = vsel %vm4815, %v4831, %v4837
      %v4839 = vrot.slane %v2889, 1
      %v4840 = vsel %vm4815, %v4833, %v4839
      %v4841 = vrot.slane %v2890, 1
      %v4842 = vsel %vm4815, %v4835, %v4841
      %v4843 = vrot.slane %v2891, 1
      %v4844 = vsel %vm4815, %v4837, %v4843
      %v4845 = vrot.slane %v2892, 1
      %v4846 = vsel %vm4815, %v4839, %v4845
      %v4847 = vrot.slane %v2893, 1
      %v4848 = vsel %vm4815, %v4841, %v4847
      %v4849 = vrot.slane %v2894, 1
      %v4850 = vsel %vm4815, %v4843, %v4849
      %v4851 = vrot.slane %v2895, 1
      %v4852 = vsel %vm4815, %v4845, %v4851
      %v4853 = vrot.slane %v2896, 1
      %v4854 = vsel %vm4815, %v4847, %v4853
      %v4855 = vrot.slane %v2897, 1
      %v4856 = vsel %vm4815, %v4849, %v4855
      %v4857 = vrot.slane %v2898, 1
      %v4858 = vsel %vm4815, %v4851, %v4857
      %v4859 = vrot.slane %v2899, 1
      %v4860 = vsel %vm4815, %v4853, %v4859
      %v4861 = vrot.slane %v2900, 1
      %v4862 = vsel %vm4815, %v4855, %v4861
      %v4863 = vrot.slane %v2901, 1
      %v4864 = vsel %vm4815, %v4857, %v4863
      %v4865 = vrot.slane %v2902, 1
      %v4866 = vsel %vm4815, %v4859, %v4865
      %v4867 = vrot.slane %v2903, 1
      %v4868 = vsel %vm4815, %v4861, %v4867
      %v4869 = vrot.slane %v2904, 1
      %v4870 = vsel %vm4815, %v4863, %v4869
      %v4871 = vrot.slane %v2905, 1
      %v4872 = vsel %vm4815, %v4865, %v4871
      %v4873 = vrot.slane %v2906, 1
      %v4874 = vsel %vm4815, %v4867, %v4873
      %v4875 = vrot.slane %v2907, 1
      %v4876 = vsel %vm4815, %v4869, %v4875
      %v4877 = vrot.slane %v2908, 1
      %v4878 = vsel %vm4815, %v4871, %v4877
      %v4879 = vrot.slane %v2909, 1
      %v4880 = vsel %vm4815, %v4873, %v4879
      %v4881 = vrot.slane %v2910, 1
      %v4882 = vsel %vm4815, %v4875, %v4881
      %v4883 = vrot.slane %v2911, 1
      %v4884 = vsel %vm4815, %v4877, %v4883
      %v4885 = vrot.slane %v2912, 1
      %v4886 = vsel %vm4815, %v4879, %v4885
      %v4887 = vrot.slane %v2913, 1
      %v4888 = vsel %vm4815, %v4881, %v4887
      %v4889 = vrot.slane %v2914, 1
      %v4890 = vsel %vm4815, %v4883, %v4889
      %v4891 = vrot.slane %v2915, 1
      %v4892 = vsel %vm4815, %v4885, %v4891
      %v4893 = vrot.slane %v2916, 1
      %v4894 = vsel %vm4815, %v4887, %v4893
      %v4895 = vrot.slane %v2917, 1
      %v4896 = vsel %vm4815, %v4889, %v4895
      %v4897 = vrot.slane %v2918, 1
      %v4898 = vsel %vm4815, %v4891, %v4897
      %v4899 = vrot.slane %v2919, 1
      %v4900 = vsel %vm4815, %v4893, %v4899
      %v4901 = vrot.slane %v2920, 1
      %v4902 = vsel %vm4815, %v4895, %v4901
      %v4903 = vrot.slane %v2921, 1
      %v4904 = vsel %vm4815, %v4897, %v4903
      %v4905 = vrot.slane %v2922, 1
      %v4906 = vsel %vm4815, %v4899, %v4905
      %v4907 = vrot.slane %v2923, 1
      %v4908 = vsel %vm4815, %v4901, %v4907
      %v4909 = vrot.slane %v2924, 1
      %v4910 = vsel %vm4815, %v4903, %v4909
      %v4911 = vrot.slane %v2925, 1
      %v4912 = vsel %vm4815, %v4905, %v4911
      %v4913 = vrot.slane %v2926, 1
      %v4914 = vsel %vm4815, %v4907, %v4913
      %v4915 = vrot.slane %v2927, 1
      %v4916 = vsel %vm4815, %v4909, %v4915
      %v4917 = vrot.slane %v2928, 1
      %v4918 = vsel %vm4815, %v4911, %v4917
      %v4919 = vrot.slane %v2929, 1
      %v4920 = vsel %vm4815, %v4913, %v4919
      %v4921 = vrot.slane %v2930, 1
      %v4922 = vsel %vm4815, %v4915, %v4921
      %v4923 = vrot.slane %v2931, 1
      %v4924 = vsel %vm4815, %v4917, %v4923
      %v4925 = vrot.slane %v2932, 1
      %v4926 = vsel %vm4815, %v4919, %v4925
      %v4927 = vrot.slane %v2933, 1
      %v4928 = vsel %vm4815, %v4921, %v4927
      %v4929 = vrot.slane %v2934, 1
      %v4930 = vsel %vm4815, %v4923, %v4929
      %v4931 = vrot.slane %v2935, 1
      %v4932 = vsel %vm4815, %v4925, %v4931
      %v4933 = vrot.slane %v2936, 1
      %v4934 = vsel %vm4815, %v4927, %v4933
      %v4935 = vrot.slane %v2937, 1
      %v4936 = vsel %vm4815, %v4929, %v4935
      %v4937 = vrot.slane %v2938, 1
      %v4938 = vsel %vm4815, %v4931, %v4937
      %v5047 = vunpack.c.l.b16 %v4759
      %v5048 = vunpack.c.l.b16 %v4760
      %v5049 = vunpack.c.l.b16 %v4761
      %v5050 = vunpack.c.l.b16 %v4762
      %v5051 = vunpack.c.l.b16 %v4763
      %v5052 = vunpack.c.l.b16 %v4764
      %v5053 = vunpack.c.l.b16 %v4765
      %v5054 = vunpack.c.l.b16 %v4766
      %v5055 = vunpack.c.l.b16 %v4767
      %v5056 = vunpack.c.l.b16 %v4768
      %v5057 = vunpack.c.l.b16 %v4769
      %v5058 = vunpack.c.l.b16 %v4770
      %v5059 = vunpack.c.l.b16 %v4771
      %v5060 = vunpack.c.l.b16 %v4772
      %v5061 = vunpack.c.l.b16 %v4773
      %v5062 = vunpack.c.l.b16 %v4774
      %v5063 = vunpack.c.l.b16 %v4775
      %v5064 = vunpack.c.l.b16 %v4776
      %v5065 = vunpack.c.l.b16 %v4777
      %v5066 = vunpack.c.l.b16 %v4778
      %v5067 = vunpack.c.l.b16 %v4779
      %v5068 = vunpack.c.l.b16 %v4780
      %v5069 = vunpack.c.l.b16 %v4781
      %v5070 = vunpack.c.l.b16 %v4782
      %v5071 = vunpack.c.l.b16 %v4783
      %v5072 = vunpack.c.l.b16 %v4784
      %v5073 = vunpack.c.l.b16 %v4785
      %v5074 = vunpack.c.l.b16 %v4786
      %v5075 = vunpack.c.l.b16 %v4787
      %v5076 = vunpack.c.l.b16 %v4788
      %v5077 = vunpack.c.l.b16 %v4789
      %v5078 = vunpack.c.l.b16 %v4790
      %v5079 = vunpack.c.l.b16 %v4791
      %v5080 = vunpack.c.l.b16 %v4792
      %v5081 = vunpack.c.l.b16 %v4793
      %v5082 = vunpack.c.l.b16 %v4794
      %v5083 = vunpack.c.l.b16 %v4795
      %v5084 = vunpack.c.l.b16 %v4796
      %v5085 = vunpack.c.l.b16 %v4797
      %v5086 = vunpack.c.l.b16 %v4798
      %v5087 = vunpack.c.l.b16 %v4799
      %v5088 = vunpack.c.l.b16 %v4800
      %v5089 = vunpack.c.l.b16 %v4801
      %v5090 = vunpack.c.l.b16 %v4802
      %v5091 = vunpack.c.l.b16 %v4803
      %v5092 = vunpack.c.l.b16 %v4804
      %v5093 = vunpack.c.l.b16 %v4805
      %v5094 = vunpack.c.l.b16 %v4806
      %v5095 = vpack.c.b16 %v5048, %v5047
      %v5096 = vpack.c.b16 %v5050, %v5049
      %v5097 = vpack.c.b16 %v5052, %v5051
      %v5098 = vpack.c.b16 %v5054, %v5053
      %v5099 = vpack.c.b16 %v5056, %v5055
      %v5100 = vpack.c.b16 %v5058, %v5057
      %v5101 = vpack.c.b16 %v5060, %v5059
      %v5102 = vpack.c.b16 %v5062, %v5061
      %v5103 = vpack.c.b16 %v5064, %v5063
      %v5104 = vpack.c.b16 %v5066, %v5065
      %v5105 = vpack.c.b16 %v5068, %v5067
      %v5106 = vpack.c.b16 %v5070, %v5069
      %v5107 = vpack.c.b16 %v5072, %v5071
      %v5108 = vpack.c.b16 %v5074, %v5073
      %v5109 = vpack.c.b16 %v5076, %v5075
      %v5110 = vpack.c.b16 %v5078, %v5077
      %v5111 = vpack.c.b16 %v5080, %v5079
      %v5112 = vpack.c.b16 %v5082, %v5081
      %v5113 = vpack.c.b16 %v5084, %v5083
      %v5114 = vpack.c.b16 %v5086, %v5085
      %v5115 = vpack.c.b16 %v5088, %v5087
      %v5116 = vpack.c.b16 %v5090, %v5089
      %v5117 = vpack.c.b16 %v5092, %v5091
      %v5118 = vpack.c.b16 %v5094, %v5093
      %5143 = vmatpush.bf16.msra.mxu0 %v5102
      %5144 = vmatpush.bf16.msra.mxu0 %v5101
      %5145 = vmatpush.bf16.msra.mxu0 %v5100
      %5146 = vmatpush.bf16.msra.mxu0 %v5099
      %5147 = vmatpush.bf16.msra.mxu0 %v5098
      %5148 = vmatpush.bf16.msra.mxu0 %v5097
      %5149 = vmatpush.bf16.msra.mxu0 %v5096
      %5150 = vmatpush.bf16.msra.mxu0 %v5095
      %5151 = vmatmul.bf16.gmra.mxu0 %v4818
      %v5152 = vpop.f32.mrf.mxu0
      %v5153 = vadd.f32 0.0, %v5152
      %v5154 = vpop.f32.mrf.mxu0
      %v5155 = vadd.f32 0.0, %v5154
      %5156 = vmatmul.bf16.gmra.mxu0 %v4826
      %v5157 = vpop.f32.mrf.mxu0
      %v5158 = vadd.f32 0.0, %v5157
      %v5159 = vpop.f32.mrf.mxu0
      %v5160 = vadd.f32 0.0, %v5159
      %5161 = vmatmul.bf16.gmra.mxu0 %v4832
      %v5162 = vpop.f32.mrf.mxu0
      %v5163 = vadd.f32 0.0, %v5162
      %v5164 = vpop.f32.mrf.mxu0
      %v5165 = vadd.f32 0.0, %v5164
      %5166 = vmatmul.bf16.gmra.mxu0 %v4838
      %v5167 = vpop.f32.mrf.mxu0
      %v5168 = vadd.f32 0.0, %v5167
      %v5169 = vpop.f32.mrf.mxu0
      %v5170 = vadd.f32 0.0, %v5169
      %5171 = vmatmul.bf16.gmra.mxu0 %v4844
      %v5172 = vpop.f32.mrf.mxu0
      %v5173 = vadd.f32 0.0, %v5172
      %v5174 = vpop.f32.mrf.mxu0
      %v5175 = vadd.f32 0.0, %v5174
      %5176 = vmatmul.bf16.gmra.mxu0 %v4850
      %v5177 = vpop.f32.mrf.mxu0
      %v5178 = vadd.f32 0.0, %v5177
      %v5179 = vpop.f32.mrf.mxu0
      %v5180 = vadd.f32 0.0, %v5179
      %5181 = vmatmul.bf16.gmra.mxu0 %v4856
      %v5182 = vpop.f32.mrf.mxu0
      %v5183 = vadd.f32 0.0, %v5182
      %v5184 = vpop.f32.mrf.mxu0
      %v5185 = vadd.f32 0.0, %v5184
      %5186 = vmatmul.bf16.gmra.mxu0 %v4862
      %v5187 = vpop.f32.mrf.mxu0
      %v5188 = vadd.f32 0.0, %v5187
      %v5189 = vpop.f32.mrf.mxu0
      %v5190 = vadd.f32 0.0, %v5189
      %5191 = vmatmul.bf16.gmra.mxu0 %v4868
      %v5192 = vpop.f32.mrf.mxu0
      %v5193 = vadd.f32 0.0, %v5192
      %v5194 = vpop.f32.mrf.mxu0
      %v5195 = vadd.f32 0.0, %v5194
      %5196 = vmatmul.bf16.gmra.mxu0 %v4874
      %v5197 = vpop.f32.mrf.mxu0
      %v5198 = vadd.f32 0.0, %v5197
      %v5199 = vpop.f32.mrf.mxu0
      %v5200 = vadd.f32 0.0, %v5199
      %5201 = vmatmul.bf16.gmra.mxu0 %v4880
      %v5202 = vpop.f32.mrf.mxu0
      %v5203 = vadd.f32 0.0, %v5202
      %v5204 = vpop.f32.mrf.mxu0
      %v5205 = vadd.f32 0.0, %v5204
      %5206 = vmatmul.bf16.gmra.mxu0 %v4886
      %v5207 = vpop.f32.mrf.mxu0
      %v5208 = vadd.f32 0.0, %v5207
      %v5209 = vpop.f32.mrf.mxu0
      %v5210 = vadd.f32 0.0, %v5209
      %5211 = vmatmul.bf16.gmra.mxu0 %v4892
      %v5212 = vpop.f32.mrf.mxu0
      %v5213 = vadd.f32 0.0, %v5212
      %v5214 = vpop.f32.mrf.mxu0
      %v5215 = vadd.f32 0.0, %v5214
      %5216 = vmatmul.bf16.gmra.mxu0 %v4898
      %v5217 = vpop.f32.mrf.mxu0
      %v5218 = vadd.f32 0.0, %v5217
      %v5219 = vpop.f32.mrf.mxu0
      %v5220 = vadd.f32 0.0, %v5219
      %5221 = vmatmul.bf16.gmra.mxu0 %v4904
      %v5222 = vpop.f32.mrf.mxu0
      %v5223 = vadd.f32 0.0, %v5222
      %v5224 = vpop.f32.mrf.mxu0
      %v5225 = vadd.f32 0.0, %v5224
      %5226 = vmatmul.bf16.gmra.mxu0 %v4910
      %v5227 = vpop.f32.mrf.mxu0
      %v5228 = vadd.f32 0.0, %v5227
      %v5229 = vpop.f32.mrf.mxu0
      %v5230 = vadd.f32 0.0, %v5229
      %5231 = vmatmul.bf16.gmra.mxu0 %v4916
      %v5232 = vpop.f32.mrf.mxu0
      %v5233 = vadd.f32 0.0, %v5232
      %v5234 = vpop.f32.mrf.mxu0
      %v5235 = vadd.f32 0.0, %v5234
      %5236 = vmatmul.bf16.gmra.mxu0 %v4922
      %v5237 = vpop.f32.mrf.mxu0
      %v5238 = vadd.f32 0.0, %v5237
      %v5239 = vpop.f32.mrf.mxu0
      %v5240 = vadd.f32 0.0, %v5239
      %5241 = vmatmul.bf16.gmra.mxu0 %v4928
      %v5242 = vpop.f32.mrf.mxu0
      %v5243 = vadd.f32 0.0, %v5242
      %v5244 = vpop.f32.mrf.mxu0
      %v5245 = vadd.f32 0.0, %v5244
      %5246 = vmatmul.bf16.gmra.mxu0 %v4934
      %v5247 = vpop.f32.mrf.mxu0
      %v5248 = vadd.f32 0.0, %v5247
      %v5249 = vpop.f32.mrf.mxu0
      %v5250 = vadd.f32 0.0, %v5249
      %5251 = vdwg.mxu0
      %5252 = vmatpush.bf16.msra.mxu0 %v5110
      %5253 = vmatpush.bf16.msra.mxu0 %v5109
      %5254 = vmatpush.bf16.msra.mxu0 %v5108
      %5255 = vmatpush.bf16.msra.mxu0 %v5107
      %5256 = vmatpush.bf16.msra.mxu0 %v5106
      %5257 = vmatpush.bf16.msra.mxu0 %v5105
      %5258 = vmatpush.bf16.msra.mxu0 %v5104
      %5259 = vmatpush.bf16.msra.mxu0 %v5103
      %5260 = vmatmul.bf16.gmra.mxu0 %v4821
      %v5261 = vpop.f32.mrf.mxu0
      %v5262 = vadd.f32 %v5153, %v5261
      %v5263 = vpop.f32.mrf.mxu0
      %v5264 = vadd.f32 %v5155, %v5263
      %5265 = vmatmul.bf16.gmra.mxu0 %v4828
      %v5266 = vpop.f32.mrf.mxu0
      %v5267 = vadd.f32 %v5158, %v5266
      %v5268 = vpop.f32.mrf.mxu0
      %v5269 = vadd.f32 %v5160, %v5268
      %5270 = vmatmul.bf16.gmra.mxu0 %v4834
      %v5271 = vpop.f32.mrf.mxu0
      %v5272 = vadd.f32 %v5163, %v5271
      %v5273 = vpop.f32.mrf.mxu0
      %v5274 = vadd.f32 %v5165, %v5273
      %5275 = vmatmul.bf16.gmra.mxu0 %v4840
      %v5276 = vpop.f32.mrf.mxu0
      %v5277 = vadd.f32 %v5168, %v5276
      %v5278 = vpop.f32.mrf.mxu0
      %v5279 = vadd.f32 %v5170, %v5278
      %5280 = vmatmul.bf16.gmra.mxu0 %v4846
      %v5281 = vpop.f32.mrf.mxu0
      %v5282 = vadd.f32 %v5173, %v5281
      %v5283 = vpop.f32.mrf.mxu0
      %v5284 = vadd.f32 %v5175, %v5283
      %5285 = vmatmul.bf16.gmra.mxu0 %v4852
      %v5286 = vpop.f32.mrf.mxu0
      %v5287 = vadd.f32 %v5178, %v5286
      %v5288 = vpop.f32.mrf.mxu0
      %v5289 = vadd.f32 %v5180, %v5288
      %5290 = vmatmul.bf16.gmra.mxu0 %v4858
      %v5291 = vpop.f32.mrf.mxu0
      %v5292 = vadd.f32 %v5183, %v5291
      %v5293 = vpop.f32.mrf.mxu0
      %v5294 = vadd.f32 %v5185, %v5293
      %5295 = vmatmul.bf16.gmra.mxu0 %v4864
      %v5296 = vpop.f32.mrf.mxu0
      %v5297 = vadd.f32 %v5188, %v5296
      %v5298 = vpop.f32.mrf.mxu0
      %v5299 = vadd.f32 %v5190, %v5298
      %5300 = vmatmul.bf16.gmra.mxu0 %v4870
      %v5301 = vpop.f32.mrf.mxu0
      %v5302 = vadd.f32 %v5193, %v5301
      %v5303 = vpop.f32.mrf.mxu0
      %v5304 = vadd.f32 %v5195, %v5303
      %5305 = vmatmul.bf16.gmra.mxu0 %v4876
      %v5306 = vpop.f32.mrf.mxu0
      %v5307 = vadd.f32 %v5198, %v5306
      %v5308 = vpop.f32.mrf.mxu0
      %v5309 = vadd.f32 %v5200, %v5308
      %5310 = vmatmul.bf16.gmra.mxu0 %v4882
      %v5311 = vpop.f32.mrf.mxu0
      %v5312 = vadd.f32 %v5203, %v5311
      %v5313 = vpop.f32.mrf.mxu0
      %v5314 = vadd.f32 %v5205, %v5313
      %5315 = vmatmul.bf16.gmra.mxu0 %v4888
      %v5316 = vpop.f32.mrf.mxu0
      %v5317 = vadd.f32 %v5208, %v5316
      %v5318 = vpop.f32.mrf.mxu0
      %v5319 = vadd.f32 %v5210, %v5318
      %5320 = vmatmul.bf16.gmra.mxu0 %v4894
      %v5321 = vpop.f32.mrf.mxu0
      %v5322 = vadd.f32 %v5213, %v5321
      %v5323 = vpop.f32.mrf.mxu0
      %v5324 = vadd.f32 %v5215, %v5323
      %5325 = vmatmul.bf16.gmra.mxu0 %v4900
      %v5326 = vpop.f32.mrf.mxu0
      %v5327 = vadd.f32 %v5218, %v5326
      %v5328 = vpop.f32.mrf.mxu0
      %v5329 = vadd.f32 %v5220, %v5328
      %5330 = vmatmul.bf16.gmra.mxu0 %v4906
      %v5331 = vpop.f32.mrf.mxu0
      %v5332 = vadd.f32 %v5223, %v5331
      %v5333 = vpop.f32.mrf.mxu0
      %v5334 = vadd.f32 %v5225, %v5333
      %5335 = vmatmul.bf16.gmra.mxu0 %v4912
      %v5336 = vpop.f32.mrf.mxu0
      %v5337 = vadd.f32 %v5228, %v5336
      %v5338 = vpop.f32.mrf.mxu0
      %v5339 = vadd.f32 %v5230, %v5338
      %5340 = vmatmul.bf16.gmra.mxu0 %v4918
      %v5341 = vpop.f32.mrf.mxu0
      %v5342 = vadd.f32 %v5233, %v5341
      %v5343 = vpop.f32.mrf.mxu0
      %v5344 = vadd.f32 %v5235, %v5343
      %5345 = vmatmul.bf16.gmra.mxu0 %v4924
      %v5346 = vpop.f32.mrf.mxu0
      %v5347 = vadd.f32 %v5238, %v5346
      %v5348 = vpop.f32.mrf.mxu0
      %v5349 = vadd.f32 %v5240, %v5348
      %5350 = vmatmul.bf16.gmra.mxu0 %v4930
      %v5351 = vpop.f32.mrf.mxu0
      %v5352 = vadd.f32 %v5243, %v5351
      %v5353 = vpop.f32.mrf.mxu0
      %v5354 = vadd.f32 %v5245, %v5353
      %5355 = vmatmul.bf16.gmra.mxu0 %v4936
      %v5356 = vpop.f32.mrf.mxu0
      %v5357 = vadd.f32 %v5248, %v5356
      %v5358 = vpop.f32.mrf.mxu0
      %v5359 = vadd.f32 %v5250, %v5358
      %5360 = vdwg.mxu0
      %5361 = vmatpush.bf16.msra.mxu0 %v5118
      %5362 = vmatpush.bf16.msra.mxu0 %v5117
      %5363 = vmatpush.bf16.msra.mxu0 %v5116
      %5364 = vmatpush.bf16.msra.mxu0 %v5115
      %5365 = vmatpush.bf16.msra.mxu0 %v5114
      %5366 = vmatpush.bf16.msra.mxu0 %v5113
      %5367 = vmatpush.bf16.msra.mxu0 %v5112
      %5368 = vmatpush.bf16.msra.mxu0 %v5111
      %5369 = vmatmul.bf16.gmra.mxu0 %v4824
      %v5370 = vpop.f32.mrf.mxu0
      %v5371 = vadd.f32 %v5262, %v5370
      %v5372 = vpop.f32.mrf.mxu0
      %v5373 = vadd.f32 %v5264, %v5372
      %5374 = vmatmul.bf16.gmra.mxu0 %v4830
      %v5375 = vpop.f32.mrf.mxu0
      %v5376 = vadd.f32 %v5267, %v5375
      %v5377 = vpop.f32.mrf.mxu0
      %v5378 = vadd.f32 %v5269, %v5377
      %5379 = vmatmul.bf16.gmra.mxu0 %v4836
      %v5380 = vpop.f32.mrf.mxu0
      %v5381 = vadd.f32 %v5272, %v5380
      %v5382 = vpop.f32.mrf.mxu0
      %v5383 = vadd.f32 %v5274, %v5382
      %5384 = vmatmul.bf16.gmra.mxu0 %v4842
      %v5385 = vpop.f32.mrf.mxu0
      %v5386 = vadd.f32 %v5277, %v5385
      %v5387 = vpop.f32.mrf.mxu0
      %v5388 = vadd.f32 %v5279, %v5387
      %5389 = vmatmul.bf16.gmra.mxu0 %v4848
      %v5390 = vpop.f32.mrf.mxu0
      %v5391 = vadd.f32 %v5282, %v5390
      %v5392 = vpop.f32.mrf.mxu0
      %v5393 = vadd.f32 %v5284, %v5392
      %5394 = vmatmul.bf16.gmra.mxu0 %v4854
      %v5395 = vpop.f32.mrf.mxu0
      %v5396 = vadd.f32 %v5287, %v5395
      %v5397 = vpop.f32.mrf.mxu0
      %v5398 = vadd.f32 %v5289, %v5397
      %5399 = vmatmul.bf16.gmra.mxu0 %v4860
      %v5400 = vpop.f32.mrf.mxu0
      %v5401 = vadd.f32 %v5292, %v5400
      %v5402 = vpop.f32.mrf.mxu0
      %v5403 = vadd.f32 %v5294, %v5402
      %5404 = vmatmul.bf16.gmra.mxu0 %v4866
      %v5405 = vpop.f32.mrf.mxu0
      %v5406 = vadd.f32 %v5297, %v5405
      %v5407 = vpop.f32.mrf.mxu0
      %v5408 = vadd.f32 %v5299, %v5407
      %5409 = vmatmul.bf16.gmra.mxu0 %v4872
      %v5410 = vpop.f32.mrf.mxu0
      %v5411 = vadd.f32 %v5302, %v5410
      %v5412 = vpop.f32.mrf.mxu0
      %v5413 = vadd.f32 %v5304, %v5412
      %5414 = vmatmul.bf16.gmra.mxu0 %v4878
      %v5415 = vpop.f32.mrf.mxu0
      %v5416 = vadd.f32 %v5307, %v5415
      %v5417 = vpop.f32.mrf.mxu0
      %v5418 = vadd.f32 %v5309, %v5417
      %5419 = vmatmul.bf16.gmra.mxu0 %v4884
      %v5420 = vpop.f32.mrf.mxu0
      %v5421 = vadd.f32 %v5312, %v5420
      %v5422 = vpop.f32.mrf.mxu0
      %v5423 = vadd.f32 %v5314, %v5422
      %5424 = vmatmul.bf16.gmra.mxu0 %v4890
      %v5425 = vpop.f32.mrf.mxu0
      %v5426 = vadd.f32 %v5317, %v5425
      %v5427 = vpop.f32.mrf.mxu0
      %v5428 = vadd.f32 %v5319, %v5427
      %5429 = vmatmul.bf16.gmra.mxu0 %v4896
      %v5430 = vpop.f32.mrf.mxu0
      %v5431 = vadd.f32 %v5322, %v5430
      %v5432 = vpop.f32.mrf.mxu0
      %v5433 = vadd.f32 %v5324, %v5432
      %5434 = vmatmul.bf16.gmra.mxu0 %v4902
      %v5435 = vpop.f32.mrf.mxu0
      %v5436 = vadd.f32 %v5327, %v5435
      %v5437 = vpop.f32.mrf.mxu0
      %v5438 = vadd.f32 %v5329, %v5437
      %5439 = vmatmul.bf16.gmra.mxu0 %v4908
      %v5440 = vpop.f32.mrf.mxu0
      %v5441 = vadd.f32 %v5332, %v5440
      %v5442 = vpop.f32.mrf.mxu0
      %v5443 = vadd.f32 %v5334, %v5442
      %5444 = vmatmul.bf16.gmra.mxu0 %v4914
      %v5445 = vpop.f32.mrf.mxu0
      %v5446 = vadd.f32 %v5337, %v5445
      %v5447 = vpop.f32.mrf.mxu0
      %v5448 = vadd.f32 %v5339, %v5447
      %5449 = vmatmul.bf16.gmra.mxu0 %v4920
      %v5450 = vpop.f32.mrf.mxu0
      %v5451 = vadd.f32 %v5342, %v5450
      %v5452 = vpop.f32.mrf.mxu0
      %v5453 = vadd.f32 %v5344, %v5452
      %5454 = vmatmul.bf16.gmra.mxu0 %v4926
      %v5455 = vpop.f32.mrf.mxu0
      %v5456 = vadd.f32 %v5347, %v5455
      %v5457 = vpop.f32.mrf.mxu0
      %v5458 = vadd.f32 %v5349, %v5457
      %5459 = vmatmul.bf16.gmra.mxu0 %v4932
      %v5460 = vpop.f32.mrf.mxu0
      %v5461 = vadd.f32 %v5352, %v5460
      %v5462 = vpop.f32.mrf.mxu0
      %v5463 = vadd.f32 %v5354, %v5462
      %5464 = vmatmul.bf16.gmra.mxu0 %v4938
      %v5465 = vpop.f32.mrf.mxu0
      %v5466 = vadd.f32 %v5357, %v5465
      %v5467 = vpop.f32.mrf.mxu0
      %v5468 = vadd.f32 %v5359, %v5467
      %5469 = vdwg.mxu0
      %v5470 = vadd.f32 %v4655, %v5371
      %v5471 = vadd.f32 %v4657, %v5373
      %v5472 = vadd.f32 %v4660, %v5376
      %v5473 = vadd.f32 %v4662, %v5378
      %v5474 = vadd.f32 %v4665, %v5381
      %v5475 = vadd.f32 %v4667, %v5383
      %v5476 = vadd.f32 %v4670, %v5386
      %v5477 = vadd.f32 %v4672, %v5388
      %v5478 = vadd.f32 %v4675, %v5391
      %v5479 = vadd.f32 %v4677, %v5393
      %v5480 = vadd.f32 %v4680, %v5396
      %v5481 = vadd.f32 %v4682, %v5398
      %v5482 = vadd.f32 %v4685, %v5401
      %v5483 = vadd.f32 %v4687, %v5403
      %v5484 = vadd.f32 %v4690, %v5406
      %v5485 = vadd.f32 %v4692, %v5408
      %v5486 = vadd.f32 %v4695, %v5411
      %v5487 = vadd.f32 %v4697, %v5413
      %v5488 = vadd.f32 %v4700, %v5416
      %v5489 = vadd.f32 %v4702, %v5418
      %v5490 = vadd.f32 %v4705, %v5421
      %v5491 = vadd.f32 %v4707, %v5423
      %v5492 = vadd.f32 %v4710, %v5426
      %v5493 = vadd.f32 %v4712, %v5428
      %v5494 = vadd.f32 %v4715, %v5431
      %v5495 = vadd.f32 %v4717, %v5433
      %v5496 = vadd.f32 %v4720, %v5436
      %v5497 = vadd.f32 %v4722, %v5438
      %v5498 = vadd.f32 %v4725, %v5441
      %v5499 = vadd.f32 %v4727, %v5443
      %v5500 = vadd.f32 %v4730, %v5446
      %v5501 = vadd.f32 %v4732, %v5448
      %v5502 = vadd.f32 %v4735, %v5451
      %v5503 = vadd.f32 %v4737, %v5453
      %v5504 = vadd.f32 %v4740, %v5456
      %v5505 = vadd.f32 %v4742, %v5458
      %v5506 = vadd.f32 %v4745, %v5461
      %v5507 = vadd.f32 %v4747, %v5463
      %v5508 = vadd.f32 %v4750, %v5466
      %v5509 = vadd.f32 %v4752, %v5468
      %v5511 = vperm.slane %v387, 0
      %v5513 = vadd.f32 %v5470, %v5511
      %v5514 = vadd.f32 %v5471, %v5511
      %v5515 = vadd.f32 %v5472, %v5511
      %v5516 = vadd.f32 %v5473, %v5511
      %v5517 = vadd.f32 %v5474, %v5511
      %v5518 = vadd.f32 %v5475, %v5511
      %v5519 = vadd.f32 %v5476, %v5511
      %v5520 = vadd.f32 %v5477, %v5511
      %v5521 = vadd.f32 %v5478, %v5511
      %v5522 = vadd.f32 %v5479, %v5511
      %v5523 = vadd.f32 %v5480, %v5511
      %v5524 = vadd.f32 %v5481, %v5511
      %v5525 = vadd.f32 %v5482, %v5511
      %v5526 = vadd.f32 %v5483, %v5511
      %v5527 = vadd.f32 %v5484, %v5511
      %v5528 = vadd.f32 %v5485, %v5511
      %v5529 = vadd.f32 %v5486, %v5511
      %v5530 = vadd.f32 %v5487, %v5511
      %v5531 = vadd.f32 %v5488, %v5511
      %v5532 = vadd.f32 %v5489, %v5511
      %v5533 = vadd.f32 %v5490, %v5511
      %v5534 = vadd.f32 %v5491, %v5511
      %v5535 = vadd.f32 %v5492, %v5511
      %v5536 = vadd.f32 %v5493, %v5511
      %v5537 = vadd.f32 %v5494, %v5511
      %v5538 = vadd.f32 %v5495, %v5511
      %v5539 = vadd.f32 %v5496, %v5511
      %v5540 = vadd.f32 %v5497, %v5511
      %v5541 = vadd.f32 %v5498, %v5511
      %v5542 = vadd.f32 %v5499, %v5511
      %v5543 = vadd.f32 %v5500, %v5511
      %v5544 = vadd.f32 %v5501, %v5511
      %v5545 = vadd.f32 %v5502, %v5511
      %v5546 = vadd.f32 %v5503, %v5511
      %v5547 = vadd.f32 %v5504, %v5511
      %v5548 = vadd.f32 %v5505, %v5511
      %v5549 = vadd.f32 %v5506, %v5511
      %v5550 = vadd.f32 %v5507, %v5511
      %v5551 = vadd.f32 %v5508, %v5511
      %v5552 = vadd.f32 %v5509, %v5511
      %v5553 = vmax.f32 %v5513, 0.0
      %v5554 = vmax.f32 %v5514, 0.0
      %v5555 = vmax.f32 %v5515, 0.0
      %v5556 = vmax.f32 %v5516, 0.0
      %v5557 = vmax.f32 %v5517, 0.0
      %v5558 = vmax.f32 %v5518, 0.0
      %v5559 = vmax.f32 %v5519, 0.0
      %v5560 = vmax.f32 %v5520, 0.0
      %v5561 = vmax.f32 %v5521, 0.0
      %v5562 = vmax.f32 %v5522, 0.0
      %v5563 = vmax.f32 %v5523, 0.0
      %v5564 = vmax.f32 %v5524, 0.0
      %v5565 = vmax.f32 %v5525, 0.0
      %v5566 = vmax.f32 %v5526, 0.0
      %v5567 = vmax.f32 %v5527, 0.0
      %v5568 = vmax.f32 %v5528, 0.0
      %v5569 = vmax.f32 %v5529, 0.0
      %v5570 = vmax.f32 %v5530, 0.0
      %v5571 = vmax.f32 %v5531, 0.0
      %v5572 = vmax.f32 %v5532, 0.0
      %v5573 = vmax.f32 %v5533, 0.0
      %v5574 = vmax.f32 %v5534, 0.0
      %v5575 = vmax.f32 %v5535, 0.0
      %v5576 = vmax.f32 %v5536, 0.0
      %v5577 = vmax.f32 %v5537, 0.0
      %v5578 = vmax.f32 %v5538, 0.0
      %v5579 = vmax.f32 %v5539, 0.0
      %v5580 = vmax.f32 %v5540, 0.0
      %v5581 = vmax.f32 %v5541, 0.0
      %v5582 = vmax.f32 %v5542, 0.0
      %v5583 = vmax.f32 %v5543, 0.0
      %v5584 = vmax.f32 %v5544, 0.0
      %v5585 = vmax.f32 %v5545, 0.0
      %v5586 = vmax.f32 %v5546, 0.0
      %v5587 = vmax.f32 %v5547, 0.0
      %v5588 = vmax.f32 %v5548, 0.0
      %v5589 = vmax.f32 %v5549, 0.0
      %v5590 = vmax.f32 %v5550, 0.0
      %v5591 = vmax.f32 %v5551, 0.0
      %v5592 = vmax.f32 %v5552, 0.0
      %v5633 = vrot.slane %v5553, 4
      %v5634 = vrot.slane %v5554, 4
      %v5635 = vrot.slane %v5555, 4
      %v5636 = vrot.slane %v5556, 4
      %v5637 = vrot.slane %v5557, 4
      %v5638 = vrot.slane %v5558, 4
      %v5639 = vrot.slane %v5559, 4
      %v5640 = vrot.slane %v5560, 4
      %v5641 = vrot.slane %v5561, 4
      %v5642 = vrot.slane %v5562, 4
      %v5643 = vrot.slane %v5563, 4
      %v5644 = vrot.slane %v5564, 4
      %v5645 = vrot.slane %v5565, 4
      %v5646 = vrot.slane %v5566, 4
      %v5647 = vrot.slane %v5567, 4
      %v5648 = vrot.slane %v5568, 4
      %v5649 = vrot.slane %v5569, 4
      %v5650 = vrot.slane %v5570, 4
      %v5651 = vrot.slane %v5571, 4
      %v5652 = vrot.slane %v5572, 4
      %v5653 = vrot.slane %v5573, 4
      %v5654 = vrot.slane %v5574, 4
      %v5655 = vrot.slane %v5575, 4
      %v5656 = vrot.slane %v5576, 4
      %v5657 = vrot.slane %v5577, 4
      %v5658 = vrot.slane %v5578, 4
      %v5659 = vrot.slane %v5579, 4
      %v5660 = vrot.slane %v5580, 4
      %v5661 = vrot.slane %v5581, 4
      %v5662 = vrot.slane %v5582, 4
      %v5663 = vrot.slane %v5583, 4
      %v5664 = vrot.slane %v5584, 4
      %v5665 = vrot.slane %v5585, 4
      %v5666 = vrot.slane %v5586, 4
      %v5667 = vrot.slane %v5587, 4
      %v5668 = vrot.slane %v5588, 4
      %v5669 = vrot.slane %v5589, 4
      %v5670 = vrot.slane %v5590, 4
      %v5671 = vrot.slane %v5591, 4
      %v5672 = vrot.slane %v5592, 4
      %5673 = vst [vmem:[#allocation1] ss:$2 sm:$0xff] %v5553
      %s5674 = scalar_lea.vmem [#allocation1], 1
      %5675 = vst [vmem:[%s5674] ss:$2 sm:$0xff] %v5633
      %s5676 = scalar_lea.vmem [#allocation1], 16
      %5677 = vst [vmem:[%s5676] ss:$2 sm:$0xff] %v5554
      %s5678 = scalar_lea.vmem [#allocation1], 17
      %5679 = vst [vmem:[%s5678] ss:$2 sm:$0xff] %v5634
      %s5680 = scalar_lea.vmem [#allocation1], 32
      %5681 = vst [vmem:[%s5680] ss:$2 sm:$0xff] %v5555
      %v5682 = vld.sshfl [vmem:[#allocation1] sm:$0xff pattern:$0x75316420]
      %v5683 = vld.sshfl [vmem:[#allocation1 + $0x10] sm:$0xff pattern:$0x75316420]
      %v5684 = vld.sshfl [vmem:[#allocation1 + $0x20] sm:$0xff pattern:$0x75316420]
      %s5685 = scalar_lea.vmem [#allocation1], 48
      %5686 = vst [vmem:[%s5685] ss:$2 sm:$0xff] %v5635
      %s5687 = scalar_lea.vmem [#allocation1], 49
      %5688 = vst [vmem:[%s5687] ss:$2 sm:$0xff] %v5556
      %v5689 = vld.sshfl [vmem:[#allocation1 + $0x30] sm:$0xff pattern:$0x75316420]
      %5690 = vst [vmem:[#allocation1] ss:$2 sm:$0xff] %v5636
      %5691 = vst [vmem:[%s5674] ss:$2 sm:$0xff] %v5557
      %5692 = vst [vmem:[%s5676] ss:$2 sm:$0xff] %v5637
      %v5693 = vld.sshfl [vmem:[#allocation1] sm:$0xff pattern:$0x75316420]
      %v5694 = vld.sshfl [vmem:[#allocation1 + $0x10] sm:$0xff pattern:$0x75316420]
      %5695 = vst [vmem:[%s5680] ss:$2 sm:$0xff] %v5558
      %s5696 = scalar_lea.vmem [#allocation1], 33
      %5697 = vst [vmem:[%s5696] ss:$2 sm:$0xff] %v5638
      %5698 = vst [vmem:[%s5685] ss:$2 sm:$0xff] %v5559
      %5699 = vst [vmem:[%s5687] ss:$2 sm:$0xff] %v5639
      %v5700 = vld.sshfl [vmem:[#allocation1 + $0x20] sm:$0xff pattern:$0x75316420]
      %v5701 = vld.sshfl [vmem:[#allocation1 + $0x30] sm:$0xff pattern:$0x75316420]
      %5702 = vst [vmem:[#allocation1] ss:$2 sm:$0xff] %v5560
      %v5703 = vld.sshfl [vmem:[#allocation1] sm:$0xff pattern:$0x75316420]
      %5704 = vst [vmem:[%s5676] ss:$2 sm:$0xff] %v5640
      %5705 = vst [vmem:[%s5678] ss:$2 sm:$0xff] %v5561
      %5706 = vst [vmem:[%s5680] ss:$2 sm:$0xff] %v5641
      %5707 = vst [vmem:[%s5696] ss:$2 sm:$0xff] %v5562
      %5708 = vst [vmem:[%s5685] ss:$2 sm:$0xff] %v5642
      %v5709 = vld.sshfl [vmem:[#allocation1 + $0x10] sm:$0xff pattern:$0x75316420]
      %v5710 = vld.sshfl [vmem:[#allocation1 + $0x20] sm:$0xff pattern:$0x75316420]
      %v5711 = vld.sshfl [vmem:[#allocation1 + $0x30] sm:$0xff pattern:$0x75316420]
      %5712 = vst [vmem:[#allocation1] ss:$2 sm:$0xff] %v5563
      %5713 = vst [vmem:[%s5674] ss:$2 sm:$0xff] %v5643
      %5714 = vst [vmem:[%s5676] ss:$2 sm:$0xff] %v5564
      %5715 = vst [vmem:[%s5678] ss:$2 sm:$0xff] %v5644
      %5716 = vst [vmem:[%s5680] ss:$2 sm:$0xff] %v5565
      %v5717 = vld.sshfl [vmem:[#allocation1] sm:$0xff pattern:$0x75316420]
      %v5718 = vld.sshfl [vmem:[#allocation1 + $0x10] sm:$0xff pattern:$0x75316420]
      %v5719 = vld.sshfl [vmem:[#allocation1 + $0x20] sm:$0xff pattern:$0x75316420]
      %5720 = vst [vmem:[%s5685] ss:$2 sm:$0xff] %v5645
      %5721 = vst [vmem:[%s5687] ss:$2 sm:$0xff] %v5566
      %v5722 = vld.sshfl [vmem:[#allocation1 + $0x30] sm:$0xff pattern:$0x75316420]
      %5723 = vst [vmem:[#allocation1] ss:$2 sm:$0xff] %v5646
      %5724 = vst [vmem:[%s5674] ss:$2 sm:$0xff] %v5567
      %5725 = vst [vmem:[%s5676] ss:$2 sm:$0xff] %v5647
      %v5726 = vld.sshfl [vmem:[#allocation1] sm:$0xff pattern:$0x75316420]
      %v5727 = vld.sshfl [vmem:[#allocation1 + $0x10] sm:$0xff pattern:$0x75316420]
      %5728 = vst [vmem:[%s5680] ss:$2 sm:$0xff] %v5568
      %5729 = vst [vmem:[%s5696] ss:$2 sm:$0xff] %v5648
      %5730 = vst [vmem:[%s5685] ss:$2 sm:$0xff] %v5569
      %5731 = vst [vmem:[%s5687] ss:$2 sm:$0xff] %v5649
      %v5732 = vld.sshfl [vmem:[#allocation1 + $0x20] sm:$0xff pattern:$0x75316420]
      %v5733 = vld.sshfl [vmem:[#allocation1 + $0x30] sm:$0xff pattern:$0x75316420]
      %5734 = vst [vmem:[#allocation1] ss:$2 sm:$0xff] %v5570
      %v5735 = vld.sshfl [vmem:[#allocation1] sm:$0xff pattern:$0x75316420]
      %5736 = vst [vmem:[%s5676] ss:$2 sm:$0xff] %v5650
      %5737 = vst [vmem:[%s5678] ss:$2 sm:$0xff] %v5571
      %5738 = vst [vmem:[%s5680] ss:$2 sm:$0xff] %v5651
      %5739 = vst [vmem:[%s5696] ss:$2 sm:$0xff] %v5572
      %5740 = vst [vmem:[%s5685] ss:$2 sm:$0xff] %v5652
      %v5741 = vld.sshfl [vmem:[#allocation1 + $0x10] sm:$0xff pattern:$0x75316420]
      %v5742 = vld.sshfl [vmem:[#allocation1 + $0x20] sm:$0xff pattern:$0x75316420]
      %v5743 = vld.sshfl [vmem:[#allocation1 + $0x30] sm:$0xff pattern:$0x75316420]
      %5744 = vst [vmem:[#allocation1] ss:$2 sm:$0xff] %v5573
      %5745 = vst [vmem:[%s5674] ss:$2 sm:$0xff] %v5653
      %5746 = vst [vmem:[%s5676] ss:$2 sm:$0xff] %v5574
      %5747 = vst [vmem:[%s5678] ss:$2 sm:$0xff] %v5654
      %5748 = vst [vmem:[%s5680] ss:$2 sm:$0xff] %v5575
      %v5749 = vld.sshfl [vmem:[#allocation1] sm:$0xff pattern:$0x75316420]
      %v5750 = vld.sshfl [vmem:[#allocation1 + $0x10] sm:$0xff pattern:$0x75316420]
      %v5751 = vld.sshfl [vmem:[#allocation1 + $0x20] sm:$0xff pattern:$0x75316420]
      %5752 = vst [vmem:[%s5685] ss:$2 sm:$0xff] %v5655
      %5753 = vst [vmem:[%s5687] ss:$2 sm:$0xff] %v5576
      %v5754 = vld.sshfl [vmem:[#allocation1 + $0x30] sm:$0xff pattern:$0x75316420]
      %5755 = vst [vmem:[#allocation1] ss:$2 sm:$0xff] %v5656
      %5756 = vst [vmem:[%s5674] ss:$2 sm:$0xff] %v5577
      %5757 = vst [vmem:[%s5676] ss:$2 sm:$0xff] %v5657
      %v5758 = vld.sshfl [vmem:[#allocation1] sm:$0xff pattern:$0x75316420]
      %v5759 = vld.sshfl [vmem:[#allocation1 + $0x10] sm:$0xff pattern:$0x75316420]
      %5760 = vst [vmem:[%s5680] ss:$2 sm:$0xff] %v5578
      %5761 = vst [vmem:[%s5696] ss:$2 sm:$0xff] %v5658
      %5762 = vst [vmem:[%s5685] ss:$2 sm:$0xff] %v5579
      %5763 = vst [vmem:[%s5687] ss:$2 sm:$0xff] %v5659
      %v5764 = vld.sshfl [vmem:[#allocation1 + $0x20] sm:$0xff pattern:$0x75316420]
      %v5765 = vld.sshfl [vmem:[#allocation1 + $0x30] sm:$0xff pattern:$0x75316420]
      %5766 = vst [vmem:[#allocation1] ss:$2 sm:$0xff] %v5580
      %v5767 = vld.sshfl [vmem:[#allocation1] sm:$0xff pattern:$0x75316420]
      %5768 = vst [vmem:[%s5676] ss:$2 sm:$0xff] %v5660
      %5769 = vst [vmem:[%s5678] ss:$2 sm:$0xff] %v5581
      %5770 = vst [vmem:[%s5680] ss:$2 sm:$0xff] %v5661
      %5771 = vst [vmem:[%s5696] ss:$2 sm:$0xff] %v5582
      %5772 = vst [vmem:[%s5685] ss:$2 sm:$0xff] %v5662
      %v5773 = vld.sshfl [vmem:[#allocation1 + $0x10] sm:$0xff pattern:$0x75316420]
      %v5774 = vld.sshfl [vmem:[#allocation1 + $0x20] sm:$0xff pattern:$0x75316420]
      %v5775 = vld.sshfl [vmem:[#allocation1 + $0x30] sm:$0xff pattern:$0x75316420]
      %5776 = vst [vmem:[#allocation1] ss:$2 sm:$0xff] %v5583
      %5777 = vst [vmem:[%s5674] ss:$2 sm:$0xff] %v5663
      %5778 = vst [vmem:[%s5676] ss:$2 sm:$0xff] %v5584
      %5779 = vst [vmem:[%s5678] ss:$2 sm:$0xff] %v5664
      %5780 = vst [vmem:[%s5680] ss:$2 sm:$0xff] %v5585
      %v5781 = vld.sshfl [vmem:[#allocation1] sm:$0xff pattern:$0x75316420]
      %v5782 = vld.sshfl [vmem:[#allocation1 + $0x10] sm:$0xff pattern:$0x75316420]
      %v5783 = vld.sshfl [vmem:[#allocation1 + $0x20] sm:$0xff pattern:$0x75316420]
      %5784 = vst [vmem:[%s5685] ss:$2 sm:$0xff] %v5665
      %5785 = vst [vmem:[%s5687] ss:$2 sm:$0xff] %v5586
      %v5786 = vld.sshfl [vmem:[#allocation1 + $0x30] sm:$0xff pattern:$0x75316420]
      %5787 = vst [vmem:[#allocation1] ss:$2 sm:$0xff] %v5666
      %5788 = vst [vmem:[%s5674] ss:$2 sm:$0xff] %v5587
      %5789 = vst [vmem:[%s5676] ss:$2 sm:$0xff] %v5667
      %v5790 = vld.sshfl [vmem:[#allocation1] sm:$0xff pattern:$0x75316420]
      %v5791 = vld.sshfl [vmem:[#allocation1 + $0x10] sm:$0xff pattern:$0x75316420]
      %5792 = vst [vmem:[%s5680] ss:$2 sm:$0xff] %v5588
      %5793 = vst [vmem:[%s5696] ss:$2 sm:$0xff] %v5668
      %5794 = vst [vmem:[%s5685] ss:$2 sm:$0xff] %v5589
      %5795 = vst [vmem:[%s5687] ss:$2 sm:$0xff] %v5669
      %v5796 = vld.sshfl [vmem:[#allocation1 + $0x20] sm:$0xff pattern:$0x75316420]
      %v5797 = vld.sshfl [vmem:[#allocation1 + $0x30] sm:$0xff pattern:$0x75316420]
      %5798 = vst [vmem:[#allocation1] ss:$2 sm:$0xff] %v5590
      %v5799 = vld.sshfl [vmem:[#allocation1] sm:$0xff pattern:$0x75316420]
      %5800 = vst [vmem:[%s5676] ss:$2 sm:$0xff] %v5670
      %5801 = vst [vmem:[%s5678] ss:$2 sm:$0xff] %v5591
      %5802 = vst [vmem:[%s5680] ss:$2 sm:$0xff] %v5671
      %5803 = vst [vmem:[%s5696] ss:$2 sm:$0xff] %v5592
      %5804 = vst [vmem:[%s5685] ss:$2 sm:$0xff] %v5672
      %v5805 = vld.sshfl [vmem:[#allocation1 + $0x10] sm:$0xff pattern:$0x75316420]
      %v5806 = vld.sshfl [vmem:[#allocation1 + $0x20] sm:$0xff pattern:$0x75316420]
      %v5807 = vld.sshfl [vmem:[#allocation1 + $0x30] sm:$0xff pattern:$0x75316420]
      %v5856 = vpack.c.bf16 %v5682, %v5682
      %v5857 = vpack.c.bf16 %v5683, %v5683
      %v5858 = vpack.c.bf16 %v5684, %v5684
      %v5859 = vpack.c.bf16 %v5689, %v5689
      %v5860 = vpack.c.bf16 %v5693, %v5693
      %v5861 = vpack.c.bf16 %v5694, %v5694
      %v5862 = vpack.c.bf16 %v5700, %v5700
      %v5863 = vpack.c.bf16 %v5701, %v5701
      %v5864 = vpack.c.bf16 %v5703, %v5703
      %v5865 = vpack.c.bf16 %v5709, %v5709
      %v5866 = vpack.c.bf16 %v5710, %v5710
      %v5867 = vpack.c.bf16 %v5711, %v5711
      %v5868 = vpack.c.bf16 %v5717, %v5717
      %v5869 = vpack.c.bf16 %v5718, %v5718
      %v5870 = vpack.c.bf16 %v5719, %v5719
      %v5871 = vpack.c.bf16 %v5722, %v5722
      %v5872 = vpack.c.bf16 %v5726, %v5726
      %v5873 = vpack.c.bf16 %v5727, %v5727
      %v5874 = vpack.c.bf16 %v5732, %v5732
      %v5875 = vpack.c.bf16 %v5733, %v5733
      %v5876 = vpack.c.bf16 %v5735, %v5735
      %v5877 = vpack.c.bf16 %v5741, %v5741
      %v5878 = vpack.c.bf16 %v5742, %v5742
      %v5879 = vpack.c.bf16 %v5743, %v5743
      %v5880 = vpack.c.bf16 %v5749, %v5749
      %v5881 = vpack.c.bf16 %v5750, %v5750
      %v5882 = vpack.c.bf16 %v5751, %v5751
      %v5883 = vpack.c.bf16 %v5754, %v5754
      %v5884 = vpack.c.bf16 %v5758, %v5758
      %v5885 = vpack.c.bf16 %v5759, %v5759
      %v5886 = vpack.c.bf16 %v5764, %v5764
      %v5887 = vpack.c.bf16 %v5765, %v5765
      %v5888 = vpack.c.bf16 %v5767, %v5767
      %v5889 = vpack.c.bf16 %v5773, %v5773
      %v5890 = vpack.c.bf16 %v5774, %v5774
      %v5891 = vpack.c.bf16 %v5775, %v5775
      %v5892 = vpack.c.bf16 %v5781, %v5781
      %v5893 = vpack.c.bf16 %v5782, %v5782
      %v5894 = vpack.c.bf16 %v5783, %v5783
      %v5895 = vpack.c.bf16 %v5786, %v5786
      %v5896 = vpack.c.bf16 %v5790, %v5790
      %v5897 = vpack.c.bf16 %v5791, %v5791
      %v5898 = vpack.c.bf16 %v5796, %v5796
      %v5899 = vpack.c.bf16 %v5797, %v5797
      %v5900 = vpack.c.bf16 %v5799, %v5799
      %v5901 = vpack.c.bf16 %v5805, %v5805
      %v5902 = vpack.c.bf16 %v5806, %v5806
      %v5903 = vpack.c.bf16 %v5807, %v5807
      %vm5904 = vsmask.f32 256
      %vm5905 = vsmask.f32 4368
      %vm5906 = vmor %vm5904, %vm5905
      %v5908 = vshrl.u32 %v5856, 16
      %v5910 = vrot.slane %v5908, 7
      %v5911 = vshll.u32 %v5856, 16
      %v5913 = vor.u32 %v5910, %v5911
      %v5914 = vrot.slane %v5910, 4
      %v5916 = vshrl.u32 %v5857, 16
      %v5918 = vrot.slane %v5916, 7
      %v5919 = vshll.u32 %v5857, 16
      %v5921 = vor.u32 %v5918, %v5919
      %v5922 = vsel %vm5906, %v5914, %v5921
      %v5923 = vrot.slane %v5918, 4
      %v5925 = vshll.u32 %v5858, 16
      %v5927 = vsel %vm5906, %v5923, %v5925
      %v5929 = vshrl.u32 %v5859, 16
      %v5931 = vrot.slane %v5929, 7
      %v5932 = vshll.u32 %v5859, 16
      %v5934 = vor.u32 %v5931, %v5932
      %v5935 = vrot.slane %v5931, 4
      %v5937 = vshrl.u32 %v5860, 16
      %v5939 = vrot.slane %v5937, 7
      %v5940 = vshll.u32 %v5860, 16
      %v5942 = vor.u32 %v5939, %v5940
      %v5943 = vsel %vm5906, %v5935, %v5942
      %v5944 = vrot.slane %v5939, 4
      %v5946 = vshll.u32 %v5861, 16
      %v5948 = vsel %vm5906, %v5944, %v5946
      %v5950 = vshrl.u32 %v5862, 16
      %v5952 = vrot.slane %v5950, 7
      %v5953 = vshll.u32 %v5862, 16
      %v5955 = vor.u32 %v5952, %v5953
      %v5956 = vrot.slane %v5952, 4
      %v5958 = vshrl.u32 %v5863, 16
      %v5960 = vrot.slane %v5958, 7
      %v5961 = vshll.u32 %v5863, 16
      %v5963 = vor.u32 %v5960, %v5961
      %v5964 = vsel %vm5906, %v5956, %v5963
      %v5965 = vrot.slane %v5960, 4
      %v5967 = vshll.u32 %v5864, 16
      %v5969 = vsel %vm5906, %v5965, %v5967
      %v5971 = vshrl.u32 %v5865, 16
      %v5973 = vrot.slane %v5971, 7
      %v5974 = vshll.u32 %v5865, 16
      %v5976 = vor.u32 %v5973, %v5974
      %v5977 = vrot.slane %v5973, 4
      %v5979 = vshrl.u32 %v5866, 16
      %v5981 = vrot.slane %v5979, 7
      %v5982 = vshll.u32 %v5866, 16
      %v5984 = vor.u32 %v5981, %v5982
      %v5985 = vsel %vm5906, %v5977, %v5984
      %v5986 = vrot.slane %v5981, 4
      %v5988 = vshll.u32 %v5867, 16
      %v5990 = vsel %vm5906, %v5986, %v5988
      %v5992 = vshrl.u32 %v5868, 16
      %v5994 = vrot.slane %v5992, 7
      %v5995 = vshll.u32 %v5868, 16
      %v5997 = vor.u32 %v5994, %v5995
      %v5998 = vrot.slane %v5994, 4
      %v6000 = vshrl.u32 %v5869, 16
      %v6002 = vrot.slane %v6000, 7
      %v6003 = vshll.u32 %v5869, 16
      %v6005 = vor.u32 %v6002, %v6003
      %v6006 = vsel %vm5906, %v5998, %v6005
      %v6007 = vrot.slane %v6002, 4
      %v6009 = vshll.u32 %v5870, 16
      %v6011 = vsel %vm5906, %v6007, %v6009
      %v6013 = vshrl.u32 %v5871, 16
      %v6015 = vrot.slane %v6013, 7
      %v6016 = vshll.u32 %v5871, 16
      %v6018 = vor.u32 %v6015, %v6016
      %v6019 = vrot.slane %v6015, 4
      %v6021 = vshrl.u32 %v5872, 16
      %v6023 = vrot.slane %v6021, 7
      %v6024 = vshll.u32 %v5872, 16
      %v6026 = vor.u32 %v6023, %v6024
      %v6027 = vsel %vm5906, %v6019, %v6026
      %v6028 = vrot.slane %v6023, 4
      %v6030 = vshll.u32 %v5873, 16
      %v6032 = vsel %vm5906, %v6028, %v6030
      %v6034 = vshrl.u32 %v5874, 16
      %v6036 = vrot.slane %v6034, 7
      %v6037 = vshll.u32 %v5874, 16
      %v6039 = vor.u32 %v6036, %v6037
      %v6040 = vrot.slane %v6036, 4
      %v6042 = vshrl.u32 %v5875, 16
      %v6044 = vrot.slane %v6042, 7
      %v6045 = vshll.u32 %v5875, 16
      %v6047 = vor.u32 %v6044, %v6045
      %v6048 = vsel %vm5906, %v6040, %v6047
      %v6049 = vrot.slane %v6044, 4
      %v6051 = vshll.u32 %v5876, 16
      %v6053 = vsel %vm5906, %v6049, %v6051
      %v6055 = vshrl.u32 %v5877, 16
      %v6057 = vrot.slane %v6055, 7
      %v6058 = vshll.u32 %v5877, 16
      %v6060 = vor.u32 %v6057, %v6058
      %v6061 = vrot.slane %v6057, 4
      %v6063 = vshrl.u32 %v5878, 16
      %v6065 = vrot.slane %v6063, 7
      %v6066 = vshll.u32 %v5878, 16
      %v6068 = vor.u32 %v6065, %v6066
      %v6069 = vsel %vm5906, %v6061, %v6068
      %v6070 = vrot.slane %v6065, 4
      %v6072 = vshll.u32 %v5879, 16
      %v6074 = vsel %vm5906, %v6070, %v6072
      %v6076 = vshrl.u32 %v5880, 16
      %v6078 = vrot.slane %v6076, 7
      %v6079 = vshll.u32 %v5880, 16
      %v6081 = vor.u32 %v6078, %v6079
      %v6082 = vrot.slane %v6078, 4
      %v6084 = vshrl.u32 %v5881, 16
      %v6086 = vrot.slane %v6084, 7
      %v6087 = vshll.u32 %v5881, 16
      %v6089 = vor.u32 %v6086, %v6087
      %v6090 = vsel %vm5906, %v6082, %v6089
      %v6091 = vrot.slane %v6086, 4
      %v6093 = vshll.u32 %v5882, 16
      %v6095 = vsel %vm5906, %v6091, %v6093
      %v6097 = vshrl.u32 %v5883, 16
      %v6099 = vrot.slane %v6097, 7
      %v6100 = vshll.u32 %v5883, 16
      %v6102 = vor.u32 %v6099, %v6100
      %v6103 = vrot.slane %v6099, 4
      %v6105 = vshrl.u32 %v5884, 16
      %v6107 = vrot.slane %v6105, 7
      %v6108 = vshll.u32 %v5884, 16
      %v6110 = vor.u32 %v6107, %v6108
      %v6111 = vsel %vm5906, %v6103, %v6110
      %v6112 = vrot.slane %v6107, 4
      %v6114 = vshll.u32 %v5885, 16
      %v6116 = vsel %vm5906, %v6112, %v6114
      %v6118 = vshrl.u32 %v5886, 16
      %v6120 = vrot.slane %v6118, 7
      %v6121 = vshll.u32 %v5886, 16
      %v6123 = vor.u32 %v6120, %v6121
      %v6124 = vrot.slane %v6120, 4
      %v6126 = vshrl.u32 %v5887, 16
      %v6128 = vrot.slane %v6126, 7
      %v6129 = vshll.u32 %v5887, 16
      %v6131 = vor.u32 %v6128, %v6129
      %v6132 = vsel %vm5906, %v6124, %v6131
      %v6133 = vrot.slane %v6128, 4
      %v6135 = vshll.u32 %v5888, 16
      %v6137 = vsel %vm5906, %v6133, %v6135
      %v6139 = vshrl.u32 %v5889, 16
      %v6141 = vrot.slane %v6139, 7
      %v6142 = vshll.u32 %v5889, 16
      %v6144 = vor.u32 %v6141, %v6142
      %v6145 = vrot.slane %v6141, 4
      %v6147 = vshrl.u32 %v5890, 16
      %v6149 = vrot.slane %v6147, 7
      %v6150 = vshll.u32 %v5890, 16
      %v6152 = vor.u32 %v6149, %v6150
      %v6153 = vsel %vm5906, %v6145, %v6152
      %v6154 = vrot.slane %v6149, 4
      %v6156 = vshll.u32 %v5891, 16
      %v6158 = vsel %vm5906, %v6154, %v6156
      %v6160 = vshrl.u32 %v5892, 16
      %v6162 = vrot.slane %v6160, 7
      %v6163 = vshll.u32 %v5892, 16
      %v6165 = vor.u32 %v6162, %v6163
      %v6166 = vrot.slane %v6162, 4
      %v6168 = vshrl.u32 %v5893, 16
      %v6170 = vrot.slane %v6168, 7
      %v6171 = vshll.u32 %v5893, 16
      %v6173 = vor.u32 %v6170, %v6171
      %v6174 = vsel %vm5906, %v6166, %v6173
      %v6175 = vrot.slane %v6170, 4
      %v6177 = vshll.u32 %v5894, 16
      %v6179 = vsel %vm5906, %v6175, %v6177
      %v6181 = vshrl.u32 %v5895, 16
      %v6183 = vrot.slane %v6181, 7
      %v6184 = vshll.u32 %v5895, 16
      %v6186 = vor.u32 %v6183, %v6184
      %v6187 = vrot.slane %v6183, 4
      %v6189 = vshrl.u32 %v5896, 16
      %v6191 = vrot.slane %v6189, 7
      %v6192 = vshll.u32 %v5896, 16
      %v6194 = vor.u32 %v6191, %v6192
      %v6195 = vsel %vm5906, %v6187, %v6194
      %v6196 = vrot.slane %v6191, 4
      %v6198 = vshll.u32 %v5897, 16
      %v6200 = vsel %vm5906, %v6196, %v6198
      %v6202 = vshrl.u32 %v5898, 16
      %v6204 = vrot.slane %v6202, 7
      %v6205 = vshll.u32 %v5898, 16
      %v6207 = vor.u32 %v6204, %v6205
      %v6208 = vrot.slane %v6204, 4
      %v6210 = vshrl.u32 %v5899, 16
      %v6212 = vrot.slane %v6210, 7
      %v6213 = vshll.u32 %v5899, 16
      %v6215 = vor.u32 %v6212, %v6213
      %v6216 = vsel %vm5906, %v6208, %v6215
      %v6217 = vrot.slane %v6212, 4
      %v6219 = vshll.u32 %v5900, 16
      %v6221 = vsel %vm5906, %v6217, %v6219
      %v6223 = vshrl.u32 %v5901, 16
      %v6225 = vrot.slane %v6223, 7
      %v6226 = vshll.u32 %v5901, 16
      %v6228 = vor.u32 %v6225, %v6226
      %v6229 = vrot.slane %v6225, 4
      %v6231 = vshrl.u32 %v5902, 16
      %v6233 = vrot.slane %v6231, 7
      %v6234 = vshll.u32 %v5902, 16
      %v6236 = vor.u32 %v6233, %v6234
      %v6237 = vsel %vm5906, %v6229, %v6236
      %v6238 = vrot.slane %v6233, 4
      %v6240 = vshll.u32 %v5903, 16
      %v6242 = vsel %vm5906, %v6238, %v6240
      %s6291 = scalar_lea.vmem [#allocation3], 12
      %6292 = vst [vmem:[%s6291] sm:$0xe] %v5913
      %6293 = vst [vmem:[%s6291 + $0x4] sm:$0xf] %v5922
      %6294 = vst [vmem:[%s6291 + $0x8] sm:$0x1] %v5927
      %6295 = vst [vmem:[%s6291 + $0xc] sm:$0xe] %v5934
      %6296 = vst [vmem:[%s6291 + $0x10] sm:$0xf] %v5943
      %6297 = vst [vmem:[%s6291 + $0x14] sm:$0x1] %v5948
      %6298 = vst [vmem:[%s6291 + $0x18] sm:$0xe] %v5955
      %6299 = vst [vmem:[%s6291 + $0x1c] sm:$0xf] %v5964
      %6300 = vst [vmem:[%s6291 + $0x20] sm:$0x1] %v5969
      %6301 = vst [vmem:[%s6291 + $0x24] sm:$0xe] %v5976
      %6302 = vst [vmem:[%s6291 + $0x28] sm:$0xf] %v5985
      %6303 = vst [vmem:[%s6291 + $0x2c] sm:$0x1] %v5990
      %6304 = vst [vmem:[%s6291 + $0x30] sm:$0xe] %v5997
      %6305 = vst [vmem:[%s6291 + $0x34] sm:$0xf] %v6006
      %6306 = vst [vmem:[%s6291 + $0x38] sm:$0x1] %v6011
      %6307 = vst [vmem:[%s6291 + $0x3c] sm:$0xe] %v6018
      %6308 = vst [vmem:[%s6291 + $0x40] sm:$0xf] %v6027
      %6309 = vst [vmem:[%s6291 + $0x44] sm:$0x1] %v6032
      %6310 = vst [vmem:[%s6291 + $0x48] sm:$0xe] %v6039
      %6311 = vst [vmem:[%s6291 + $0x4c] sm:$0xf] %v6048
      %6312 = vst [vmem:[%s6291 + $0x50] sm:$0x1] %v6053
      %6313 = vst [vmem:[%s6291 + $0x54] sm:$0xe] %v6060
      %6314 = vst [vmem:[%s6291 + $0x58] sm:$0xf] %v6069
      %6315 = vst [vmem:[%s6291 + $0x5c] sm:$0x1] %v6074
      %6316 = vst [vmem:[%s6291 + $0x60] sm:$0xe] %v6081
      %6317 = vst [vmem:[%s6291 + $0x64] sm:$0xf] %v6090
      %6318 = vst [vmem:[%s6291 + $0x68] sm:$0x1] %v6095
      %6319 = vst [vmem:[%s6291 + $0x6c] sm:$0xe] %v6102
      %6320 = vst [vmem:[%s6291 + $0x70] sm:$0xf] %v6111
      %6321 = vst [vmem:[%s6291 + $0x74] sm:$0x1] %v6116
      %6322 = vst [vmem:[%s6291 + $0x78] sm:$0xe] %v6123
      %6323 = vst [vmem:[%s6291 + $0x7c] sm:$0xf] %v6132
      %6324 = vst [vmem:[%s6291 + $0x80] sm:$0x1] %v6137
      %6325 = vst [vmem:[%s6291 + $0x84] sm:$0xe] %v6144
      %6326 = vst [vmem:[%s6291 + $0x88] sm:$0xf] %v6153
      %6327 = vst [vmem:[%s6291 + $0x8c] sm:$0x1] %v6158
      %6328 = vst [vmem:[%s6291 + $0x90] sm:$0xe] %v6165
      %6329 = vst [vmem:[%s6291 + $0x94] sm:$0xf] %v6174
      %6330 = vst [vmem:[%s6291 + $0x98] sm:$0x1] %v6179
      %6331 = vst [vmem:[%s6291 + $0x9c] sm:$0xe] %v6186
      %6332 = vst [vmem:[%s6291 + $0xa0] sm:$0xf] %v6195
      %6333 = vst [vmem:[%s6291 + $0xa4] sm:$0x1] %v6200
      %6334 = vst [vmem:[%s6291 + $0xa8] sm:$0xe] %v6207
      %6335 = vst [vmem:[%s6291 + $0xac] sm:$0xf] %v6216
      %6336 = vst [vmem:[%s6291 + $0xb0] sm:$0x1] %v6221
      %6337 = vst [vmem:[%s6291 + $0xb4] sm:$0xe] %v6228
      %6338 = vst [vmem:[%s6291 + $0xb8] sm:$0xf] %v6237
      %6339 = vst [vmem:[%s6291 + $0xbc] sm:$0x1] %v6242
      %v6340 = vld [vmem:[#allocation3] sm:$0xf]
      %v6341 = vld [vmem:[#allocation3 + $0x4] sm:$0xf]
      %v6342 = vld [vmem:[#allocation3 + $0x8] sm:$0x3]
      %v6343 = vld [vmem:[#allocation3 + $0xc] sm:$0xf]
      %v6344 = vld [vmem:[#allocation3 + $0x10] sm:$0xf]
      %v6345 = vld [vmem:[#allocation3 + $0x14] sm:$0x3]
      %v6346 = vld [vmem:[#allocation3 + $0x18] sm:$0xf]
      %v6347 = vld [vmem:[#allocation3 + $0x1c] sm:$0xf]
      %v6348 = vld [vmem:[#allocation3 + $0x20] sm:$0x3]
      %v6349 = vld [vmem:[#allocation3 + $0x24] sm:$0xf]
      %v6350 = vld [vmem:[#allocation3 + $0x28] sm:$0xf]
      %v6351 = vld [vmem:[#allocation3 + $0x2c] sm:$0x3]
      %v6352 = vld [vmem:[#allocation3 + $0x30] sm:$0xf]
      %v6353 = vld [vmem:[#allocation3 + $0x34] sm:$0xf]
      %v6354 = vld [vmem:[#allocation3 + $0x38] sm:$0x3]
      %v6355 = vld [vmem:[#allocation3 + $0x3c] sm:$0xf]
      %v6356 = vld [vmem:[#allocation3 + $0x40] sm:$0xf]
      %v6357 = vld [vmem:[#allocation3 + $0x44] sm:$0x3]
      %v6358 = vld [vmem:[#allocation3 + $0x48] sm:$0xf]
      %v6359 = vld [vmem:[#allocation3 + $0x4c] sm:$0xf]
      %v6360 = vld [vmem:[#allocation3 + $0x50] sm:$0x3]
      %v6361 = vld [vmem:[#allocation3 + $0x54] sm:$0xf]
      %v6362 = vld [vmem:[#allocation3 + $0x58] sm:$0xf]
      %v6363 = vld [vmem:[#allocation3 + $0x5c] sm:$0x3]
      %v6364 = vld [vmem:[#allocation3 + $0x60] sm:$0xf]
      %v6365 = vld [vmem:[#allocation3 + $0x64] sm:$0xf]
      %v6366 = vld [vmem:[#allocation3 + $0x68] sm:$0x3]
      %v6367 = vld [vmem:[#allocation3 + $0x6c] sm:$0xf]
      %v6368 = vld [vmem:[#allocation3 + $0x70] sm:$0xf]
      %v6369 = vld [vmem:[#allocation3 + $0x74] sm:$0x3]
      %v6370 = vld [vmem:[#allocation3 + $0x78] sm:$0xf]
      %v6371 = vld [vmem:[#allocation3 + $0x7c] sm:$0xf]
      %v6372 = vld [vmem:[#allocation3 + $0x80] sm:$0x3]
      %v6373 = vld [vmem:[#allocation3 + $0x84] sm:$0xf]
      %v6374 = vld [vmem:[#allocation3 + $0x88] sm:$0xf]
      %v6375 = vld [vmem:[#allocation3 + $0x8c] sm:$0x3]
      %v6376 = vld [vmem:[#allocation3 + $0x90] sm:$0xf]
      %v6377 = vld [vmem:[#allocation3 + $0x94] sm:$0xf]
      %v6378 = vld [vmem:[#allocation3 + $0x98] sm:$0x3]
      %v6379 = vld [vmem:[#allocation3 + $0x9c] sm:$0xf]
      %v6380 = vld [vmem:[#allocation3 + $0xa0] sm:$0xf]
      %v6381 = vld [vmem:[#allocation3 + $0xa4] sm:$0x3]
      %v6382 = vld [vmem:[#allocation3 + $0xa8] sm:$0xf]
      %v6383 = vld [vmem:[#allocation3 + $0xac] sm:$0xf]
      %v6384 = vld [vmem:[#allocation3 + $0xb0] sm:$0x3]
      %v6385 = vld [vmem:[#allocation3 + $0xb4] sm:$0xf]
      %v6386 = vld [vmem:[#allocation3 + $0xb8] sm:$0xf]
      %v6387 = vld [vmem:[#allocation3 + $0xbc] sm:$0x3]
      %v6436 = vrot.slane %v6340, 2
      %v6437 = vrot.slane %v6341, 2
      %v6438 = vrot.slane %v6342, 2
      %v6439 = vrot.slane %v6343, 2
      %v6440 = vrot.slane %v6344, 2
      %v6441 = vrot.slane %v6345, 2
      %v6442 = vrot.slane %v6346, 2
      %v6443 = vrot.slane %v6347, 2
      %v6444 = vrot.slane %v6348, 2
      %v6445 = vrot.slane %v6349, 2
      %v6446 = vrot.slane %v6350, 2
      %v6447 = vrot.slane %v6351, 2
      %v6448 = vrot.slane %v6352, 2
      %v6449 = vrot.slane %v6353, 2
      %v6450 = vrot.slane %v6354, 2
      %v6451 = vrot.slane %v6355, 2
      %v6452 = vrot.slane %v6356, 2
      %v6453 = vrot.slane %v6357, 2
      %v6454 = vrot.slane %v6358, 2
      %v6455 = vrot.slane %v6359, 2
      %v6456 = vrot.slane %v6360, 2
      %v6457 = vrot.slane %v6361, 2
      %v6458 = vrot.slane %v6362, 2
      %v6459 = vrot.slane %v6363, 2
      %v6460 = vrot.slane %v6364, 2
      %v6461 = vrot.slane %v6365, 2
      %v6462 = vrot.slane %v6366, 2
      %v6463 = vrot.slane %v6367, 2
      %v6464 = vrot.slane %v6368, 2
      %v6465 = vrot.slane %v6369, 2
      %v6466 = vrot.slane %v6370, 2
      %v6467 = vrot.slane %v6371, 2
      %v6468 = vrot.slane %v6372, 2
      %v6469 = vrot.slane %v6373, 2
      %v6470 = vrot.slane %v6374, 2
      %v6471 = vrot.slane %v6375, 2
      %v6472 = vrot.slane %v6376, 2
      %v6473 = vrot.slane %v6377, 2
      %v6474 = vrot.slane %v6378, 2
      %v6475 = vrot.slane %v6379, 2
      %v6476 = vrot.slane %v6380, 2
      %v6477 = vrot.slane %v6381, 2
      %v6478 = vrot.slane %v6382, 2
      %v6479 = vrot.slane %v6383, 2
      %v6480 = vrot.slane %v6384, 2
      %v6481 = vrot.slane %v6385, 2
      %v6482 = vrot.slane %v6386, 2
      %v6483 = vrot.slane %v6387, 2
      %v6486 = vsel %vm582, %v6340, %v6436
      %v6487 = vsel %vm586, %v6340, %v6436
      %v6489 = vrot.slane %v6487, 2
      %v6492 = vsel %vm582, %v6341, %v6437
      %v6493 = vsel %vm586, %v6341, %v6437
      %v6495 = vrot.slane %v6493, 2
      %v6498 = vsel %vm582, %v6342, %v6438
      %v6501 = vsel %vm582, %v6343, %v6439
      %v6502 = vsel %vm586, %v6343, %v6439
      %v6504 = vrot.slane %v6502, 2
      %v6507 = vsel %vm582, %v6344, %v6440
      %v6508 = vsel %vm586, %v6344, %v6440
      %v6510 = vrot.slane %v6508, 2
      %v6513 = vsel %vm582, %v6345, %v6441
      %v6516 = vsel %vm582, %v6346, %v6442
      %v6517 = vsel %vm586, %v6346, %v6442
      %v6519 = vrot.slane %v6517, 2
      %v6522 = vsel %vm582, %v6347, %v6443
      %v6523 = vsel %vm586, %v6347, %v6443
      %v6525 = vrot.slane %v6523, 2
      %v6528 = vsel %vm582, %v6348, %v6444
      %v6531 = vsel %vm582, %v6349, %v6445
      %v6532 = vsel %vm586, %v6349, %v6445
      %v6534 = vrot.slane %v6532, 2
      %v6537 = vsel %vm582, %v6350, %v6446
      %v6538 = vsel %vm586, %v6350, %v6446
      %v6540 = vrot.slane %v6538, 2
      %v6543 = vsel %vm582, %v6351, %v6447
      %v6546 = vsel %vm582, %v6352, %v6448
      %v6547 = vsel %vm586, %v6352, %v6448
      %v6549 = vrot.slane %v6547, 2
      %v6552 = vsel %vm582, %v6353, %v6449
      %v6553 = vsel %vm586, %v6353, %v6449
      %v6555 = vrot.slane %v6553, 2
      %v6558 = vsel %vm582, %v6354, %v6450
      %v6561 = vsel %vm582, %v6355, %v6451
      %v6562 = vsel %vm586, %v6355, %v6451
      %v6564 = vrot.slane %v6562, 2
      %v6567 = vsel %vm582, %v6356, %v6452
      %v6568 = vsel %vm586, %v6356, %v6452
      %v6570 = vrot.slane %v6568, 2
      %v6573 = vsel %vm582, %v6357, %v6453
      %v6576 = vsel %vm582, %v6358, %v6454
      %v6577 = vsel %vm586, %v6358, %v6454
      %v6579 = vrot.slane %v6577, 2
      %v6582 = vsel %vm582, %v6359, %v6455
      %v6583 = vsel %vm586, %v6359, %v6455
      %v6585 = vrot.slane %v6583, 2
      %v6588 = vsel %vm582, %v6360, %v6456
      %v6591 = vsel %vm582, %v6361, %v6457
      %v6592 = vsel %vm586, %v6361, %v6457
      %v6594 = vrot.slane %v6592, 2
      %v6597 = vsel %vm582, %v6362, %v6458
      %v6598 = vsel %vm586, %v6362, %v6458
      %v6600 = vrot.slane %v6598, 2
      %v6603 = vsel %vm582, %v6363, %v6459
      %v6606 = vsel %vm582, %v6364, %v6460
      %v6607 = vsel %vm586, %v6364, %v6460
      %v6609 = vrot.slane %v6607, 2
      %v6612 = vsel %vm582, %v6365, %v6461
      %v6613 = vsel %vm586, %v6365, %v6461
      %v6615 = vrot.slane %v6613, 2
      %v6618 = vsel %vm582, %v6366, %v6462
      %v6621 = vsel %vm582, %v6367, %v6463
      %v6622 = vsel %vm586, %v6367, %v6463
      %v6624 = vrot.slane %v6622, 2
      %v6627 = vsel %vm582, %v6368, %v6464
      %v6628 = vsel %vm586, %v6368, %v6464
      %v6630 = vrot.slane %v6628, 2
      %v6633 = vsel %vm582, %v6369, %v6465
      %v6636 = vsel %vm582, %v6370, %v6466
      %v6637 = vsel %vm586, %v6370, %v6466
      %v6639 = vrot.slane %v6637, 2
      %v6642 = vsel %vm582, %v6371, %v6467
      %v6643 = vsel %vm586, %v6371, %v6467
      %v6645 = vrot.slane %v6643, 2
      %v6648 = vsel %vm582, %v6372, %v6468
      %v6651 = vsel %vm582, %v6373, %v6469
      %v6652 = vsel %vm586, %v6373, %v6469
      %v6654 = vrot.slane %v6652, 2
      %v6657 = vsel %vm582, %v6374, %v6470
      %v6658 = vsel %vm586, %v6374, %v6470
      %v6660 = vrot.slane %v6658, 2
      %v6663 = vsel %vm582, %v6375, %v6471
      %v6666 = vsel %vm582, %v6376, %v6472
      %v6667 = vsel %vm586, %v6376, %v6472
      %v6669 = vrot.slane %v6667, 2
      %v6672 = vsel %vm582, %v6377, %v6473
      %v6673 = vsel %vm586, %v6377, %v6473
      %v6675 = vrot.slane %v6673, 2
      %v6678 = vsel %vm582, %v6378, %v6474
      %v6681 = vsel %vm582, %v6379, %v6475
      %v6682 = vsel %vm586, %v6379, %v6475
      %v6684 = vrot.slane %v6682, 2
      %v6687 = vsel %vm582, %v6380, %v6476
      %v6688 = vsel %vm586, %v6380, %v6476
      %v6690 = vrot.slane %v6688, 2
      %v6693 = vsel %vm582, %v6381, %v6477
      %v6696 = vsel %vm582, %v6382, %v6478
      %v6697 = vsel %vm586, %v6382, %v6478
      %v6699 = vrot.slane %v6697, 2
      %v6702 = vsel %vm582, %v6383, %v6479
      %v6703 = vsel %vm586, %v6383, %v6479
      %v6705 = vrot.slane %v6703, 2
      %v6708 = vsel %vm582, %v6384, %v6480
      %v6711 = vsel %vm582, %v6385, %v6481
      %v6712 = vsel %vm586, %v6385, %v6481
      %v6714 = vrot.slane %v6712, 2
      %v6717 = vsel %vm582, %v6386, %v6482
      %v6718 = vsel %vm586, %v6386, %v6482
      %v6720 = vrot.slane %v6718, 2
      %v6723 = vsel %vm582, %v6387, %v6483
      %6724 = vst [vmem:[#allocation1] ss:$2 sm:$0xff] %v6486
      %s6726 = scalar_lea.vmem [#allocation1], 1
      %6727 = vst [vmem:[%s6726] ss:$2 sm:$0xff] %v6489
      %s6728 = scalar_lea.vmem [#allocation1], 16
      %6729 = vst [vmem:[%s6728] ss:$2 sm:$0xff] %v6492
      %s6731 = scalar_lea.vmem [#allocation1], 17
      %6732 = vst [vmem:[%s6731] ss:$2 sm:$0xff] %v6495
      %s6733 = scalar_lea.vmem [#allocation1], 32
      %6734 = vst [vmem:[%s6733] ss:$2 sm:$0xff] %v6498
      %s6735 = scalar_lea.vmem [#allocation1], 33
      %6736 = vst [vmem:[%s6735] ss:$2 sm:$0xff] %v6501
      %s6738 = scalar_lea.vmem [#allocation1], 48
      %6739 = vst [vmem:[%s6738] ss:$2 sm:$0xff] %v6504
      %s6740 = scalar_lea.vmem [#allocation1], 49
      %6741 = vst [vmem:[%s6740] ss:$2 sm:$0xff] %v6507
      %v6742 = vld.sshfl [vmem:[#allocation1] sm:$0xff pattern:$0x75643120]
      %v6743 = vld.sshfl [vmem:[#allocation1 + $0x10] sm:$0xff pattern:$0x75643120]
      %v6744 = vld.sshfl [vmem:[#allocation1 + $0x20] sm:$0xff pattern:$0x75643120]
      %v6745 = vld.sshfl [vmem:[#allocation1 + $0x30] sm:$0xff pattern:$0x75643120]
      %6747 = vst [vmem:[#allocation1] ss:$2 sm:$0xff] %v6510
      %6748 = vst [vmem:[%s6726] ss:$2 sm:$0xff] %v6513
      %6749 = vst [vmem:[%s6728] ss:$2 sm:$0xff] %v6516
      %6751 = vst [vmem:[%s6731] ss:$2 sm:$0xff] %v6519
      %6752 = vst [vmem:[%s6733] ss:$2 sm:$0xff] %v6522
      %6754 = vst [vmem:[%s6735] ss:$2 sm:$0xff] %v6525
      %6755 = vst [vmem:[%s6738] ss:$2 sm:$0xff] %v6528
      %6756 = vst [vmem:[%s6740] ss:$2 sm:$0xff] %v6531
      %v6757 = vld.sshfl [vmem:[#allocation1] sm:$0xff pattern:$0x75643120]
      %v6758 = vld.sshfl [vmem:[#allocation1 + $0x10] sm:$0xff pattern:$0x75643120]
      %v6759 = vld.sshfl [vmem:[#allocation1 + $0x20] sm:$0xff pattern:$0x75643120]
      %v6760 = vld.sshfl [vmem:[#allocation1 + $0x30] sm:$0xff pattern:$0x75643120]
      %6762 = vst [vmem:[#allocation1] ss:$2 sm:$0xff] %v6534
      %6763 = vst [vmem:[%s6726] ss:$2 sm:$0xff] %v6537
      %6765 = vst [vmem:[%s6728] ss:$2 sm:$0xff] %v6540
      %6766 = vst [vmem:[%s6731] ss:$2 sm:$0xff] %v6543
      %6767 = vst [vmem:[%s6733] ss:$2 sm:$0xff] %v6546
      %6769 = vst [vmem:[%s6735] ss:$2 sm:$0xff] %v6549
      %6770 = vst [vmem:[%s6738] ss:$2 sm:$0xff] %v6552
      %6772 = vst [vmem:[%s6740] ss:$2 sm:$0xff] %v6555
      %v6773 = vld.sshfl [vmem:[#allocation1] sm:$0xff pattern:$0x75643120]
      %v6774 = vld.sshfl [vmem:[#allocation1 + $0x10] sm:$0xff pattern:$0x75643120]
      %v6775 = vld.sshfl [vmem:[#allocation1 + $0x20] sm:$0xff pattern:$0x75643120]
      %v6776 = vld.sshfl [vmem:[#allocation1 + $0x30] sm:$0xff pattern:$0x75643120]
      %6777 = vst [vmem:[#allocation1] ss:$2 sm:$0xff] %v6558
      %6778 = vst [vmem:[%s6726] ss:$2 sm:$0xff] %v6561
      %6780 = vst [vmem:[%s6728] ss:$2 sm:$0xff] %v6564
      %6781 = vst [vmem:[%s6731] ss:$2 sm:$0xff] %v6567
      %6783 = vst [vmem:[%s6733] ss:$2 sm:$0xff] %v6570
      %6784 = vst [vmem:[%s6735] ss:$2 sm:$0xff] %v6573
      %6785 = vst [vmem:[%s6738] ss:$2 sm:$0xff] %v6576
      %6787 = vst [vmem:[%s6740] ss:$2 sm:$0xff] %v6579
      %v6788 = vld.sshfl [vmem:[#allocation1] sm:$0xff pattern:$0x75643120]
      %v6789 = vld.sshfl [vmem:[#allocation1 + $0x10] sm:$0xff pattern:$0x75643120]
      %v6790 = vld.sshfl [vmem:[#allocation1 + $0x20] sm:$0xff pattern:$0x75643120]
      %v6791 = vld.sshfl [vmem:[#allocation1 + $0x30] sm:$0xff pattern:$0x75643120]
      %6792 = vst [vmem:[#allocation1] ss:$2 sm:$0xff] %v6582
      %6794 = vst [vmem:[%s6726] ss:$2 sm:$0xff] %v6585
      %6795 = vst [vmem:[%s6728] ss:$2 sm:$0xff] %v6588
      %6796 = vst [vmem:[%s6731] ss:$2 sm:$0xff] %v6591
      %6798 = vst [vmem:[%s6733] ss:$2 sm:$0xff] %v6594
      %6799 = vst [vmem:[%s6735] ss:$2 sm:$0xff] %v6597
      %6801 = vst [vmem:[%s6738] ss:$2 sm:$0xff] %v6600
      %6802 = vst [vmem:[%s6740] ss:$2 sm:$0xff] %v6603
      %v6803 = vld.sshfl [vmem:[#allocation1] sm:$0xff pattern:$0x75643120]
      %v6804 = vld.sshfl [vmem:[#allocation1 + $0x10] sm:$0xff pattern:$0x75643120]
      %v6805 = vld.sshfl [vmem:[#allocation1 + $0x20] sm:$0xff pattern:$0x75643120]
      %v6806 = vld.sshfl [vmem:[#allocation1 + $0x30] sm:$0xff pattern:$0x75643120]
      %6807 = vst [vmem:[#allocation1] ss:$2 sm:$0xff] %v6606
      %6809 = vst [vmem:[%s6726] ss:$2 sm:$0xff] %v6609
      %6810 = vst [vmem:[%s6728] ss:$2 sm:$0xff] %v6612
      %6812 = vst [vmem:[%s6731] ss:$2 sm:$0xff] %v6615
      %6813 = vst [vmem:[%s6733] ss:$2 sm:$0xff] %v6618
      %6814 = vst [vmem:[%s6735] ss:$2 sm:$0xff] %v6621
      %6816 = vst [vmem:[%s6738] ss:$2 sm:$0xff] %v6624
      %6817 = vst [vmem:[%s6740] ss:$2 sm:$0xff] %v6627
      %v6818 = vld.sshfl [vmem:[#allocation1] sm:$0xff pattern:$0x75643120]
      %v6819 = vld.sshfl [vmem:[#allocation1 + $0x10] sm:$0xff pattern:$0x75643120]
      %v6820 = vld.sshfl [vmem:[#allocation1 + $0x20] sm:$0xff pattern:$0x75643120]
      %v6821 = vld.sshfl [vmem:[#allocation1 + $0x30] sm:$0xff pattern:$0x75643120]
      %6823 = vst [vmem:[#allocation1] ss:$2 sm:$0xff] %v6630
      %6824 = vst [vmem:[%s6726] ss:$2 sm:$0xff] %v6633
      %6825 = vst [vmem:[%s6728] ss:$2 sm:$0xff] %v6636
      %6827 = vst [vmem:[%s6731] ss:$2 sm:$0xff] %v6639
      %6828 = vst [vmem:[%s6733] ss:$2 sm:$0xff] %v6642
      %6830 = vst [vmem:[%s6735] ss:$2 sm:$0xff] %v6645
      %6831 = vst [vmem:[%s6738] ss:$2 sm:$0xff] %v6648
      %6832 = vst [vmem:[%s6740] ss:$2 sm:$0xff] %v6651
      %v6833 = vld.sshfl [vmem:[#allocation1] sm:$0xff pattern:$0x75643120]
      %v6834 = vld.sshfl [vmem:[#allocation1 + $0x10] sm:$0xff pattern:$0x75643120]
      %v6835 = vld.sshfl [vmem:[#allocation1 + $0x20] sm:$0xff pattern:$0x75643120]
      %v6836 = vld.sshfl [vmem:[#allocation1 + $0x30] sm:$0xff pattern:$0x75643120]
      %6838 = vst [vmem:[#allocation1] ss:$2 sm:$0xff] %v6654
      %6839 = vst [vmem:[%s6726] ss:$2 sm:$0xff] %v6657
      %6841 = vst [vmem:[%s6728] ss:$2 sm:$0xff] %v6660
      %6842 = vst [vmem:[%s6731] ss:$2 sm:$0xff] %v6663
      %6843 = vst [vmem:[%s6733] ss:$2 sm:$0xff] %v6666
      %6845 = vst [vmem:[%s6735] ss:$2 sm:$0xff] %v6669
      %6846 = vst [vmem:[%s6738] ss:$2 sm:$0xff] %v6672
      %6848 = vst [vmem:[%s6740] ss:$2 sm:$0xff] %v6675
      %v6849 = vld.sshfl [vmem:[#allocation1] sm:$0xff pattern:$0x75643120]
      %v6850 = vld.sshfl [vmem:[#allocation1 + $0x10] sm:$0xff pattern:$0x75643120]
      %v6851 = vld.sshfl [vmem:[#allocation1 + $0x20] sm:$0xff pattern:$0x75643120]
      %v6852 = vld.sshfl [vmem:[#allocation1 + $0x30] sm:$0xff pattern:$0x75643120]
      %6853 = vst [vmem:[#allocation1] ss:$2 sm:$0xff] %v6678
      %6854 = vst [vmem:[%s6726] ss:$2 sm:$0xff] %v6681
      %6856 = vst [vmem:[%s6728] ss:$2 sm:$0xff] %v6684
      %6857 = vst [vmem:[%s6731] ss:$2 sm:$0xff] %v6687
      %6859 = vst [vmem:[%s6733] ss:$2 sm:$0xff] %v6690
      %6860 = vst [vmem:[%s6735] ss:$2 sm:$0xff] %v6693
      %6861 = vst [vmem:[%s6738] ss:$2 sm:$0xff] %v6696
      %6863 = vst [vmem:[%s6740] ss:$2 sm:$0xff] %v6699
      %v6864 = vld.sshfl [vmem:[#allocation1] sm:$0xff pattern:$0x75643120]
      %v6865 = vld.sshfl [vmem:[#allocation1 + $0x10] sm:$0xff pattern:$0x75643120]
      %v6866 = vld.sshfl [vmem:[#allocation1 + $0x20] sm:$0xff pattern:$0x75643120]
      %v6867 = vld.sshfl [vmem:[#allocation1 + $0x30] sm:$0xff pattern:$0x75643120]
      %6868 = vst [vmem:[#allocation1] ss:$2 sm:$0xff] %v6702
      %6870 = vst [vmem:[%s6726] ss:$2 sm:$0xff] %v6705
      %6871 = vst [vmem:[%s6728] ss:$2 sm:$0xff] %v6708
      %6872 = vst [vmem:[%s6731] ss:$2 sm:$0xff] %v6711
      %6874 = vst [vmem:[%s6733] ss:$2 sm:$0xff] %v6714
      %6875 = vst [vmem:[%s6735] ss:$2 sm:$0xff] %v6717
      %6877 = vst [vmem:[%s6738] ss:$2 sm:$0xff] %v6720
      %6878 = vst [vmem:[%s6740] ss:$2 sm:$0xff] %v6723
      %v6879 = vld.sshfl [vmem:[#allocation1] sm:$0xff pattern:$0x75643120]
      %v6880 = vld.sshfl [vmem:[#allocation1 + $0x10] sm:$0xff pattern:$0x75643120]
      %v6881 = vld.sshfl [vmem:[#allocation1 + $0x20] sm:$0xff pattern:$0x75643120]
      %v6882 = vld.sshfl [vmem:[#allocation1 + $0x30] sm:$0xff pattern:$0x75643120]
      %6923 = vst [vmem:[#allocation4] sm:$0xf] %v6742
      %6924 = vst [vmem:[#allocation4 + $0xc] sm:$0xf] %v6743
      %6925 = vst [vmem:[#allocation4 + $0x18] sm:$0xf] %v6744
      %6926 = vst [vmem:[#allocation4 + $0x24] sm:$0xf] %v6745
      %6927 = vst [vmem:[#allocation4 + $0x30] sm:$0xf] %v6757
      %6928 = vst [vmem:[#allocation4 + $0x3c] sm:$0xf] %v6758
      %6929 = vst [vmem:[#allocation4 + $0x48] sm:$0xf] %v6759
      %6930 = vst [vmem:[#allocation4 + $0x54] sm:$0xf] %v6760
      %6931 = vst [vmem:[#allocation4 + $0x60] sm:$0xf] %v6773
      %6932 = vst [vmem:[#allocation4 + $0x6c] sm:$0xf] %v6774
      %6933 = vst [vmem:[#allocation4 + $0x78] sm:$0xf] %v6775
      %6934 = vst [vmem:[#allocation4 + $0x84] sm:$0xf] %v6776
      %6935 = vst [vmem:[#allocation4 + $0x90] sm:$0xf] %v6788
      %6936 = vst [vmem:[#allocation4 + $0x9c] sm:$0xf] %v6789
      %6937 = vst [vmem:[#allocation4 + $0xa8] sm:$0xf] %v6790
      %6938 = vst [vmem:[#allocation4 + $0xb4] sm:$0xf] %v6791
      %6939 = vst [vmem:[#allocation4 + $0xc0] sm:$0xf] %v6803
      %6940 = vst [vmem:[#allocation4 + $0xcc] sm:$0xf] %v6804
      %6941 = vst [vmem:[#allocation4 + $0xd8] sm:$0xf] %v6805
      %6942 = vst [vmem:[#allocation4 + $0xe4] sm:$0xf] %v6806
      %6943 = vst [vmem:[#allocation4 + $0xf0] sm:$0xf] %v6818
      %6944 = vst [vmem:[#allocation4 + $0xfc] sm:$0xf] %v6819
      %6945 = vst [vmem:[#allocation4 + $0x108] sm:$0xf] %v6820
      %6946 = vst [vmem:[#allocation4 + $0x114] sm:$0xf] %v6821
      %6947 = vst [vmem:[#allocation4 + $0x120] sm:$0xf] %v6833
      %6948 = vst [vmem:[#allocation4 + $0x12c] sm:$0xf] %v6834
      %6949 = vst [vmem:[#allocation4 + $0x138] sm:$0xf] %v6835
      %6950 = vst [vmem:[#allocation4 + $0x144] sm:$0xf] %v6836
      %6951 = vst [vmem:[#allocation4 + $0x150] sm:$0xf] %v6849
      %6952 = vst [vmem:[#allocation4 + $0x15c] sm:$0xf] %v6850
      %6953 = vst [vmem:[#allocation4 + $0x168] sm:$0xf] %v6851
      %6954 = vst [vmem:[#allocation4 + $0x174] sm:$0xf] %v6852
      %6955 = vst [vmem:[#allocation4 + $0x180] sm:$0xf] %v6864
      %6956 = vst [vmem:[#allocation4 + $0x18c] sm:$0xf] %v6865
      %6957 = vst [vmem:[#allocation4 + $0x198] sm:$0xf] %v6866
      %6958 = vst [vmem:[#allocation4 + $0x1a4] sm:$0xf] %v6867
      %6959 = vst [vmem:[#allocation4 + $0x1b0] sm:$0xf] %v6879
      %6960 = vst [vmem:[#allocation4 + $0x1bc] sm:$0xf] %v6880
      %6961 = vst [vmem:[#allocation4 + $0x1c8] sm:$0xf] %v6881
      %6962 = vst [vmem:[#allocation4 + $0x1d4] sm:$0xf] %v6882
      %v6963 = vld [vmem:[%s6291] sm:$0xf]
      %v6964 = vld [vmem:[%s6291 + $0x4] sm:$0xf]
      %v6965 = vld [vmem:[%s6291 + $0x8] sm:$0x3]
      %v6966 = vld [vmem:[%s6291 + $0xc] sm:$0xf]
      %v6967 = vld [vmem:[%s6291 + $0x10] sm:$0xf]
      %v6968 = vld [vmem:[%s6291 + $0x14] sm:$0x3]
      %v6969 = vld [vmem:[%s6291 + $0x18] sm:$0xf]
      %v6970 = vld [vmem:[%s6291 + $0x1c] sm:$0xf]
      %v6971 = vld [vmem:[%s6291 + $0x20] sm:$0x3]
      %v6972 = vld [vmem:[%s6291 + $0x24] sm:$0xf]
      %v6973 = vld [vmem:[%s6291 + $0x28] sm:$0xf]
      %v6974 = vld [vmem:[%s6291 + $0x2c] sm:$0x3]
      %v6975 = vld [vmem:[%s6291 + $0x30] sm:$0xf]
      %v6976 = vld [vmem:[%s6291 + $0x34] sm:$0xf]
      %v6977 = vld [vmem:[%s6291 + $0x38] sm:$0x3]
      %v6978 = vld [vmem:[%s6291 + $0x3c] sm:$0xf]
      %v6979 = vld [vmem:[%s6291 + $0x40] sm:$0xf]
      %v6980 = vld [vmem:[%s6291 + $0x44] sm:$0x3]
      %v6981 = vld [vmem:[%s6291 + $0x48] sm:$0xf]
      %v6982 = vld [vmem:[%s6291 + $0x4c] sm:$0xf]
      %v6983 = vld [vmem:[%s6291 + $0x50] sm:$0x3]
      %v6984 = vld [vmem:[%s6291 + $0x54] sm:$0xf]
      %v6985 = vld [vmem:[%s6291 + $0x58] sm:$0xf]
      %v6986 = vld [vmem:[%s6291 + $0x5c] sm:$0x3]
      %v6987 = vld [vmem:[%s6291 + $0x60] sm:$0xf]
      %v6988 = vld [vmem:[%s6291 + $0x64] sm:$0xf]
      %v6989 = vld [vmem:[%s6291 + $0x68] sm:$0x3]
      %v6990 = vld [vmem:[%s6291 + $0x6c] sm:$0xf]
      %v6991 = vld [vmem:[%s6291 + $0x70] sm:$0xf]
      %v6992 = vld [vmem:[%s6291 + $0x74] sm:$0x3]
      %v6993 = vld [vmem:[%s6291 + $0x78] sm:$0xf]
      %v6994 = vld [vmem:[%s6291 + $0x7c] sm:$0xf]
      %v6995 = vld [vmem:[%s6291 + $0x80] sm:$0x3]
      %v6996 = vld [vmem:[%s6291 + $0x84] sm:$0xf]
      %v6997 = vld [vmem:[%s6291 + $0x88] sm:$0xf]
      %v6998 = vld [vmem:[%s6291 + $0x8c] sm:$0x3]
      %v6999 = vld [vmem:[%s6291 + $0x90] sm:$0xf]
      %v7000 = vld [vmem:[%s6291 + $0x94] sm:$0xf]
      %v7001 = vld [vmem:[%s6291 + $0x98] sm:$0x3]
      %v7002 = vld [vmem:[%s6291 + $0x9c] sm:$0xf]
      %v7003 = vld [vmem:[%s6291 + $0xa0] sm:$0xf]
      %v7004 = vld [vmem:[%s6291 + $0xa4] sm:$0x3]
      %v7005 = vld [vmem:[%s6291 + $0xa8] sm:$0xf]
      %v7006 = vld [vmem:[%s6291 + $0xac] sm:$0xf]
      %v7007 = vld [vmem:[%s6291 + $0xb0] sm:$0x3]
      %v7008 = vld [vmem:[%s6291 + $0xb4] sm:$0xf]
      %v7009 = vld [vmem:[%s6291 + $0xb8] sm:$0xf]
      %v7010 = vld [vmem:[%s6291 + $0xbc] sm:$0x3]
      %v7059 = vrot.slane %v6963, 2
      %v7060 = vrot.slane %v6964, 2
      %v7061 = vrot.slane %v6965, 2
      %v7062 = vrot.slane %v6966, 2
      %v7063 = vrot.slane %v6967, 2
      %v7064 = vrot.slane %v6968, 2
      %v7065 = vrot.slane %v6969, 2
      %v7066 = vrot.slane %v6970, 2
      %v7067 = vrot.slane %v6971, 2
      %v7068 = vrot.slane %v6972, 2
      %v7069 = vrot.slane %v6973, 2
      %v7070 = vrot.slane %v6974, 2
      %v7071 = vrot.slane %v6975, 2
      %v7072 = vrot.slane %v6976, 2
      %v7073 = vrot.slane %v6977, 2
      %v7074 = vrot.slane %v6978, 2
      %v7075 = vrot.slane %v6979, 2
      %v7076 = vrot.slane %v6980, 2
      %v7077 = vrot.slane %v6981, 2
      %v7078 = vrot.slane %v6982, 2
      %v7079 = vrot.slane %v6983, 2
      %v7080 = vrot.slane %v6984, 2
      %v7081 = vrot.slane %v6985, 2
      %v7082 = vrot.slane %v6986, 2
      %v7083 = vrot.slane %v6987, 2
      %v7084 = vrot.slane %v6988, 2
      %v7085 = vrot.slane %v6989, 2
      %v7086 = vrot.slane %v6990, 2
      %v7087 = vrot.slane %v6991, 2
      %v7088 = vrot.slane %v6992, 2
      %v7089 = vrot.slane %v6993, 2
      %v7090 = vrot.slane %v6994, 2
      %v7091 = vrot.slane %v6995, 2
      %v7092 = vrot.slane %v6996, 2
      %v7093 = vrot.slane %v6997, 2
      %v7094 = vrot.slane %v6998, 2
      %v7095 = vrot.slane %v6999, 2
      %v7096 = vrot.slane %v7000, 2
      %v7097 = vrot.slane %v7001, 2
      %v7098 = vrot.slane %v7002, 2
      %v7099 = vrot.slane %v7003, 2
      %v7100 = vrot.slane %v7004, 2
      %v7101 = vrot.slane %v7005, 2
      %v7102 = vrot.slane %v7006, 2
      %v7103 = vrot.slane %v7007, 2
      %v7104 = vrot.slane %v7008, 2
      %v7105 = vrot.slane %v7009, 2
      %v7106 = vrot.slane %v7010, 2
      %v7109 = vsel %vm582, %v6963, %v7059
      %v7110 = vsel %vm586, %v6963, %v7059
      %v7112 = vrot.slane %v7110, 2
      %v7115 = vsel %vm582, %v6964, %v7060
      %v7116 = vsel %vm586, %v6964, %v7060
      %v7118 = vrot.slane %v7116, 2
      %v7121 = vsel %vm582, %v6965, %v7061
      %v7124 = vsel %vm582, %v6966, %v7062
      %v7125 = vsel %vm586, %v6966, %v7062
      %v7127 = vrot.slane %v7125, 2
      %v7130 = vsel %vm582, %v6967, %v7063
      %v7131 = vsel %vm586, %v6967, %v7063
      %v7133 = vrot.slane %v7131, 2
      %v7136 = vsel %vm582, %v6968, %v7064
      %v7139 = vsel %vm582, %v6969, %v7065
      %v7140 = vsel %vm586, %v6969, %v7065
      %v7142 = vrot.slane %v7140, 2
      %v7145 = vsel %vm582, %v6970, %v7066
      %v7146 = vsel %vm586, %v6970, %v7066
      %v7148 = vrot.slane %v7146, 2
      %v7151 = vsel %vm582, %v6971, %v7067
      %v7154 = vsel %vm582, %v6972, %v7068
      %v7155 = vsel %vm586, %v6972, %v7068
      %v7157 = vrot.slane %v7155, 2
      %v7160 = vsel %vm582, %v6973, %v7069
      %v7161 = vsel %vm586, %v6973, %v7069
      %v7163 = vrot.slane %v7161, 2
      %v7166 = vsel %vm582, %v6974, %v7070
      %v7169 = vsel %vm582, %v6975, %v7071
      %v7170 = vsel %vm586, %v6975, %v7071
      %v7172 = vrot.slane %v7170, 2
      %v7175 = vsel %vm582, %v6976, %v7072
      %v7176 = vsel %vm586, %v6976, %v7072
      %v7178 = vrot.slane %v7176, 2
      %v7181 = vsel %vm582, %v6977, %v7073
      %v7184 = vsel %vm582, %v6978, %v7074
      %v7185 = vsel %vm586, %v6978, %v7074
      %v7187 = vrot.slane %v7185, 2
      %v7190 = vsel %vm582, %v6979, %v7075
      %v7191 = vsel %vm586, %v6979, %v7075
      %v7193 = vrot.slane %v7191, 2
      %v7196 = vsel %vm582, %v6980, %v7076
      %v7199 = vsel %vm582, %v6981, %v7077
      %v7200 = vsel %vm586, %v6981, %v7077
      %v7202 = vrot.slane %v7200, 2
      %v7205 = vsel %vm582, %v6982, %v7078
      %v7206 = vsel %vm586, %v6982, %v7078
      %v7208 = vrot.slane %v7206, 2
      %v7211 = vsel %vm582, %v6983, %v7079
      %v7214 = vsel %vm582, %v6984, %v7080
      %v7215 = vsel %vm586, %v6984, %v7080
      %v7217 = vrot.slane %v7215, 2
      %v7220 = vsel %vm582, %v6985, %v7081
      %v7221 = vsel %vm586, %v6985, %v7081
      %v7223 = vrot.slane %v7221, 2
      %v7226 = vsel %vm582, %v6986, %v7082
      %v7229 = vsel %vm582, %v6987, %v7083
      %v7230 = vsel %vm586, %v6987, %v7083
      %v7232 = vrot.slane %v7230, 2
      %v7235 = vsel %vm582, %v6988, %v7084
      %v7236 = vsel %vm586, %v6988, %v7084
      %v7238 = vrot.slane %v7236, 2
      %v7241 = vsel %vm582, %v6989, %v7085
      %v7244 = vsel %vm582, %v6990, %v7086
      %v7245 = vsel %vm586, %v6990, %v7086
      %v7247 = vrot.slane %v7245, 2
      %v7250 = vsel %vm582, %v6991, %v7087
      %v7251 = vsel %vm586, %v6991, %v7087
      %v7253 = vrot.slane %v7251, 2
      %v7256 = vsel %vm582, %v6992, %v7088
      %v7259 = vsel %vm582, %v6993, %v7089
      %v7260 = vsel %vm586, %v6993, %v7089
      %v7262 = vrot.slane %v7260, 2
      %v7265 = vsel %vm582, %v6994, %v7090
      %v7266 = vsel %vm586, %v6994, %v7090
      %v7268 = vrot.slane %v7266, 2
      %v7271 = vsel %vm582, %v6995, %v7091
      %v7274 = vsel %vm582, %v6996, %v7092
      %v7275 = vsel %vm586, %v6996, %v7092
      %v7277 = vrot.slane %v7275, 2
      %v7280 = vsel %vm582, %v6997, %v7093
      %v7281 = vsel %vm586, %v6997, %v7093
      %v7283 = vrot.slane %v7281, 2
      %v7286 = vsel %vm582, %v6998, %v7094
      %v7289 = vsel %vm582, %v6999, %v7095
      %v7290 = vsel %vm586, %v6999, %v7095
      %v7292 = vrot.slane %v7290, 2
      %v7295 = vsel %vm582, %v7000, %v7096
      %v7296 = vsel %vm586, %v7000, %v7096
      %v7298 = vrot.slane %v7296, 2
      %v7301 = vsel %vm582, %v7001, %v7097
      %v7304 = vsel %vm582, %v7002, %v7098
      %v7305 = vsel %vm586, %v7002, %v7098
      %v7307 = vrot.slane %v7305, 2
      %v7310 = vsel %vm582, %v7003, %v7099
      %v7311 = vsel %vm586, %v7003, %v7099
      %v7313 = vrot.slane %v7311, 2
      %v7316 = vsel %vm582, %v7004, %v7100
      %v7319 = vsel %vm582, %v7005, %v7101
      %v7320 = vsel %vm586, %v7005, %v7101
      %v7322 = vrot.slane %v7320, 2
      %v7325 = vsel %vm582, %v7006, %v7102
      %v7326 = vsel %vm586, %v7006, %v7102
      %v7328 = vrot.slane %v7326, 2
      %v7331 = vsel %vm582, %v7007, %v7103
      %v7334 = vsel %vm582, %v7008, %v7104
      %v7335 = vsel %vm586, %v7008, %v7104
      %v7337 = vrot.slane %v7335, 2
      %v7340 = vsel %vm582, %v7009, %v7105
      %v7341 = vsel %vm586, %v7009, %v7105
      %v7343 = vrot.slane %v7341, 2
      %v7346 = vsel %vm582, %v7010, %v7106
      %7347 = vst [vmem:[#allocation1] ss:$2 sm:$0xff] %v7109
      %s7349 = scalar_lea.vmem [#allocation1], 1
      %7350 = vst [vmem:[%s7349] ss:$2 sm:$0xff] %v7112
      %s7351 = scalar_lea.vmem [#allocation1], 16
      %7352 = vst [vmem:[%s7351] ss:$2 sm:$0xff] %v7115
      %s7354 = scalar_lea.vmem [#allocation1], 17
      %7355 = vst [vmem:[%s7354] ss:$2 sm:$0xff] %v7118
      %s7356 = scalar_lea.vmem [#allocation1], 32
      %7357 = vst [vmem:[%s7356] ss:$2 sm:$0xff] %v7121
      %s7358 = scalar_lea.vmem [#allocation1], 33
      %7359 = vst [vmem:[%s7358] ss:$2 sm:$0xff] %v7124
      %s7361 = scalar_lea.vmem [#allocation1], 48
      %7362 = vst [vmem:[%s7361] ss:$2 sm:$0xff] %v7127
      %s7363 = scalar_lea.vmem [#allocation1], 49
      %7364 = vst [vmem:[%s7363] ss:$2 sm:$0xff] %v7130
      %v7365 = vld.sshfl [vmem:[#allocation1] sm:$0xff pattern:$0x75643120]
      %v7366 = vld.sshfl [vmem:[#allocation1 + $0x10] sm:$0xff pattern:$0x75643120]
      %v7367 = vld.sshfl [vmem:[#allocation1 + $0x20] sm:$0xff pattern:$0x75643120]
      %v7368 = vld.sshfl [vmem:[#allocation1 + $0x30] sm:$0xff pattern:$0x75643120]
      %7370 = vst [vmem:[#allocation1] ss:$2 sm:$0xff] %v7133
      %7371 = vst [vmem:[%s7349] ss:$2 sm:$0xff] %v7136
      %7372 = vst [vmem:[%s7351] ss:$2 sm:$0xff] %v7139
      %7374 = vst [vmem:[%s7354] ss:$2 sm:$0xff] %v7142
      %7375 = vst [vmem:[%s7356] ss:$2 sm:$0xff] %v7145
      %7377 = vst [vmem:[%s7358] ss:$2 sm:$0xff] %v7148
      %7378 = vst [vmem:[%s7361] ss:$2 sm:$0xff] %v7151
      %7379 = vst [vmem:[%s7363] ss:$2 sm:$0xff] %v7154
      %v7380 = vld.sshfl [vmem:[#allocation1] sm:$0xff pattern:$0x75643120]
      %v7381 = vld.sshfl [vmem:[#allocation1 + $0x10] sm:$0xff pattern:$0x75643120]
      %v7382 = vld.sshfl [vmem:[#allocation1 + $0x20] sm:$0xff pattern:$0x75643120]
      %v7383 = vld.sshfl [vmem:[#allocation1 + $0x30] sm:$0xff pattern:$0x75643120]
      %7385 = vst [vmem:[#allocation1] ss:$2 sm:$0xff] %v7157
      %7386 = vst [vmem:[%s7349] ss:$2 sm:$0xff] %v7160
      %7388 = vst [vmem:[%s7351] ss:$2 sm:$0xff] %v7163
      %7389 = vst [vmem:[%s7354] ss:$2 sm:$0xff] %v7166
      %7390 = vst [vmem:[%s7356] ss:$2 sm:$0xff] %v7169
      %7392 = vst [vmem:[%s7358] ss:$2 sm:$0xff] %v7172
      %7393 = vst [vmem:[%s7361] ss:$2 sm:$0xff] %v7175
      %7395 = vst [vmem:[%s7363] ss:$2 sm:$0xff] %v7178
      %v7396 = vld.sshfl [vmem:[#allocation1] sm:$0xff pattern:$0x75643120]
      %v7397 = vld.sshfl [vmem:[#allocation1 + $0x10] sm:$0xff pattern:$0x75643120]
      %v7398 = vld.sshfl [vmem:[#allocation1 + $0x20] sm:$0xff pattern:$0x75643120]
      %v7399 = vld.sshfl [vmem:[#allocation1 + $0x30] sm:$0xff pattern:$0x75643120]
      %7400 = vst [vmem:[#allocation1] ss:$2 sm:$0xff] %v7181
      %7401 = vst [vmem:[%s7349] ss:$2 sm:$0xff] %v7184
      %7403 = vst [vmem:[%s7351] ss:$2 sm:$0xff] %v7187
      %7404 = vst [vmem:[%s7354] ss:$2 sm:$0xff] %v7190
      %7406 = vst [vmem:[%s7356] ss:$2 sm:$0xff] %v7193
      %7407 = vst [vmem:[%s7358] ss:$2 sm:$0xff] %v7196
      %7408 = vst [vmem:[%s7361] ss:$2 sm:$0xff] %v7199
      %7410 = vst [vmem:[%s7363] ss:$2 sm:$0xff] %v7202
      %v7411 = vld.sshfl [vmem:[#allocation1] sm:$0xff pattern:$0x75643120]
      %v7412 = vld.sshfl [vmem:[#allocation1 + $0x10] sm:$0xff pattern:$0x75643120]
      %v7413 = vld.sshfl [vmem:[#allocation1 + $0x20] sm:$0xff pattern:$0x75643120]
      %v7414 = vld.sshfl [vmem:[#allocation1 + $0x30] sm:$0xff pattern:$0x75643120]
      %7415 = vst [vmem:[#allocation1] ss:$2 sm:$0xff] %v7205
      %7417 = vst [vmem:[%s7349] ss:$2 sm:$0xff] %v7208
      %7418 = vst [vmem:[%s7351] ss:$2 sm:$0xff] %v7211
      %7419 = vst [vmem:[%s7354] ss:$2 sm:$0xff] %v7214
      %7421 = vst [vmem:[%s7356] ss:$2 sm:$0xff] %v7217
      %7422 = vst [vmem:[%s7358] ss:$2 sm:$0xff] %v7220
      %7424 = vst [vmem:[%s7361] ss:$2 sm:$0xff] %v7223
      %7425 = vst [vmem:[%s7363] ss:$2 sm:$0xff] %v7226
      %v7426 = vld.sshfl [vmem:[#allocation1] sm:$0xff pattern:$0x75643120]
      %v7427 = vld.sshfl [vmem:[#allocation1 + $0x10] sm:$0xff pattern:$0x75643120]
      %v7428 = vld.sshfl [vmem:[#allocation1 + $0x20] sm:$0xff pattern:$0x75643120]
      %v7429 = vld.sshfl [vmem:[#allocation1 + $0x30] sm:$0xff pattern:$0x75643120]
      %7430 = vst [vmem:[#allocation1] ss:$2 sm:$0xff] %v7229
      %7432 = vst [vmem:[%s7349] ss:$2 sm:$0xff] %v7232
      %7433 = vst [vmem:[%s7351] ss:$2 sm:$0xff] %v7235
      %7435 = vst [vmem:[%s7354] ss:$2 sm:$0xff] %v7238
      %7436 = vst [vmem:[%s7356] ss:$2 sm:$0xff] %v7241
      %7437 = vst [vmem:[%s7358] ss:$2 sm:$0xff] %v7244
      %7439 = vst [vmem:[%s7361] ss:$2 sm:$0xff] %v7247
      %7440 = vst [vmem:[%s7363] ss:$2 sm:$0xff] %v7250
      %v7441 = vld.sshfl [vmem:[#allocation1] sm:$0xff pattern:$0x75643120]
      %v7442 = vld.sshfl [vmem:[#allocation1 + $0x10] sm:$0xff pattern:$0x75643120]
      %v7443 = vld.sshfl [vmem:[#allocation1 + $0x20] sm:$0xff pattern:$0x75643120]
      %v7444 = vld.sshfl [vmem:[#allocation1 + $0x30] sm:$0xff pattern:$0x75643120]
      %7446 = vst [vmem:[#allocation1] ss:$2 sm:$0xff] %v7253
      %7447 = vst [vmem:[%s7349] ss:$2 sm:$0xff] %v7256
      %7448 = vst [vmem:[%s7351] ss:$2 sm:$0xff] %v7259
      %7450 = vst [vmem:[%s7354] ss:$2 sm:$0xff] %v7262
      %7451 = vst [vmem:[%s7356] ss:$2 sm:$0xff] %v7265
      %7453 = vst [vmem:[%s7358] ss:$2 sm:$0xff] %v7268
      %7454 = vst [vmem:[%s7361] ss:$2 sm:$0xff] %v7271
      %7455 = vst [vmem:[%s7363] ss:$2 sm:$0xff] %v7274
      %v7456 = vld.sshfl [vmem:[#allocation1] sm:$0xff pattern:$0x75643120]
      %v7457 = vld.sshfl [vmem:[#allocation1 + $0x10] sm:$0xff pattern:$0x75643120]
      %v7458 = vld.sshfl [vmem:[#allocation1 + $0x20] sm:$0xff pattern:$0x75643120]
      %v7459 = vld.sshfl [vmem:[#allocation1 + $0x30] sm:$0xff pattern:$0x75643120]
      %7461 = vst [vmem:[#allocation1] ss:$2 sm:$0xff] %v7277
      %7462 = vst [vmem:[%s7349] ss:$2 sm:$0xff] %v7280
      %7464 = vst [vmem:[%s7351] ss:$2 sm:$0xff] %v7283
      %7465 = vst [vmem:[%s7354] ss:$2 sm:$0xff] %v7286
      %7466 = vst [vmem:[%s7356] ss:$2 sm:$0xff] %v7289
      %7468 = vst [vmem:[%s7358] ss:$2 sm:$0xff] %v7292
      %7469 = vst [vmem:[%s7361] ss:$2 sm:$0xff] %v7295
      %7471 = vst [vmem:[%s7363] ss:$2 sm:$0xff] %v7298
      %v7472 = vld.sshfl [vmem:[#allocation1] sm:$0xff pattern:$0x75643120]
      %v7473 = vld.sshfl [vmem:[#allocation1 + $0x10] sm:$0xff pattern:$0x75643120]
      %v7474 = vld.sshfl [vmem:[#allocation1 + $0x20] sm:$0xff pattern:$0x75643120]
      %v7475 = vld.sshfl [vmem:[#allocation1 + $0x30] sm:$0xff pattern:$0x75643120]
      %7476 = vst [vmem:[#allocation1] ss:$2 sm:$0xff] %v7301
      %7477 = vst [vmem:[%s7349] ss:$2 sm:$0xff] %v7304
      %7479 = vst [vmem:[%s7351] ss:$2 sm:$0xff] %v7307
      %7480 = vst [vmem:[%s7354] ss:$2 sm:$0xff] %v7310
      %7482 = vst [vmem:[%s7356] ss:$2 sm:$0xff] %v7313
      %7483 = vst [vmem:[%s7358] ss:$2 sm:$0xff] %v7316
      %7484 = vst [vmem:[%s7361] ss:$2 sm:$0xff] %v7319
      %7486 = vst [vmem:[%s7363] ss:$2 sm:$0xff] %v7322
      %v7487 = vld.sshfl [vmem:[#allocation1] sm:$0xff pattern:$0x75643120]
      %v7488 = vld.sshfl [vmem:[#allocation1 + $0x10] sm:$0xff pattern:$0x75643120]
      %v7489 = vld.sshfl [vmem:[#allocation1 + $0x20] sm:$0xff pattern:$0x75643120]
      %v7490 = vld.sshfl [vmem:[#allocation1 + $0x30] sm:$0xff pattern:$0x75643120]
      %7491 = vst [vmem:[#allocation1] ss:$2 sm:$0xff] %v7325
      %7493 = vst [vmem:[%s7349] ss:$2 sm:$0xff] %v7328
      %7494 = vst [vmem:[%s7351] ss:$2 sm:$0xff] %v7331
      %7495 = vst [vmem:[%s7354] ss:$2 sm:$0xff] %v7334
      %7497 = vst [vmem:[%s7356] ss:$2 sm:$0xff] %v7337
      %7498 = vst [vmem:[%s7358] ss:$2 sm:$0xff] %v7340
      %7500 = vst [vmem:[%s7361] ss:$2 sm:$0xff] %v7343
      %7501 = vst [vmem:[%s7363] ss:$2 sm:$0xff] %v7346
      %v7502 = vld.sshfl [vmem:[#allocation1] sm:$0xff pattern:$0x75643120]
      %v7503 = vld.sshfl [vmem:[#allocation1 + $0x10] sm:$0xff pattern:$0x75643120]
      %v7504 = vld.sshfl [vmem:[#allocation1 + $0x20] sm:$0xff pattern:$0x75643120]
      %v7505 = vld.sshfl [vmem:[#allocation1 + $0x30] sm:$0xff pattern:$0x75643120]
      %7546 = vst [vmem:[#allocation4 + $0x4] sm:$0xf] %v7365
      %7547 = vst [vmem:[#allocation4 + $0x10] sm:$0xf] %v7366
      %7548 = vst [vmem:[#allocation4 + $0x1c] sm:$0xf] %v7367
      %7549 = vst [vmem:[#allocation4 + $0x28] sm:$0xf] %v7368
      %7550 = vst [vmem:[#allocation4 + $0x34] sm:$0xf] %v7380
      %7551 = vst [vmem:[#allocation4 + $0x40] sm:$0xf] %v7381
      %7552 = vst [vmem:[#allocation4 + $0x4c] sm:$0xf] %v7382
      %7553 = vst [vmem:[#allocation4 + $0x58] sm:$0xf] %v7383
      %7554 = vst [vmem:[#allocation4 + $0x64] sm:$0xf] %v7396
      %7555 = vst [vmem:[#allocation4 + $0x70] sm:$0xf] %v7397
      %7556 = vst [vmem:[#allocation4 + $0x7c] sm:$0xf] %v7398
      %7557 = vst [vmem:[#allocation4 + $0x88] sm:$0xf] %v7399
      %7558 = vst [vmem:[#allocation4 + $0x94] sm:$0xf] %v7411
      %7559 = vst [vmem:[#allocation4 + $0xa0] sm:$0xf] %v7412
      %7560 = vst [vmem:[#allocation4 + $0xac] sm:$0xf] %v7413
      %7561 = vst [vmem:[#allocation4 + $0xb8] sm:$0xf] %v7414
      %7562 = vst [vmem:[#allocation4 + $0xc4] sm:$0xf] %v7426
      %7563 = vst [vmem:[#allocation4 + $0xd0] sm:$0xf] %v7427
      %7564 = vst [vmem:[#allocation4 + $0xdc] sm:$0xf] %v7428
      %7565 = vst [vmem:[#allocation4 + $0xe8] sm:$0xf] %v7429
      %7566 = vst [vmem:[#allocation4 + $0xf4] sm:$0xf] %v7441
      %7567 = vst [vmem:[#allocation4 + $0x100] sm:$0xf] %v7442
      %7568 = vst [vmem:[#allocation4 + $0x10c] sm:$0xf] %v7443
      %7569 = vst [vmem:[#allocation4 + $0x118] sm:$0xf] %v7444
      %7570 = vst [vmem:[#allocation4 + $0x124] sm:$0xf] %v7456
      %7571 = vst [vmem:[#allocation4 + $0x130] sm:$0xf] %v7457
      %7572 = vst [vmem:[#allocation4 + $0x13c] sm:$0xf] %v7458
      %7573 = vst [vmem:[#allocation4 + $0x148] sm:$0xf] %v7459
      %7574 = vst [vmem:[#allocation4 + $0x154] sm:$0xf] %v7472
      %7575 = vst [vmem:[#allocation4 + $0x160] sm:$0xf] %v7473
      %7576 = vst [vmem:[#allocation4 + $0x16c] sm:$0xf] %v7474
      %7577 = vst [vmem:[#allocation4 + $0x178] sm:$0xf] %v7475
      %7578 = vst [vmem:[#allocation4 + $0x184] sm:$0xf] %v7487
      %7579 = vst [vmem:[#allocation4 + $0x190] sm:$0xf] %v7488
      %7580 = vst [vmem:[#allocation4 + $0x19c] sm:$0xf] %v7489
      %7581 = vst [vmem:[#allocation4 + $0x1a8] sm:$0xf] %v7490
      %7582 = vst [vmem:[#allocation4 + $0x1b4] sm:$0xf] %v7502
      %7583 = vst [vmem:[#allocation4 + $0x1c0] sm:$0xf] %v7503
      %7584 = vst [vmem:[#allocation4 + $0x1cc] sm:$0xf] %v7504
      %7585 = vst [vmem:[#allocation4 + $0x1d8] sm:$0xf] %v7505
      %s7586 = scalar_lea.vmem [#allocation3], 24
      %v7587 = vld [vmem:[%s7586] sm:$0xf]
      %v7588 = vld [vmem:[%s7586 + $0x4] sm:$0xf]
      %v7589 = vld [vmem:[%s7586 + $0x8] sm:$0x3]
      %v7590 = vld [vmem:[%s7586 + $0xc] sm:$0xf]
      %v7591 = vld [vmem:[%s7586 + $0x10] sm:$0xf]
      %v7592 = vld [vmem:[%s7586 + $0x14] sm:$0x3]
      %v7593 = vld [vmem:[%s7586 + $0x18] sm:$0xf]
      %v7594 = vld [vmem:[%s7586 + $0x1c] sm:$0xf]
      %v7595 = vld [vmem:[%s7586 + $0x20] sm:$0x3]
      %v7596 = vld [vmem:[%s7586 + $0x24] sm:$0xf]
      %v7597 = vld [vmem:[%s7586 + $0x28] sm:$0xf]
      %v7598 = vld [vmem:[%s7586 + $0x2c] sm:$0x3]
      %v7599 = vld [vmem:[%s7586 + $0x30] sm:$0xf]
      %v7600 = vld [vmem:[%s7586 + $0x34] sm:$0xf]
      %v7601 = vld [vmem:[%s7586 + $0x38] sm:$0x3]
      %v7602 = vld [vmem:[%s7586 + $0x3c] sm:$0xf]
      %v7603 = vld [vmem:[%s7586 + $0x40] sm:$0xf]
      %v7604 = vld [vmem:[%s7586 + $0x44] sm:$0x3]
      %v7605 = vld [vmem:[%s7586 + $0x48] sm:$0xf]
      %v7606 = vld [vmem:[%s7586 + $0x4c] sm:$0xf]
      %v7607 = vld [vmem:[%s7586 + $0x50] sm:$0x3]
      %v7608 = vld [vmem:[%s7586 + $0x54] sm:$0xf]
      %v7609 = vld [vmem:[%s7586 + $0x58] sm:$0xf]
      %v7610 = vld [vmem:[%s7586 + $0x5c] sm:$0x3]
      %v7611 = vld [vmem:[%s7586 + $0x60] sm:$0xf]
      %v7612 = vld [vmem:[%s7586 + $0x64] sm:$0xf]
      %v7613 = vld [vmem:[%s7586 + $0x68] sm:$0x3]
      %v7614 = vld [vmem:[%s7586 + $0x6c] sm:$0xf]
      %v7615 = vld [vmem:[%s7586 + $0x70] sm:$0xf]
      %v7616 = vld [vmem:[%s7586 + $0x74] sm:$0x3]
      %v7617 = vld [vmem:[%s7586 + $0x78] sm:$0xf]
      %v7618 = vld [vmem:[%s7586 + $0x7c] sm:$0xf]
      %v7619 = vld [vmem:[%s7586 + $0x80] sm:$0x3]
      %v7620 = vld [vmem:[%s7586 + $0x84] sm:$0xf]
      %v7621 = vld [vmem:[%s7586 + $0x88] sm:$0xf]
      %v7622 = vld [vmem:[%s7586 + $0x8c] sm:$0x3]
      %v7623 = vld [vmem:[%s7586 + $0x90] sm:$0xf]
      %v7624 = vld [vmem:[%s7586 + $0x94] sm:$0xf]
      %v7625 = vld [vmem:[%s7586 + $0x98] sm:$0x3]
      %v7626 = vld [vmem:[%s7586 + $0x9c] sm:$0xf]
      %v7627 = vld [vmem:[%s7586 + $0xa0] sm:$0xf]
      %v7628 = vld [vmem:[%s7586 + $0xa4] sm:$0x3]
      %v7629 = vld [vmem:[%s7586 + $0xa8] sm:$0xf]
      %v7630 = vld [vmem:[%s7586 + $0xac] sm:$0xf]
      %v7631 = vld [vmem:[%s7586 + $0xb0] sm:$0x3]
      %v7632 = vld [vmem:[%s7586 + $0xb4] sm:$0xf]
      %v7633 = vld [vmem:[%s7586 + $0xb8] sm:$0xf]
      %v7634 = vld [vmem:[%s7586 + $0xbc] sm:$0x3]
      %v7683 = vrot.slane %v7587, 2
      %v7684 = vrot.slane %v7588, 2
      %v7685 = vrot.slane %v7589, 2
      %v7686 = vrot.slane %v7590, 2
      %v7687 = vrot.slane %v7591, 2
      %v7688 = vrot.slane %v7592, 2
      %v7689 = vrot.slane %v7593, 2
      %v7690 = vrot.slane %v7594, 2
      %v7691 = vrot.slane %v7595, 2
      %v7692 = vrot.slane %v7596, 2
      %v7693 = vrot.slane %v7597, 2
      %v7694 = vrot.slane %v7598, 2
      %v7695 = vrot.slane %v7599, 2
      %v7696 = vrot.slane %v7600, 2
      %v7697 = vrot.slane %v7601, 2
      %v7698 = vrot.slane %v7602, 2
      %v7699 = vrot.slane %v7603, 2
      %v7700 = vrot.slane %v7604, 2
      %v7701 = vrot.slane %v7605, 2
      %v7702 = vrot.slane %v7606, 2
      %v7703 = vrot.slane %v7607, 2
      %v7704 = vrot.slane %v7608, 2
      %v7705 = vrot.slane %v7609, 2
      %v7706 = vrot.slane %v7610, 2
      %v7707 = vrot.slane %v7611, 2
      %v7708 = vrot.slane %v7612, 2
      %v7709 = vrot.slane %v7613, 2
      %v7710 = vrot.slane %v7614, 2
      %v7711 = vrot.slane %v7615, 2
      %v7712 = vrot.slane %v7616, 2
      %v7713 = vrot.slane %v7617, 2
      %v7714 = vrot.slane %v7618, 2
      %v7715 = vrot.slane %v7619, 2
      %v7716 = vrot.slane %v7620, 2
      %v7717 = vrot.slane %v7621, 2
      %v7718 = vrot.slane %v7622, 2
      %v7719 = vrot.slane %v7623, 2
      %v7720 = vrot.slane %v7624, 2
      %v7721 = vrot.slane %v7625, 2
      %v7722 = vrot.slane %v7626, 2
      %v7723 = vrot.slane %v7627, 2
      %v7724 = vrot.slane %v7628, 2
      %v7725 = vrot.slane %v7629, 2
      %v7726 = vrot.slane %v7630, 2
      %v7727 = vrot.slane %v7631, 2
      %v7728 = vrot.slane %v7632, 2
      %v7729 = vrot.slane %v7633, 2
      %v7730 = vrot.slane %v7634, 2
      %v7733 = vsel %vm582, %v7587, %v7683
      %v7734 = vsel %vm586, %v7587, %v7683
      %v7736 = vrot.slane %v7734, 2
      %v7739 = vsel %vm582, %v7588, %v7684
      %v7740 = vsel %vm586, %v7588, %v7684
      %v7742 = vrot.slane %v7740, 2
      %v7745 = vsel %vm582, %v7589, %v7685
      %v7748 = vsel %vm582, %v7590, %v7686
      %v7749 = vsel %vm586, %v7590, %v7686
      %v7751 = vrot.slane %v7749, 2
      %v7754 = vsel %vm582, %v7591, %v7687
      %v7755 = vsel %vm586, %v7591, %v7687
      %v7757 = vrot.slane %v7755, 2
      %v7760 = vsel %vm582, %v7592, %v7688
      %v7763 = vsel %vm582, %v7593, %v7689
      %v7764 = vsel %vm586, %v7593, %v7689
      %v7766 = vrot.slane %v7764, 2
      %v7769 = vsel %vm582, %v7594, %v7690
      %v7770 = vsel %vm586, %v7594, %v7690
      %v7772 = vrot.slane %v7770, 2
      %v7775 = vsel %vm582, %v7595, %v7691
      %v7778 = vsel %vm582, %v7596, %v7692
      %v7779 = vsel %vm586, %v7596, %v7692
      %v7781 = vrot.slane %v7779, 2
      %v7784 = vsel %vm582, %v7597, %v7693
      %v7785 = vsel %vm586, %v7597, %v7693
      %v7787 = vrot.slane %v7785, 2
      %v7790 = vsel %vm582, %v7598, %v7694
      %v7793 = vsel %vm582, %v7599, %v7695
      %v7794 = vsel %vm586, %v7599, %v7695
      %v7796 = vrot.slane %v7794, 2
      %v7799 = vsel %vm582, %v7600, %v7696
      %v7800 = vsel %vm586, %v7600, %v7696
      %v7802 = vrot.slane %v7800, 2
      %v7805 = vsel %vm582, %v7601, %v7697
      %v7808 = vsel %vm582, %v7602, %v7698
      %v7809 = vsel %vm586, %v7602, %v7698
      %v7811 = vrot.slane %v7809, 2
      %v7814 = vsel %vm582, %v7603, %v7699
      %v7815 = vsel %vm586, %v7603, %v7699
      %v7817 = vrot.slane %v7815, 2
      %v7820 = vsel %vm582, %v7604, %v7700
      %v7823 = vsel %vm582, %v7605, %v7701
      %v7824 = vsel %vm586, %v7605, %v7701
      %v7826 = vrot.slane %v7824, 2
      %v7829 = vsel %vm582, %v7606, %v7702
      %v7830 = vsel %vm586, %v7606, %v7702
      %v7832 = vrot.slane %v7830, 2
      %v7835 = vsel %vm582, %v7607, %v7703
      %v7838 = vsel %vm582, %v7608, %v7704
      %v7839 = vsel %vm586, %v7608, %v7704
      %v7841 = vrot.slane %v7839, 2
      %v7844 = vsel %vm582, %v7609, %v7705
      %v7845 = vsel %vm586, %v7609, %v7705
      %v7847 = vrot.slane %v7845, 2
      %v7850 = vsel %vm582, %v7610, %v7706
      %v7853 = vsel %vm582, %v7611, %v7707
      %v7854 = vsel %vm586, %v7611, %v7707
      %v7856 = vrot.slane %v7854, 2
      %v7859 = vsel %vm582, %v7612, %v7708
      %v7860 = vsel %vm586, %v7612, %v7708
      %v7862 = vrot.slane %v7860, 2
      %v7865 = vsel %vm582, %v7613, %v7709
      %v7868 = vsel %vm582, %v7614, %v7710
      %v7869 = vsel %vm586, %v7614, %v7710
      %v7871 = vrot.slane %v7869, 2
      %v7874 = vsel %vm582, %v7615, %v7711
      %v7875 = vsel %vm586, %v7615, %v7711
      %v7877 = vrot.slane %v7875, 2
      %v7880 = vsel %vm582, %v7616, %v7712
      %v7883 = vsel %vm582, %v7617, %v7713
      %v7884 = vsel %vm586, %v7617, %v7713
      %v7886 = vrot.slane %v7884, 2
      %v7889 = vsel %vm582, %v7618, %v7714
      %v7890 = vsel %vm586, %v7618, %v7714
      %v7892 = vrot.slane %v7890, 2
      %v7895 = vsel %vm582, %v7619, %v7715
      %v7898 = vsel %vm582, %v7620, %v7716
      %v7899 = vsel %vm586, %v7620, %v7716
      %v7901 = vrot.slane %v7899, 2
      %v7904 = vsel %vm582, %v7621, %v7717
      %v7905 = vsel %vm586, %v7621, %v7717
      %v7907 = vrot.slane %v7905, 2
      %v7910 = vsel %vm582, %v7622, %v7718
      %v7913 = vsel %vm582, %v7623, %v7719
      %v7914 = vsel %vm586, %v7623, %v7719
      %v7916 = vrot.slane %v7914, 2
      %v7919 = vsel %vm582, %v7624, %v7720
      %v7920 = vsel %vm586, %v7624, %v7720
      %v7922 = vrot.slane %v7920, 2
      %v7925 = vsel %vm582, %v7625, %v7721
      %v7928 = vsel %vm582, %v7626, %v7722
      %v7929 = vsel %vm586, %v7626, %v7722
      %v7931 = vrot.slane %v7929, 2
      %v7934 = vsel %vm582, %v7627, %v7723
      %v7935 = vsel %vm586, %v7627, %v7723
      %v7937 = vrot.slane %v7935, 2
      %v7940 = vsel %vm582, %v7628, %v7724
      %v7943 = vsel %vm582, %v7629, %v7725
      %v7944 = vsel %vm586, %v7629, %v7725
      %v7946 = vrot.slane %v7944, 2
      %v7949 = vsel %vm582, %v7630, %v7726
      %v7950 = vsel %vm586, %v7630, %v7726
      %v7952 = vrot.slane %v7950, 2
      %v7955 = vsel %vm582, %v7631, %v7727
      %v7958 = vsel %vm582, %v7632, %v7728
      %v7959 = vsel %vm586, %v7632, %v7728
      %v7961 = vrot.slane %v7959, 2
      %v7964 = vsel %vm582, %v7633, %v7729
      %v7965 = vsel %vm586, %v7633, %v7729
      %v7967 = vrot.slane %v7965, 2
      %v7970 = vsel %vm582, %v7634, %v7730
      %7971 = vst [vmem:[#allocation1] ss:$2 sm:$0xff] %v7733
      %s7973 = scalar_lea.vmem [#allocation1], 1
      %7974 = vst [vmem:[%s7973] ss:$2 sm:$0xff] %v7736
      %s7975 = scalar_lea.vmem [#allocation1], 16
      %7976 = vst [vmem:[%s7975] ss:$2 sm:$0xff] %v7739
      %s7978 = scalar_lea.vmem [#allocation1], 17
      %7979 = vst [vmem:[%s7978] ss:$2 sm:$0xff] %v7742
      %s7980 = scalar_lea.vmem [#allocation1], 32
      %7981 = vst [vmem:[%s7980] ss:$2 sm:$0xff] %v7745
      %s7982 = scalar_lea.vmem [#allocation1], 33
      %7983 = vst [vmem:[%s7982] ss:$2 sm:$0xff] %v7748
      %s7985 = scalar_lea.vmem [#allocation1], 48
      %7986 = vst [vmem:[%s7985] ss:$2 sm:$0xff] %v7751
      %s7987 = scalar_lea.vmem [#allocation1], 49
      %7988 = vst [vmem:[%s7987] ss:$2 sm:$0xff] %v7754
      %v7989 = vld.sshfl [vmem:[#allocation1] sm:$0xff pattern:$0x75643120]
      %v7990 = vld.sshfl [vmem:[#allocation1 + $0x10] sm:$0xff pattern:$0x75643120]
      %v7991 = vld.sshfl [vmem:[#allocation1 + $0x20] sm:$0xff pattern:$0x75643120]
      %v7992 = vld.sshfl [vmem:[#allocation1 + $0x30] sm:$0xff pattern:$0x75643120]
      %7994 = vst [vmem:[#allocation1] ss:$2 sm:$0xff] %v7757
      %7995 = vst [vmem:[%s7973] ss:$2 sm:$0xff] %v7760
      %7996 = vst [vmem:[%s7975] ss:$2 sm:$0xff] %v7763
      %7998 = vst [vmem:[%s7978] ss:$2 sm:$0xff] %v7766
      %7999 = vst [vmem:[%s7980] ss:$2 sm:$0xff] %v7769
      %8001 = vst [vmem:[%s7982] ss:$2 sm:$0xff] %v7772
      %8002 = vst [vmem:[%s7985] ss:$2 sm:$0xff] %v7775
      %8003 = vst [vmem:[%s7987] ss:$2 sm:$0xff] %v7778
      %v8004 = vld.sshfl [vmem:[#allocation1] sm:$0xff pattern:$0x75643120]
      %v8005 = vld.sshfl [vmem:[#allocation1 + $0x10] sm:$0xff pattern:$0x75643120]
      %v8006 = vld.sshfl [vmem:[#allocation1 + $0x20] sm:$0xff pattern:$0x75643120]
      %v8007 = vld.sshfl [vmem:[#allocation1 + $0x30] sm:$0xff pattern:$0x75643120]
      %8009 = vst [vmem:[#allocation1] ss:$2 sm:$0xff] %v7781
      %8010 = vst [vmem:[%s7973] ss:$2 sm:$0xff] %v7784
      %8012 = vst [vmem:[%s7975] ss:$2 sm:$0xff] %v7787
      %8013 = vst [vmem:[%s7978] ss:$2 sm:$0xff] %v7790
      %8014 = vst [vmem:[%s7980] ss:$2 sm:$0xff] %v7793
      %8016 = vst [vmem:[%s7982] ss:$2 sm:$0xff] %v7796
      %8017 = vst [vmem:[%s7985] ss:$2 sm:$0xff] %v7799
      %8019 = vst [vmem:[%s7987] ss:$2 sm:$0xff] %v7802
      %v8020 = vld.sshfl [vmem:[#allocation1] sm:$0xff pattern:$0x75643120]
      %v8021 = vld.sshfl [vmem:[#allocation1 + $0x10] sm:$0xff pattern:$0x75643120]
      %v8022 = vld.sshfl [vmem:[#allocation1 + $0x20] sm:$0xff pattern:$0x75643120]
      %v8023 = vld.sshfl [vmem:[#allocation1 + $0x30] sm:$0xff pattern:$0x75643120]
      %8024 = vst [vmem:[#allocation1] ss:$2 sm:$0xff] %v7805
      %8025 = vst [vmem:[%s7973] ss:$2 sm:$0xff] %v7808
      %8027 = vst [vmem:[%s7975] ss:$2 sm:$0xff] %v7811
      %8028 = vst [vmem:[%s7978] ss:$2 sm:$0xff] %v7814
      %8030 = vst [vmem:[%s7980] ss:$2 sm:$0xff] %v7817
      %8031 = vst [vmem:[%s7982] ss:$2 sm:$0xff] %v7820
      %8032 = vst [vmem:[%s7985] ss:$2 sm:$0xff] %v7823
      %8034 = vst [vmem:[%s7987] ss:$2 sm:$0xff] %v7826
      %v8035 = vld.sshfl [vmem:[#allocation1] sm:$0xff pattern:$0x75643120]
      %v8036 = vld.sshfl [vmem:[#allocation1 + $0x10] sm:$0xff pattern:$0x75643120]
      %v8037 = vld.sshfl [vmem:[#allocation1 + $0x20] sm:$0xff pattern:$0x75643120]
      %v8038 = vld.sshfl [vmem:[#allocation1 + $0x30] sm:$0xff pattern:$0x75643120]
      %8039 = vst [vmem:[#allocation1] ss:$2 sm:$0xff] %v7829
      %8041 = vst [vmem:[%s7973] ss:$2 sm:$0xff] %v7832
      %8042 = vst [vmem:[%s7975] ss:$2 sm:$0xff] %v7835
      %8043 = vst [vmem:[%s7978] ss:$2 sm:$0xff] %v7838
      %8045 = vst [vmem:[%s7980] ss:$2 sm:$0xff] %v7841
      %8046 = vst [vmem:[%s7982] ss:$2 sm:$0xff] %v7844
      %8048 = vst [vmem:[%s7985] ss:$2 sm:$0xff] %v7847
      %8049 = vst [vmem:[%s7987] ss:$2 sm:$0xff] %v7850
      %v8050 = vld.sshfl [vmem:[#allocation1] sm:$0xff pattern:$0x75643120]
      %v8051 = vld.sshfl [vmem:[#allocation1 + $0x10] sm:$0xff pattern:$0x75643120]
      %v8052 = vld.sshfl [vmem:[#allocation1 + $0x20] sm:$0xff pattern:$0x75643120]
      %v8053 = vld.sshfl [vmem:[#allocation1 + $0x30] sm:$0xff pattern:$0x75643120]
      %8054 = vst [vmem:[#allocation1] ss:$2 sm:$0xff] %v7853
      %8056 = vst [vmem:[%s7973] ss:$2 sm:$0xff] %v7856
      %8057 = vst [vmem:[%s7975] ss:$2 sm:$0xff] %v7859
      %8059 = vst [vmem:[%s7978] ss:$2 sm:$0xff] %v7862
      %8060 = vst [vmem:[%s7980] ss:$2 sm:$0xff] %v7865
      %8061 = vst [vmem:[%s7982] ss:$2 sm:$0xff] %v7868
      %8063 = vst [vmem:[%s7985] ss:$2 sm:$0xff] %v7871
      %8064 = vst [vmem:[%s7987] ss:$2 sm:$0xff] %v7874
      %v8065 = vld.sshfl [vmem:[#allocation1] sm:$0xff pattern:$0x75643120]
      %v8066 = vld.sshfl [vmem:[#allocation1 + $0x10] sm:$0xff pattern:$0x75643120]
      %v8067 = vld.sshfl [vmem:[#allocation1 + $0x20] sm:$0xff pattern:$0x75643120]
      %v8068 = vld.sshfl [vmem:[#allocation1 + $0x30] sm:$0xff pattern:$0x75643120]
      %8070 = vst [vmem:[#allocation1] ss:$2 sm:$0xff] %v7877
      %8071 = vst [vmem:[%s7973] ss:$2 sm:$0xff] %v7880
      %8072 = vst [vmem:[%s7975] ss:$2 sm:$0xff] %v7883
      %8074 = vst [vmem:[%s7978] ss:$2 sm:$0xff] %v7886
      %8075 = vst [vmem:[%s7980] ss:$2 sm:$0xff] %v7889
      %8077 = vst [vmem:[%s7982] ss:$2 sm:$0xff] %v7892
      %8078 = vst [vmem:[%s7985] ss:$2 sm:$0xff] %v7895
      %8079 = vst [vmem:[%s7987] ss:$2 sm:$0xff] %v7898
      %v8080 = vld.sshfl [vmem:[#allocation1] sm:$0xff pattern:$0x75643120]
      %v8081 = vld.sshfl [vmem:[#allocation1 + $0x10] sm:$0xff pattern:$0x75643120]
      %v8082 = vld.sshfl [vmem:[#allocation1 + $0x20] sm:$0xff pattern:$0x75643120]
      %v8083 = vld.sshfl [vmem:[#allocation1 + $0x30] sm:$0xff pattern:$0x75643120]
      %8085 = vst [vmem:[#allocation1] ss:$2 sm:$0xff] %v7901
      %8086 = vst [vmem:[%s7973] ss:$2 sm:$0xff] %v7904
      %8088 = vst [vmem:[%s7975] ss:$2 sm:$0xff] %v7907
      %8089 = vst [vmem:[%s7978] ss:$2 sm:$0xff] %v7910
      %8090 = vst [vmem:[%s7980] ss:$2 sm:$0xff] %v7913
      %8092 = vst [vmem:[%s7982] ss:$2 sm:$0xff] %v7916
      %8093 = vst [vmem:[%s7985] ss:$2 sm:$0xff] %v7919
      %8095 = vst [vmem:[%s7987] ss:$2 sm:$0xff] %v7922
      %v8096 = vld.sshfl [vmem:[#allocation1] sm:$0xff pattern:$0x75643120]
      %v8097 = vld.sshfl [vmem:[#allocation1 + $0x10] sm:$0xff pattern:$0x75643120]
      %v8098 = vld.sshfl [vmem:[#allocation1 + $0x20] sm:$0xff pattern:$0x75643120]
      %v8099 = vld.sshfl [vmem:[#allocation1 + $0x30] sm:$0xff pattern:$0x75643120]
      %8100 = vst [vmem:[#allocation1] ss:$2 sm:$0xff] %v7925
      %8101 = vst [vmem:[%s7973] ss:$2 sm:$0xff] %v7928
      %8103 = vst [vmem:[%s7975] ss:$2 sm:$0xff] %v7931
      %8104 = vst [vmem:[%s7978] ss:$2 sm:$0xff] %v7934
      %8106 = vst [vmem:[%s7980] ss:$2 sm:$0xff] %v7937
      %8107 = vst [vmem:[%s7982] ss:$2 sm:$0xff] %v7940
      %8108 = vst [vmem:[%s7985] ss:$2 sm:$0xff] %v7943
      %8110 = vst [vmem:[%s7987] ss:$2 sm:$0xff] %v7946
      %v8111 = vld.sshfl [vmem:[#allocation1] sm:$0xff pattern:$0x75643120]
      %v8112 = vld.sshfl [vmem:[#allocation1 + $0x10] sm:$0xff pattern:$0x75643120]
      %v8113 = vld.sshfl [vmem:[#allocation1 + $0x20] sm:$0xff pattern:$0x75643120]
      %v8114 = vld.sshfl [vmem:[#allocation1 + $0x30] sm:$0xff pattern:$0x75643120]
      %8115 = vst [vmem:[#allocation1] ss:$2 sm:$0xff] %v7949
      %8117 = vst [vmem:[%s7973] ss:$2 sm:$0xff] %v7952
      %8118 = vst [vmem:[%s7975] ss:$2 sm:$0xff] %v7955
      %8119 = vst [vmem:[%s7978] ss:$2 sm:$0xff] %v7958
      %8121 = vst [vmem:[%s7980] ss:$2 sm:$0xff] %v7961
      %8122 = vst [vmem:[%s7982] ss:$2 sm:$0xff] %v7964
      %8124 = vst [vmem:[%s7985] ss:$2 sm:$0xff] %v7967
      %8125 = vst [vmem:[%s7987] ss:$2 sm:$0xff] %v7970
      %v8126 = vld.sshfl [vmem:[#allocation1] sm:$0xff pattern:$0x75643120]
      %v8127 = vld.sshfl [vmem:[#allocation1 + $0x10] sm:$0xff pattern:$0x75643120]
      %v8128 = vld.sshfl [vmem:[#allocation1 + $0x20] sm:$0xff pattern:$0x75643120]
      %v8129 = vld.sshfl [vmem:[#allocation1 + $0x30] sm:$0xff pattern:$0x75643120]
      %8170 = vst [vmem:[#allocation4 + $0x8] sm:$0xf] %v7989
      %8171 = vst [vmem:[#allocation4 + $0x14] sm:$0xf] %v7990
      %8172 = vst [vmem:[#allocation4 + $0x20] sm:$0xf] %v7991
      %8173 = vst [vmem:[#allocation4 + $0x2c] sm:$0xf] %v7992
      %8174 = vst [vmem:[#allocation4 + $0x38] sm:$0xf] %v8004
      %8175 = vst [vmem:[#allocation4 + $0x44] sm:$0xf] %v8005
      %8176 = vst [vmem:[#allocation4 + $0x50] sm:$0xf] %v8006
      %8177 = vst [vmem:[#allocation4 + $0x5c] sm:$0xf] %v8007
      %8178 = vst [vmem:[#allocation4 + $0x68] sm:$0xf] %v8020
      %8179 = vst [vmem:[#allocation4 + $0x74] sm:$0xf] %v8021
      %8180 = vst [vmem:[#allocation4 + $0x80] sm:$0xf] %v8022
      %8181 = vst [vmem:[#allocation4 + $0x8c] sm:$0xf] %v8023
      %8182 = vst [vmem:[#allocation4 + $0x98] sm:$0xf] %v8035
      %8183 = vst [vmem:[#allocation4 + $0xa4] sm:$0xf] %v8036
      %8184 = vst [vmem:[#allocation4 + $0xb0] sm:$0xf] %v8037
      %8185 = vst [vmem:[#allocation4 + $0xbc] sm:$0xf] %v8038
      %8186 = vst [vmem:[#allocation4 + $0xc8] sm:$0xf] %v8050
      %8187 = vst [vmem:[#allocation4 + $0xd4] sm:$0xf] %v8051
      %8188 = vst [vmem:[#allocation4 + $0xe0] sm:$0xf] %v8052
      %8189 = vst [vmem:[#allocation4 + $0xec] sm:$0xf] %v8053
      %8190 = vst [vmem:[#allocation4 + $0xf8] sm:$0xf] %v8065
      %8191 = vst [vmem:[#allocation4 + $0x104] sm:$0xf] %v8066
      %8192 = vst [vmem:[#allocation4 + $0x110] sm:$0xf] %v8067
      %8193 = vst [vmem:[#allocation4 + $0x11c] sm:$0xf] %v8068
      %8194 = vst [vmem:[#allocation4 + $0x128] sm:$0xf] %v8080
      %8195 = vst [vmem:[#allocation4 + $0x134] sm:$0xf] %v8081
      %8196 = vst [vmem:[#allocation4 + $0x140] sm:$0xf] %v8082
      %8197 = vst [vmem:[#allocation4 + $0x14c] sm:$0xf] %v8083
      %8198 = vst [vmem:[#allocation4 + $0x158] sm:$0xf] %v8096
      %8199 = vst [vmem:[#allocation4 + $0x164] sm:$0xf] %v8097
      %8200 = vst [vmem:[#allocation4 + $0x170] sm:$0xf] %v8098
      %8201 = vst [vmem:[#allocation4 + $0x17c] sm:$0xf] %v8099
      %8202 = vst [vmem:[#allocation4 + $0x188] sm:$0xf] %v8111
      %8203 = vst [vmem:[#allocation4 + $0x194] sm:$0xf] %v8112
      %8204 = vst [vmem:[#allocation4 + $0x1a0] sm:$0xf] %v8113
      %8205 = vst [vmem:[#allocation4 + $0x1ac] sm:$0xf] %v8114
      %8206 = vst [vmem:[#allocation4 + $0x1b8] sm:$0xf] %v8126
      %8207 = vst [vmem:[#allocation4 + $0x1c4] sm:$0xf] %v8127
      %8208 = vst [vmem:[#allocation4 + $0x1d0] sm:$0xf] %v8128
      %8209 = vst [vmem:[#allocation4 + $0x1dc] sm:$0xf] %v8129
      %v8210 = vld [vmem:[#allocation4] sm:$0xff]
      %v8211 = vld [vmem:[#allocation4 + $0x8] sm:$0xf]
      %v8212 = vld [vmem:[#allocation4 + $0xc] sm:$0xff]
      %v8213 = vld [vmem:[#allocation4 + $0x14] sm:$0xf]
      %v8214 = vld [vmem:[#allocation4 + $0x18] sm:$0xff]
      %v8215 = vld [vmem:[#allocation4 + $0x20] sm:$0xf]
      %v8216 = vld [vmem:[#allocation4 + $0x24] sm:$0xff]
      %v8217 = vld [vmem:[#allocation4 + $0x2c] sm:$0xf]
      %v8218 = vld [vmem:[#allocation4 + $0x30] sm:$0xff]
      %v8219 = vld [vmem:[#allocation4 + $0x38] sm:$0xf]
      %v8220 = vld [vmem:[#allocation4 + $0x3c] sm:$0xff]
      %v8221 = vld [vmem:[#allocation4 + $0x44] sm:$0xf]
      %v8222 = vld [vmem:[#allocation4 + $0x48] sm:$0xff]
      %v8223 = vld [vmem:[#allocation4 + $0x50] sm:$0xf]
      %v8224 = vld [vmem:[#allocation4 + $0x54] sm:$0xff]
      %v8225 = vld [vmem:[#allocation4 + $0x5c] sm:$0xf]
      %v8226 = vld [vmem:[#allocation4 + $0x60] sm:$0xff]
      %v8227 = vld [vmem:[#allocation4 + $0x68] sm:$0xf]
      %v8228 = vld [vmem:[#allocation4 + $0x6c] sm:$0xff]
      %v8229 = vld [vmem:[#allocation4 + $0x74] sm:$0xf]
      %v8230 = vld [vmem:[#allocation4 + $0x78] sm:$0xff]
      %v8231 = vld [vmem:[#allocation4 + $0x80] sm:$0xf]
      %v8232 = vld [vmem:[#allocation4 + $0x84] sm:$0xff]
      %v8233 = vld [vmem:[#allocation4 + $0x8c] sm:$0xf]
      %v8234 = vld [vmem:[#allocation4 + $0x90] sm:$0xff]
      %v8235 = vld [vmem:[#allocation4 + $0x98] sm:$0xf]
      %v8236 = vld [vmem:[#allocation4 + $0x9c] sm:$0xff]
      %v8237 = vld [vmem:[#allocation4 + $0xa4] sm:$0xf]
      %v8238 = vld [vmem:[#allocation4 + $0xa8] sm:$0xff]
      %v8239 = vld [vmem:[#allocation4 + $0xb0] sm:$0xf]
      %v8240 = vld [vmem:[#allocation4 + $0xb4] sm:$0xff]
      %v8241 = vld [vmem:[#allocation4 + $0xbc] sm:$0xf]
      %v8242 = vld [vmem:[#allocation4 + $0xc0] sm:$0xff]
      %v8243 = vld [vmem:[#allocation4 + $0xc8] sm:$0xf]
      %v8244 = vld [vmem:[#allocation4 + $0xcc] sm:$0xff]
      %v8245 = vld [vmem:[#allocation4 + $0xd4] sm:$0xf]
      %v8246 = vld [vmem:[#allocation4 + $0xd8] sm:$0xff]
      %v8247 = vld [vmem:[#allocation4 + $0xe0] sm:$0xf]
      %v8248 = vld [vmem:[#allocation4 + $0xe4] sm:$0xff]
      %v8249 = vld [vmem:[#allocation4 + $0xec] sm:$0xf]
      %v8250 = vld [vmem:[#allocation4 + $0xf0] sm:$0xff]
      %v8251 = vld [vmem:[#allocation4 + $0xf8] sm:$0xf]
      %v8252 = vld [vmem:[#allocation4 + $0xfc] sm:$0xff]
      %v8253 = vld [vmem:[#allocation4 + $0x104] sm:$0xf]
      %v8254 = vld [vmem:[#allocation4 + $0x108] sm:$0xff]
      %v8255 = vld [vmem:[#allocation4 + $0x110] sm:$0xf]
      %v8256 = vld [vmem:[#allocation4 + $0x114] sm:$0xff]
      %v8257 = vld [vmem:[#allocation4 + $0x11c] sm:$0xf]
      %v8258 = vld [vmem:[#allocation4 + $0x120] sm:$0xff]
      %v8259 = vld [vmem:[#allocation4 + $0x128] sm:$0xf]
      %v8260 = vld [vmem:[#allocation4 + $0x12c] sm:$0xff]
      %v8261 = vld [vmem:[#allocation4 + $0x134] sm:$0xf]
      %v8262 = vld [vmem:[#allocation4 + $0x138] sm:$0xff]
      %v8263 = vld [vmem:[#allocation4 + $0x140] sm:$0xf]
      %v8264 = vld [vmem:[#allocation4 + $0x144] sm:$0xff]
      %v8265 = vld [vmem:[#allocation4 + $0x14c] sm:$0xf]
      %v8266 = vld [vmem:[#allocation4 + $0x150] sm:$0xff]
      %v8267 = vld [vmem:[#allocation4 + $0x158] sm:$0xf]
      %v8268 = vld [vmem:[#allocation4 + $0x15c] sm:$0xff]
      %v8269 = vld [vmem:[#allocation4 + $0x164] sm:$0xf]
      %v8270 = vld [vmem:[#allocation4 + $0x168] sm:$0xff]
      %v8271 = vld [vmem:[#allocation4 + $0x170] sm:$0xf]
      %v8272 = vld [vmem:[#allocation4 + $0x174] sm:$0xff]
      %v8273 = vld [vmem:[#allocation4 + $0x17c] sm:$0xf]
      %v8274 = vld [vmem:[#allocation4 + $0x180] sm:$0xff]
      %v8275 = vld [vmem:[#allocation4 + $0x188] sm:$0xf]
      %v8276 = vld [vmem:[#allocation4 + $0x18c] sm:$0xff]
      %v8277 = vld [vmem:[#allocation4 + $0x194] sm:$0xf]
      %v8278 = vld [vmem:[#allocation4 + $0x198] sm:$0xff]
      %v8279 = vld [vmem:[#allocation4 + $0x1a0] sm:$0xf]
      %v8280 = vld [vmem:[#allocation4 + $0x1a4] sm:$0xff]
      %v8281 = vld [vmem:[#allocation4 + $0x1ac] sm:$0xf]
      %v8282 = vld [vmem:[#allocation4 + $0x1b0] sm:$0xff]
      %v8283 = vld [vmem:[#allocation4 + $0x1b8] sm:$0xf]
      %v8284 = vld [vmem:[#allocation4 + $0x1bc] sm:$0xff]
      %v8285 = vld [vmem:[#allocation4 + $0x1c4] sm:$0xf]
      %v8286 = vld [vmem:[#allocation4 + $0x1c8] sm:$0xff]
      %v8287 = vld [vmem:[#allocation4 + $0x1d0] sm:$0xf]
      %v8288 = vld [vmem:[#allocation4 + $0x1d4] sm:$0xff]
      %v8289 = vld [vmem:[#allocation4 + $0x1dc] sm:$0xf]
      %s8290 = smul.addr %s2487, 4
      %s8291 = scalar_lea.vmem %s3, %s8290
      %v8292 = vld [vmem:[%s8291] sm:$0xf]
      %v8293 = vld [vmem:[%s8291 + $0x4] sm:$0xf]
      %v8294 = vld [vmem:[%s8291 + $0x8] sm:$0xf]
      %v8295 = vld [vmem:[%s8291 + $0xc] sm:$0xf]
      %v8296 = vld [vmem:[%s8291 + $0x10] sm:$0xf]
      %v8297 = vld [vmem:[%s8291 + $0x14] sm:$0xf]
      %v8298 = vld [vmem:[%s8291 + $0x18] sm:$0xf]
      %v8299 = vld [vmem:[%s8291 + $0x1c] sm:$0xf]
      %v8300 = vld [vmem:[%s8291 + $0x20] sm:$0xf]
      %v8301 = vld [vmem:[%s8291 + $0x24] sm:$0xf]
      %v8302 = vld [vmem:[%s8291 + $0x28] sm:$0xf]
      %v8303 = vld [vmem:[%s8291 + $0x2c] sm:$0xf]
      %v8304 = vld [vmem:[%s8291 + $0x30] sm:$0xf]
      %v8305 = vld [vmem:[%s8291 + $0x34] sm:$0xf]
      %v8306 = vld [vmem:[%s8291 + $0x38] sm:$0xf]
      %v8307 = vld [vmem:[%s8291 + $0x3c] sm:$0xf]
      %v8308 = vld [vmem:[%s8291 + $0x40] sm:$0xf]
      %v8309 = vld [vmem:[%s8291 + $0x44] sm:$0xf]
      %v8310 = vld [vmem:[%s8291 + $0x48] sm:$0xf]
      %v8311 = vld [vmem:[%s8291 + $0x4c] sm:$0xf]
      %v8312 = vld [vmem:[%s8291 + $0x50] sm:$0xf]
      %v8313 = vld [vmem:[%s8291 + $0x54] sm:$0xf]
      %v8314 = vld [vmem:[%s8291 + $0x58] sm:$0xf]
      %v8315 = vld [vmem:[%s8291 + $0x5c] sm:$0xf]
      %v8316 = vld [vmem:[%s8291 + $0x60] sm:$0xf]
      %v8317 = vld [vmem:[%s8291 + $0x64] sm:$0xf]
      %v8318 = vld [vmem:[%s8291 + $0x68] sm:$0xf]
      %v8319 = vld [vmem:[%s8291 + $0x6c] sm:$0xf]
      %v8320 = vld [vmem:[%s8291 + $0x70] sm:$0xf]
      %v8321 = vld [vmem:[%s8291 + $0x74] sm:$0xf]
      %v8322 = vld [vmem:[%s8291 + $0x78] sm:$0xf]
      %v8323 = vld [vmem:[%s8291 + $0x7c] sm:$0xf]
      %v8324 = vld [vmem:[%s8291 + $0x80] sm:$0xf]
      %v8325 = vld [vmem:[%s8291 + $0x84] sm:$0xf]
      %v8326 = vld [vmem:[%s8291 + $0x88] sm:$0xf]
      %v8327 = vld [vmem:[%s8291 + $0x8c] sm:$0xf]
      %v8328 = vld [vmem:[%s8291 + $0x90] sm:$0xf]
      %v8329 = vld [vmem:[%s8291 + $0x94] sm:$0xf]
      %v8330 = vld [vmem:[%s8291 + $0x98] sm:$0xf]
      %v8331 = vld [vmem:[%s8291 + $0x9c] sm:$0xf]
      %v8332 = vld [vmem:[%s8291 + $0xa0] sm:$0xf]
      %v8333 = vld [vmem:[%s8291 + $0xa4] sm:$0xf]
      %v8334 = vld [vmem:[%s8291 + $0xa8] sm:$0xf]
      %v8335 = vld [vmem:[%s8291 + $0xac] sm:$0xf]
      %v8336 = vld [vmem:[%s8291 + $0xb0] sm:$0xf]
      %v8337 = vld [vmem:[%s8291 + $0xb4] sm:$0xf]
      %v8338 = vld [vmem:[%s8291 + $0xb8] sm:$0xf]
      %v8339 = vld [vmem:[%s8291 + $0xbc] sm:$0xf]
      %v8340 = vld [vmem:[#allocation4] sm:$0xff]
      %v8341 = vld [vmem:[#allocation4 + $0x8] sm:$0xf]
      %v8342 = vld [vmem:[#allocation4 + $0xc] sm:$0xff]
      %v8343 = vld [vmem:[#allocation4 + $0x14] sm:$0xf]
      %v8344 = vld [vmem:[#allocation4 + $0x18] sm:$0xff]
      %v8345 = vld [vmem:[#allocation4 + $0x20] sm:$0xf]
      %v8346 = vld [vmem:[#allocation4 + $0x24] sm:$0xff]
      %v8347 = vld [vmem:[#allocation4 + $0x2c] sm:$0xf]
      %v8348 = vld [vmem:[#allocation4 + $0x30] sm:$0xff]
      %v8349 = vld [vmem:[#allocation4 + $0x38] sm:$0xf]
      %v8350 = vld [vmem:[#allocation4 + $0x3c] sm:$0xff]
      %v8351 = vld [vmem:[#allocation4 + $0x44] sm:$0xf]
      %v8352 = vld [vmem:[#allocation4 + $0x48] sm:$0xff]
      %v8353 = vld [vmem:[#allocation4 + $0x50] sm:$0xf]
      %v8354 = vld [vmem:[#allocation4 + $0x54] sm:$0xff]
      %v8355 = vld [vmem:[#allocation4 + $0x5c] sm:$0xf]
      %v8356 = vld [vmem:[#allocation4 + $0x60] sm:$0xff]
      %v8357 = vld [vmem:[#allocation4 + $0x68] sm:$0xf]
      %v8358 = vld [vmem:[#allocation4 + $0x6c] sm:$0xff]
      %v8359 = vld [vmem:[#allocation4 + $0x74] sm:$0xf]
      %v8360 = vld [vmem:[#allocation4 + $0x78] sm:$0xff]
      %v8361 = vld [vmem:[#allocation4 + $0x80] sm:$0xf]
      %v8362 = vld [vmem:[#allocation4 + $0x84] sm:$0xff]
      %v8363 = vld [vmem:[#allocation4 + $0x8c] sm:$0xf]
      %v8364 = vld [vmem:[#allocation4 + $0x90] sm:$0xff]
      %v8365 = vld [vmem:[#allocation4 + $0x98] sm:$0xf]
      %v8366 = vld [vmem:[#allocation4 + $0x9c] sm:$0xff]
      %v8367 = vld [vmem:[#allocation4 + $0xa4] sm:$0xf]
      %v8368 = vld [vmem:[#allocation4 + $0xa8] sm:$0xff]
      %v8369 = vld [vmem:[#allocation4 + $0xb0] sm:$0xf]
      %v8370 = vld [vmem:[#allocation4 + $0xb4] sm:$0xff]
      %v8371 = vld [vmem:[#allocation4 + $0xbc] sm:$0xf]
      %v8372 = vld [vmem:[#allocation4 + $0xc0] sm:$0xff]
      %v8373 = vld [vmem:[#allocation4 + $0xc8] sm:$0xf]
      %v8374 = vld [vmem:[#allocation4 + $0xcc] sm:$0xff]
      %v8375 = vld [vmem:[#allocation4 + $0xd4] sm:$0xf]
      %v8376 = vld [vmem:[#allocation4 + $0xd8] sm:$0xff]
      %v8377 = vld [vmem:[#allocation4 + $0xe0] sm:$0xf]
      %v8378 = vld [vmem:[#allocation4 + $0xe4] sm:$0xff]
      %v8379 = vld [vmem:[#allocation4 + $0xec] sm:$0xf]
      %v8380 = vld [vmem:[#allocation4 + $0xf0] sm:$0xff]
      %v8381 = vld [vmem:[#allocation4 + $0xf8] sm:$0xf]
      %v8382 = vld [vmem:[#allocation4 + $0xfc] sm:$0xff]
      %v8383 = vld [vmem:[#allocation4 + $0x104] sm:$0xf]
      %v8384 = vld [vmem:[#allocation4 + $0x108] sm:$0xff]
      %v8385 = vld [vmem:[#allocation4 + $0x110] sm:$0xf]
      %v8386 = vld [vmem:[#allocation4 + $0x114] sm:$0xff]
      %v8387 = vld [vmem:[#allocation4 + $0x11c] sm:$0xf]
      %v8388 = vld [vmem:[#allocation4 + $0x120] sm:$0xff]
      %v8389 = vld [vmem:[#allocation4 + $0x128] sm:$0xf]
      %v8390 = vld [vmem:[#allocation4 + $0x12c] sm:$0xff]
      %v8391 = vld [vmem:[#allocation4 + $0x134] sm:$0xf]
      %v8392 = vld [vmem:[#allocation4 + $0x138] sm:$0xff]
      %v8393 = vld [vmem:[#allocation4 + $0x140] sm:$0xf]
      %v8394 = vld [vmem:[#allocation4 + $0x144] sm:$0xff]
      %v8395 = vld [vmem:[#allocation4 + $0x14c] sm:$0xf]
      %v8396 = vld [vmem:[#allocation4 + $0x150] sm:$0xff]
      %v8397 = vld [vmem:[#allocation4 + $0x158] sm:$0xf]
      %v8398 = vld [vmem:[#allocation4 + $0x15c] sm:$0xff]
      %v8399 = vld [vmem:[#allocation4 + $0x164] sm:$0xf]
      %v8400 = vld [vmem:[#allocation4 + $0x168] sm:$0xff]
      %v8401 = vld [vmem:[#allocation4 + $0x170] sm:$0xf]
      %v8402 = vld [vmem:[#allocation4 + $0x174] sm:$0xff]
      %v8403 = vld [vmem:[#allocation4 + $0x17c] sm:$0xf]
      %v8404 = vld [vmem:[#allocation4 + $0x180] sm:$0xff]
      %v8405 = vld [vmem:[#allocation4 + $0x188] sm:$0xf]
      %v8406 = vld [vmem:[#allocation4 + $0x18c] sm:$0xff]
      %v8407 = vld [vmem:[#allocation4 + $0x194] sm:$0xf]
      %v8408 = vld [vmem:[#allocation4 + $0x198] sm:$0xff]
      %v8409 = vld [vmem:[#allocation4 + $0x1a0] sm:$0xf]
      %v8410 = vld [vmem:[#allocation4 + $0x1a4] sm:$0xff]
      %v8411 = vld [vmem:[#allocation4 + $0x1ac] sm:$0xf]
      %v8412 = vld [vmem:[#allocation4 + $0x1b0] sm:$0xff]
      %v8413 = vld [vmem:[#allocation4 + $0x1b8] sm:$0xf]
      %v8414 = vld [vmem:[#allocation4 + $0x1bc] sm:$0xff]
      %v8415 = vld [vmem:[#allocation4 + $0x1c4] sm:$0xf]
      %v8416 = vld [vmem:[#allocation4 + $0x1c8] sm:$0xff]
      %v8417 = vld [vmem:[#allocation4 + $0x1d0] sm:$0xf]
      %v8418 = vld [vmem:[#allocation4 + $0x1d4] sm:$0xff]
      %v8419 = vld [vmem:[#allocation4 + $0x1dc] sm:$0xf]
      %v8420 = vld [vmem:[#allocation4 + $0x1e0] sm:$0x11]
      %v8421 = vld [vmem:[#allocation4 + $0x1e8] sm:$0x1]
      %s8422 = smul.addr %s2620, 4
      %s8423 = scalar_lea.vmem %s3, %s8422
      %v8424 = vld [vmem:[%s8423] sm:$0xf]
      %v8425 = vld [vmem:[%s8423 + $0x4] sm:$0xf]
      %v8426 = vld [vmem:[%s8423 + $0x8] sm:$0xf]
      %v8427 = vld [vmem:[%s8423 + $0xc] sm:$0xf]
      %v8428 = vld [vmem:[%s8423 + $0x10] sm:$0xf]
      %v8429 = vld [vmem:[%s8423 + $0x14] sm:$0xf]
      %v8430 = vld [vmem:[%s8423 + $0x18] sm:$0xf]
      %v8431 = vld [vmem:[%s8423 + $0x1c] sm:$0xf]
      %v8432 = vld [vmem:[%s8423 + $0x20] sm:$0xf]
      %v8433 = vld [vmem:[%s8423 + $0x24] sm:$0xf]
      %v8434 = vld [vmem:[%s8423 + $0x28] sm:$0xf]
      %v8435 = vld [vmem:[%s8423 + $0x2c] sm:$0xf]
      %v8436 = vld [vmem:[%s8423 + $0x30] sm:$0xf]
      %v8437 = vld [vmem:[%s8423 + $0x34] sm:$0xf]
      %v8438 = vld [vmem:[%s8423 + $0x38] sm:$0xf]
      %v8439 = vld [vmem:[%s8423 + $0x3c] sm:$0xf]
      %v8440 = vld [vmem:[%s8423 + $0x40] sm:$0xf]
      %v8441 = vld [vmem:[%s8423 + $0x44] sm:$0xf]
      %v8442 = vld [vmem:[%s8423 + $0x48] sm:$0xf]
      %v8443 = vld [vmem:[%s8423 + $0x4c] sm:$0xf]
      %v8444 = vld [vmem:[%s8423 + $0x50] sm:$0xf]
      %v8445 = vld [vmem:[%s8423 + $0x54] sm:$0xf]
      %v8446 = vld [vmem:[%s8423 + $0x58] sm:$0xf]
      %v8447 = vld [vmem:[%s8423 + $0x5c] sm:$0xf]
      %v8448 = vld [vmem:[%s8423 + $0x60] sm:$0xf]
      %v8449 = vld [vmem:[%s8423 + $0x64] sm:$0xf]
      %v8450 = vld [vmem:[%s8423 + $0x68] sm:$0xf]
      %v8451 = vld [vmem:[%s8423 + $0x6c] sm:$0xf]
      %v8452 = vld [vmem:[%s8423 + $0x70] sm:$0xf]
      %v8453 = vld [vmem:[%s8423 + $0x74] sm:$0xf]
      %v8454 = vld [vmem:[%s8423 + $0x78] sm:$0xf]
      %v8455 = vld [vmem:[%s8423 + $0x7c] sm:$0xf]
      %v8456 = vld [vmem:[%s8423 + $0x80] sm:$0xf]
      %v8457 = vld [vmem:[%s8423 + $0x84] sm:$0xf]
      %v8458 = vld [vmem:[%s8423 + $0x88] sm:$0xf]
      %v8459 = vld [vmem:[%s8423 + $0x8c] sm:$0xf]
      %v8460 = vld [vmem:[%s8423 + $0x90] sm:$0xf]
      %v8461 = vld [vmem:[%s8423 + $0x94] sm:$0xf]
      %v8462 = vld [vmem:[%s8423 + $0x98] sm:$0xf]
      %v8463 = vld [vmem:[%s8423 + $0x9c] sm:$0xf]
      %v8464 = vld [vmem:[%s8423 + $0xa0] sm:$0xf]
      %v8465 = vld [vmem:[%s8423 + $0xa4] sm:$0xf]
      %v8466 = vld [vmem:[%s8423 + $0xa8] sm:$0xf]
      %v8467 = vld [vmem:[%s8423 + $0xac] sm:$0xf]
      %v8468 = vld [vmem:[%s8423 + $0xb0] sm:$0xf]
      %v8469 = vld [vmem:[%s8423 + $0xb4] sm:$0xf]
      %v8470 = vld [vmem:[%s8423 + $0xb8] sm:$0xf]
      %v8471 = vld [vmem:[%s8423 + $0xbc] sm:$0xf]
      %v8554 = vunpack.c.l.b16 %v8340
      %v8555 = vunpack.c.h.b16 %v8340
      %v8556 = vunpack.c.l.b16 %v8341
      %v8557 = vunpack.c.l.b16 %v8342
      %v8558 = vunpack.c.h.b16 %v8342
      %v8559 = vunpack.c.l.b16 %v8343
      %v8560 = vunpack.c.l.b16 %v8344
      %v8561 = vunpack.c.h.b16 %v8344
      %v8562 = vunpack.c.l.b16 %v8345
      %v8563 = vunpack.c.l.b16 %v8346
      %v8564 = vunpack.c.h.b16 %v8346
      %v8565 = vunpack.c.l.b16 %v8347
      %v8566 = vunpack.c.l.b16 %v8348
      %v8567 = vunpack.c.h.b16 %v8348
      %v8568 = vunpack.c.l.b16 %v8349
      %v8569 = vunpack.c.l.b16 %v8350
      %v8570 = vunpack.c.h.b16 %v8350
      %v8571 = vunpack.c.l.b16 %v8351
      %v8572 = vunpack.c.l.b16 %v8352
      %v8573 = vunpack.c.h.b16 %v8352
      %v8574 = vunpack.c.l.b16 %v8353
      %v8575 = vunpack.c.l.b16 %v8354
      %v8576 = vunpack.c.h.b16 %v8354
      %v8577 = vunpack.c.l.b16 %v8355
      %v8578 = vunpack.c.l.b16 %v8356
      %v8579 = vunpack.c.h.b16 %v8356
      %v8580 = vunpack.c.l.b16 %v8357
      %v8581 = vunpack.c.l.b16 %v8358
      %v8582 = vunpack.c.h.b16 %v8358
      %v8583 = vunpack.c.l.b16 %v8359
      %v8584 = vunpack.c.l.b16 %v8360
      %v8585 = vunpack.c.h.b16 %v8360
      %v8586 = vunpack.c.l.b16 %v8361
      %v8587 = vunpack.c.l.b16 %v8362
      %v8588 = vunpack.c.h.b16 %v8362
      %v8589 = vunpack.c.l.b16 %v8363
      %v8590 = vunpack.c.l.b16 %v8364
      %v8591 = vunpack.c.h.b16 %v8364
      %v8592 = vunpack.c.l.b16 %v8365
      %v8593 = vunpack.c.l.b16 %v8366
      %v8594 = vunpack.c.h.b16 %v8366
      %v8595 = vunpack.c.l.b16 %v8367
      %v8596 = vunpack.c.l.b16 %v8368
      %v8597 = vunpack.c.h.b16 %v8368
      %v8598 = vunpack.c.l.b16 %v8369
      %v8599 = vunpack.c.l.b16 %v8370
      %v8600 = vunpack.c.h.b16 %v8370
      %v8601 = vunpack.c.l.b16 %v8371
      %v8602 = vunpack.c.l.b16 %v8372
      %v8603 = vunpack.c.h.b16 %v8372
      %v8604 = vunpack.c.l.b16 %v8373
      %v8605 = vunpack.c.l.b16 %v8374
      %v8606 = vunpack.c.h.b16 %v8374
      %v8607 = vunpack.c.l.b16 %v8375
      %v8608 = vunpack.c.l.b16 %v8376
      %v8609 = vunpack.c.h.b16 %v8376
      %v8610 = vunpack.c.l.b16 %v8377
      %v8611 = vunpack.c.l.b16 %v8378
      %v8612 = vunpack.c.h.b16 %v8378
      %v8613 = vunpack.c.l.b16 %v8379
      %v8614 = vunpack.c.l.b16 %v8380
      %v8615 = vunpack.c.h.b16 %v8380
      %v8616 = vunpack.c.l.b16 %v8381
      %v8617 = vunpack.c.l.b16 %v8382
      %v8618 = vunpack.c.h.b16 %v8382
      %v8619 = vunpack.c.l.b16 %v8383
      %v8620 = vunpack.c.l.b16 %v8384
      %v8621 = vunpack.c.h.b16 %v8384
      %v8622 = vunpack.c.l.b16 %v8385
      %v8623 = vunpack.c.l.b16 %v8386
      %v8624 = vunpack.c.h.b16 %v8386
      %v8625 = vunpack.c.l.b16 %v8387
      %v8626 = vunpack.c.l.b16 %v8388
      %v8627 = vunpack.c.h.b16 %v8388
      %v8628 = vunpack.c.l.b16 %v8389
      %v8629 = vunpack.c.l.b16 %v8390
      %v8630 = vunpack.c.h.b16 %v8390
      %v8631 = vunpack.c.l.b16 %v8391
      %v8632 = vunpack.c.l.b16 %v8392
      %v8633 = vunpack.c.h.b16 %v8392
      %v8634 = vunpack.c.l.b16 %v8393
      %v8635 = vunpack.c.l.b16 %v8394
      %v8636 = vunpack.c.h.b16 %v8394
      %v8637 = vunpack.c.l.b16 %v8395
      %v8638 = vunpack.c.l.b16 %v8396
      %v8639 = vunpack.c.h.b16 %v8396
      %v8640 = vunpack.c.l.b16 %v8397
      %v8641 = vunpack.c.l.b16 %v8398
      %v8642 = vunpack.c.h.b16 %v8398
      %v8643 = vunpack.c.l.b16 %v8399
      %v8644 = vunpack.c.l.b16 %v8400
      %v8645 = vunpack.c.h.b16 %v8400
      %v8646 = vunpack.c.l.b16 %v8401
      %v8647 = vunpack.c.l.b16 %v8402
      %v8648 = vunpack.c.h.b16 %v8402
      %v8649 = vunpack.c.l.b16 %v8403
      %v8650 = vunpack.c.l.b16 %v8404
      %v8651 = vunpack.c.h.b16 %v8404
      %v8652 = vunpack.c.l.b16 %v8405
      %v8653 = vunpack.c.l.b16 %v8406
      %v8654 = vunpack.c.h.b16 %v8406
      %v8655 = vunpack.c.l.b16 %v8407
      %v8656 = vunpack.c.l.b16 %v8408
      %v8657 = vunpack.c.h.b16 %v8408
      %v8658 = vunpack.c.l.b16 %v8409
      %v8659 = vunpack.c.l.b16 %v8410
      %v8660 = vunpack.c.h.b16 %v8410
      %v8661 = vunpack.c.l.b16 %v8411
      %v8662 = vunpack.c.l.b16 %v8412
      %v8663 = vunpack.c.h.b16 %v8412
      %v8664 = vunpack.c.l.b16 %v8413
      %v8665 = vunpack.c.l.b16 %v8414
      %v8666 = vunpack.c.h.b16 %v8414
      %v8667 = vunpack.c.l.b16 %v8415
      %v8668 = vunpack.c.l.b16 %v8416
      %v8669 = vunpack.c.h.b16 %v8416
      %v8670 = vunpack.c.l.b16 %v8417
      %v8671 = vunpack.c.l.b16 %v8418
      %v8672 = vunpack.c.h.b16 %v8418
      %v8673 = vunpack.c.l.b16 %v8419
      %v8674 = vunpack.c.l.b16 %v8420
      %v8675 = vunpack.c.h.b16 %v8420
      %v8676 = vunpack.c.l.b16 %v8421
      %v8677 = vpack.c.b16 %v8557, %v8554
      %v8678 = vpack.c.b16 %v8558, %v8555
      %v8679 = vpack.c.b16 %v8559, %v8556
      %v8680 = vpack.c.b16 %v8563, %v8560
      %v8681 = vpack.c.b16 %v8564, %v8561
      %v8682 = vpack.c.b16 %v8565, %v8562
      %v8683 = vpack.c.b16 %v8569, %v8566
      %v8684 = vpack.c.b16 %v8570, %v8567
      %v8685 = vpack.c.b16 %v8571, %v8568
      %v8686 = vpack.c.b16 %v8575, %v8572
      %v8687 = vpack.c.b16 %v8576, %v8573
      %v8688 = vpack.c.b16 %v8577, %v8574
      %v8689 = vpack.c.b16 %v8581, %v8578
      %v8690 = vpack.c.b16 %v8582, %v8579
      %v8691 = vpack.c.b16 %v8583, %v8580
      %v8692 = vpack.c.b16 %v8587, %v8584
      %v8693 = vpack.c.b16 %v8588, %v8585
      %v8694 = vpack.c.b16 %v8589, %v8586
      %v8695 = vpack.c.b16 %v8593, %v8590
      %v8696 = vpack.c.b16 %v8594, %v8591
      %v8697 = vpack.c.b16 %v8595, %v8592
      %v8698 = vpack.c.b16 %v8599, %v8596
      %v8699 = vpack.c.b16 %v8600, %v8597
      %v8700 = vpack.c.b16 %v8601, %v8598
      %v8701 = vpack.c.b16 %v8605, %v8602
      %v8702 = vpack.c.b16 %v8606, %v8603
      %v8703 = vpack.c.b16 %v8607, %v8604
      %v8704 = vpack.c.b16 %v8611, %v8608
      %v8705 = vpack.c.b16 %v8612, %v8609
      %v8706 = vpack.c.b16 %v8613, %v8610
      %v8707 = vpack.c.b16 %v8617, %v8614
      %v8708 = vpack.c.b16 %v8618, %v8615
      %v8709 = vpack.c.b16 %v8619, %v8616
      %v8710 = vpack.c.b16 %v8623, %v8620
      %v8711 = vpack.c.b16 %v8624, %v8621
      %v8712 = vpack.c.b16 %v8625, %v8622
      %v8713 = vpack.c.b16 %v8629, %v8626
      %v8714 = vpack.c.b16 %v8630, %v8627
      %v8715 = vpack.c.b16 %v8631, %v8628
      %v8716 = vpack.c.b16 %v8635, %v8632
      %v8717 = vpack.c.b16 %v8636, %v8633
      %v8718 = vpack.c.b16 %v8637, %v8634
      %v8719 = vpack.c.b16 %v8641, %v8638
      %v8720 = vpack.c.b16 %v8642, %v8639
      %v8721 = vpack.c.b16 %v8643, %v8640
      %v8722 = vpack.c.b16 %v8647, %v8644
      %v8723 = vpack.c.b16 %v8648, %v8645
      %v8724 = vpack.c.b16 %v8649, %v8646
      %v8725 = vpack.c.b16 %v8653, %v8650
      %v8726 = vpack.c.b16 %v8654, %v8651
      %v8727 = vpack.c.b16 %v8655, %v8652
      %v8728 = vpack.c.b16 %v8659, %v8656
      %v8729 = vpack.c.b16 %v8660, %v8657
      %v8730 = vpack.c.b16 %v8661, %v8658
      %v8731 = vpack.c.b16 %v8665, %v8662
      %v8732 = vpack.c.b16 %v8666, %v8663
      %v8733 = vpack.c.b16 %v8667, %v8664
      %v8734 = vpack.c.b16 %v8671, %v8668
      %v8735 = vpack.c.b16 %v8672, %v8669
      %v8736 = vpack.c.b16 %v8673, %v8670
      %v8737 = vpack.c.b16 %v8674, %v8674
      %v8738 = vpack.c.b16 %v8675, %v8675
      %v8739 = vpack.c.b16 %v8676, %v8676
      %v8741 = vshrl.u32 %v8677, 16
      %v8743 = vshll.u32 %v8677, 16
      %v8745 = vrot.slane %v8743, 1
      %v8746 = vor.u32 %v8741, %v8745
      %v8748 = vshll.u32 %v8680, 16
      %v8750 = vrot.slane %v8748, 1
      %v8751 = vsel %vm2939, %v8746, %v8750
      %v8753 = vshrl.u32 %v8678, 16
      %v8755 = vshll.u32 %v8678, 16
      %v8757 = vrot.slane %v8755, 1
      %v8758 = vor.u32 %v8753, %v8757
      %v8760 = vshll.u32 %v8681, 16
      %v8762 = vrot.slane %v8760, 1
      %v8763 = vsel %vm2939, %v8758, %v8762
      %v8765 = vshrl.u32 %v8679, 16
      %v8767 = vshll.u32 %v8679, 16
      %v8769 = vrot.slane %v8767, 1
      %v8770 = vor.u32 %v8765, %v8769
      %v8772 = vshll.u32 %v8682, 16
      %v8774 = vrot.slane %v8772, 1
      %v8775 = vsel %vm2939, %v8770, %v8774
      %v8776 = vshrl.u32 %v8680, 16
      %v8778 = vor.u32 %v8776, %v8750
      %v8780 = vshll.u32 %v8683, 16
      %v8782 = vrot.slane %v8780, 1
      %v8783 = vsel %vm2939, %v8778, %v8782
      %v8784 = vshrl.u32 %v8681, 16
      %v8786 = vor.u32 %v8784, %v8762
      %v8788 = vshll.u32 %v8684, 16
      %v8790 = vrot.slane %v8788, 1
      %v8791 = vsel %vm2939, %v8786, %v8790
      %v8792 = vshrl.u32 %v8682, 16
      %v8794 = vor.u32 %v8792, %v8774
      %v8796 = vshll.u32 %v8685, 16
      %v8798 = vrot.slane %v8796, 1
      %v8799 = vsel %vm2939, %v8794, %v8798
      %v8800 = vshrl.u32 %v8683, 16
      %v8802 = vor.u32 %v8800, %v8782
      %v8804 = vshll.u32 %v8686, 16
      %v8806 = vrot.slane %v8804, 1
      %v8807 = vsel %vm2939, %v8802, %v8806
      %v8808 = vshrl.u32 %v8684, 16
      %v8810 = vor.u32 %v8808, %v8790
      %v8812 = vshll.u32 %v8687, 16
      %v8814 = vrot.slane %v8812, 1
      %v8815 = vsel %vm2939, %v8810, %v8814
      %v8816 = vshrl.u32 %v8685, 16
      %v8818 = vor.u32 %v8816, %v8798
      %v8820 = vshll.u32 %v8688, 16
      %v8822 = vrot.slane %v8820, 1
      %v8823 = vsel %vm2939, %v8818, %v8822
      %v8824 = vshrl.u32 %v8686, 16
      %v8826 = vor.u32 %v8824, %v8806
      %v8828 = vshll.u32 %v8689, 16
      %v8830 = vrot.slane %v8828, 1
      %v8831 = vsel %vm2939, %v8826, %v8830
      %v8832 = vshrl.u32 %v8687, 16
      %v8834 = vor.u32 %v8832, %v8814
      %v8836 = vshll.u32 %v8690, 16
      %v8838 = vrot.slane %v8836, 1
      %v8839 = vsel %vm2939, %v8834, %v8838
      %v8840 = vshrl.u32 %v8688, 16
      %v8842 = vor.u32 %v8840, %v8822
      %v8844 = vshll.u32 %v8691, 16
      %v8846 = vrot.slane %v8844, 1
      %v8847 = vsel %vm2939, %v8842, %v8846
      %v8848 = vshrl.u32 %v8689, 16
      %v8850 = vor.u32 %v8848, %v8830
      %v8852 = vshll.u32 %v8692, 16
      %v8854 = vrot.slane %v8852, 1
      %v8855 = vsel %vm2939, %v8850, %v8854
      %v8856 = vshrl.u32 %v8690, 16
      %v8858 = vor.u32 %v8856, %v8838
      %v8860 = vshll.u32 %v8693, 16
      %v8862 = vrot.slane %v8860, 1
      %v8863 = vsel %vm2939, %v8858, %v8862
      %v8864 = vshrl.u32 %v8691, 16
      %v8866 = vor.u32 %v8864, %v8846
      %v8868 = vshll.u32 %v8694, 16
      %v8870 = vrot.slane %v8868, 1
      %v8871 = vsel %vm2939, %v8866, %v8870
      %v8872 = vshrl.u32 %v8692, 16
      %v8874 = vor.u32 %v8872, %v8854
      %v8876 = vshll.u32 %v8695, 16
      %v8878 = vrot.slane %v8876, 1
      %v8879 = vsel %vm2939, %v8874, %v8878
      %v8880 = vshrl.u32 %v8693, 16
      %v8882 = vor.u32 %v8880, %v8862
      %v8884 = vshll.u32 %v8696, 16
      %v8886 = vrot.slane %v8884, 1
      %v8887 = vsel %vm2939, %v8882, %v8886
      %v8888 = vshrl.u32 %v8694, 16
      %v8890 = vor.u32 %v8888, %v8870
      %v8892 = vshll.u32 %v8697, 16
      %v8894 = vrot.slane %v8892, 1
      %v8895 = vsel %vm2939, %v8890, %v8894
      %v8896 = vshrl.u32 %v8695, 16
      %v8898 = vor.u32 %v8896, %v8878
      %v8900 = vshll.u32 %v8698, 16
      %v8902 = vrot.slane %v8900, 1
      %v8903 = vsel %vm2939, %v8898, %v8902
      %v8904 = vshrl.u32 %v8696, 16
      %v8906 = vor.u32 %v8904, %v8886
      %v8908 = vshll.u32 %v8699, 16
      %v8910 = vrot.slane %v8908, 1
      %v8911 = vsel %vm2939, %v8906, %v8910
      %v8912 = vshrl.u32 %v8697, 16
      %v8914 = vor.u32 %v8912, %v8894
      %v8916 = vshll.u32 %v8700, 16
      %v8918 = vrot.slane %v8916, 1
      %v8919 = vsel %vm2939, %v8914, %v8918
      %v8920 = vshrl.u32 %v8698, 16
      %v8922 = vor.u32 %v8920, %v8902
      %v8924 = vshll.u32 %v8701, 16
      %v8926 = vrot.slane %v8924, 1
      %v8927 = vsel %vm2939, %v8922, %v8926
      %v8928 = vshrl.u32 %v8699, 16
      %v8930 = vor.u32 %v8928, %v8910
      %v8932 = vshll.u32 %v8702, 16
      %v8934 = vrot.slane %v8932, 1
      %v8935 = vsel %vm2939, %v8930, %v8934
      %v8936 = vshrl.u32 %v8700, 16
      %v8938 = vor.u32 %v8936, %v8918
      %v8940 = vshll.u32 %v8703, 16
      %v8942 = vrot.slane %v8940, 1
      %v8943 = vsel %vm2939, %v8938, %v8942
      %v8944 = vshrl.u32 %v8701, 16
      %v8946 = vor.u32 %v8944, %v8926
      %v8948 = vshll.u32 %v8704, 16
      %v8950 = vrot.slane %v8948, 1
      %v8951 = vsel %vm2939, %v8946, %v8950
      %v8952 = vshrl.u32 %v8702, 16
      %v8954 = vor.u32 %v8952, %v8934
      %v8956 = vshll.u32 %v8705, 16
      %v8958 = vrot.slane %v8956, 1
      %v8959 = vsel %vm2939, %v8954, %v8958
      %v8960 = vshrl.u32 %v8703, 16
      %v8962 = vor.u32 %v8960, %v8942
      %v8964 = vshll.u32 %v8706, 16
      %v8966 = vrot.slane %v8964, 1
      %v8967 = vsel %vm2939, %v8962, %v8966
      %v8968 = vshrl.u32 %v8704, 16
      %v8970 = vor.u32 %v8968, %v8950
      %v8972 = vshll.u32 %v8707, 16
      %v8974 = vrot.slane %v8972, 1
      %v8975 = vsel %vm2939, %v8970, %v8974
      %v8976 = vshrl.u32 %v8705, 16
      %v8978 = vor.u32 %v8976, %v8958
      %v8980 = vshll.u32 %v8708, 16
      %v8982 = vrot.slane %v8980, 1
      %v8983 = vsel %vm2939, %v8978, %v8982
      %v8984 = vshrl.u32 %v8706, 16
      %v8986 = vor.u32 %v8984, %v8966
      %v8988 = vshll.u32 %v8709, 16
      %v8990 = vrot.slane %v8988, 1
      %v8991 = vsel %vm2939, %v8986, %v8990
      %v8992 = vshrl.u32 %v8707, 16
      %v8994 = vor.u32 %v8992, %v8974
      %v8996 = vshll.u32 %v8710, 16
      %v8998 = vrot.slane %v8996, 1
      %v8999 = vsel %vm2939, %v8994, %v8998
      %v9000 = vshrl.u32 %v8708, 16
      %v9002 = vor.u32 %v9000, %v8982
      %v9004 = vshll.u32 %v8711, 16
      %v9006 = vrot.slane %v9004, 1
      %v9007 = vsel %vm2939, %v9002, %v9006
      %v9008 = vshrl.u32 %v8709, 16
      %v9010 = vor.u32 %v9008, %v8990
      %v9012 = vshll.u32 %v8712, 16
      %v9014 = vrot.slane %v9012, 1
      %v9015 = vsel %vm2939, %v9010, %v9014
      %v9016 = vshrl.u32 %v8710, 16
      %v9018 = vor.u32 %v9016, %v8998
      %v9020 = vshll.u32 %v8713, 16
      %v9022 = vrot.slane %v9020, 1
      %v9023 = vsel %vm2939, %v9018, %v9022
      %v9024 = vshrl.u32 %v8711, 16
      %v9026 = vor.u32 %v9024, %v9006
      %v9028 = vshll.u32 %v8714, 16
      %v9030 = vrot.slane %v9028, 1
      %v9031 = vsel %vm2939, %v9026, %v9030
      %v9032 = vshrl.u32 %v8712, 16
      %v9034 = vor.u32 %v9032, %v9014
      %v9036 = vshll.u32 %v8715, 16
      %v9038 = vrot.slane %v9036, 1
      %v9039 = vsel %vm2939, %v9034, %v9038
      %v9040 = vshrl.u32 %v8713, 16
      %v9042 = vor.u32 %v9040, %v9022
      %v9044 = vshll.u32 %v8716, 16
      %v9046 = vrot.slane %v9044, 1
      %v9047 = vsel %vm2939, %v9042, %v9046
      %v9048 = vshrl.u32 %v8714, 16
      %v9050 = vor.u32 %v9048, %v9030
      %v9052 = vshll.u32 %v8717, 16
      %v9054 = vrot.slane %v9052, 1
      %v9055 = vsel %vm2939, %v9050, %v9054
      %v9056 = vshrl.u32 %v8715, 16
      %v9058 = vor.u32 %v9056, %v9038
      %v9060 = vshll.u32 %v8718, 16
      %v9062 = vrot.slane %v9060, 1
      %v9063 = vsel %vm2939, %v9058, %v9062
      %v9064 = vshrl.u32 %v8716, 16
      %v9066 = vor.u32 %v9064, %v9046
      %v9068 = vshll.u32 %v8719, 16
      %v9070 = vrot.slane %v9068, 1
      %v9071 = vsel %vm2939, %v9066, %v9070
      %v9072 = vshrl.u32 %v8717, 16
      %v9074 = vor.u32 %v9072, %v9054
      %v9076 = vshll.u32 %v8720, 16
      %v9078 = vrot.slane %v9076, 1
      %v9079 = vsel %vm2939, %v9074, %v9078
      %v9080 = vshrl.u32 %v8718, 16
      %v9082 = vor.u32 %v9080, %v9062
      %v9084 = vshll.u32 %v8721, 16
      %v9086 = vrot.slane %v9084, 1
      %v9087 = vsel %vm2939, %v9082, %v9086
      %v9088 = vshrl.u32 %v8719, 16
      %v9090 = vor.u32 %v9088, %v9070
      %v9092 = vshll.u32 %v8722, 16
      %v9094 = vrot.slane %v9092, 1
      %v9095 = vsel %vm2939, %v9090, %v9094
      %v9096 = vshrl.u32 %v8720, 16
      %v9098 = vor.u32 %v9096, %v9078
      %v9100 = vshll.u32 %v8723, 16
      %v9102 = vrot.slane %v9100, 1
      %v9103 = vsel %vm2939, %v9098, %v9102
      %v9104 = vshrl.u32 %v8721, 16
      %v9106 = vor.u32 %v9104, %v9086
      %v9108 = vshll.u32 %v8724, 16
      %v9110 = vrot.slane %v9108, 1
      %v9111 = vsel %vm2939, %v9106, %v9110
      %v9112 = vshrl.u32 %v8722, 16
      %v9114 = vor.u32 %v9112, %v9094
      %v9116 = vshll.u32 %v8725, 16
      %v9118 = vrot.slane %v9116, 1
      %v9119 = vsel %vm2939, %v9114, %v9118
      %v9120 = vshrl.u32 %v8723, 16
      %v9122 = vor.u32 %v9120, %v9102
      %v9124 = vshll.u32 %v8726, 16
      %v9126 = vrot.slane %v9124, 1
      %v9127 = vsel %vm2939, %v9122, %v9126
      %v9128 = vshrl.u32 %v8724, 16
      %v9130 = vor.u32 %v9128, %v9110
      %v9132 = vshll.u32 %v8727, 16
      %v9134 = vrot.slane %v9132, 1
      %v9135 = vsel %vm2939, %v9130, %v9134
      %v9136 = vshrl.u32 %v8725, 16
      %v9138 = vor.u32 %v9136, %v9118
      %v9140 = vshll.u32 %v8728, 16
      %v9142 = vrot.slane %v9140, 1
      %v9143 = vsel %vm2939, %v9138, %v9142
      %v9144 = vshrl.u32 %v8726, 16
      %v9146 = vor.u32 %v9144, %v9126
      %v9148 = vshll.u32 %v8729, 16
      %v9150 = vrot.slane %v9148, 1
      %v9151 = vsel %vm2939, %v9146, %v9150
      %v9152 = vshrl.u32 %v8727, 16
      %v9154 = vor.u32 %v9152, %v9134
      %v9156 = vshll.u32 %v8730, 16
      %v9158 = vrot.slane %v9156, 1
      %v9159 = vsel %vm2939, %v9154, %v9158
      %v9160 = vshrl.u32 %v8728, 16
      %v9162 = vor.u32 %v9160, %v9142
      %v9164 = vshll.u32 %v8731, 16
      %v9166 = vrot.slane %v9164, 1
      %v9167 = vsel %vm2939, %v9162, %v9166
      %v9168 = vshrl.u32 %v8729, 16
      %v9170 = vor.u32 %v9168, %v9150
      %v9172 = vshll.u32 %v8732, 16
      %v9174 = vrot.slane %v9172, 1
      %v9175 = vsel %vm2939, %v9170, %v9174
      %v9176 = vshrl.u32 %v8730, 16
      %v9178 = vor.u32 %v9176, %v9158
      %v9180 = vshll.u32 %v8733, 16
      %v9182 = vrot.slane %v9180, 1
      %v9183 = vsel %vm2939, %v9178, %v9182
      %v9184 = vshrl.u32 %v8731, 16
      %v9186 = vor.u32 %v9184, %v9166
      %v9188 = vshll.u32 %v8734, 16
      %v9190 = vrot.slane %v9188, 1
      %v9191 = vsel %vm2939, %v9186, %v9190
      %v9192 = vshrl.u32 %v8732, 16
      %v9194 = vor.u32 %v9192, %v9174
      %v9196 = vshll.u32 %v8735, 16
      %v9198 = vrot.slane %v9196, 1
      %v9199 = vsel %vm2939, %v9194, %v9198
      %v9200 = vshrl.u32 %v8733, 16
      %v9202 = vor.u32 %v9200, %v9182
      %v9204 = vshll.u32 %v8736, 16
      %v9206 = vrot.slane %v9204, 1
      %v9207 = vsel %vm2939, %v9202, %v9206
      %v9208 = vshrl.u32 %v8734, 16
      %v9210 = vor.u32 %v9208, %v9190
      %v9212 = vshll.u32 %v8737, 16
      %v9214 = vrot.slane %v9212, 1
      %v9215 = vsel %vm2939, %v9210, %v9214
      %v9216 = vshrl.u32 %v8735, 16
      %v9218 = vor.u32 %v9216, %v9198
      %v9220 = vshll.u32 %v8738, 16
      %v9222 = vrot.slane %v9220, 1
      %v9223 = vsel %vm2939, %v9218, %v9222
      %v9224 = vshrl.u32 %v8736, 16
      %v9226 = vor.u32 %v9224, %v9206
      %v9228 = vshll.u32 %v8739, 16
      %v9230 = vrot.slane %v9228, 1
      %v9231 = vsel %vm2939, %v9226, %v9230
      %v9340 = vunpack.c.l.b16 %v8424
      %v9341 = vunpack.c.l.b16 %v8425
      %v9342 = vunpack.c.l.b16 %v8426
      %v9343 = vunpack.c.l.b16 %v8427
      %v9344 = vunpack.c.l.b16 %v8428
      %v9345 = vunpack.c.l.b16 %v8429
      %v9346 = vunpack.c.l.b16 %v8430
      %v9347 = vunpack.c.l.b16 %v8431
      %v9348 = vunpack.c.l.b16 %v8432
      %v9349 = vunpack.c.l.b16 %v8433
      %v9350 = vunpack.c.l.b16 %v8434
      %v9351 = vunpack.c.l.b16 %v8435
      %v9352 = vunpack.c.l.b16 %v8436
      %v9353 = vunpack.c.l.b16 %v8437
      %v9354 = vunpack.c.l.b16 %v8438
      %v9355 = vunpack.c.l.b16 %v8439
      %v9356 = vunpack.c.l.b16 %v8440
      %v9357 = vunpack.c.l.b16 %v8441
      %v9358 = vunpack.c.l.b16 %v8442
      %v9359 = vunpack.c.l.b16 %v8443
      %v9360 = vunpack.c.l.b16 %v8444
      %v9361 = vunpack.c.l.b16 %v8445
      %v9362 = vunpack.c.l.b16 %v8446
      %v9363 = vunpack.c.l.b16 %v8447
      %v9364 = vunpack.c.l.b16 %v8448
      %v9365 = vunpack.c.l.b16 %v8449
      %v9366 = vunpack.c.l.b16 %v8450
      %v9367 = vunpack.c.l.b16 %v8451
      %v9368 = vunpack.c.l.b16 %v8452
      %v9369 = vunpack.c.l.b16 %v8453
      %v9370 = vunpack.c.l.b16 %v8454
      %v9371 = vunpack.c.l.b16 %v8455
      %v9372 = vunpack.c.l.b16 %v8456
      %v9373 = vunpack.c.l.b16 %v8457
      %v9374 = vunpack.c.l.b16 %v8458
      %v9375 = vunpack.c.l.b16 %v8459
      %v9376 = vunpack.c.l.b16 %v8460
      %v9377 = vunpack.c.l.b16 %v8461
      %v9378 = vunpack.c.l.b16 %v8462
      %v9379 = vunpack.c.l.b16 %v8463
      %v9380 = vunpack.c.l.b16 %v8464
      %v9381 = vunpack.c.l.b16 %v8465
      %v9382 = vunpack.c.l.b16 %v8466
      %v9383 = vunpack.c.l.b16 %v8467
      %v9384 = vunpack.c.l.b16 %v8468
      %v9385 = vunpack.c.l.b16 %v8469
      %v9386 = vunpack.c.l.b16 %v8470
      %v9387 = vunpack.c.l.b16 %v8471
      %v9388 = vpack.c.b16 %v9341, %v9340
      %v9389 = vpack.c.b16 %v9343, %v9342
      %v9390 = vpack.c.b16 %v9345, %v9344
      %v9391 = vpack.c.b16 %v9347, %v9346
      %v9392 = vpack.c.b16 %v9349, %v9348
      %v9393 = vpack.c.b16 %v9351, %v9350
      %v9394 = vpack.c.b16 %v9353, %v9352
      %v9395 = vpack.c.b16 %v9355, %v9354
      %v9396 = vpack.c.b16 %v9357, %v9356
      %v9397 = vpack.c.b16 %v9359, %v9358
      %v9398 = vpack.c.b16 %v9361, %v9360
      %v9399 = vpack.c.b16 %v9363, %v9362
      %v9400 = vpack.c.b16 %v9365, %v9364
      %v9401 = vpack.c.b16 %v9367, %v9366
      %v9402 = vpack.c.b16 %v9369, %v9368
      %v9403 = vpack.c.b16 %v9371, %v9370
      %v9404 = vpack.c.b16 %v9373, %v9372
      %v9405 = vpack.c.b16 %v9375, %v9374
      %v9406 = vpack.c.b16 %v9377, %v9376
      %v9407 = vpack.c.b16 %v9379, %v9378
      %v9408 = vpack.c.b16 %v9381, %v9380
      %v9409 = vpack.c.b16 %v9383, %v9382
      %v9410 = vpack.c.b16 %v9385, %v9384
      %v9411 = vpack.c.b16 %v9387, %v9386
      %9436 = vmatpush.bf16.msra.mxu0 %v9395
      %9437 = vmatpush.bf16.msra.mxu0 %v9394
      %9438 = vmatpush.bf16.msra.mxu0 %v9393
      %9439 = vmatpush.bf16.msra.mxu0 %v9392
      %9440 = vmatpush.bf16.msra.mxu0 %v9391
      %9441 = vmatpush.bf16.msra.mxu0 %v9390
      %9442 = vmatpush.bf16.msra.mxu0 %v9389
      %9443 = vmatpush.bf16.msra.mxu0 %v9388
      %9444 = vmatmul.bf16.gmra.mxu0 %v8751
      %v9445 = vpop.f32.mrf.mxu0
      %v9446 = vadd.f32 0.0, %v9445
      %v9447 = vpop.f32.mrf.mxu0
      %v9448 = vadd.f32 0.0, %v9447
      %9449 = vmatmul.bf16.gmra.mxu0 %v8783
      %v9450 = vpop.f32.mrf.mxu0
      %v9451 = vadd.f32 0.0, %v9450
      %v9452 = vpop.f32.mrf.mxu0
      %v9453 = vadd.f32 0.0, %v9452
      %9454 = vmatmul.bf16.gmra.mxu0 %v8807
      %v9455 = vpop.f32.mrf.mxu0
      %v9456 = vadd.f32 0.0, %v9455
      %v9457 = vpop.f32.mrf.mxu0
      %v9458 = vadd.f32 0.0, %v9457
      %9459 = vmatmul.bf16.gmra.mxu0 %v8831
      %v9460 = vpop.f32.mrf.mxu0
      %v9461 = vadd.f32 0.0, %v9460
      %v9462 = vpop.f32.mrf.mxu0
      %v9463 = vadd.f32 0.0, %v9462
      %9464 = vmatmul.bf16.gmra.mxu0 %v8855
      %v9465 = vpop.f32.mrf.mxu0
      %v9466 = vadd.f32 0.0, %v9465
      %v9467 = vpop.f32.mrf.mxu0
      %v9468 = vadd.f32 0.0, %v9467
      %9469 = vmatmul.bf16.gmra.mxu0 %v8879
      %v9470 = vpop.f32.mrf.mxu0
      %v9471 = vadd.f32 0.0, %v9470
      %v9472 = vpop.f32.mrf.mxu0
      %v9473 = vadd.f32 0.0, %v9472
      %9474 = vmatmul.bf16.gmra.mxu0 %v8903
      %v9475 = vpop.f32.mrf.mxu0
      %v9476 = vadd.f32 0.0, %v9475
      %v9477 = vpop.f32.mrf.mxu0
      %v9478 = vadd.f32 0.0, %v9477
      %9479 = vmatmul.bf16.gmra.mxu0 %v8927
      %v9480 = vpop.f32.mrf.mxu0
      %v9481 = vadd.f32 0.0, %v9480
      %v9482 = vpop.f32.mrf.mxu0
      %v9483 = vadd.f32 0.0, %v9482
      %9484 = vmatmul.bf16.gmra.mxu0 %v8951
      %v9485 = vpop.f32.mrf.mxu0
      %v9486 = vadd.f32 0.0, %v9485
      %v9487 = vpop.f32.mrf.mxu0
      %v9488 = vadd.f32 0.0, %v9487
      %9489 = vmatmul.bf16.gmra.mxu0 %v8975
      %v9490 = vpop.f32.mrf.mxu0
      %v9491 = vadd.f32 0.0, %v9490
      %v9492 = vpop.f32.mrf.mxu0
      %v9493 = vadd.f32 0.0, %v9492
      %9494 = vmatmul.bf16.gmra.mxu0 %v8999
      %v9495 = vpop.f32.mrf.mxu0
      %v9496 = vadd.f32 0.0, %v9495
      %v9497 = vpop.f32.mrf.mxu0
      %v9498 = vadd.f32 0.0, %v9497
      %9499 = vmatmul.bf16.gmra.mxu0 %v9023
      %v9500 = vpop.f32.mrf.mxu0
      %v9501 = vadd.f32 0.0, %v9500
      %v9502 = vpop.f32.mrf.mxu0
      %v9503 = vadd.f32 0.0, %v9502
      %9504 = vmatmul.bf16.gmra.mxu0 %v9047
      %v9505 = vpop.f32.mrf.mxu0
      %v9506 = vadd.f32 0.0, %v9505
      %v9507 = vpop.f32.mrf.mxu0
      %v9508 = vadd.f32 0.0, %v9507
      %9509 = vmatmul.bf16.gmra.mxu0 %v9071
      %v9510 = vpop.f32.mrf.mxu0
      %v9511 = vadd.f32 0.0, %v9510
      %v9512 = vpop.f32.mrf.mxu0
      %v9513 = vadd.f32 0.0, %v9512
      %9514 = vmatmul.bf16.gmra.mxu0 %v9095
      %v9515 = vpop.f32.mrf.mxu0
      %v9516 = vadd.f32 0.0, %v9515
      %v9517 = vpop.f32.mrf.mxu0
      %v9518 = vadd.f32 0.0, %v9517
      %9519 = vmatmul.bf16.gmra.mxu0 %v9119
      %v9520 = vpop.f32.mrf.mxu0
      %v9521 = vadd.f32 0.0, %v9520
      %v9522 = vpop.f32.mrf.mxu0
      %v9523 = vadd.f32 0.0, %v9522
      %9524 = vmatmul.bf16.gmra.mxu0 %v9143
      %v9525 = vpop.f32.mrf.mxu0
      %v9526 = vadd.f32 0.0, %v9525
      %v9527 = vpop.f32.mrf.mxu0
      %v9528 = vadd.f32 0.0, %v9527
      %9529 = vmatmul.bf16.gmra.mxu0 %v9167
      %v9530 = vpop.f32.mrf.mxu0
      %v9531 = vadd.f32 0.0, %v9530
      %v9532 = vpop.f32.mrf.mxu0
      %v9533 = vadd.f32 0.0, %v9532
      %9534 = vmatmul.bf16.gmra.mxu0 %v9191
      %v9535 = vpop.f32.mrf.mxu0
      %v9536 = vadd.f32 0.0, %v9535
      %v9537 = vpop.f32.mrf.mxu0
      %v9538 = vadd.f32 0.0, %v9537
      %9539 = vmatmul.bf16.gmra.mxu0 %v9215
      %v9540 = vpop.f32.mrf.mxu0
      %v9541 = vadd.f32 0.0, %v9540
      %v9542 = vpop.f32.mrf.mxu0
      %v9543 = vadd.f32 0.0, %v9542
      %9544 = vdwg.mxu0
      %9545 = vmatpush.bf16.msra.mxu0 %v9403
      %9546 = vmatpush.bf16.msra.mxu0 %v9402
      %9547 = vmatpush.bf16.msra.mxu0 %v9401
      %9548 = vmatpush.bf16.msra.mxu0 %v9400
      %9549 = vmatpush.bf16.msra.mxu0 %v9399
      %9550 = vmatpush.bf16.msra.mxu0 %v9398
      %9551 = vmatpush.bf16.msra.mxu0 %v9397
      %9552 = vmatpush.bf16.msra.mxu0 %v9396
      %9553 = vmatmul.bf16.gmra.mxu0 %v8763
      %v9554 = vpop.f32.mrf.mxu0
      %v9555 = vadd.f32 %v9446, %v9554
      %v9556 = vpop.f32.mrf.mxu0
      %v9557 = vadd.f32 %v9448, %v9556
      %9558 = vmatmul.bf16.gmra.mxu0 %v8791
      %v9559 = vpop.f32.mrf.mxu0
      %v9560 = vadd.f32 %v9451, %v9559
      %v9561 = vpop.f32.mrf.mxu0
      %v9562 = vadd.f32 %v9453, %v9561
      %9563 = vmatmul.bf16.gmra.mxu0 %v8815
      %v9564 = vpop.f32.mrf.mxu0
      %v9565 = vadd.f32 %v9456, %v9564
      %v9566 = vpop.f32.mrf.mxu0
      %v9567 = vadd.f32 %v9458, %v9566
      %9568 = vmatmul.bf16.gmra.mxu0 %v8839
      %v9569 = vpop.f32.mrf.mxu0
      %v9570 = vadd.f32 %v9461, %v9569
      %v9571 = vpop.f32.mrf.mxu0
      %v9572 = vadd.f32 %v9463, %v9571
      %9573 = vmatmul.bf16.gmra.mxu0 %v8863
      %v9574 = vpop.f32.mrf.mxu0
      %v9575 = vadd.f32 %v9466, %v9574
      %v9576 = vpop.f32.mrf.mxu0
      %v9577 = vadd.f32 %v9468, %v9576
      %9578 = vmatmul.bf16.gmra.mxu0 %v8887
      %v9579 = vpop.f32.mrf.mxu0
      %v9580 = vadd.f32 %v9471, %v9579
      %v9581 = vpop.f32.mrf.mxu0
      %v9582 = vadd.f32 %v9473, %v9581
      %9583 = vmatmul.bf16.gmra.mxu0 %v8911
      %v9584 = vpop.f32.mrf.mxu0
      %v9585 = vadd.f32 %v9476, %v9584
      %v9586 = vpop.f32.mrf.mxu0
      %v9587 = vadd.f32 %v9478, %v9586
      %9588 = vmatmul.bf16.gmra.mxu0 %v8935
      %v9589 = vpop.f32.mrf.mxu0
      %v9590 = vadd.f32 %v9481, %v9589
      %v9591 = vpop.f32.mrf.mxu0
      %v9592 = vadd.f32 %v9483, %v9591
      %9593 = vmatmul.bf16.gmra.mxu0 %v8959
      %v9594 = vpop.f32.mrf.mxu0
      %v9595 = vadd.f32 %v9486, %v9594
      %v9596 = vpop.f32.mrf.mxu0
      %v9597 = vadd.f32 %v9488, %v9596
      %9598 = vmatmul.bf16.gmra.mxu0 %v8983
      %v9599 = vpop.f32.mrf.mxu0
      %v9600 = vadd.f32 %v9491, %v9599
      %v9601 = vpop.f32.mrf.mxu0
      %v9602 = vadd.f32 %v9493, %v9601
      %9603 = vmatmul.bf16.gmra.mxu0 %v9007
      %v9604 = vpop.f32.mrf.mxu0
      %v9605 = vadd.f32 %v9496, %v9604
      %v9606 = vpop.f32.mrf.mxu0
      %v9607 = vadd.f32 %v9498, %v9606
      %9608 = vmatmul.bf16.gmra.mxu0 %v9031
      %v9609 = vpop.f32.mrf.mxu0
      %v9610 = vadd.f32 %v9501, %v9609
      %v9611 = vpop.f32.mrf.mxu0
      %v9612 = vadd.f32 %v9503, %v9611
      %9613 = vmatmul.bf16.gmra.mxu0 %v9055
      %v9614 = vpop.f32.mrf.mxu0
      %v9615 = vadd.f32 %v9506, %v9614
      %v9616 = vpop.f32.mrf.mxu0
      %v9617 = vadd.f32 %v9508, %v9616
      %9618 = vmatmul.bf16.gmra.mxu0 %v9079
      %v9619 = vpop.f32.mrf.mxu0
      %v9620 = vadd.f32 %v9511, %v9619
      %v9621 = vpop.f32.mrf.mxu0
      %v9622 = vadd.f32 %v9513, %v9621
      %9623 = vmatmul.bf16.gmra.mxu0 %v9103
      %v9624 = vpop.f32.mrf.mxu0
      %v9625 = vadd.f32 %v9516, %v9624
      %v9626 = vpop.f32.mrf.mxu0
      %v9627 = vadd.f32 %v9518, %v9626
      %9628 = vmatmul.bf16.gmra.mxu0 %v9127
      %v9629 = vpop.f32.mrf.mxu0
      %v9630 = vadd.f32 %v9521, %v9629
      %v9631 = vpop.f32.mrf.mxu0
      %v9632 = vadd.f32 %v9523, %v9631
      %9633 = vmatmul.bf16.gmra.mxu0 %v9151
      %v9634 = vpop.f32.mrf.mxu0
      %v9635 = vadd.f32 %v9526, %v9634
      %v9636 = vpop.f32.mrf.mxu0
      %v9637 = vadd.f32 %v9528, %v9636
      %9638 = vmatmul.bf16.gmra.mxu0 %v9175
      %v9639 = vpop.f32.mrf.mxu0
      %v9640 = vadd.f32 %v9531, %v9639
      %v9641 = vpop.f32.mrf.mxu0
      %v9642 = vadd.f32 %v9533, %v9641
      %9643 = vmatmul.bf16.gmra.mxu0 %v9199
      %v9644 = vpop.f32.mrf.mxu0
      %v9645 = vadd.f32 %v9536, %v9644
      %v9646 = vpop.f32.mrf.mxu0
      %v9647 = vadd.f32 %v9538, %v9646
      %9648 = vmatmul.bf16.gmra.mxu0 %v9223
      %v9649 = vpop.f32.mrf.mxu0
      %v9650 = vadd.f32 %v9541, %v9649
      %v9651 = vpop.f32.mrf.mxu0
      %v9652 = vadd.f32 %v9543, %v9651
      %9653 = vdwg.mxu0
      %9654 = vmatpush.bf16.msra.mxu0 %v9411
      %9655 = vmatpush.bf16.msra.mxu0 %v9410
      %9656 = vmatpush.bf16.msra.mxu0 %v9409
      %9657 = vmatpush.bf16.msra.mxu0 %v9408
      %9658 = vmatpush.bf16.msra.mxu0 %v9407
      %9659 = vmatpush.bf16.msra.mxu0 %v9406
      %9660 = vmatpush.bf16.msra.mxu0 %v9405
      %9661 = vmatpush.bf16.msra.mxu0 %v9404
      %9662 = vmatmul.bf16.gmra.mxu0 %v8775
      %v9663 = vpop.f32.mrf.mxu0
      %v9664 = vadd.f32 %v9555, %v9663
      %v9665 = vpop.f32.mrf.mxu0
      %v9666 = vadd.f32 %v9557, %v9665
      %9667 = vmatmul.bf16.gmra.mxu0 %v8799
      %v9668 = vpop.f32.mrf.mxu0
      %v9669 = vadd.f32 %v9560, %v9668
      %v9670 = vpop.f32.mrf.mxu0
      %v9671 = vadd.f32 %v9562, %v9670
      %9672 = vmatmul.bf16.gmra.mxu0 %v8823
      %v9673 = vpop.f32.mrf.mxu0
      %v9674 = vadd.f32 %v9565, %v9673
      %v9675 = vpop.f32.mrf.mxu0
      %v9676 = vadd.f32 %v9567, %v9675
      %9677 = vmatmul.bf16.gmra.mxu0 %v8847
      %v9678 = vpop.f32.mrf.mxu0
      %v9679 = vadd.f32 %v9570, %v9678
      %v9680 = vpop.f32.mrf.mxu0
      %v9681 = vadd.f32 %v9572, %v9680
      %9682 = vmatmul.bf16.gmra.mxu0 %v8871
      %v9683 = vpop.f32.mrf.mxu0
      %v9684 = vadd.f32 %v9575, %v9683
      %v9685 = vpop.f32.mrf.mxu0
      %v9686 = vadd.f32 %v9577, %v9685
      %9687 = vmatmul.bf16.gmra.mxu0 %v8895
      %v9688 = vpop.f32.mrf.mxu0
      %v9689 = vadd.f32 %v9580, %v9688
      %v9690 = vpop.f32.mrf.mxu0
      %v9691 = vadd.f32 %v9582, %v9690
      %9692 = vmatmul.bf16.gmra.mxu0 %v8919
      %v9693 = vpop.f32.mrf.mxu0
      %v9694 = vadd.f32 %v9585, %v9693
      %v9695 = vpop.f32.mrf.mxu0
      %v9696 = vadd.f32 %v9587, %v9695
      %9697 = vmatmul.bf16.gmra.mxu0 %v8943
      %v9698 = vpop.f32.mrf.mxu0
      %v9699 = vadd.f32 %v9590, %v9698
      %v9700 = vpop.f32.mrf.mxu0
      %v9701 = vadd.f32 %v9592, %v9700
      %9702 = vmatmul.bf16.gmra.mxu0 %v8967
      %v9703 = vpop.f32.mrf.mxu0
      %v9704 = vadd.f32 %v9595, %v9703
      %v9705 = vpop.f32.mrf.mxu0
      %v9706 = vadd.f32 %v9597, %v9705
      %9707 = vmatmul.bf16.gmra.mxu0 %v8991
      %v9708 = vpop.f32.mrf.mxu0
      %v9709 = vadd.f32 %v9600, %v9708
      %v9710 = vpop.f32.mrf.mxu0
      %v9711 = vadd.f32 %v9602, %v9710
      %9712 = vmatmul.bf16.gmra.mxu0 %v9015
      %v9713 = vpop.f32.mrf.mxu0
      %v9714 = vadd.f32 %v9605, %v9713
      %v9715 = vpop.f32.mrf.mxu0
      %v9716 = vadd.f32 %v9607, %v9715
      %9717 = vmatmul.bf16.gmra.mxu0 %v9039
      %v9718 = vpop.f32.mrf.mxu0
      %v9719 = vadd.f32 %v9610, %v9718
      %v9720 = vpop.f32.mrf.mxu0
      %v9721 = vadd.f32 %v9612, %v9720
      %9722 = vmatmul.bf16.gmra.mxu0 %v9063
      %v9723 = vpop.f32.mrf.mxu0
      %v9724 = vadd.f32 %v9615, %v9723
      %v9725 = vpop.f32.mrf.mxu0
      %v9726 = vadd.f32 %v9617, %v9725
      %9727 = vmatmul.bf16.gmra.mxu0 %v9087
      %v9728 = vpop.f32.mrf.mxu0
      %v9729 = vadd.f32 %v9620, %v9728
      %v9730 = vpop.f32.mrf.mxu0
      %v9731 = vadd.f32 %v9622, %v9730
      %9732 = vmatmul.bf16.gmra.mxu0 %v9111
      %v9733 = vpop.f32.mrf.mxu0
      %v9734 = vadd.f32 %v9625, %v9733
      %v9735 = vpop.f32.mrf.mxu0
      %v9736 = vadd.f32 %v9627, %v9735
      %9737 = vmatmul.bf16.gmra.mxu0 %v9135
      %v9738 = vpop.f32.mrf.mxu0
      %v9739 = vadd.f32 %v9630, %v9738
      %v9740 = vpop.f32.mrf.mxu0
      %v9741 = vadd.f32 %v9632, %v9740
      %9742 = vmatmul.bf16.gmra.mxu0 %v9159
      %v9743 = vpop.f32.mrf.mxu0
      %v9744 = vadd.f32 %v9635, %v9743
      %v9745 = vpop.f32.mrf.mxu0
      %v9746 = vadd.f32 %v9637, %v9745
      %9747 = vmatmul.bf16.gmra.mxu0 %v9183
      %v9748 = vpop.f32.mrf.mxu0
      %v9749 = vadd.f32 %v9640, %v9748
      %v9750 = vpop.f32.mrf.mxu0
      %v9751 = vadd.f32 %v9642, %v9750
      %9752 = vmatmul.bf16.gmra.mxu0 %v9207
      %v9753 = vpop.f32.mrf.mxu0
      %v9754 = vadd.f32 %v9645, %v9753
      %v9755 = vpop.f32.mrf.mxu0
      %v9756 = vadd.f32 %v9647, %v9755
      %9757 = vmatmul.bf16.gmra.mxu0 %v9231
      %v9758 = vpop.f32.mrf.mxu0
      %v9759 = vadd.f32 %v9650, %v9758
      %v9760 = vpop.f32.mrf.mxu0
      %v9761 = vadd.f32 %v9652, %v9760
      %9762 = vdwg.mxu0
      %v9843 = vunpack.c.l.b16 %v8210
      %v9844 = vunpack.c.h.b16 %v8210
      %v9845 = vunpack.c.l.b16 %v8211
      %v9846 = vunpack.c.l.b16 %v8212
      %v9847 = vunpack.c.h.b16 %v8212
      %v9848 = vunpack.c.l.b16 %v8213
      %v9849 = vunpack.c.l.b16 %v8214
      %v9850 = vunpack.c.h.b16 %v8214
      %v9851 = vunpack.c.l.b16 %v8215
      %v9852 = vunpack.c.l.b16 %v8216
      %v9853 = vunpack.c.h.b16 %v8216
      %v9854 = vunpack.c.l.b16 %v8217
      %v9855 = vunpack.c.l.b16 %v8218
      %v9856 = vunpack.c.h.b16 %v8218
      %v9857 = vunpack.c.l.b16 %v8219
      %v9858 = vunpack.c.l.b16 %v8220
      %v9859 = vunpack.c.h.b16 %v8220
      %v9860 = vunpack.c.l.b16 %v8221
      %v9861 = vunpack.c.l.b16 %v8222
      %v9862 = vunpack.c.h.b16 %v8222
      %v9863 = vunpack.c.l.b16 %v8223
      %v9864 = vunpack.c.l.b16 %v8224
      %v9865 = vunpack.c.h.b16 %v8224
      %v9866 = vunpack.c.l.b16 %v8225
      %v9867 = vunpack.c.l.b16 %v8226
      %v9868 = vunpack.c.h.b16 %v8226
      %v9869 = vunpack.c.l.b16 %v8227
      %v9870 = vunpack.c.l.b16 %v8228
      %v9871 = vunpack.c.h.b16 %v8228
      %v9872 = vunpack.c.l.b16 %v8229
      %v9873 = vunpack.c.l.b16 %v8230
      %v9874 = vunpack.c.h.b16 %v8230
      %v9875 = vunpack.c.l.b16 %v8231
      %v9876 = vunpack.c.l.b16 %v8232
      %v9877 = vunpack.c.h.b16 %v8232
      %v9878 = vunpack.c.l.b16 %v8233
      %v9879 = vunpack.c.l.b16 %v8234
      %v9880 = vunpack.c.h.b16 %v8234
      %v9881 = vunpack.c.l.b16 %v8235
      %v9882 = vunpack.c.l.b16 %v8236
      %v9883 = vunpack.c.h.b16 %v8236
      %v9884 = vunpack.c.l.b16 %v8237
      %v9885 = vunpack.c.l.b16 %v8238
      %v9886 = vunpack.c.h.b16 %v8238
      %v9887 = vunpack.c.l.b16 %v8239
      %v9888 = vunpack.c.l.b16 %v8240
      %v9889 = vunpack.c.h.b16 %v8240
      %v9890 = vunpack.c.l.b16 %v8241
      %v9891 = vunpack.c.l.b16 %v8242
      %v9892 = vunpack.c.h.b16 %v8242
      %v9893 = vunpack.c.l.b16 %v8243
      %v9894 = vunpack.c.l.b16 %v8244
      %v9895 = vunpack.c.h.b16 %v8244
      %v9896 = vunpack.c.l.b16 %v8245
      %v9897 = vunpack.c.l.b16 %v8246
      %v9898 = vunpack.c.h.b16 %v8246
      %v9899 = vunpack.c.l.b16 %v8247
      %v9900 = vunpack.c.l.b16 %v8248
      %v9901 = vunpack.c.h.b16 %v8248
      %v9902 = vunpack.c.l.b16 %v8249
      %v9903 = vunpack.c.l.b16 %v8250
      %v9904 = vunpack.c.h.b16 %v8250
      %v9905 = vunpack.c.l.b16 %v8251
      %v9906 = vunpack.c.l.b16 %v8252
      %v9907 = vunpack.c.h.b16 %v8252
      %v9908 = vunpack.c.l.b16 %v8253
      %v9909 = vunpack.c.l.b16 %v8254
      %v9910 = vunpack.c.h.b16 %v8254
      %v9911 = vunpack.c.l.b16 %v8255
      %v9912 = vunpack.c.l.b16 %v8256
      %v9913 = vunpack.c.h.b16 %v8256
      %v9914 = vunpack.c.l.b16 %v8257
      %v9915 = vunpack.c.l.b16 %v8258
      %v9916 = vunpack.c.h.b16 %v8258
      %v9917 = vunpack.c.l.b16 %v8259
      %v9918 = vunpack.c.l.b16 %v8260
      %v9919 = vunpack.c.h.b16 %v8260
      %v9920 = vunpack.c.l.b16 %v8261
      %v9921 = vunpack.c.l.b16 %v8262
      %v9922 = vunpack.c.h.b16 %v8262
      %v9923 = vunpack.c.l.b16 %v8263
      %v9924 = vunpack.c.l.b16 %v8264
      %v9925 = vunpack.c.h.b16 %v8264
      %v9926 = vunpack.c.l.b16 %v8265
      %v9927 = vunpack.c.l.b16 %v8266
      %v9928 = vunpack.c.h.b16 %v8266
      %v9929 = vunpack.c.l.b16 %v8267
      %v9930 = vunpack.c.l.b16 %v8268
      %v9931 = vunpack.c.h.b16 %v8268
      %v9932 = vunpack.c.l.b16 %v8269
      %v9933 = vunpack.c.l.b16 %v8270
      %v9934 = vunpack.c.h.b16 %v8270
      %v9935 = vunpack.c.l.b16 %v8271
      %v9936 = vunpack.c.l.b16 %v8272
      %v9937 = vunpack.c.h.b16 %v8272
      %v9938 = vunpack.c.l.b16 %v8273
      %v9939 = vunpack.c.l.b16 %v8274
      %v9940 = vunpack.c.h.b16 %v8274
      %v9941 = vunpack.c.l.b16 %v8275
      %v9942 = vunpack.c.l.b16 %v8276
      %v9943 = vunpack.c.h.b16 %v8276
      %v9944 = vunpack.c.l.b16 %v8277
      %v9945 = vunpack.c.l.b16 %v8278
      %v9946 = vunpack.c.h.b16 %v8278
      %v9947 = vunpack.c.l.b16 %v8279
      %v9948 = vunpack.c.l.b16 %v8280
      %v9949 = vunpack.c.h.b16 %v8280
      %v9950 = vunpack.c.l.b16 %v8281
      %v9951 = vunpack.c.l.b16 %v8282
      %v9952 = vunpack.c.h.b16 %v8282
      %v9953 = vunpack.c.l.b16 %v8283
      %v9954 = vunpack.c.l.b16 %v8284
      %v9955 = vunpack.c.h.b16 %v8284
      %v9956 = vunpack.c.l.b16 %v8285
      %v9957 = vunpack.c.l.b16 %v8286
      %v9958 = vunpack.c.h.b16 %v8286
      %v9959 = vunpack.c.l.b16 %v8287
      %v9960 = vunpack.c.l.b16 %v8288
      %v9961 = vunpack.c.h.b16 %v8288
      %v9962 = vunpack.c.l.b16 %v8289
      %v9963 = vpack.c.b16 %v9846, %v9843
      %v9964 = vpack.c.b16 %v9847, %v9844
      %v9965 = vpack.c.b16 %v9848, %v9845
      %v9966 = vpack.c.b16 %v9852, %v9849
      %v9967 = vpack.c.b16 %v9853, %v9850
      %v9968 = vpack.c.b16 %v9854, %v9851
      %v9969 = vpack.c.b16 %v9858, %v9855
      %v9970 = vpack.c.b16 %v9859, %v9856
      %v9971 = vpack.c.b16 %v9860, %v9857
      %v9972 = vpack.c.b16 %v9864, %v9861
      %v9973 = vpack.c.b16 %v9865, %v9862
      %v9974 = vpack.c.b16 %v9866, %v9863
      %v9975 = vpack.c.b16 %v9870, %v9867
      %v9976 = vpack.c.b16 %v9871, %v9868
      %v9977 = vpack.c.b16 %v9872, %v9869
      %v9978 = vpack.c.b16 %v9876, %v9873
      %v9979 = vpack.c.b16 %v9877, %v9874
      %v9980 = vpack.c.b16 %v9878, %v9875
      %v9981 = vpack.c.b16 %v9882, %v9879
      %v9982 = vpack.c.b16 %v9883, %v9880
      %v9983 = vpack.c.b16 %v9884, %v9881
      %v9984 = vpack.c.b16 %v9888, %v9885
      %v9985 = vpack.c.b16 %v9889, %v9886
      %v9986 = vpack.c.b16 %v9890, %v9887
      %v9987 = vpack.c.b16 %v9894, %v9891
      %v9988 = vpack.c.b16 %v9895, %v9892
      %v9989 = vpack.c.b16 %v9896, %v9893
      %v9990 = vpack.c.b16 %v9900, %v9897
      %v9991 = vpack.c.b16 %v9901, %v9898
      %v9992 = vpack.c.b16 %v9902, %v9899
      %v9993 = vpack.c.b16 %v9906, %v9903
      %v9994 = vpack.c.b16 %v9907, %v9904
      %v9995 = vpack.c.b16 %v9908, %v9905
      %v9996 = vpack.c.b16 %v9912, %v9909
      %v9997 = vpack.c.b16 %v9913, %v9910
      %v9998 = vpack.c.b16 %v9914, %v9911
      %v9999 = vpack.c.b16 %v9918, %v9915
      %v10000 = vpack.c.b16 %v9919, %v9916
      %v10001 = vpack.c.b16 %v9920, %v9917
      %v10002 = vpack.c.b16 %v9924, %v9921
      %v10003 = vpack.c.b16 %v9925, %v9922
      %v10004 = vpack.c.b16 %v9926, %v9923
      %v10005 = vpack.c.b16 %v9930, %v9927
      %v10006 = vpack.c.b16 %v9931, %v9928
      %v10007 = vpack.c.b16 %v9932, %v9929
      %v10008 = vpack.c.b16 %v9936, %v9933
      %v10009 = vpack.c.b16 %v9937, %v9934
      %v10010 = vpack.c.b16 %v9938, %v9935
      %v10011 = vpack.c.b16 %v9942, %v9939
      %v10012 = vpack.c.b16 %v9943, %v9940
      %v10013 = vpack.c.b16 %v9944, %v9941
      %v10014 = vpack.c.b16 %v9948, %v9945
      %v10015 = vpack.c.b16 %v9949, %v9946
      %v10016 = vpack.c.b16 %v9950, %v9947
      %v10017 = vpack.c.b16 %v9954, %v9951
      %v10018 = vpack.c.b16 %v9955, %v9952
      %v10019 = vpack.c.b16 %v9956, %v9953
      %v10020 = vpack.c.b16 %v9960, %v9957
      %v10021 = vpack.c.b16 %v9961, %v9958
      %v10022 = vpack.c.b16 %v9962, %v9959
      %v10131 = vunpack.c.l.b16 %v8292
      %v10132 = vunpack.c.l.b16 %v8293
      %v10133 = vunpack.c.l.b16 %v8294
      %v10134 = vunpack.c.l.b16 %v8295
      %v10135 = vunpack.c.l.b16 %v8296
      %v10136 = vunpack.c.l.b16 %v8297
      %v10137 = vunpack.c.l.b16 %v8298
      %v10138 = vunpack.c.l.b16 %v8299
      %v10139 = vunpack.c.l.b16 %v8300
      %v10140 = vunpack.c.l.b16 %v8301
      %v10141 = vunpack.c.l.b16 %v8302
      %v10142 = vunpack.c.l.b16 %v8303
      %v10143 = vunpack.c.l.b16 %v8304
      %v10144 = vunpack.c.l.b16 %v8305
      %v10145 = vunpack.c.l.b16 %v8306
      %v10146 = vunpack.c.l.b16 %v8307
      %v10147 = vunpack.c.l.b16 %v8308
      %v10148 = vunpack.c.l.b16 %v8309
      %v10149 = vunpack.c.l.b16 %v8310
      %v10150 = vunpack.c.l.b16 %v8311
      %v10151 = vunpack.c.l.b16 %v8312
      %v10152 = vunpack.c.l.b16 %v8313
      %v10153 = vunpack.c.l.b16 %v8314
      %v10154 = vunpack.c.l.b16 %v8315
      %v10155 = vunpack.c.l.b16 %v8316
      %v10156 = vunpack.c.l.b16 %v8317
      %v10157 = vunpack.c.l.b16 %v8318
      %v10158 = vunpack.c.l.b16 %v8319
      %v10159 = vunpack.c.l.b16 %v8320
      %v10160 = vunpack.c.l.b16 %v8321
      %v10161 = vunpack.c.l.b16 %v8322
      %v10162 = vunpack.c.l.b16 %v8323
      %v10163 = vunpack.c.l.b16 %v8324
      %v10164 = vunpack.c.l.b16 %v8325
      %v10165 = vunpack.c.l.b16 %v8326
      %v10166 = vunpack.c.l.b16 %v8327
      %v10167 = vunpack.c.l.b16 %v8328
      %v10168 = vunpack.c.l.b16 %v8329
      %v10169 = vunpack.c.l.b16 %v8330
      %v10170 = vunpack.c.l.b16 %v8331
      %v10171 = vunpack.c.l.b16 %v8332
      %v10172 = vunpack.c.l.b16 %v8333
      %v10173 = vunpack.c.l.b16 %v8334
      %v10174 = vunpack.c.l.b16 %v8335
      %v10175 = vunpack.c.l.b16 %v8336
      %v10176 = vunpack.c.l.b16 %v8337
      %v10177 = vunpack.c.l.b16 %v8338
      %v10178 = vunpack.c.l.b16 %v8339
      %v10179 = vpack.c.b16 %v10132, %v10131
      %v10180 = vpack.c.b16 %v10134, %v10133
      %v10181 = vpack.c.b16 %v10136, %v10135
      %v10182 = vpack.c.b16 %v10138, %v10137
      %v10183 = vpack.c.b16 %v10140, %v10139
      %v10184 = vpack.c.b16 %v10142, %v10141
      %v10185 = vpack.c.b16 %v10144, %v10143
      %v10186 = vpack.c.b16 %v10146, %v10145
      %v10187 = vpack.c.b16 %v10148, %v10147
      %v10188 = vpack.c.b16 %v10150, %v10149
      %v10189 = vpack.c.b16 %v10152, %v10151
      %v10190 = vpack.c.b16 %v10154, %v10153
      %v10191 = vpack.c.b16 %v10156, %v10155
      %v10192 = vpack.c.b16 %v10158, %v10157
      %v10193 = vpack.c.b16 %v10160, %v10159
      %v10194 = vpack.c.b16 %v10162, %v10161
      %v10195 = vpack.c.b16 %v10164, %v10163
      %v10196 = vpack.c.b16 %v10166, %v10165
      %v10197 = vpack.c.b16 %v10168, %v10167
      %v10198 = vpack.c.b16 %v10170, %v10169
      %v10199 = vpack.c.b16 %v10172, %v10171
      %v10200 = vpack.c.b16 %v10174, %v10173
      %v10201 = vpack.c.b16 %v10176, %v10175
      %v10202 = vpack.c.b16 %v10178, %v10177
      %10227 = vmatpush.bf16.msra.mxu0 %v10186
      %10228 = vmatpush.bf16.msra.mxu0 %v10185
      %10229 = vmatpush.bf16.msra.mxu0 %v10184
      %10230 = vmatpush.bf16.msra.mxu0 %v10183
      %10231 = vmatpush.bf16.msra.mxu0 %v10182
      %10232 = vmatpush.bf16.msra.mxu0 %v10181
      %10233 = vmatpush.bf16.msra.mxu0 %v10180
      %10234 = vmatpush.bf16.msra.mxu0 %v10179
      %10235 = vmatmul.bf16.gmra.mxu0 %v9963
      %v10236 = vpop.f32.mrf.mxu0
      %v10237 = vadd.f32 %v9664, %v10236
      %v10238 = vpop.f32.mrf.mxu0
      %v10239 = vadd.f32 %v9666, %v10238
      %10240 = vmatmul.bf16.gmra.mxu0 %v9966
      %v10241 = vpop.f32.mrf.mxu0
      %v10242 = vadd.f32 %v9669, %v10241
      %v10243 = vpop.f32.mrf.mxu0
      %v10244 = vadd.f32 %v9671, %v10243
      %10245 = vmatmul.bf16.gmra.mxu0 %v9969
      %v10246 = vpop.f32.mrf.mxu0
      %v10247 = vadd.f32 %v9674, %v10246
      %v10248 = vpop.f32.mrf.mxu0
      %v10249 = vadd.f32 %v9676, %v10248
      %10250 = vmatmul.bf16.gmra.mxu0 %v9972
      %v10251 = vpop.f32.mrf.mxu0
      %v10252 = vadd.f32 %v9679, %v10251
      %v10253 = vpop.f32.mrf.mxu0
      %v10254 = vadd.f32 %v9681, %v10253
      %10255 = vmatmul.bf16.gmra.mxu0 %v9975
      %v10256 = vpop.f32.mrf.mxu0
      %v10257 = vadd.f32 %v9684, %v10256
      %v10258 = vpop.f32.mrf.mxu0
      %v10259 = vadd.f32 %v9686, %v10258
      %10260 = vmatmul.bf16.gmra.mxu0 %v9978
      %v10261 = vpop.f32.mrf.mxu0
      %v10262 = vadd.f32 %v9689, %v10261
      %v10263 = vpop.f32.mrf.mxu0
      %v10264 = vadd.f32 %v9691, %v10263
      %10265 = vmatmul.bf16.gmra.mxu0 %v9981
      %v10266 = vpop.f32.mrf.mxu0
      %v10267 = vadd.f32 %v9694, %v10266
      %v10268 = vpop.f32.mrf.mxu0
      %v10269 = vadd.f32 %v9696, %v10268
      %10270 = vmatmul.bf16.gmra.mxu0 %v9984
      %v10271 = vpop.f32.mrf.mxu0
      %v10272 = vadd.f32 %v9699, %v10271
      %v10273 = vpop.f32.mrf.mxu0
      %v10274 = vadd.f32 %v9701, %v10273
      %10275 = vmatmul.bf16.gmra.mxu0 %v9987
      %v10276 = vpop.f32.mrf.mxu0
      %v10277 = vadd.f32 %v9704, %v10276
      %v10278 = vpop.f32.mrf.mxu0
      %v10279 = vadd.f32 %v9706, %v10278
      %10280 = vmatmul.bf16.gmra.mxu0 %v9990
      %v10281 = vpop.f32.mrf.mxu0
      %v10282 = vadd.f32 %v9709, %v10281
      %v10283 = vpop.f32.mrf.mxu0
      %v10284 = vadd.f32 %v9711, %v10283
      %10285 = vmatmul.bf16.gmra.mxu0 %v9993
      %v10286 = vpop.f32.mrf.mxu0
      %v10287 = vadd.f32 %v9714, %v10286
      %v10288 = vpop.f32.mrf.mxu0
      %v10289 = vadd.f32 %v9716, %v10288
      %10290 = vmatmul.bf16.gmra.mxu0 %v9996
      %v10291 = vpop.f32.mrf.mxu0
      %v10292 = vadd.f32 %v9719, %v10291
      %v10293 = vpop.f32.mrf.mxu0
      %v10294 = vadd.f32 %v9721, %v10293
      %10295 = vmatmul.bf16.gmra.mxu0 %v9999
      %v10296 = vpop.f32.mrf.mxu0
      %v10297 = vadd.f32 %v9724, %v10296
      %v10298 = vpop.f32.mrf.mxu0
      %v10299 = vadd.f32 %v9726, %v10298
      %10300 = vmatmul.bf16.gmra.mxu0 %v10002
      %v10301 = vpop.f32.mrf.mxu0
      %v10302 = vadd.f32 %v9729, %v10301
      %v10303 = vpop.f32.mrf.mxu0
      %v10304 = vadd.f32 %v9731, %v10303
      %10305 = vmatmul.bf16.gmra.mxu0 %v10005
      %v10306 = vpop.f32.mrf.mxu0
      %v10307 = vadd.f32 %v9734, %v10306
      %v10308 = vpop.f32.mrf.mxu0
      %v10309 = vadd.f32 %v9736, %v10308
      %10310 = vmatmul.bf16.gmra.mxu0 %v10008
      %v10311 = vpop.f32.mrf.mxu0
      %v10312 = vadd.f32 %v9739, %v10311
      %v10313 = vpop.f32.mrf.mxu0
      %v10314 = vadd.f32 %v9741, %v10313
      %10315 = vmatmul.bf16.gmra.mxu0 %v10011
      %v10316 = vpop.f32.mrf.mxu0
      %v10317 = vadd.f32 %v9744, %v10316
      %v10318 = vpop.f32.mrf.mxu0
      %v10319 = vadd.f32 %v9746, %v10318
      %10320 = vmatmul.bf16.gmra.mxu0 %v10014
      %v10321 = vpop.f32.mrf.mxu0
      %v10322 = vadd.f32 %v9749, %v10321
      %v10323 = vpop.f32.mrf.mxu0
      %v10324 = vadd.f32 %v9751, %v10323
      %10325 = vmatmul.bf16.gmra.mxu0 %v10017
      %v10326 = vpop.f32.mrf.mxu0
      %v10327 = vadd.f32 %v9754, %v10326
      %v10328 = vpop.f32.mrf.mxu0
      %v10329 = vadd.f32 %v9756, %v10328
      %10330 = vmatmul.bf16.gmra.mxu0 %v10020
      %v10331 = vpop.f32.mrf.mxu0
      %v10332 = vadd.f32 %v9759, %v10331
      %v10333 = vpop.f32.mrf.mxu0
      %v10334 = vadd.f32 %v9761, %v10333
      %10335 = vdwg.mxu0
      %10336 = vmatpush.bf16.msra.mxu0 %v10194
      %10337 = vmatpush.bf16.msra.mxu0 %v10193
      %10338 = vmatpush.bf16.msra.mxu0 %v10192
      %10339 = vmatpush.bf16.msra.mxu0 %v10191
      %10340 = vmatpush.bf16.msra.mxu0 %v10190
      %10341 = vmatpush.bf16.msra.mxu0 %v10189
      %10342 = vmatpush.bf16.msra.mxu0 %v10188
      %10343 = vmatpush.bf16.msra.mxu0 %v10187
      %10344 = vmatmul.bf16.gmra.mxu0 %v9964
      %v10345 = vpop.f32.mrf.mxu0
      %v10346 = vadd.f32 %v10237, %v10345
      %v10347 = vpop.f32.mrf.mxu0
      %v10348 = vadd.f32 %v10239, %v10347
      %10349 = vmatmul.bf16.gmra.mxu0 %v9967
      %v10350 = vpop.f32.mrf.mxu0
      %v10351 = vadd.f32 %v10242, %v10350
      %v10352 = vpop.f32.mrf.mxu0
      %v10353 = vadd.f32 %v10244, %v10352
      %10354 = vmatmul.bf16.gmra.mxu0 %v9970
      %v10355 = vpop.f32.mrf.mxu0
      %v10356 = vadd.f32 %v10247, %v10355
      %v10357 = vpop.f32.mrf.mxu0
      %v10358 = vadd.f32 %v10249, %v10357
      %10359 = vmatmul.bf16.gmra.mxu0 %v9973
      %v10360 = vpop.f32.mrf.mxu0
      %v10361 = vadd.f32 %v10252, %v10360
      %v10362 = vpop.f32.mrf.mxu0
      %v10363 = vadd.f32 %v10254, %v10362
      %10364 = vmatmul.bf16.gmra.mxu0 %v9976
      %v10365 = vpop.f32.mrf.mxu0
      %v10366 = vadd.f32 %v10257, %v10365
      %v10367 = vpop.f32.mrf.mxu0
      %v10368 = vadd.f32 %v10259, %v10367
      %10369 = vmatmul.bf16.gmra.mxu0 %v9979
      %v10370 = vpop.f32.mrf.mxu0
      %v10371 = vadd.f32 %v10262, %v10370
      %v10372 = vpop.f32.mrf.mxu0
      %v10373 = vadd.f32 %v10264, %v10372
      %10374 = vmatmul.bf16.gmra.mxu0 %v9982
      %v10375 = vpop.f32.mrf.mxu0
      %v10376 = vadd.f32 %v10267, %v10375
      %v10377 = vpop.f32.mrf.mxu0
      %v10378 = vadd.f32 %v10269, %v10377
      %10379 = vmatmul.bf16.gmra.mxu0 %v9985
      %v10380 = vpop.f32.mrf.mxu0
      %v10381 = vadd.f32 %v10272, %v10380
      %v10382 = vpop.f32.mrf.mxu0
      %v10383 = vadd.f32 %v10274, %v10382
      %10384 = vmatmul.bf16.gmra.mxu0 %v9988
      %v10385 = vpop.f32.mrf.mxu0
      %v10386 = vadd.f32 %v10277, %v10385
      %v10387 = vpop.f32.mrf.mxu0
      %v10388 = vadd.f32 %v10279, %v10387
      %10389 = vmatmul.bf16.gmra.mxu0 %v9991
      %v10390 = vpop.f32.mrf.mxu0
      %v10391 = vadd.f32 %v10282, %v10390
      %v10392 = vpop.f32.mrf.mxu0
      %v10393 = vadd.f32 %v10284, %v10392
      %10394 = vmatmul.bf16.gmra.mxu0 %v9994
      %v10395 = vpop.f32.mrf.mxu0
      %v10396 = vadd.f32 %v10287, %v10395
      %v10397 = vpop.f32.mrf.mxu0
      %v10398 = vadd.f32 %v10289, %v10397
      %10399 = vmatmul.bf16.gmra.mxu0 %v9997
      %v10400 = vpop.f32.mrf.mxu0
      %v10401 = vadd.f32 %v10292, %v10400
      %v10402 = vpop.f32.mrf.mxu0
      %v10403 = vadd.f32 %v10294, %v10402
      %10404 = vmatmul.bf16.gmra.mxu0 %v10000
      %v10405 = vpop.f32.mrf.mxu0
      %v10406 = vadd.f32 %v10297, %v10405
      %v10407 = vpop.f32.mrf.mxu0
      %v10408 = vadd.f32 %v10299, %v10407
      %10409 = vmatmul.bf16.gmra.mxu0 %v10003
      %v10410 = vpop.f32.mrf.mxu0
      %v10411 = vadd.f32 %v10302, %v10410
      %v10412 = vpop.f32.mrf.mxu0
      %v10413 = vadd.f32 %v10304, %v10412
      %10414 = vmatmul.bf16.gmra.mxu0 %v10006
      %v10415 = vpop.f32.mrf.mxu0
      %v10416 = vadd.f32 %v10307, %v10415
      %v10417 = vpop.f32.mrf.mxu0
      %v10418 = vadd.f32 %v10309, %v10417
      %10419 = vmatmul.bf16.gmra.mxu0 %v10009
      %v10420 = vpop.f32.mrf.mxu0
      %v10421 = vadd.f32 %v10312, %v10420
      %v10422 = vpop.f32.mrf.mxu0
      %v10423 = vadd.f32 %v10314, %v10422
      %10424 = vmatmul.bf16.gmra.mxu0 %v10012
      %v10425 = vpop.f32.mrf.mxu0
      %v10426 = vadd.f32 %v10317, %v10425
      %v10427 = vpop.f32.mrf.mxu0
      %v10428 = vadd.f32 %v10319, %v10427
      %10429 = vmatmul.bf16.gmra.mxu0 %v10015
      %v10430 = vpop.f32.mrf.mxu0
      %v10431 = vadd.f32 %v10322, %v10430
      %v10432 = vpop.f32.mrf.mxu0
      %v10433 = vadd.f32 %v10324, %v10432
      %10434 = vmatmul.bf16.gmra.mxu0 %v10018
      %v10435 = vpop.f32.mrf.mxu0
      %v10436 = vadd.f32 %v10327, %v10435
      %v10437 = vpop.f32.mrf.mxu0
      %v10438 = vadd.f32 %v10329, %v10437
      %10439 = vmatmul.bf16.gmra.mxu0 %v10021
      %v10440 = vpop.f32.mrf.mxu0
      %v10441 = vadd.f32 %v10332, %v10440
      %v10442 = vpop.f32.mrf.mxu0
      %v10443 = vadd.f32 %v10334, %v10442
      %10444 = vdwg.mxu0
      %10445 = vmatpush.bf16.msra.mxu0 %v10202
      %10446 = vmatpush.bf16.msra.mxu0 %v10201
      %10447 = vmatpush.bf16.msra.mxu0 %v10200
      %10448 = vmatpush.bf16.msra.mxu0 %v10199
      %10449 = vmatpush.bf16.msra.mxu0 %v10198
      %10450 = vmatpush.bf16.msra.mxu0 %v10197
      %10451 = vmatpush.bf16.msra.mxu0 %v10196
      %10452 = vmatpush.bf16.msra.mxu0 %v10195
      %10453 = vmatmul.bf16.gmra.mxu0 %v9965
      %v10454 = vpop.f32.mrf.mxu0
      %v10455 = vadd.f32 %v10346, %v10454
      %v10456 = vpop.f32.mrf.mxu0
      %v10457 = vadd.f32 %v10348, %v10456
      %10458 = vmatmul.bf16.gmra.mxu0 %v9968
      %v10459 = vpop.f32.mrf.mxu0
      %v10460 = vadd.f32 %v10351, %v10459
      %v10461 = vpop.f32.mrf.mxu0
      %v10462 = vadd.f32 %v10353, %v10461
      %10463 = vmatmul.bf16.gmra.mxu0 %v9971
      %v10464 = vpop.f32.mrf.mxu0
      %v10465 = vadd.f32 %v10356, %v10464
      %v10466 = vpop.f32.mrf.mxu0
      %v10467 = vadd.f32 %v10358, %v10466
      %10468 = vmatmul.bf16.gmra.mxu0 %v9974
      %v10469 = vpop.f32.mrf.mxu0
      %v10470 = vadd.f32 %v10361, %v10469
      %v10471 = vpop.f32.mrf.mxu0
      %v10472 = vadd.f32 %v10363, %v10471
      %10473 = vmatmul.bf16.gmra.mxu0 %v9977
      %v10474 = vpop.f32.mrf.mxu0
      %v10475 = vadd.f32 %v10366, %v10474
      %v10476 = vpop.f32.mrf.mxu0
      %v10477 = vadd.f32 %v10368, %v10476
      %10478 = vmatmul.bf16.gmra.mxu0 %v9980
      %v10479 = vpop.f32.mrf.mxu0
      %v10480 = vadd.f32 %v10371, %v10479
      %v10481 = vpop.f32.mrf.mxu0
      %v10482 = vadd.f32 %v10373, %v10481
      %10483 = vmatmul.bf16.gmra.mxu0 %v9983
      %v10484 = vpop.f32.mrf.mxu0
      %v10485 = vadd.f32 %v10376, %v10484
      %v10486 = vpop.f32.mrf.mxu0
      %v10487 = vadd.f32 %v10378, %v10486
      %10488 = vmatmul.bf16.gmra.mxu0 %v9986
      %v10489 = vpop.f32.mrf.mxu0
      %v10490 = vadd.f32 %v10381, %v10489
      %v10491 = vpop.f32.mrf.mxu0
      %v10492 = vadd.f32 %v10383, %v10491
      %10493 = vmatmul.bf16.gmra.mxu0 %v9989
      %v10494 = vpop.f32.mrf.mxu0
      %v10495 = vadd.f32 %v10386, %v10494
      %v10496 = vpop.f32.mrf.mxu0
      %v10497 = vadd.f32 %v10388, %v10496
      %10498 = vmatmul.bf16.gmra.mxu0 %v9992
      %v10499 = vpop.f32.mrf.mxu0
      %v10500 = vadd.f32 %v10391, %v10499
      %v10501 = vpop.f32.mrf.mxu0
      %v10502 = vadd.f32 %v10393, %v10501
      %10503 = vmatmul.bf16.gmra.mxu0 %v9995
      %v10504 = vpop.f32.mrf.mxu0
      %v10505 = vadd.f32 %v10396, %v10504
      %v10506 = vpop.f32.mrf.mxu0
      %v10507 = vadd.f32 %v10398, %v10506
      %10508 = vmatmul.bf16.gmra.mxu0 %v9998
      %v10509 = vpop.f32.mrf.mxu0
      %v10510 = vadd.f32 %v10401, %v10509
      %v10511 = vpop.f32.mrf.mxu0
      %v10512 = vadd.f32 %v10403, %v10511
      %10513 = vmatmul.bf16.gmra.mxu0 %v10001
      %v10514 = vpop.f32.mrf.mxu0
      %v10515 = vadd.f32 %v10406, %v10514
      %v10516 = vpop.f32.mrf.mxu0
      %v10517 = vadd.f32 %v10408, %v10516
      %10518 = vmatmul.bf16.gmra.mxu0 %v10004
      %v10519 = vpop.f32.mrf.mxu0
      %v10520 = vadd.f32 %v10411, %v10519
      %v10521 = vpop.f32.mrf.mxu0
      %v10522 = vadd.f32 %v10413, %v10521
      %10523 = vmatmul.bf16.gmra.mxu0 %v10007
      %v10524 = vpop.f32.mrf.mxu0
      %v10525 = vadd.f32 %v10416, %v10524
      %v10526 = vpop.f32.mrf.mxu0
      %v10527 = vadd.f32 %v10418, %v10526
      %10528 = vmatmul.bf16.gmra.mxu0 %v10010
      %v10529 = vpop.f32.mrf.mxu0
      %v10530 = vadd.f32 %v10421, %v10529
      %v10531 = vpop.f32.mrf.mxu0
      %v10532 = vadd.f32 %v10423, %v10531
      %10533 = vmatmul.bf16.gmra.mxu0 %v10013
      %v10534 = vpop.f32.mrf.mxu0
      %v10535 = vadd.f32 %v10426, %v10534
      %v10536 = vpop.f32.mrf.mxu0
      %v10537 = vadd.f32 %v10428, %v10536
      %10538 = vmatmul.bf16.gmra.mxu0 %v10016
      %v10539 = vpop.f32.mrf.mxu0
      %v10540 = vadd.f32 %v10431, %v10539
      %v10541 = vpop.f32.mrf.mxu0
      %v10542 = vadd.f32 %v10433, %v10541
      %10543 = vmatmul.bf16.gmra.mxu0 %v10019
      %v10544 = vpop.f32.mrf.mxu0
      %v10545 = vadd.f32 %v10436, %v10544
      %v10546 = vpop.f32.mrf.mxu0
      %v10547 = vadd.f32 %v10438, %v10546
      %10548 = vmatmul.bf16.gmra.mxu0 %v10022
      %v10549 = vpop.f32.mrf.mxu0
      %v10550 = vadd.f32 %v10441, %v10549
      %v10551 = vpop.f32.mrf.mxu0
      %v10552 = vadd.f32 %v10443, %v10551
      %10553 = vdwg.mxu0
      %v10554 = vld [vmem:[#allocation4] sm:$0xee]
      %v10555 = vld [vmem:[#allocation4 + $0x8] sm:$0xe]
      %s10556 = smul.addr %s4756, 4
      %s10557 = scalar_lea.vmem %s3, %s10556
      %v10558 = vld [vmem:[%s10557] sm:$0xf]
      %v10559 = vld [vmem:[%s10557 + $0x4] sm:$0xf]
      %v10560 = vld [vmem:[%s10557 + $0x8] sm:$0xf]
      %v10561 = vld [vmem:[%s10557 + $0xc] sm:$0xf]
      %v10562 = vld [vmem:[%s10557 + $0x10] sm:$0xf]
      %v10563 = vld [vmem:[%s10557 + $0x14] sm:$0xf]
      %v10564 = vld [vmem:[%s10557 + $0x18] sm:$0xf]
      %v10565 = vld [vmem:[%s10557 + $0x1c] sm:$0xf]
      %v10566 = vld [vmem:[%s10557 + $0x20] sm:$0xf]
      %v10567 = vld [vmem:[%s10557 + $0x24] sm:$0xf]
      %v10568 = vld [vmem:[%s10557 + $0x28] sm:$0xf]
      %v10569 = vld [vmem:[%s10557 + $0x2c] sm:$0xf]
      %v10570 = vld [vmem:[%s10557 + $0x30] sm:$0xf]
      %v10571 = vld [vmem:[%s10557 + $0x34] sm:$0xf]
      %v10572 = vld [vmem:[%s10557 + $0x38] sm:$0xf]
      %v10573 = vld [vmem:[%s10557 + $0x3c] sm:$0xf]
      %v10574 = vld [vmem:[%s10557 + $0x40] sm:$0xf]
      %v10575 = vld [vmem:[%s10557 + $0x44] sm:$0xf]
      %v10576 = vld [vmem:[%s10557 + $0x48] sm:$0xf]
      %v10577 = vld [vmem:[%s10557 + $0x4c] sm:$0xf]
      %v10578 = vld [vmem:[%s10557 + $0x50] sm:$0xf]
      %v10579 = vld [vmem:[%s10557 + $0x54] sm:$0xf]
      %v10580 = vld [vmem:[%s10557 + $0x58] sm:$0xf]
      %v10581 = vld [vmem:[%s10557 + $0x5c] sm:$0xf]
      %v10582 = vld [vmem:[%s10557 + $0x60] sm:$0xf]
      %v10583 = vld [vmem:[%s10557 + $0x64] sm:$0xf]
      %v10584 = vld [vmem:[%s10557 + $0x68] sm:$0xf]
      %v10585 = vld [vmem:[%s10557 + $0x6c] sm:$0xf]
      %v10586 = vld [vmem:[%s10557 + $0x70] sm:$0xf]
      %v10587 = vld [vmem:[%s10557 + $0x74] sm:$0xf]
      %v10588 = vld [vmem:[%s10557 + $0x78] sm:$0xf]
      %v10589 = vld [vmem:[%s10557 + $0x7c] sm:$0xf]
      %v10590 = vld [vmem:[%s10557 + $0x80] sm:$0xf]
      %v10591 = vld [vmem:[%s10557 + $0x84] sm:$0xf]
      %v10592 = vld [vmem:[%s10557 + $0x88] sm:$0xf]
      %v10593 = vld [vmem:[%s10557 + $0x8c] sm:$0xf]
      %v10594 = vld [vmem:[%s10557 + $0x90] sm:$0xf]
      %v10595 = vld [vmem:[%s10557 + $0x94] sm:$0xf]
      %v10596 = vld [vmem:[%s10557 + $0x98] sm:$0xf]
      %v10597 = vld [vmem:[%s10557 + $0x9c] sm:$0xf]
      %v10598 = vld [vmem:[%s10557 + $0xa0] sm:$0xf]
      %v10599 = vld [vmem:[%s10557 + $0xa4] sm:$0xf]
      %v10600 = vld [vmem:[%s10557 + $0xa8] sm:$0xf]
      %v10601 = vld [vmem:[%s10557 + $0xac] sm:$0xf]
      %v10602 = vld [vmem:[%s10557 + $0xb0] sm:$0xf]
      %v10603 = vld [vmem:[%s10557 + $0xb4] sm:$0xf]
      %v10604 = vld [vmem:[%s10557 + $0xb8] sm:$0xf]
      %v10605 = vld [vmem:[%s10557 + $0xbc] sm:$0xf]
      %v10608 = vunpack.c.l.b16 %v10554
      %v10609 = vunpack.c.h.b16 %v10554
      %v10610 = vunpack.c.l.b16 %v10555
      %v10611 = vpack.c.b16 %v8557, %v10608
      %v10612 = vpack.c.b16 %v8558, %v10609
      %v10613 = vpack.c.b16 %v8559, %v10610
      %v10614 = vrot.slane %v10611, 1
      %v10615 = vrot.slane %v8680, 1
      %v10616 = vsel %vm4815, %v10614, %v10615
      %v10617 = vrot.slane %v10612, 1
      %v10618 = vrot.slane %v8681, 1
      %v10619 = vsel %vm4815, %v10617, %v10618
      %v10620 = vrot.slane %v10613, 1
      %v10621 = vrot.slane %v8682, 1
      %v10622 = vsel %vm4815, %v10620, %v10621
      %v10623 = vrot.slane %v8683, 1
      %v10624 = vsel %vm4815, %v10615, %v10623
      %v10625 = vrot.slane %v8684, 1
      %v10626 = vsel %vm4815, %v10618, %v10625
      %v10627 = vrot.slane %v8685, 1
      %v10628 = vsel %vm4815, %v10621, %v10627
      %v10629 = vrot.slane %v8686, 1
      %v10630 = vsel %vm4815, %v10623, %v10629
      %v10631 = vrot.slane %v8687, 1
      %v10632 = vsel %vm4815, %v10625, %v10631
      %v10633 = vrot.slane %v8688, 1
      %v10634 = vsel %vm4815, %v10627, %v10633
      %v10635 = vrot.slane %v8689, 1
      %v10636 = vsel %vm4815, %v10629, %v10635
      %v10637 = vrot.slane %v8690, 1
      %v10638 = vsel %vm4815, %v10631, %v10637
      %v10639 = vrot.slane %v8691, 1
      %v10640 = vsel %vm4815, %v10633, %v10639
      %v10641 = vrot.slane %v8692, 1
      %v10642 = vsel %vm4815, %v10635, %v10641
      %v10643 = vrot.slane %v8693, 1
      %v10644 = vsel %vm4815, %v10637, %v10643
      %v10645 = vrot.slane %v8694, 1
      %v10646 = vsel %vm4815, %v10639, %v10645
      %v10647 = vrot.slane %v8695, 1
      %v10648 = vsel %vm4815, %v10641, %v10647
      %v10649 = vrot.slane %v8696, 1
      %v10650 = vsel %vm4815, %v10643, %v10649
      %v10651 = vrot.slane %v8697, 1
      %v10652 = vsel %vm4815, %v10645, %v10651
      %v10653 = vrot.slane %v8698, 1
      %v10654 = vsel %vm4815, %v10647, %v10653
      %v10655 = vrot.slane %v8699, 1
      %v10656 = vsel %vm4815, %v10649, %v10655
      %v10657 = vrot.slane %v8700, 1
      %v10658 = vsel %vm4815, %v10651, %v10657
      %v10659 = vrot.slane %v8701, 1
      %v10660 = vsel %vm4815, %v10653, %v10659
      %v10661 = vrot.slane %v8702, 1
      %v10662 = vsel %vm4815, %v10655, %v10661
      %v10663 = vrot.slane %v8703, 1
      %v10664 = vsel %vm4815, %v10657, %v10663
      %v10665 = vrot.slane %v8704, 1
      %v10666 = vsel %vm4815, %v10659, %v10665
      %v10667 = vrot.slane %v8705, 1
      %v10668 = vsel %vm4815, %v10661, %v10667
      %v10669 = vrot.slane %v8706, 1
      %v10670 = vsel %vm4815, %v10663, %v10669
      %v10671 = vrot.slane %v8707, 1
      %v10672 = vsel %vm4815, %v10665, %v10671
      %v10673 = vrot.slane %v8708, 1
      %v10674 = vsel %vm4815, %v10667, %v10673
      %v10675 = vrot.slane %v8709, 1
      %v10676 = vsel %vm4815, %v10669, %v10675
      %v10677 = vrot.slane %v8710, 1
      %v10678 = vsel %vm4815, %v10671, %v10677
      %v10679 = vrot.slane %v8711, 1
      %v10680 = vsel %vm4815, %v10673, %v10679
      %v10681 = vrot.slane %v8712, 1
      %v10682 = vsel %vm4815, %v10675, %v10681
      %v10683 = vrot.slane %v8713, 1
      %v10684 = vsel %vm4815, %v10677, %v10683
      %v10685 = vrot.slane %v8714, 1
      %v10686 = vsel %vm4815, %v10679, %v10685
      %v10687 = vrot.slane %v8715, 1
      %v10688 = vsel %vm4815, %v10681, %v10687
      %v10689 = vrot.slane %v8716, 1
      %v10690 = vsel %vm4815, %v10683, %v10689
      %v10691 = vrot.slane %v8717, 1
      %v10692 = vsel %vm4815, %v10685, %v10691
      %v10693 = vrot.slane %v8718, 1
      %v10694 = vsel %vm4815, %v10687, %v10693
      %v10695 = vrot.slane %v8719, 1
      %v10696 = vsel %vm4815, %v10689, %v10695
      %v10697 = vrot.slane %v8720, 1
      %v10698 = vsel %vm4815, %v10691, %v10697
      %v10699 = vrot.slane %v8721, 1
      %v10700 = vsel %vm4815, %v10693, %v10699
      %v10701 = vrot.slane %v8722, 1
      %v10702 = vsel %vm4815, %v10695, %v10701
      %v10703 = vrot.slane %v8723, 1
      %v10704 = vsel %vm4815, %v10697, %v10703
      %v10705 = vrot.slane %v8724, 1
      %v10706 = vsel %vm4815, %v10699, %v10705
      %v10707 = vrot.slane %v8725, 1
      %v10708 = vsel %vm4815, %v10701, %v10707
      %v10709 = vrot.slane %v8726, 1
      %v10710 = vsel %vm4815, %v10703, %v10709
      %v10711 = vrot.slane %v8727, 1
      %v10712 = vsel %vm4815, %v10705, %v10711
      %v10713 = vrot.slane %v8728, 1
      %v10714 = vsel %vm4815, %v10707, %v10713
      %v10715 = vrot.slane %v8729, 1
      %v10716 = vsel %vm4815, %v10709, %v10715
      %v10717 = vrot.slane %v8730, 1
      %v10718 = vsel %vm4815, %v10711, %v10717
      %v10719 = vrot.slane %v8731, 1
      %v10720 = vsel %vm4815, %v10713, %v10719
      %v10721 = vrot.slane %v8732, 1
      %v10722 = vsel %vm4815, %v10715, %v10721
      %v10723 = vrot.slane %v8733, 1
      %v10724 = vsel %vm4815, %v10717, %v10723
      %v10725 = vrot.slane %v8734, 1
      %v10726 = vsel %vm4815, %v10719, %v10725
      %v10727 = vrot.slane %v8735, 1
      %v10728 = vsel %vm4815, %v10721, %v10727
      %v10729 = vrot.slane %v8736, 1
      %v10730 = vsel %vm4815, %v10723, %v10729
      %v10731 = vrot.slane %v8737, 1
      %v10732 = vsel %vm4815, %v10725, %v10731
      %v10733 = vrot.slane %v8738, 1
      %v10734 = vsel %vm4815, %v10727, %v10733
      %v10735 = vrot.slane %v8739, 1
      %v10736 = vsel %vm4815, %v10729, %v10735
      %v10845 = vunpack.c.l.b16 %v10558
      %v10846 = vunpack.c.l.b16 %v10559
      %v10847 = vunpack.c.l.b16 %v10560
      %v10848 = vunpack.c.l.b16 %v10561
      %v10849 = vunpack.c.l.b16 %v10562
      %v10850 = vunpack.c.l.b16 %v10563
      %v10851 = vunpack.c.l.b16 %v10564
      %v10852 = vunpack.c.l.b16 %v10565
      %v10853 = vunpack.c.l.b16 %v10566
      %v10854 = vunpack.c.l.b16 %v10567
      %v10855 = vunpack.c.l.b16 %v10568
      %v10856 = vunpack.c.l.b16 %v10569
      %v10857 = vunpack.c.l.b16 %v10570
      %v10858 = vunpack.c.l.b16 %v10571
      %v10859 = vunpack.c.l.b16 %v10572
      %v10860 = vunpack.c.l.b16 %v10573
      %v10861 = vunpack.c.l.b16 %v10574
      %v10862 = vunpack.c.l.b16 %v10575
      %v10863 = vunpack.c.l.b16 %v10576
      %v10864 = vunpack.c.l.b16 %v10577
      %v10865 = vunpack.c.l.b16 %v10578
      %v10866 = vunpack.c.l.b16 %v10579
      %v10867 = vunpack.c.l.b16 %v10580
      %v10868 = vunpack.c.l.b16 %v10581
      %v10869 = vunpack.c.l.b16 %v10582
      %v10870 = vunpack.c.l.b16 %v10583
      %v10871 = vunpack.c.l.b16 %v10584
      %v10872 = vunpack.c.l.b16 %v10585
      %v10873 = vunpack.c.l.b16 %v10586
      %v10874 = vunpack.c.l.b16 %v10587
      %v10875 = vunpack.c.l.b16 %v10588
      %v10876 = vunpack.c.l.b16 %v10589
      %v10877 = vunpack.c.l.b16 %v10590
      %v10878 = vunpack.c.l.b16 %v10591
      %v10879 = vunpack.c.l.b16 %v10592
      %v10880 = vunpack.c.l.b16 %v10593
      %v10881 = vunpack.c.l.b16 %v10594
      %v10882 = vunpack.c.l.b16 %v10595
      %v10883 = vunpack.c.l.b16 %v10596
      %v10884 = vunpack.c.l.b16 %v10597
      %v10885 = vunpack.c.l.b16 %v10598
      %v10886 = vunpack.c.l.b16 %v10599
      %v10887 = vunpack.c.l.b16 %v10600
      %v10888 = vunpack.c.l.b16 %v10601
      %v10889 = vunpack.c.l.b16 %v10602
      %v10890 = vunpack.c.l.b16 %v10603
      %v10891 = vunpack.c.l.b16 %v10604
      %v10892 = vunpack.c.l.b16 %v10605
      %v10893 = vpack.c.b16 %v10846, %v10845
      %v10894 = vpack.c.b16 %v10848, %v10847
      %v10895 = vpack.c.b16 %v10850, %v10849
      %v10896 = vpack.c.b16 %v10852, %v10851
      %v10897 = vpack.c.b16 %v10854, %v10853
      %v10898 = vpack.c.b16 %v10856, %v10855
      %v10899 = vpack.c.b16 %v10858, %v10857
      %v10900 = vpack.c.b16 %v10860, %v10859
      %v10901 = vpack.c.b16 %v10862, %v10861
      %v10902 = vpack.c.b16 %v10864, %v10863
      %v10903 = vpack.c.b16 %v10866, %v10865
      %v10904 = vpack.c.b16 %v10868, %v10867
      %v10905 = vpack.c.b16 %v10870, %v10869
      %v10906 = vpack.c.b16 %v10872, %v10871
      %v10907 = vpack.c.b16 %v10874, %v10873
      %v10908 = vpack.c.b16 %v10876, %v10875
      %v10909 = vpack.c.b16 %v10878, %v10877
      %v10910 = vpack.c.b16 %v10880, %v10879
      %v10911 = vpack.c.b16 %v10882, %v10881
      %v10912 = vpack.c.b16 %v10884, %v10883
      %v10913 = vpack.c.b16 %v10886, %v10885
      %v10914 = vpack.c.b16 %v10888, %v10887
      %v10915 = vpack.c.b16 %v10890, %v10889
      %v10916 = vpack.c.b16 %v10892, %v10891
      %10941 = vmatpush.bf16.msra.mxu0 %v10900
      %10942 = vmatpush.bf16.msra.mxu0 %v10899
      %10943 = vmatpush.bf16.msra.mxu0 %v10898
      %10944 = vmatpush.bf16.msra.mxu0 %v10897
      %10945 = vmatpush.bf16.msra.mxu0 %v10896
      %10946 = vmatpush.bf16.msra.mxu0 %v10895
      %10947 = vmatpush.bf16.msra.mxu0 %v10894
      %10948 = vmatpush.bf16.msra.mxu0 %v10893
      %10949 = vmatmul.bf16.gmra.mxu0 %v10616
      %v10950 = vpop.f32.mrf.mxu0
      %v10951 = vadd.f32 0.0, %v10950
      %v10952 = vpop.f32.mrf.mxu0
      %v10953 = vadd.f32 0.0, %v10952
      %10954 = vmatmul.bf16.gmra.mxu0 %v10624
      %v10955 = vpop.f32.mrf.mxu0
      %v10956 = vadd.f32 0.0, %v10955
      %v10957 = vpop.f32.mrf.mxu0
      %v10958 = vadd.f32 0.0, %v10957
      %10959 = vmatmul.bf16.gmra.mxu0 %v10630
      %v10960 = vpop.f32.mrf.mxu0
      %v10961 = vadd.f32 0.0, %v10960
      %v10962 = vpop.f32.mrf.mxu0
      %v10963 = vadd.f32 0.0, %v10962
      %10964 = vmatmul.bf16.gmra.mxu0 %v10636
      %v10965 = vpop.f32.mrf.mxu0
      %v10966 = vadd.f32 0.0, %v10965
      %v10967 = vpop.f32.mrf.mxu0
      %v10968 = vadd.f32 0.0, %v10967
      %10969 = vmatmul.bf16.gmra.mxu0 %v10642
      %v10970 = vpop.f32.mrf.mxu0
      %v10971 = vadd.f32 0.0, %v10970
      %v10972 = vpop.f32.mrf.mxu0
      %v10973 = vadd.f32 0.0, %v10972
      %10974 = vmatmul.bf16.gmra.mxu0 %v10648
      %v10975 = vpop.f32.mrf.mxu0
      %v10976 = vadd.f32 0.0, %v10975
      %v10977 = vpop.f32.mrf.mxu0
      %v10978 = vadd.f32 0.0, %v10977
      %10979 = vmatmul.bf16.gmra.mxu0 %v10654
      %v10980 = vpop.f32.mrf.mxu0
      %v10981 = vadd.f32 0.0, %v10980
      %v10982 = vpop.f32.mrf.mxu0
      %v10983 = vadd.f32 0.0, %v10982
      %10984 = vmatmul.bf16.gmra.mxu0 %v10660
      %v10985 = vpop.f32.mrf.mxu0
      %v10986 = vadd.f32 0.0, %v10985
      %v10987 = vpop.f32.mrf.mxu0
      %v10988 = vadd.f32 0.0, %v10987
      %10989 = vmatmul.bf16.gmra.mxu0 %v10666
      %v10990 = vpop.f32.mrf.mxu0
      %v10991 = vadd.f32 0.0, %v10990
      %v10992 = vpop.f32.mrf.mxu0
      %v10993 = vadd.f32 0.0, %v10992
      %10994 = vmatmul.bf16.gmra.mxu0 %v10672
      %v10995 = vpop.f32.mrf.mxu0
      %v10996 = vadd.f32 0.0, %v10995
      %v10997 = vpop.f32.mrf.mxu0
      %v10998 = vadd.f32 0.0, %v10997
      %10999 = vmatmul.bf16.gmra.mxu0 %v10678
      %v11000 = vpop.f32.mrf.mxu0
      %v11001 = vadd.f32 0.0, %v11000
      %v11002 = vpop.f32.mrf.mxu0
      %v11003 = vadd.f32 0.0, %v11002
      %11004 = vmatmul.bf16.gmra.mxu0 %v10684
      %v11005 = vpop.f32.mrf.mxu0
      %v11006 = vadd.f32 0.0, %v11005
      %v11007 = vpop.f32.mrf.mxu0
      %v11008 = vadd.f32 0.0, %v11007
      %11009 = vmatmul.bf16.gmra.mxu0 %v10690
      %v11010 = vpop.f32.mrf.mxu0
      %v11011 = vadd.f32 0.0, %v11010
      %v11012 = vpop.f32.mrf.mxu0
      %v11013 = vadd.f32 0.0, %v11012
      %11014 = vmatmul.bf16.gmra.mxu0 %v10696
      %v11015 = vpop.f32.mrf.mxu0
      %v11016 = vadd.f32 0.0, %v11015
      %v11017 = vpop.f32.mrf.mxu0
      %v11018 = vadd.f32 0.0, %v11017
      %11019 = vmatmul.bf16.gmra.mxu0 %v10702
      %v11020 = vpop.f32.mrf.mxu0
      %v11021 = vadd.f32 0.0, %v11020
      %v11022 = vpop.f32.mrf.mxu0
      %v11023 = vadd.f32 0.0, %v11022
      %11024 = vmatmul.bf16.gmra.mxu0 %v10708
      %v11025 = vpop.f32.mrf.mxu0
      %v11026 = vadd.f32 0.0, %v11025
      %v11027 = vpop.f32.mrf.mxu0
      %v11028 = vadd.f32 0.0, %v11027
      %11029 = vmatmul.bf16.gmra.mxu0 %v10714
      %v11030 = vpop.f32.mrf.mxu0
      %v11031 = vadd.f32 0.0, %v11030
      %v11032 = vpop.f32.mrf.mxu0
      %v11033 = vadd.f32 0.0, %v11032
      %11034 = vmatmul.bf16.gmra.mxu0 %v10720
      %v11035 = vpop.f32.mrf.mxu0
      %v11036 = vadd.f32 0.0, %v11035
      %v11037 = vpop.f32.mrf.mxu0
      %v11038 = vadd.f32 0.0, %v11037
      %11039 = vmatmul.bf16.gmra.mxu0 %v10726
      %v11040 = vpop.f32.mrf.mxu0
      %v11041 = vadd.f32 0.0, %v11040
      %v11042 = vpop.f32.mrf.mxu0
      %v11043 = vadd.f32 0.0, %v11042
      %11044 = vmatmul.bf16.gmra.mxu0 %v10732
      %v11045 = vpop.f32.mrf.mxu0
      %v11046 = vadd.f32 0.0, %v11045
      %v11047 = vpop.f32.mrf.mxu0
      %v11048 = vadd.f32 0.0, %v11047
      %11049 = vdwg.mxu0
      %11050 = vmatpush.bf16.msra.mxu0 %v10908
      %11051 = vmatpush.bf16.msra.mxu0 %v10907
      %11052 = vmatpush.bf16.msra.mxu0 %v10906
      %11053 = vmatpush.bf16.msra.mxu0 %v10905
      %11054 = vmatpush.bf16.msra.mxu0 %v10904
      %11055 = vmatpush.bf16.msra.mxu0 %v10903
      %11056 = vmatpush.bf16.msra.mxu0 %v10902
      %11057 = vmatpush.bf16.msra.mxu0 %v10901
      %11058 = vmatmul.bf16.gmra.mxu0 %v10619
      %v11059 = vpop.f32.mrf.mxu0
      %v11060 = vadd.f32 %v10951, %v11059
      %v11061 = vpop.f32.mrf.mxu0
      %v11062 = vadd.f32 %v10953, %v11061
      %11063 = vmatmul.bf16.gmra.mxu0 %v10626
      %v11064 = vpop.f32.mrf.mxu0
      %v11065 = vadd.f32 %v10956, %v11064
      %v11066 = vpop.f32.mrf.mxu0
      %v11067 = vadd.f32 %v10958, %v11066
      %11068 = vmatmul.bf16.gmra.mxu0 %v10632
      %v11069 = vpop.f32.mrf.mxu0
      %v11070 = vadd.f32 %v10961, %v11069
      %v11071 = vpop.f32.mrf.mxu0
      %v11072 = vadd.f32 %v10963, %v11071
      %11073 = vmatmul.bf16.gmra.mxu0 %v10638
      %v11074 = vpop.f32.mrf.mxu0
      %v11075 = vadd.f32 %v10966, %v11074
      %v11076 = vpop.f32.mrf.mxu0
      %v11077 = vadd.f32 %v10968, %v11076
      %11078 = vmatmul.bf16.gmra.mxu0 %v10644
      %v11079 = vpop.f32.mrf.mxu0
      %v11080 = vadd.f32 %v10971, %v11079
      %v11081 = vpop.f32.mrf.mxu0
      %v11082 = vadd.f32 %v10973, %v11081
      %11083 = vmatmul.bf16.gmra.mxu0 %v10650
      %v11084 = vpop.f32.mrf.mxu0
      %v11085 = vadd.f32 %v10976, %v11084
      %v11086 = vpop.f32.mrf.mxu0
      %v11087 = vadd.f32 %v10978, %v11086
      %11088 = vmatmul.bf16.gmra.mxu0 %v10656
      %v11089 = vpop.f32.mrf.mxu0
      %v11090 = vadd.f32 %v10981, %v11089
      %v11091 = vpop.f32.mrf.mxu0
      %v11092 = vadd.f32 %v10983, %v11091
      %11093 = vmatmul.bf16.gmra.mxu0 %v10662
      %v11094 = vpop.f32.mrf.mxu0
      %v11095 = vadd.f32 %v10986, %v11094
      %v11096 = vpop.f32.mrf.mxu0
      %v11097 = vadd.f32 %v10988, %v11096
      %11098 = vmatmul.bf16.gmra.mxu0 %v10668
      %v11099 = vpop.f32.mrf.mxu0
      %v11100 = vadd.f32 %v10991, %v11099
      %v11101 = vpop.f32.mrf.mxu0
      %v11102 = vadd.f32 %v10993, %v11101
      %11103 = vmatmul.bf16.gmra.mxu0 %v10674
      %v11104 = vpop.f32.mrf.mxu0
      %v11105 = vadd.f32 %v10996, %v11104
      %v11106 = vpop.f32.mrf.mxu0
      %v11107 = vadd.f32 %v10998, %v11106
      %11108 = vmatmul.bf16.gmra.mxu0 %v10680
      %v11109 = vpop.f32.mrf.mxu0
      %v11110 = vadd.f32 %v11001, %v11109
      %v11111 = vpop.f32.mrf.mxu0
      %v11112 = vadd.f32 %v11003, %v11111
      %11113 = vmatmul.bf16.gmra.mxu0 %v10686
      %v11114 = vpop.f32.mrf.mxu0
      %v11115 = vadd.f32 %v11006, %v11114
      %v11116 = vpop.f32.mrf.mxu0
      %v11117 = vadd.f32 %v11008, %v11116
      %11118 = vmatmul.bf16.gmra.mxu0 %v10692
      %v11119 = vpop.f32.mrf.mxu0
      %v11120 = vadd.f32 %v11011, %v11119
      %v11121 = vpop.f32.mrf.mxu0
      %v11122 = vadd.f32 %v11013, %v11121
      %11123 = vmatmul.bf16.gmra.mxu0 %v10698
      %v11124 = vpop.f32.mrf.mxu0
      %v11125 = vadd.f32 %v11016, %v11124
      %v11126 = vpop.f32.mrf.mxu0
      %v11127 = vadd.f32 %v11018, %v11126
      %11128 = vmatmul.bf16.gmra.mxu0 %v10704
      %v11129 = vpop.f32.mrf.mxu0
      %v11130 = vadd.f32 %v11021, %v11129
      %v11131 = vpop.f32.mrf.mxu0
      %v11132 = vadd.f32 %v11023, %v11131
      %11133 = vmatmul.bf16.gmra.mxu0 %v10710
      %v11134 = vpop.f32.mrf.mxu0
      %v11135 = vadd.f32 %v11026, %v11134
      %v11136 = vpop.f32.mrf.mxu0
      %v11137 = vadd.f32 %v11028, %v11136
      %11138 = vmatmul.bf16.gmra.mxu0 %v10716
      %v11139 = vpop.f32.mrf.mxu0
      %v11140 = vadd.f32 %v11031, %v11139
      %v11141 = vpop.f32.mrf.mxu0
      %v11142 = vadd.f32 %v11033, %v11141
      %11143 = vmatmul.bf16.gmra.mxu0 %v10722
      %v11144 = vpop.f32.mrf.mxu0
      %v11145 = vadd.f32 %v11036, %v11144
      %v11146 = vpop.f32.mrf.mxu0
      %v11147 = vadd.f32 %v11038, %v11146
      %11148 = vmatmul.bf16.gmra.mxu0 %v10728
      %v11149 = vpop.f32.mrf.mxu0
      %v11150 = vadd.f32 %v11041, %v11149
      %v11151 = vpop.f32.mrf.mxu0
      %v11152 = vadd.f32 %v11043, %v11151
      %11153 = vmatmul.bf16.gmra.mxu0 %v10734
      %v11154 = vpop.f32.mrf.mxu0
      %v11155 = vadd.f32 %v11046, %v11154
      %v11156 = vpop.f32.mrf.mxu0
      %v11157 = vadd.f32 %v11048, %v11156
      %11158 = vdwg.mxu0
      %11159 = vmatpush.bf16.msra.mxu0 %v10916
      %11160 = vmatpush.bf16.msra.mxu0 %v10915
      %11161 = vmatpush.bf16.msra.mxu0 %v10914
      %11162 = vmatpush.bf16.msra.mxu0 %v10913
      %11163 = vmatpush.bf16.msra.mxu0 %v10912
      %11164 = vmatpush.bf16.msra.mxu0 %v10911
      %11165 = vmatpush.bf16.msra.mxu0 %v10910
      %11166 = vmatpush.bf16.msra.mxu0 %v10909
      %11167 = vmatmul.bf16.gmra.mxu0 %v10622
      %v11168 = vpop.f32.mrf.mxu0
      %v11169 = vadd.f32 %v11060, %v11168
      %v11170 = vpop.f32.mrf.mxu0
      %v11171 = vadd.f32 %v11062, %v11170
      %11172 = vmatmul.bf16.gmra.mxu0 %v10628
      %v11173 = vpop.f32.mrf.mxu0
      %v11174 = vadd.f32 %v11065, %v11173
      %v11175 = vpop.f32.mrf.mxu0
      %v11176 = vadd.f32 %v11067, %v11175
      %11177 = vmatmul.bf16.gmra.mxu0 %v10634
      %v11178 = vpop.f32.mrf.mxu0
      %v11179 = vadd.f32 %v11070, %v11178
      %v11180 = vpop.f32.mrf.mxu0
      %v11181 = vadd.f32 %v11072, %v11180
      %11182 = vmatmul.bf16.gmra.mxu0 %v10640
      %v11183 = vpop.f32.mrf.mxu0
      %v11184 = vadd.f32 %v11075, %v11183
      %v11185 = vpop.f32.mrf.mxu0
      %v11186 = vadd.f32 %v11077, %v11185
      %11187 = vmatmul.bf16.gmra.mxu0 %v10646
      %v11188 = vpop.f32.mrf.mxu0
      %v11189 = vadd.f32 %v11080, %v11188
      %v11190 = vpop.f32.mrf.mxu0
      %v11191 = vadd.f32 %v11082, %v11190
      %11192 = vmatmul.bf16.gmra.mxu0 %v10652
      %v11193 = vpop.f32.mrf.mxu0
      %v11194 = vadd.f32 %v11085, %v11193
      %v11195 = vpop.f32.mrf.mxu0
      %v11196 = vadd.f32 %v11087, %v11195
      %11197 = vmatmul.bf16.gmra.mxu0 %v10658
      %v11198 = vpop.f32.mrf.mxu0
      %v11199 = vadd.f32 %v11090, %v11198
      %v11200 = vpop.f32.mrf.mxu0
      %v11201 = vadd.f32 %v11092, %v11200
      %11202 = vmatmul.bf16.gmra.mxu0 %v10664
      %v11203 = vpop.f32.mrf.mxu0
      %v11204 = vadd.f32 %v11095, %v11203
      %v11205 = vpop.f32.mrf.mxu0
      %v11206 = vadd.f32 %v11097, %v11205
      %11207 = vmatmul.bf16.gmra.mxu0 %v10670
      %v11208 = vpop.f32.mrf.mxu0
      %v11209 = vadd.f32 %v11100, %v11208
      %v11210 = vpop.f32.mrf.mxu0
      %v11211 = vadd.f32 %v11102, %v11210
      %11212 = vmatmul.bf16.gmra.mxu0 %v10676
      %v11213 = vpop.f32.mrf.mxu0
      %v11214 = vadd.f32 %v11105, %v11213
      %v11215 = vpop.f32.mrf.mxu0
      %v11216 = vadd.f32 %v11107, %v11215
      %11217 = vmatmul.bf16.gmra.mxu0 %v10682
      %v11218 = vpop.f32.mrf.mxu0
      %v11219 = vadd.f32 %v11110, %v11218
      %v11220 = vpop.f32.mrf.mxu0
      %v11221 = vadd.f32 %v11112, %v11220
      %11222 = vmatmul.bf16.gmra.mxu0 %v10688
      %v11223 = vpop.f32.mrf.mxu0
      %v11224 = vadd.f32 %v11115, %v11223
      %v11225 = vpop.f32.mrf.mxu0
      %v11226 = vadd.f32 %v11117, %v11225
      %11227 = vmatmul.bf16.gmra.mxu0 %v10694
      %v11228 = vpop.f32.mrf.mxu0
      %v11229 = vadd.f32 %v11120, %v11228
      %v11230 = vpop.f32.mrf.mxu0
      %v11231 = vadd.f32 %v11122, %v11230
      %11232 = vmatmul.bf16.gmra.mxu0 %v10700
      %v11233 = vpop.f32.mrf.mxu0
      %v11234 = vadd.f32 %v11125, %v11233
      %v11235 = vpop.f32.mrf.mxu0
      %v11236 = vadd.f32 %v11127, %v11235
      %11237 = vmatmul.bf16.gmra.mxu0 %v10706
      %v11238 = vpop.f32.mrf.mxu0
      %v11239 = vadd.f32 %v11130, %v11238
      %v11240 = vpop.f32.mrf.mxu0
      %v11241 = vadd.f32 %v11132, %v11240
      %11242 = vmatmul.bf16.gmra.mxu0 %v10712
      %v11243 = vpop.f32.mrf.mxu0
      %v11244 = vadd.f32 %v11135, %v11243
      %v11245 = vpop.f32.mrf.mxu0
      %v11246 = vadd.f32 %v11137, %v11245
      %11247 = vmatmul.bf16.gmra.mxu0 %v10718
      %v11248 = vpop.f32.mrf.mxu0
      %v11249 = vadd.f32 %v11140, %v11248
      %v11250 = vpop.f32.mrf.mxu0
      %v11251 = vadd.f32 %v11142, %v11250
      %11252 = vmatmul.bf16.gmra.mxu0 %v10724
      %v11253 = vpop.f32.mrf.mxu0
      %v11254 = vadd.f32 %v11145, %v11253
      %v11255 = vpop.f32.mrf.mxu0
      %v11256 = vadd.f32 %v11147, %v11255
      %11257 = vmatmul.bf16.gmra.mxu0 %v10730
      %v11258 = vpop.f32.mrf.mxu0
      %v11259 = vadd.f32 %v11150, %v11258
      %v11260 = vpop.f32.mrf.mxu0
      %v11261 = vadd.f32 %v11152, %v11260
      %11262 = vmatmul.bf16.gmra.mxu0 %v10736
      %v11263 = vpop.f32.mrf.mxu0
      %v11264 = vadd.f32 %v11155, %v11263
      %v11265 = vpop.f32.mrf.mxu0
      %v11266 = vadd.f32 %v11157, %v11265
      %11267 = vdwg.mxu0
      %v11268 = vadd.f32 %v10455, %v11169
      %v11269 = vadd.f32 %v10457, %v11171
      %v11270 = vadd.f32 %v10460, %v11174
      %v11271 = vadd.f32 %v10462, %v11176
      %v11272 = vadd.f32 %v10465, %v11179
      %v11273 = vadd.f32 %v10467, %v11181
      %v11274 = vadd.f32 %v10470, %v11184
      %v11275 = vadd.f32 %v10472, %v11186
      %v11276 = vadd.f32 %v10475, %v11189
      %v11277 = vadd.f32 %v10477, %v11191
      %v11278 = vadd.f32 %v10480, %v11194
      %v11279 = vadd.f32 %v10482, %v11196
      %v11280 = vadd.f32 %v10485, %v11199
      %v11281 = vadd.f32 %v10487, %v11201
      %v11282 = vadd.f32 %v10490, %v11204
      %v11283 = vadd.f32 %v10492, %v11206
      %v11284 = vadd.f32 %v10495, %v11209
      %v11285 = vadd.f32 %v10497, %v11211
      %v11286 = vadd.f32 %v10500, %v11214
      %v11287 = vadd.f32 %v10502, %v11216
      %v11288 = vadd.f32 %v10505, %v11219
      %v11289 = vadd.f32 %v10507, %v11221
      %v11290 = vadd.f32 %v10510, %v11224
      %v11291 = vadd.f32 %v10512, %v11226
      %v11292 = vadd.f32 %v10515, %v11229
      %v11293 = vadd.f32 %v10517, %v11231
      %v11294 = vadd.f32 %v10520, %v11234
      %v11295 = vadd.f32 %v10522, %v11236
      %v11296 = vadd.f32 %v10525, %v11239
      %v11297 = vadd.f32 %v10527, %v11241
      %v11298 = vadd.f32 %v10530, %v11244
      %v11299 = vadd.f32 %v10532, %v11246
      %v11300 = vadd.f32 %v10535, %v11249
      %v11301 = vadd.f32 %v10537, %v11251
      %v11302 = vadd.f32 %v10540, %v11254
      %v11303 = vadd.f32 %v10542, %v11256
      %v11304 = vadd.f32 %v10545, %v11259
      %v11305 = vadd.f32 %v10547, %v11261
      %v11306 = vadd.f32 %v10550, %v11264
      %v11307 = vadd.f32 %v10552, %v11266
      %v11309 = vperm.slane %v389, 0
      %v11311 = vadd.f32 %v11268, %v11309
      %v11312 = vadd.f32 %v11269, %v11309
      %v11313 = vadd.f32 %v11270, %v11309
      %v11314 = vadd.f32 %v11271, %v11309
      %v11315 = vadd.f32 %v11272, %v11309
      %v11316 = vadd.f32 %v11273, %v11309
      %v11317 = vadd.f32 %v11274, %v11309
      %v11318 = vadd.f32 %v11275, %v11309
      %v11319 = vadd.f32 %v11276, %v11309
      %v11320 = vadd.f32 %v11277, %v11309
      %v11321 = vadd.f32 %v11278, %v11309
      %v11322 = vadd.f32 %v11279, %v11309
      %v11323 = vadd.f32 %v11280, %v11309
      %v11324 = vadd.f32 %v11281, %v11309
      %v11325 = vadd.f32 %v11282, %v11309
      %v11326 = vadd.f32 %v11283, %v11309
      %v11327 = vadd.f32 %v11284, %v11309
      %v11328 = vadd.f32 %v11285, %v11309
      %v11329 = vadd.f32 %v11286, %v11309
      %v11330 = vadd.f32 %v11287, %v11309
      %v11331 = vadd.f32 %v11288, %v11309
      %v11332 = vadd.f32 %v11289, %v11309
      %v11333 = vadd.f32 %v11290, %v11309
      %v11334 = vadd.f32 %v11291, %v11309
      %v11335 = vadd.f32 %v11292, %v11309
      %v11336 = vadd.f32 %v11293, %v11309
      %v11337 = vadd.f32 %v11294, %v11309
      %v11338 = vadd.f32 %v11295, %v11309
      %v11339 = vadd.f32 %v11296, %v11309
      %v11340 = vadd.f32 %v11297, %v11309
      %v11341 = vadd.f32 %v11298, %v11309
      %v11342 = vadd.f32 %v11299, %v11309
      %v11343 = vadd.f32 %v11300, %v11309
      %v11344 = vadd.f32 %v11301, %v11309
      %v11345 = vadd.f32 %v11302, %v11309
      %v11346 = vadd.f32 %v11303, %v11309
      %v11347 = vadd.f32 %v11304, %v11309
      %v11348 = vadd.f32 %v11305, %v11309
      %v11349 = vadd.f32 %v11306, %v11309
      %v11350 = vadd.f32 %v11307, %v11309
      %v11391 = vrot.slane %v11311, 4
      %v11392 = vrot.slane %v11312, 4
      %v11393 = vrot.slane %v11313, 4
      %v11394 = vrot.slane %v11314, 4
      %v11395 = vrot.slane %v11315, 4
      %v11396 = vrot.slane %v11316, 4
      %v11397 = vrot.slane %v11317, 4
      %v11398 = vrot.slane %v11318, 4
      %v11399 = vrot.slane %v11319, 4
      %v11400 = vrot.slane %v11320, 4
      %v11401 = vrot.slane %v11321, 4
      %v11402 = vrot.slane %v11322, 4
      %v11403 = vrot.slane %v11323, 4
      %v11404 = vrot.slane %v11324, 4
      %v11405 = vrot.slane %v11325, 4
      %v11406 = vrot.slane %v11326, 4
      %v11407 = vrot.slane %v11327, 4
      %v11408 = vrot.slane %v11328, 4
      %v11409 = vrot.slane %v11329, 4
      %v11410 = vrot.slane %v11330, 4
      %v11411 = vrot.slane %v11331, 4
      %v11412 = vrot.slane %v11332, 4
      %v11413 = vrot.slane %v11333, 4
      %v11414 = vrot.slane %v11334, 4
      %v11415 = vrot.slane %v11335, 4
      %v11416 = vrot.slane %v11336, 4
      %v11417 = vrot.slane %v11337, 4
      %v11418 = vrot.slane %v11338, 4
      %v11419 = vrot.slane %v11339, 4
      %v11420 = vrot.slane %v11340, 4
      %v11421 = vrot.slane %v11341, 4
      %v11422 = vrot.slane %v11342, 4
      %v11423 = vrot.slane %v11343, 4
      %v11424 = vrot.slane %v11344, 4
      %v11425 = vrot.slane %v11345, 4
      %v11426 = vrot.slane %v11346, 4
      %v11427 = vrot.slane %v11347, 4
      %v11428 = vrot.slane %v11348, 4
      %v11429 = vrot.slane %v11349, 4
      %v11430 = vrot.slane %v11350, 4
      %v11431 = vld [vmem:[%s1063 + $0x2] sm:$0xff]
      %v11432 = vld [vmem:[%s1063 + $0xa] sm:$0xff]
      %v11433 = vld [vmem:[%s1063 + $0x1a] sm:$0xff]
      %v11434 = vld [vmem:[%s1063 + $0x22] sm:$0xff]
      %v11435 = vld [vmem:[%s1063 + $0x32] sm:$0xff]
      %v11436 = vld [vmem:[%s1063 + $0x3a] sm:$0xff]
      %v11437 = vld [vmem:[%s1063 + $0x4a] sm:$0xff]
      %v11438 = vld [vmem:[%s1063 + $0x52] sm:$0xff]
      %v11439 = vld [vmem:[%s1063 + $0x62] sm:$0xff]
      %v11440 = vld [vmem:[%s1063 + $0x6a] sm:$0xff]
      %v11441 = vld [vmem:[%s1063 + $0x7a] sm:$0xff]
      %v11442 = vld [vmem:[%s1063 + $0x82] sm:$0xff]
      %v11443 = vld [vmem:[%s1063 + $0x92] sm:$0xff]
      %v11444 = vld [vmem:[%s1063 + $0x9a] sm:$0xff]
      %v11445 = vld [vmem:[%s1063 + $0xaa] sm:$0xff]
      %v11446 = vld [vmem:[%s1063 + $0xb2] sm:$0xff]
      %v11447 = vld [vmem:[%s1063 + $0xc2] sm:$0xff]
      %v11448 = vld [vmem:[%s1063 + $0xca] sm:$0xff]
      %v11449 = vld [vmem:[%s1063 + $0xda] sm:$0xff]
      %v11450 = vld [vmem:[%s1063 + $0xe2] sm:$0xff]
      %v11451 = vld [vmem:[%s1063 + $0xf2] sm:$0xff]
      %v11452 = vld [vmem:[%s1063 + $0xfa] sm:$0xff]
      %v11453 = vld [vmem:[%s1063 + $0x10a] sm:$0xff]
      %v11454 = vld [vmem:[%s1063 + $0x112] sm:$0xff]
      %v11455 = vld [vmem:[%s1063 + $0x122] sm:$0xff]
      %v11456 = vld [vmem:[%s1063 + $0x12a] sm:$0xff]
      %v11457 = vld [vmem:[%s1063 + $0x13a] sm:$0xff]
      %v11458 = vld [vmem:[%s1063 + $0x142] sm:$0xff]
      %v11459 = vld [vmem:[%s1063 + $0x152] sm:$0xff]
      %v11460 = vld [vmem:[%s1063 + $0x15a] sm:$0xff]
      %v11461 = vld [vmem:[%s1063 + $0x16a] sm:$0xff]
      %v11462 = vld [vmem:[%s1063 + $0x172] sm:$0xff]
      %11463 = vst [vmem:[#allocation1] ss:$2 sm:$0xff] %v11311
      %s11464 = scalar_lea.vmem [#allocation1], 1
      %11465 = vst [vmem:[%s11464] ss:$2 sm:$0xff] %v11391
      %s11466 = scalar_lea.vmem [#allocation1], 16
      %11467 = vst [vmem:[%s11466] ss:$2 sm:$0xff] %v11312
      %s11468 = scalar_lea.vmem [#allocation1], 17
      %11469 = vst [vmem:[%s11468] ss:$2 sm:$0xff] %v11392
      %s11470 = scalar_lea.vmem [#allocation1], 32
      %11471 = vst [vmem:[%s11470] ss:$2 sm:$0xff] %v11313
      %v11472 = vld.sshfl [vmem:[#allocation1] sm:$0xff pattern:$0x75316420]
      %v11473 = vld.sshfl [vmem:[#allocation1 + $0x10] sm:$0xff pattern:$0x75316420]
      %v11474 = vld.sshfl [vmem:[#allocation1 + $0x20] sm:$0xff pattern:$0x75316420]
      %s11475 = scalar_lea.vmem [#allocation1], 48
      %11476 = vst [vmem:[%s11475] ss:$2 sm:$0xff] %v11393
      %s11477 = scalar_lea.vmem [#allocation1], 49
      %11478 = vst [vmem:[%s11477] ss:$2 sm:$0xff] %v11314
      %v11479 = vld.sshfl [vmem:[#allocation1 + $0x30] sm:$0xff pattern:$0x75316420]
      %11480 = vst [vmem:[#allocation1] ss:$2 sm:$0xff] %v11394
      %11481 = vst [vmem:[%s11464] ss:$2 sm:$0xff] %v11315
      %11482 = vst [vmem:[%s11466] ss:$2 sm:$0xff] %v11395
      %v11483 = vld.sshfl [vmem:[#allocation1] sm:$0xff pattern:$0x75316420]
      %v11484 = vld.sshfl [vmem:[#allocation1 + $0x10] sm:$0xff pattern:$0x75316420]
      %11485 = vst [vmem:[%s11470] ss:$2 sm:$0xff] %v11316
      %s11486 = scalar_lea.vmem [#allocation1], 33
      %11487 = vst [vmem:[%s11486] ss:$2 sm:$0xff] %v11396
      %11488 = vst [vmem:[%s11475] ss:$2 sm:$0xff] %v11317
      %11489 = vst [vmem:[%s11477] ss:$2 sm:$0xff] %v11397
      %v11490 = vld.sshfl [vmem:[#allocation1 + $0x20] sm:$0xff pattern:$0x75316420]
      %v11491 = vld.sshfl [vmem:[#allocation1 + $0x30] sm:$0xff pattern:$0x75316420]
      %11492 = vst [vmem:[#allocation1] ss:$2 sm:$0xff] %v11318
      %v11493 = vld.sshfl [vmem:[#allocation1] sm:$0xff pattern:$0x75316420]
      %11494 = vst [vmem:[%s11466] ss:$2 sm:$0xff] %v11398
      %11495 = vst [vmem:[%s11468] ss:$2 sm:$0xff] %v11319
      %11496 = vst [vmem:[%s11470] ss:$2 sm:$0xff] %v11399
      %11497 = vst [vmem:[%s11486] ss:$2 sm:$0xff] %v11320
      %11498 = vst [vmem:[%s11475] ss:$2 sm:$0xff] %v11400
      %v11499 = vld.sshfl [vmem:[#allocation1 + $0x10] sm:$0xff pattern:$0x75316420]
      %v11500 = vld.sshfl [vmem:[#allocation1 + $0x20] sm:$0xff pattern:$0x75316420]
      %v11501 = vld.sshfl [vmem:[#allocation1 + $0x30] sm:$0xff pattern:$0x75316420]
      %11502 = vst [vmem:[#allocation1] ss:$2 sm:$0xff] %v11321
      %11503 = vst [vmem:[%s11464] ss:$2 sm:$0xff] %v11401
      %11504 = vst [vmem:[%s11466] ss:$2 sm:$0xff] %v11322
      %11505 = vst [vmem:[%s11468] ss:$2 sm:$0xff] %v11402
      %11506 = vst [vmem:[%s11470] ss:$2 sm:$0xff] %v11323
      %v11507 = vld.sshfl [vmem:[#allocation1] sm:$0xff pattern:$0x75316420]
      %v11508 = vld.sshfl [vmem:[#allocation1 + $0x10] sm:$0xff pattern:$0x75316420]
      %v11509 = vld.sshfl [vmem:[#allocation1 + $0x20] sm:$0xff pattern:$0x75316420]
      %11510 = vst [vmem:[%s11475] ss:$2 sm:$0xff] %v11403
      %11511 = vst [vmem:[%s11477] ss:$2 sm:$0xff] %v11324
      %v11512 = vld.sshfl [vmem:[#allocation1 + $0x30] sm:$0xff pattern:$0x75316420]
      %11513 = vst [vmem:[#allocation1] ss:$2 sm:$0xff] %v11404
      %11514 = vst [vmem:[%s11464] ss:$2 sm:$0xff] %v11325
      %11515 = vst [vmem:[%s11466] ss:$2 sm:$0xff] %v11405
      %v11516 = vld.sshfl [vmem:[#allocation1] sm:$0xff pattern:$0x75316420]
      %v11517 = vld.sshfl [vmem:[#allocation1 + $0x10] sm:$0xff pattern:$0x75316420]
      %11518 = vst [vmem:[%s11470] ss:$2 sm:$0xff] %v11326
      %11519 = vst [vmem:[%s11486] ss:$2 sm:$0xff] %v11406
      %11520 = vst [vmem:[%s11475] ss:$2 sm:$0xff] %v11327
      %11521 = vst [vmem:[%s11477] ss:$2 sm:$0xff] %v11407
      %v11522 = vld.sshfl [vmem:[#allocation1 + $0x20] sm:$0xff pattern:$0x75316420]
      %v11523 = vld.sshfl [vmem:[#allocation1 + $0x30] sm:$0xff pattern:$0x75316420]
      %11524 = vst [vmem:[#allocation1] ss:$2 sm:$0xff] %v11328
      %v11525 = vld.sshfl [vmem:[#allocation1] sm:$0xff pattern:$0x75316420]
      %11526 = vst [vmem:[%s11466] ss:$2 sm:$0xff] %v11408
      %11527 = vst [vmem:[%s11468] ss:$2 sm:$0xff] %v11329
      %11528 = vst [vmem:[%s11470] ss:$2 sm:$0xff] %v11409
      %11529 = vst [vmem:[%s11486] ss:$2 sm:$0xff] %v11330
      %11530 = vst [vmem:[%s11475] ss:$2 sm:$0xff] %v11410
      %v11531 = vld.sshfl [vmem:[#allocation1 + $0x10] sm:$0xff pattern:$0x75316420]
      %v11532 = vld.sshfl [vmem:[#allocation1 + $0x20] sm:$0xff pattern:$0x75316420]
      %v11533 = vld.sshfl [vmem:[#allocation1 + $0x30] sm:$0xff pattern:$0x75316420]
      %11534 = vst [vmem:[#allocation1] ss:$2 sm:$0xff] %v11331
      %11535 = vst [vmem:[%s11464] ss:$2 sm:$0xff] %v11411
      %11536 = vst [vmem:[%s11466] ss:$2 sm:$0xff] %v11332
      %11537 = vst [vmem:[%s11468] ss:$2 sm:$0xff] %v11412
      %11538 = vst [vmem:[%s11470] ss:$2 sm:$0xff] %v11333
      %v11539 = vld.sshfl [vmem:[#allocation1] sm:$0xff pattern:$0x75316420]
      %v11540 = vld.sshfl [vmem:[#allocation1 + $0x10] sm:$0xff pattern:$0x75316420]
      %v11541 = vld.sshfl [vmem:[#allocation1 + $0x20] sm:$0xff pattern:$0x75316420]
      %11542 = vst [vmem:[%s11475] ss:$2 sm:$0xff] %v11413
      %11543 = vst [vmem:[%s11477] ss:$2 sm:$0xff] %v11334
      %v11544 = vld.sshfl [vmem:[#allocation1 + $0x30] sm:$0xff pattern:$0x75316420]
      %11545 = vst [vmem:[#allocation1] ss:$2 sm:$0xff] %v11414
      %11546 = vst [vmem:[%s11464] ss:$2 sm:$0xff] %v11335
      %11547 = vst [vmem:[%s11466] ss:$2 sm:$0xff] %v11415
      %v11548 = vld.sshfl [vmem:[#allocation1] sm:$0xff pattern:$0x75316420]
      %v11549 = vld.sshfl [vmem:[#allocation1 + $0x10] sm:$0xff pattern:$0x75316420]
      %11550 = vst [vmem:[%s11470] ss:$2 sm:$0xff] %v11336
      %11551 = vst [vmem:[%s11486] ss:$2 sm:$0xff] %v11416
      %11552 = vst [vmem:[%s11475] ss:$2 sm:$0xff] %v11337
      %11553 = vst [vmem:[%s11477] ss:$2 sm:$0xff] %v11417
      %v11554 = vld.sshfl [vmem:[#allocation1 + $0x20] sm:$0xff pattern:$0x75316420]
      %v11555 = vld.sshfl [vmem:[#allocation1 + $0x30] sm:$0xff pattern:$0x75316420]
      %11556 = vst [vmem:[#allocation1] ss:$2 sm:$0xff] %v11338
      %v11557 = vld.sshfl [vmem:[#allocation1] sm:$0xff pattern:$0x75316420]
      %11558 = vst [vmem:[%s11466] ss:$2 sm:$0xff] %v11418
      %11559 = vst [vmem:[%s11468] ss:$2 sm:$0xff] %v11339
      %11560 = vst [vmem:[%s11470] ss:$2 sm:$0xff] %v11419
      %11561 = vst [vmem:[%s11486] ss:$2 sm:$0xff] %v11340
      %11562 = vst [vmem:[%s11475] ss:$2 sm:$0xff] %v11420
      %v11563 = vld.sshfl [vmem:[#allocation1 + $0x10] sm:$0xff pattern:$0x75316420]
      %v11564 = vld.sshfl [vmem:[#allocation1 + $0x20] sm:$0xff pattern:$0x75316420]
      %v11565 = vld.sshfl [vmem:[#allocation1 + $0x30] sm:$0xff pattern:$0x75316420]
      %11566 = vst [vmem:[#allocation1] ss:$2 sm:$0xff] %v11341
      %11567 = vst [vmem:[%s11464] ss:$2 sm:$0xff] %v11421
      %11568 = vst [vmem:[%s11466] ss:$2 sm:$0xff] %v11342
      %11569 = vst [vmem:[%s11468] ss:$2 sm:$0xff] %v11422
      %11570 = vst [vmem:[%s11470] ss:$2 sm:$0xff] %v11343
      %v11571 = vld.sshfl [vmem:[#allocation1] sm:$0xff pattern:$0x75316420]
      %v11572 = vld.sshfl [vmem:[#allocation1 + $0x10] sm:$0xff pattern:$0x75316420]
      %v11573 = vld.sshfl [vmem:[#allocation1 + $0x20] sm:$0xff pattern:$0x75316420]
      %11574 = vst [vmem:[%s11475] ss:$2 sm:$0xff] %v11423
      %11575 = vst [vmem:[%s11477] ss:$2 sm:$0xff] %v11344
      %v11576 = vld.sshfl [vmem:[#allocation1 + $0x30] sm:$0xff pattern:$0x75316420]
      %11577 = vst [vmem:[#allocation1] ss:$2 sm:$0xff] %v11424
      %11578 = vst [vmem:[%s11464] ss:$2 sm:$0xff] %v11345
      %11579 = vst [vmem:[%s11466] ss:$2 sm:$0xff] %v11425
      %v11580 = vld.sshfl [vmem:[#allocation1] sm:$0xff pattern:$0x75316420]
      %v11581 = vld.sshfl [vmem:[#allocation1 + $0x10] sm:$0xff pattern:$0x75316420]
      %11582 = vst [vmem:[%s11470] ss:$2 sm:$0xff] %v11346
      %11583 = vst [vmem:[%s11486] ss:$2 sm:$0xff] %v11426
      %11584 = vst [vmem:[%s11475] ss:$2 sm:$0xff] %v11347
      %11585 = vst [vmem:[%s11477] ss:$2 sm:$0xff] %v11427
      %v11586 = vld.sshfl [vmem:[#allocation1 + $0x20] sm:$0xff pattern:$0x75316420]
      %v11587 = vld.sshfl [vmem:[#allocation1 + $0x30] sm:$0xff pattern:$0x75316420]
      %11588 = vst [vmem:[#allocation1] ss:$2 sm:$0xff] %v11348
      %v11589 = vld.sshfl [vmem:[#allocation1] sm:$0xff pattern:$0x75316420]
      %11590 = vst [vmem:[%s11466] ss:$2 sm:$0xff] %v11428
      %11591 = vst [vmem:[%s11468] ss:$2 sm:$0xff] %v11349
      %11592 = vst [vmem:[%s11470] ss:$2 sm:$0xff] %v11429
      %11593 = vst [vmem:[%s11486] ss:$2 sm:$0xff] %v11350
      %11594 = vst [vmem:[%s11475] ss:$2 sm:$0xff] %v11430
      %v11595 = vld.sshfl [vmem:[#allocation1 + $0x10] sm:$0xff pattern:$0x75316420]
      %v11596 = vld.sshfl [vmem:[#allocation1 + $0x20] sm:$0xff pattern:$0x75316420]
      %v11597 = vld.sshfl [vmem:[#allocation1 + $0x30] sm:$0xff pattern:$0x75316420]
      %vm11598 = vcmask 1046528
      %v11599 = vrot.slane %v11472, 1
      %v11600 = vrot.slane %v11473, 1
      %v11601 = vsel %vm11598, %v11599, %v11600
      %v11602 = vrot.slane %v11474, 1
      %v11603 = vsel %vm11598, %v11600, %v11602
      %v11604 = vrot.slane %v11479, 1
      %v11605 = vrot.slane %v11483, 1
      %v11606 = vsel %vm11598, %v11604, %v11605
      %v11607 = vrot.slane %v11484, 1
      %v11608 = vsel %vm11598, %v11605, %v11607
      %v11609 = vrot.slane %v11490, 1
      %v11610 = vrot.slane %v11491, 1
      %v11611 = vsel %vm11598, %v11609, %v11610
      %v11612 = vrot.slane %v11493, 1
      %v11613 = vsel %vm11598, %v11610, %v11612
      %v11614 = vrot.slane %v11499, 1
      %v11615 = vrot.slane %v11500, 1
      %v11616 = vsel %vm11598, %v11614, %v11615
      %v11617 = vrot.slane %v11501, 1
      %v11618 = vsel %vm11598, %v11615, %v11617
      %v11619 = vrot.slane %v11507, 1
      %v11620 = vrot.slane %v11508, 1
      %v11621 = vsel %vm11598, %v11619, %v11620
      %v11622 = vrot.slane %v11509, 1
      %v11623 = vsel %vm11598, %v11620, %v11622
      %v11624 = vrot.slane %v11512, 1
      %v11625 = vrot.slane %v11516, 1
      %v11626 = vsel %vm11598, %v11624, %v11625
      %v11627 = vrot.slane %v11517, 1
      %v11628 = vsel %vm11598, %v11625, %v11627
      %v11629 = vrot.slane %v11522, 1
      %v11630 = vrot.slane %v11523, 1
      %v11631 = vsel %vm11598, %v11629, %v11630
      %v11632 = vrot.slane %v11525, 1
      %v11633 = vsel %vm11598, %v11630, %v11632
      %v11634 = vrot.slane %v11531, 1
      %v11635 = vrot.slane %v11532, 1
      %v11636 = vsel %vm11598, %v11634, %v11635
      %v11637 = vrot.slane %v11533, 1
      %v11638 = vsel %vm11598, %v11635, %v11637
      %v11639 = vrot.slane %v11539, 1
      %v11640 = vrot.slane %v11540, 1
      %v11641 = vsel %vm11598, %v11639, %v11640
      %v11642 = vrot.slane %v11541, 1
      %v11643 = vsel %vm11598, %v11640, %v11642
      %v11644 = vrot.slane %v11544, 1
      %v11645 = vrot.slane %v11548, 1
      %v11646 = vsel %vm11598, %v11644, %v11645
      %v11647 = vrot.slane %v11549, 1
      %v11648 = vsel %vm11598, %v11645, %v11647
      %v11649 = vrot.slane %v11554, 1
      %v11650 = vrot.slane %v11555, 1
      %v11651 = vsel %vm11598, %v11649, %v11650
      %v11652 = vrot.slane %v11557, 1
      %v11653 = vsel %vm11598, %v11650, %v11652
      %v11654 = vrot.slane %v11563, 1
      %v11655 = vrot.slane %v11564, 1
      %v11656 = vsel %vm11598, %v11654, %v11655
      %v11657 = vrot.slane %v11565, 1
      %v11658 = vsel %vm11598, %v11655, %v11657
      %v11659 = vrot.slane %v11571, 1
      %v11660 = vrot.slane %v11572, 1
      %v11661 = vsel %vm11598, %v11659, %v11660
      %v11662 = vrot.slane %v11573, 1
      %v11663 = vsel %vm11598, %v11660, %v11662
      %v11664 = vrot.slane %v11576, 1
      %v11665 = vrot.slane %v11580, 1
      %v11666 = vsel %vm11598, %v11664, %v11665
      %v11667 = vrot.slane %v11581, 1
      %v11668 = vsel %vm11598, %v11665, %v11667
      %v11669 = vrot.slane %v11586, 1
      %v11670 = vrot.slane %v11587, 1
      %v11671 = vsel %vm11598, %v11669, %v11670
      %v11672 = vrot.slane %v11589, 1
      %v11673 = vsel %vm11598, %v11670, %v11672
      %v11674 = vrot.slane %v11595, 1
      %v11675 = vrot.slane %v11596, 1
      %v11676 = vsel %vm11598, %v11674, %v11675
      %v11677 = vrot.slane %v11597, 1
      %v11678 = vsel %vm11598, %v11675, %v11677
      %v11711 = vadd.f32 %v11431, %v11601
      %v11712 = vadd.f32 %v11432, %v11603
      %v11713 = vadd.f32 %v11433, %v11606
      %v11714 = vadd.f32 %v11434, %v11608
      %v11715 = vadd.f32 %v11435, %v11611
      %v11716 = vadd.f32 %v11436, %v11613
      %v11717 = vadd.f32 %v11437, %v11616
      %v11718 = vadd.f32 %v11438, %v11618
      %v11719 = vadd.f32 %v11439, %v11621
      %v11720 = vadd.f32 %v11440, %v11623
      %v11721 = vadd.f32 %v11441, %v11626
      %v11722 = vadd.f32 %v11442, %v11628
      %v11723 = vadd.f32 %v11443, %v11631
      %v11724 = vadd.f32 %v11444, %v11633
      %v11725 = vadd.f32 %v11445, %v11636
      %v11726 = vadd.f32 %v11446, %v11638
      %v11727 = vadd.f32 %v11447, %v11641
      %v11728 = vadd.f32 %v11448, %v11643
      %v11729 = vadd.f32 %v11449, %v11646
      %v11730 = vadd.f32 %v11450, %v11648
      %v11731 = vadd.f32 %v11451, %v11651
      %v11732 = vadd.f32 %v11452, %v11653
      %v11733 = vadd.f32 %v11453, %v11656
      %v11734 = vadd.f32 %v11454, %v11658
      %v11735 = vadd.f32 %v11455, %v11661
      %v11736 = vadd.f32 %v11456, %v11663
      %v11737 = vadd.f32 %v11457, %v11666
      %v11738 = vadd.f32 %v11458, %v11668
      %v11739 = vadd.f32 %v11459, %v11671
      %v11740 = vadd.f32 %v11460, %v11673
      %v11741 = vadd.f32 %v11461, %v11676
      %v11742 = vadd.f32 %v11462, %v11678
      %11743 = vst [vmem:[%s1063 + $0x2] sm:$0xff] %v11711
      %11744 = vst [vmem:[%s1063 + $0xa] sm:$0xff] %v11712
      %11745 = vst [vmem:[%s1063 + $0x1a] sm:$0xff] %v11713
      %11746 = vst [vmem:[%s1063 + $0x22] sm:$0xff] %v11714
      %11747 = vst [vmem:[%s1063 + $0x32] sm:$0xff] %v11715
      %11748 = vst [vmem:[%s1063 + $0x3a] sm:$0xff] %v11716
      %11749 = vst [vmem:[%s1063 + $0x4a] sm:$0xff] %v11717
      %11750 = vst [vmem:[%s1063 + $0x52] sm:$0xff] %v11718
      %11751 = vst [vmem:[%s1063 + $0x62] sm:$0xff] %v11719
      %11752 = vst [vmem:[%s1063 + $0x6a] sm:$0xff] %v11720
      %11753 = vst [vmem:[%s1063 + $0x7a] sm:$0xff] %v11721
      %11754 = vst [vmem:[%s1063 + $0x82] sm:$0xff] %v11722
      %11755 = vst [vmem:[%s1063 + $0x92] sm:$0xff] %v11723
      %11756 = vst [vmem:[%s1063 + $0x9a] sm:$0xff] %v11724
      %11757 = vst [vmem:[%s1063 + $0xaa] sm:$0xff] %v11725
      %11758 = vst [vmem:[%s1063 + $0xb2] sm:$0xff] %v11726
      %11759 = vst [vmem:[%s1063 + $0xc2] sm:$0xff] %v11727
      %11760 = vst [vmem:[%s1063 + $0xca] sm:$0xff] %v11728
      %11761 = vst [vmem:[%s1063 + $0xda] sm:$0xff] %v11729
      %11762 = vst [vmem:[%s1063 + $0xe2] sm:$0xff] %v11730
      %11763 = vst [vmem:[%s1063 + $0xf2] sm:$0xff] %v11731
      %11764 = vst [vmem:[%s1063 + $0xfa] sm:$0xff] %v11732
      %11765 = vst [vmem:[%s1063 + $0x10a] sm:$0xff] %v11733
      %11766 = vst [vmem:[%s1063 + $0x112] sm:$0xff] %v11734
      %11767 = vst [vmem:[%s1063 + $0x122] sm:$0xff] %v11735
      %11768 = vst [vmem:[%s1063 + $0x12a] sm:$0xff] %v11736
      %11769 = vst [vmem:[%s1063 + $0x13a] sm:$0xff] %v11737
      %11770 = vst [vmem:[%s1063 + $0x142] sm:$0xff] %v11738
      %11771 = vst [vmem:[%s1063 + $0x152] sm:$0xff] %v11739
      %11772 = vst [vmem:[%s1063 + $0x15a] sm:$0xff] %v11740
      %11773 = vst [vmem:[%s1063 + $0x16a] sm:$0xff] %v11741
      %11774 = vst [vmem:[%s1063 + $0x172] sm:$0xff] %v11742
      %p11775 = scmp.eq.s32.totalorder %s21, 1
      // Predicated region
      $region45: #{resblocks_forward.1} parent=39 // pred_check
        %p11776 = pneg %p11775
      $region46: #{resblocks_forward.1} parent=39 // pred_check_branch
        %11778 = sbr.rel (%p11776) target = $region48
      $region47: #{resblocks_forward.1} parent=39 // pred_region
        %v11779 = vld [vmem:[%s1063 + $0x2] sm:$0xff]
        %v11780 = vld [vmem:[%s1063 + $0xa] sm:$0xff]
        %v11781 = vld [vmem:[%s1063 + $0x1a] sm:$0xff]
        %v11782 = vld [vmem:[%s1063 + $0x22] sm:$0xff]
        %v11783 = vld [vmem:[%s1063 + $0x32] sm:$0xff]
        %v11784 = vld [vmem:[%s1063 + $0x3a] sm:$0xff]
        %v11785 = vld [vmem:[%s1063 + $0x4a] sm:$0xff]
        %v11786 = vld [vmem:[%s1063 + $0x52] sm:$0xff]
        %v11787 = vld [vmem:[%s1063 + $0x62] sm:$0xff]
        %v11788 = vld [vmem:[%s1063 + $0x6a] sm:$0xff]
        %v11789 = vld [vmem:[%s1063 + $0x7a] sm:$0xff]
        %v11790 = vld [vmem:[%s1063 + $0x82] sm:$0xff]
        %v11791 = vld [vmem:[%s1063 + $0x92] sm:$0xff]
        %v11792 = vld [vmem:[%s1063 + $0x9a] sm:$0xff]
        %v11793 = vld [vmem:[%s1063 + $0xaa] sm:$0xff]
        %v11794 = vld [vmem:[%s1063 + $0xb2] sm:$0xff]
        %v11795 = vld [vmem:[%s1063 + $0xc2] sm:$0xff]
        %v11796 = vld [vmem:[%s1063 + $0xca] sm:$0xff]
        %v11797 = vld [vmem:[%s1063 + $0xda] sm:$0xff]
        %v11798 = vld [vmem:[%s1063 + $0xe2] sm:$0xff]
        %v11799 = vld [vmem:[%s1063 + $0xf2] sm:$0xff]
        %v11800 = vld [vmem:[%s1063 + $0xfa] sm:$0xff]
        %v11801 = vld [vmem:[%s1063 + $0x10a] sm:$0xff]
        %v11802 = vld [vmem:[%s1063 + $0x112] sm:$0xff]
        %v11803 = vld [vmem:[%s1063 + $0x122] sm:$0xff]
        %v11804 = vld [vmem:[%s1063 + $0x12a] sm:$0xff]
        %v11805 = vld [vmem:[%s1063 + $0x13a] sm:$0xff]
        %v11806 = vld [vmem:[%s1063 + $0x142] sm:$0xff]
        %v11807 = vld [vmem:[%s1063 + $0x152] sm:$0xff]
        %v11808 = vld [vmem:[%s1063 + $0x15a] sm:$0xff]
        %v11809 = vld [vmem:[%s1063 + $0x16a] sm:$0xff]
        %v11810 = vld [vmem:[%s1063 + $0x172] sm:$0xff]
        %11811 = vst [vmem:[%s236] sm:$0xff] %v11779
        %11812 = vst [vmem:[%s236 + $0x8] sm:$0xff] %v11780
        %11813 = vst [vmem:[%s236 + $0x10] sm:$0xff] %v11781
        %11814 = vst [vmem:[%s236 + $0x18] sm:$0xff] %v11782
        %11815 = vst [vmem:[%s236 + $0x20] sm:$0xff] %v11783
        %11816 = vst [vmem:[%s236 + $0x28] sm:$0xff] %v11784
        %11817 = vst [vmem:[%s236 + $0x30] sm:$0xff] %v11785
        %11818 = vst [vmem:[%s236 + $0x38] sm:$0xff] %v11786
        %11819 = vst [vmem:[%s236 + $0x40] sm:$0xff] %v11787
        %11820 = vst [vmem:[%s236 + $0x48] sm:$0xff] %v11788
        %11821 = vst [vmem:[%s236 + $0x50] sm:$0xff] %v11789
        %11822 = vst [vmem:[%s236 + $0x58] sm:$0xff] %v11790
        %11823 = vst [vmem:[%s236 + $0x60] sm:$0xff] %v11791
        %11824 = vst [vmem:[%s236 + $0x68] sm:$0xff] %v11792
        %11825 = vst [vmem:[%s236 + $0x70] sm:$0xff] %v11793
        %11826 = vst [vmem:[%s236 + $0x78] sm:$0xff] %v11794
        %11827 = vst [vmem:[%s236 + $0x80] sm:$0xff] %v11795
        %11828 = vst [vmem:[%s236 + $0x88] sm:$0xff] %v11796
        %11829 = vst [vmem:[%s236 + $0x90] sm:$0xff] %v11797
        %11830 = vst [vmem:[%s236 + $0x98] sm:$0xff] %v11798
        %11831 = vst [vmem:[%s236 + $0xa0] sm:$0xff] %v11799
        %11832 = vst [vmem:[%s236 + $0xa8] sm:$0xff] %v11800
        %11833 = vst [vmem:[%s236 + $0xb0] sm:$0xff] %v11801
        %11834 = vst [vmem:[%s236 + $0xb8] sm:$0xff] %v11802
        %11835 = vst [vmem:[%s236 + $0xc0] sm:$0xff] %v11803
        %11836 = vst [vmem:[%s236 + $0xc8] sm:$0xff] %v11804
        %11837 = vst [vmem:[%s236 + $0xd0] sm:$0xff] %v11805
        %11838 = vst [vmem:[%s236 + $0xd8] sm:$0xff] %v11806
        %11839 = vst [vmem:[%s236 + $0xe0] sm:$0xff] %v11807
        %11840 = vst [vmem:[%s236 + $0xe8] sm:$0xff] %v11808
        %11841 = vst [vmem:[%s236 + $0xf0] sm:$0xff] %v11809
        %11842 = vst [vmem:[%s236 + $0xf8] sm:$0xff] %v11810
      $region48: #{resblocks_forward.1} parent=39 // pred_fallthru
        _
      %p11843 = scmp.lt.s32.totalorder %s20, 1
      %s11844 = scalar_select %p11843, %s20, 1
      %s11845 = smul.addr %s11844, 32
      %s11846 = smul.addr %s11845, 8
      %s11847 = scalar_lea.vmem %s5, %s11846
      // Predicated region
      $region49: #{resblocks_forward.1} parent=39 // pred_check
        %p11848 = pneg %p156
      $region50: #{resblocks_forward.1} parent=39 // pred_check_branch
        %11850 = sbr.rel (%p11848) target = $region52
      $region51: #{resblocks_forward.1} parent=39 // pred_region
        _
      $region52: #{resblocks_forward.1} parent=39 // pred_fallthru
        _
    $region40: #{resblocks_forward.1} parent=5 // pred_fallthru
      _
    %p11851 = scmp.le.s32.totalorder 2, %s11
    // Predicated region
    $region53: #{resblocks_forward.1} parent=5 // pred_check
      %p11852 = pneg %p11851
    $region54: #{resblocks_forward.1} parent=5 // pred_check_branch
      %11854 = sbr.rel (%p11852) target = $region56
    $region55: #{resblocks_forward.1} parent=5 // pred_region
      %s11855 = ssub.s32 %s11, 2
      // Predicated region
      $region57: #{resblocks_forward.1} parent=55 // pred_check
        %p11856 = pneg %p162
      $region58: #{resblocks_forward.1} parent=55 // pred_check_branch
        %11858 = sbr.rel (%p11856) target = $region60
      $region59: #{resblocks_forward.1} parent=55 // pred_region
        %p11859 = scmp.lt.s32.totalorder %s22, 1
        %s11860 = scalar_select %p11859, %s22, 1
        %s11861 = smul.addr %s11860, 32
        %s11862 = smul.addr %s11861, 8
        %s11863 = scalar_lea.vmem %s5, %s11862
      $region60: #{resblocks_forward.1} parent=55 // pred_fallthru
        _
    $region56: #{resblocks_forward.1} parent=5 // pred_fallthru
      _
  $region6: #{resblocks_forward.1} parent=0 // loop_footer
    %s15 = sadd.s32 1, %s11
  $region7: #{resblocks_forward.1} parent=0 // loop_footer_branch
    %10 = sbr.rel target = $region3
  $region8: #{resblocks_forward.1} parent=0 // loop_exit
    _

</llo_original>
